<compile_context>
chip_gen: v5e
topology: v5e:2x2
jax: 0.10.0
libtpu: 0.0.40
codegen_flags: <defaults>
</compile_context>

<pallas_src>
import functools

import jax
import jax.numpy as jnp
from jax.experimental import pallas as pl
from jax.experimental.pallas import tpu as pltpu


# ---------------------------------------------------------------------------
# Fused kernel: one batch element, both conv stages, intermediate in VMEM.
# ---------------------------------------------------------------------------
def _fused_input_cv_kernel(x_ref, w1_ref, b1_ref, w2_ref, b2_ref, o_ref,
                           xpad, hpad):
    """x_ref : (1, H, W, Cin)        bf16 input tile
    w1_ref  : (9*Cin, C1p)           bf16  stage-1 im2col weight (BN scale folded)
    b1_ref  : (1, C1p)               f32   stage-1 folded BN bias
    w2_ref  : (9*C1p, Cop)           bf16  stage-2 im2col weight (BN scale folded)
    b2_ref  : (1, Cop)               f32   stage-2 folded BN bias
    o_ref   : (1, H, W, Cop)         f32   output (channel-padded to 128)
    xpad    : (H+2, W+2, Cin)  bf16 VMEM scratch (zero halo)
    hpad    : (H+2, W+2, C1p)  bf16 VMEM scratch (zero halo)
    """
    _, H, W, Cop = o_ref.shape
    Cin = x_ref.shape[3]
    C1p = hpad.shape[2]

    # ------------------- stage 1: grouped conv + BN + ReLU ------------------
    # in-kernel 'SAME' padding: zero the scratch, write the interior.
    xpad[...] = jnp.zeros_like(xpad)
    xpad[1:H + 1, 1:W + 1, :] = x_ref[0]

    # im2col: (H*W, 9*Cin) patch matrix, single big-K MXU matmul.
    cols = []
    for dy in range(3):
        for dx in range(3):
            cols.append(xpad[dy:dy + H, dx:dx + W, :].reshape(H * W, Cin))
    patches = jnp.concatenate(cols, axis=-1)                       # (H*W, 9*Cin) bf16

    h = jnp.dot(patches, w1_ref[...],
                preferred_element_type=jnp.float32)                # (H*W, C1p) f32
    h = jnp.maximum(h + b1_ref[...], 0.0)

    # ------------------- stage 2: dense conv + BN + ReLU --------------------
    hpad[...] = jnp.zeros_like(hpad)
    hpad[1:H + 1, 1:W + 1, :] = h.reshape(H, W, C1p).astype(hpad.dtype)

    cols2 = []
    for dy in range(3):
        for dx in range(3):
            cols2.append(hpad[dy:dy + H, dx:dx + W, :].reshape(H * W, C1p))
    patches2 = jnp.concatenate(cols2, axis=-1)                     # (H*W, 9*C1p) bf16

    y = jnp.dot(patches2, w2_ref[...],
                preferred_element_type=jnp.float32)                # (H*W, Cop) f32
    y = jnp.maximum(y + b2_ref[...], 0.0)

    # lane-dense store (Cop == 128).
    o_ref[0] = y.reshape(H, W, Cop).astype(o_ref.dtype)


# ---------------------------------------------------------------------------
# Host-side parameter preparation (BN folding, block-diag grouped weight,
# channel padding, im2col weight reshape).  Could be hoisted out of the
# per-call path / computed once per model.
# ---------------------------------------------------------------------------
def _fold_bn(gamma, beta, mean, var, eps=1e-5):
    scale = gamma / jnp.sqrt(var + eps)
    bias = beta - mean * scale
    return scale, bias


def _grouped_weight_to_dense_hwio(w_pt, groups):
    """PyTorch grouped-conv weight (O, I/g, kH, kW) -> block-diagonal dense HWIO."""
    O, Ig, kH, kW = w_pt.shape
    opg = O // groups
    w_dense = jnp.zeros((kH, kW, Ig * groups, O), jnp.float32)
    for g in range(groups):
        blk = jnp.transpose(w_pt[g * opg:(g + 1) * opg], (2, 3, 1, 0))  # (kH,kW,Ig,opg)
        w_dense = w_dense.at[:, :, g * Ig:(g + 1) * Ig,
                             g * opg:(g + 1) * opg].set(blk)
    return w_dense


def _prepare_params(params, num_in_frames, c1_pad, co_pad):
    # Stage 1: grouped conv weight (block-diag dense), BN scale folded into weight.
    s1, b1 = _fold_bn(params["g1"], params["b1"], params["m1"], params["v1"])
    w1 = _grouped_weight_to_dense_hwio(params["w1"], num_in_frames)   # (3,3,Cin,C1)
    w1 = w1 * s1[None, None, None, :]
    kH, kW, Cin, C1 = w1.shape
    w1p = jnp.zeros((kH, kW, Cin, c1_pad), jnp.float32).at[..., :C1].set(w1)
    w1_mat = w1p.reshape(kH * kW * Cin, c1_pad).astype(jnp.bfloat16)
    b1p = jnp.zeros((1, c1_pad), jnp.float32).at[0, :C1].set(b1)

    # Stage 2: dense conv weight, BN scale folded into weight.
    s2, b2 = _fold_bn(params["g2"], params["b2"], params["m2"], params["v2"])
    w2 = jnp.transpose(params["w2"], (2, 3, 1, 0)) * s2[None, None, None, :]  # (3,3,C1,Co)
    Co = w2.shape[-1]
    w2p = jnp.zeros((kH, kW, c1_pad, co_pad), jnp.float32)
    w2p = w2p.at[:, :, :C1, :Co].set(w2)
    w2_mat = w2p.reshape(kH * kW * c1_pad, co_pad).astype(jnp.bfloat16)
    b2p = jnp.zeros((1, co_pad), jnp.float32).at[0, :Co].set(b2)

    return w1_mat, b1p, w2_mat, b2p, Co


# ---------------------------------------------------------------------------
# Public forward pass (NCHW in / NCHW out, PyTorch convention).
# ---------------------------------------------------------------------------
def input_cv_block(x_nchw, params, num_in_frames):
    N, Cin, H, W = x_nchw.shape
    C1_PAD = 128   # interm channels 120 -> padded to 128 (lane-aligned intermediate)
    CO_PAD = 128   # out channels 32   -> padded to 128 (lane-dense stores)

    x = jnp.transpose(x_nchw, (0, 2, 3, 1)).astype(jnp.bfloat16)      # NHWC, bf16
    w1_mat, b1p, w2_mat, b2p, Co = _prepare_params(
        params, num_in_frames, C1_PAD, CO_PAD)

    out = pl.pallas_call(
        _fused_input_cv_kernel,
        out_shape=jax.ShapeDtypeStruct((N, H, W, CO_PAD), jnp.float32),
        grid_spec=pltpu.PrefetchScalarGridSpec(
            num_scalar_prefetch=0,
            grid=(N,),
            in_specs=[
                pl.BlockSpec((1, H, W, Cin), lambda n: (n, 0, 0, 0)),
                pl.BlockSpec(w1_mat.shape, lambda n: (0, 0)),
                pl.BlockSpec(b1p.shape, lambda n: (0, 0)),
                pl.BlockSpec(w2_mat.shape, lambda n: (0, 0)),
                pl.BlockSpec(b2p.shape, lambda n: (0, 0)),
            ],
            out_specs=pl.BlockSpec((1, H, W, CO_PAD), lambda n: (n, 0, 0, 0)),
            scratch_shapes=[
                pltpu.VMEM((H + 2, W + 2, Cin), jnp.bfloat16),     # padded input
                pltpu.VMEM((H + 2, W + 2, C1_PAD), jnp.bfloat16),  # padded intermediate
            ],
        ),
        compiler_params=pltpu.CompilerParams(
            dimension_semantics=("parallel",)),
    )(x, w1_mat, b1p, w2_mat, b2p)

    out = out[..., :Co]                       # drop channel padding
    return jnp.transpose(out, (0, 3, 1, 2))   # -> NCHW


# ---------------------------------------------------------------------------
# Pure-JAX (f32, lax.conv) reference for validation.
# ---------------------------------------------------------------------------
def _reference(x_nchw, params, num_in_frames):
    x = jnp.transpose(x_nchw, (0, 2, 3, 1))
    dn = ("NHWC", "HWIO", "NHWC")

    w1_hwio = jnp.transpose(params["w1"], (2, 3, 1, 0))
    h = jax.lax.conv_general_dilated(
        x, w1_hwio, (1, 1), "SAME", dimension_numbers=dn,
        feature_group_count=num_in_frames)
    s1, b1 = _fold_bn(params["g1"], params["b1"], params["m1"], params["v1"])
    h = jnp.maximum(h * s1 + b1, 0.0)

    w2_hwio = jnp.transpose(params["w2"], (2, 3, 1, 0))
    y = jax.lax.conv_general_dilated(
        h, w2_hwio, (1, 1), "SAME", dimension_numbers=dn)
    s2, b2 = _fold_bn(params["g2"], params["b2"], params["m2"], params["v2"])
    y = jnp.maximum(y * s2 + b2, 0.0)
    return jnp.transpose(y, (0, 3, 1, 2))


if __name__ == "__main__":
    # num_in_frames=4 -> Cin = 4*(3+1)=16, interm_ch=30 -> C1 = 120, out_ch = 32.
    N, G, H, W = 2, 4, 16, 16
    interm_ch, out_ch = 30, 32
    Cin = G * 4
    C1 = G * interm_ch

    key = jax.random.PRNGKey(0)
    ks = jax.random.split(key, 11)

    x = jax.random.normal(ks[0], (N, Cin, H, W), jnp.float32)

    params = {
        # conv1: grouped, PyTorch layout (O, I/groups, kH, kW), bias=False (mf2f=False)
        "w1": 0.1 * jax.random.normal(ks[1], (C1, 4, 3, 3), jnp.float32),
        # conv2: dense, (O, I, kH, kW), bias=False
        "w2": 0.05 * jax.random.normal(ks[2], (out_ch, C1, 3, 3), jnp.float32),
        # BN1 (inference mode: running stats folded into scale/bias)
        "g1": 1.0 + 0.1 * jax.random.normal(ks[3], (C1,), jnp.float32),
        "b1": 0.1 * jax.random.normal(ks[4], (C1,), jnp.float32),
        "m1": 0.1 * jax.random.normal(ks[5], (C1,), jnp.float32),
        "v1": jax.random.uniform(ks[6], (C1,), jnp.float32, 0.5, 1.5),
        # BN2
        "g2": 1.0 + 0.1 * jax.random.normal(ks[7], (out_ch,), jnp.float32),
        "b2": 0.1 * jax.random.normal(ks[8], (out_ch,), jnp.float32),
        "m2": 0.1 * jax.random.normal(ks[9], (out_ch,), jnp.float32),
        "v2": jax.random.uniform(ks[10], (out_ch,), jnp.float32, 0.5, 1.5),
    }

    fwd = jax.jit(functools.partial(input_cv_block, num_in_frames=G))
    out = fwd(x, params)
    jax.block_until_ready(out)

    # Validate against the pure-JAX f32 reference (kernel uses bf16 data + f32 acc).
    ref = _reference(x, params, G)
    assert out.shape == (N, out_ch, H, W), out.shape
    max_err = float(jnp.max(jnp.abs(out - ref)))
    assert jnp.allclose(out, ref, atol=3e-2, rtol=3e-2), max_err

    print("KERNEL_OK")
</pallas_src>

<mosaic_0001>
module attributes {stable_mosaic.version = 11 : i64} {
  func.func @_fused_input_cv_kernel(%arg0: i32, %arg1: memref<1x16x16x16xbf16, #tpu.memory_space<vmem>>, %arg2: memref<144x128xbf16, #tpu.memory_space<vmem>>, %arg3: memref<1x128xf32, #tpu.memory_space<vmem>>, %arg4: memref<1152x128xbf16, #tpu.memory_space<vmem>>, %arg5: memref<1x128xf32, #tpu.memory_space<vmem>>, %arg6: memref<1x16x16x128xf32, #tpu.memory_space<vmem>>, %arg7: memref<18x18x16xbf16, #tpu.memory_space<vmem>>, %arg8: memref<18x18x128xbf16, #tpu.memory_space<vmem>>) attributes {dimension_semantics = [#tpu.dimension_semantics<parallel>], iteration_bounds = array<i64: 2>, scalar_prefetch = 0 : i64, scratch_operands = 2 : i64, tpu.core_type = #tpu.core_type<tc>, window_params = [{transform_indices = @transform_0, window_bounds = array<i64: 1, 16, 16, 16>}, {pipeline_mode = #tpu.pipeline_mode<synchronous>, transform_indices = @transform_1, window_bounds = array<i64: 144, 128>}, {pipeline_mode = #tpu.pipeline_mode<synchronous>, transform_indices = @transform_2, window_bounds = array<i64: 1, 128>}, {pipeline_mode = #tpu.pipeline_mode<synchronous>, transform_indices = @transform_3, window_bounds = array<i64: 1152, 128>}, {pipeline_mode = #tpu.pipeline_mode<synchronous>, transform_indices = @transform_4, window_bounds = array<i64: 1, 128>}, {transform_indices = @transform_5, window_bounds = array<i64: 1, 16, 16, 128>}]} {
    %cst = arith.constant 0.000000e+00 : bf16
    %0 = vector.broadcast %cst : bf16 to vector<18x18x16xbf16>
    %c0 = arith.constant 0 : index
    %c0_0 = arith.constant 0 : index
    %c0_1 = arith.constant 0 : index
    %1 = vector.load %arg7[%c0, %c0_0, %c0_1] : memref<18x18x16xbf16, #tpu.memory_space<vmem>>, vector<18x18x16xbf16>
    tpu.vector_store %arg7[%c0, %c0_0, %c0_1], %0 {strides = array<i32>} : memref<18x18x16xbf16, #tpu.memory_space<vmem>>, vector<18x18x16xbf16>,
    %c0_2 = arith.constant 0 : index
    %c0_3 = arith.constant 0 : index
    %c0_4 = arith.constant 0 : index
    %c0_5 = arith.constant 0 : index
    %2 = vector.load %arg1[%c0_2, %c0_3, %c0_4, %c0_5] : memref<1x16x16x16xbf16, #tpu.memory_space<vmem>>, vector<1x16x16x16xbf16>
    %3 = vector.shape_cast %2 : vector<1x16x16x16xbf16> to vector<16x16x16xbf16>
    %c1 = arith.constant 1 : index
    %c1_6 = arith.constant 1 : index
    %c0_7 = arith.constant 0 : index
    %4 = vector.load %arg7[%c1, %c1_6, %c0_7] : memref<18x18x16xbf16, #tpu.memory_space<vmem>>, vector<16x16x16xbf16>
    tpu.vector_store %arg7[%c1, %c1_6, %c0_7], %3 {strides = array<i32>} : memref<18x18x16xbf16, #tpu.memory_space<vmem>>, vector<16x16x16xbf16>,
    %c0_8 = arith.constant 0 : index
    %c0_9 = arith.constant 0 : index
    %c0_10 = arith.constant 0 : index
    %5 = vector.load %arg7[%c0_8, %c0_9, %c0_10] : memref<18x18x16xbf16, #tpu.memory_space<vmem>>, vector<16x16x16xbf16>
    %6 = vector.shape_cast %5 : vector<16x16x16xbf16> to vector<256x16xbf16>
    %c0_11 = arith.constant 0 : index
    %c1_12 = arith.constant 1 : index
    %c0_13 = arith.constant 0 : index
    %7 = vector.load %arg7[%c0_11, %c1_12, %c0_13] : memref<18x18x16xbf16, #tpu.memory_space<vmem>>, vector<16x16x16xbf16>
    %8 = vector.shape_cast %7 : vector<16x16x16xbf16> to vector<256x16xbf16>
    %c0_14 = arith.constant 0 : index
    %c2 = arith.constant 2 : index
    %c0_15 = arith.constant 0 : index
    %9 = vector.load %arg7[%c0_14, %c2, %c0_15] : memref<18x18x16xbf16, #tpu.memory_space<vmem>>, vector<16x16x16xbf16>
    %10 = vector.shape_cast %9 : vector<16x16x16xbf16> to vector<256x16xbf16>
    %c1_16 = arith.constant 1 : index
    %c0_17 = arith.constant 0 : index
    %c0_18 = arith.constant 0 : index
    %11 = vector.load %arg7[%c1_16, %c0_17, %c0_18] : memref<18x18x16xbf16, #tpu.memory_space<vmem>>, vector<16x16x16xbf16>
    %12 = vector.shape_cast %11 : vector<16x16x16xbf16> to vector<256x16xbf16>
    %c1_19 = arith.constant 1 : index
    %c1_20 = arith.constant 1 : index
    %c0_21 = arith.constant 0 : index
    %13 = vector.load %arg7[%c1_19, %c1_20, %c0_21] : memref<18x18x16xbf16, #tpu.memory_space<vmem>>, vector<16x16x16xbf16>
    %14 = vector.shape_cast %13 : vector<16x16x16xbf16> to vector<256x16xbf16>
    %c1_22 = arith.constant 1 : index
    %c2_23 = arith.constant 2 : index
    %c0_24 = arith.constant 0 : index
    %15 = vector.load %arg7[%c1_22, %c2_23, %c0_24] : memref<18x18x16xbf16, #tpu.memory_space<vmem>>, vector<16x16x16xbf16>
    %16 = vector.shape_cast %15 : vector<16x16x16xbf16> to vector<256x16xbf16>
    %c2_25 = arith.constant 2 : index
    %c0_26 = arith.constant 0 : index
    %c0_27 = arith.constant 0 : index
    %17 = vector.load %arg7[%c2_25, %c0_26, %c0_27] : memref<18x18x16xbf16, #tpu.memory_space<vmem>>, vector<16x16x16xbf16>
    %18 = vector.shape_cast %17 : vector<16x16x16xbf16> to vector<256x16xbf16>
    %c2_28 = arith.constant 2 : index
    %c1_29 = arith.constant 1 : index
    %c0_30 = arith.constant 0 : index
    %19 = vector.load %arg7[%c2_28, %c1_29, %c0_30] : memref<18x18x16xbf16, #tpu.memory_space<vmem>>, vector<16x16x16xbf16>
    %20 = vector.shape_cast %19 : vector<16x16x16xbf16> to vector<256x16xbf16>
    %c2_31 = arith.constant 2 : index
    %c2_32 = arith.constant 2 : index
    %c0_33 = arith.constant 0 : index
    %21 = vector.load %arg7[%c2_31, %c2_32, %c0_33] : memref<18x18x16xbf16, #tpu.memory_space<vmem>>, vector<16x16x16xbf16>
    %22 = vector.shape_cast %21 : vector<16x16x16xbf16> to vector<256x16xbf16>
    %23 = tpu.concatenate %6, %8, %10, %12, %14, %16, %18, %20, %22 in 1 : vector<256x16xbf16>, vector<256x16xbf16>, vector<256x16xbf16>, vector<256x16xbf16>, vector<256x16xbf16>, vector<256x16xbf16>, vector<256x16xbf16>, vector<256x16xbf16>, vector<256x16xbf16> -> vector<256x144xbf16>
    %c0_34 = arith.constant 0 : index
    %c0_35 = arith.constant 0 : index
    %24 = vector.load %arg2[%c0_34, %c0_35] : memref<144x128xbf16, #tpu.memory_space<vmem>>, vector<144x128xbf16>
    %cst_36 = arith.constant dense<0.000000e+00> : vector<256x128xf32>
    %25 = tpu.matmul %23, %24, %cst_36 {dimension_numbers = #tpu.dot_dimension_numbers<[1], [0], [0], [1], [0, 0, 1, 1], [], []>} : vector<256x144xbf16>, vector<144x128xbf16>, vector<256x128xf32> -> vector<256x128xf32>
    %c0_37 = arith.constant 0 : index
    %c0_38 = arith.constant 0 : index
    %26 = vector.load %arg3[%c0_37, %c0_38] : memref<1x128xf32, #tpu.memory_space<vmem>>, vector<1x128xf32>
    %27 = vector.broadcast %26 : vector<1x128xf32> to vector<256x128xf32>
    %28 = arith.addf %25, %27 : vector<256x128xf32>
    %cst_39 = arith.constant 0.000000e+00 : f32
    %29 = vector.broadcast %cst_39 : f32 to vector<256x128xf32>
    %30 = arith.maximumf %28, %29 : vector<256x128xf32>
    %cst_40 = arith.constant 0.000000e+00 : bf16
    %31 = vector.broadcast %cst_40 : bf16 to vector<18x18x128xbf16>
    %c0_41 = arith.constant 0 : index
    %c0_42 = arith.constant 0 : index
    %c0_43 = arith.constant 0 : index
    %32 = vector.load %arg8[%c0_41, %c0_42, %c0_43] : memref<18x18x128xbf16, #tpu.memory_space<vmem>>, vector<18x18x128xbf16>
    tpu.vector_store %arg8[%c0_41, %c0_42, %c0_43], %31 {strides = array<i32>} : memref<18x18x128xbf16, #tpu.memory_space<vmem>>, vector<18x18x128xbf16>,
    %33 = vector.shape_cast %30 : vector<256x128xf32> to vector<16x16x128xf32>
    %34 = arith.truncf %33 : vector<16x16x128xf32> to vector<16x16x128xbf16>
    %c1_44 = arith.constant 1 : index
    %c1_45 = arith.constant 1 : index
    %c0_46 = arith.constant 0 : index
    %35 = vector.load %arg8[%c1_44, %c1_45, %c0_46] : memref<18x18x128xbf16, #tpu.memory_space<vmem>>, vector<16x16x128xbf16>
    tpu.vector_store %arg8[%c1_44, %c1_45, %c0_46], %34 {strides = array<i32>} : memref<18x18x128xbf16, #tpu.memory_space<vmem>>, vector<16x16x128xbf16>,
    %c0_47 = arith.constant 0 : index
    %c0_48 = arith.constant 0 : index
    %c0_49 = arith.constant 0 : index
    %36 = vector.load %arg8[%c0_47, %c0_48, %c0_49] : memref<18x18x128xbf16, #tpu.memory_space<vmem>>, vector<16x16x128xbf16>
    %37 = vector.shape_cast %36 : vector<16x16x128xbf16> to vector<256x128xbf16>
    %c0_50 = arith.constant 0 : index
    %c1_51 = arith.constant 1 : index
    %c0_52 = arith.constant 0 : index
    %38 = vector.load %arg8[%c0_50, %c1_51, %c0_52] : memref<18x18x128xbf16, #tpu.memory_space<vmem>>, vector<16x16x128xbf16>
    %39 = vector.shape_cast %38 : vector<16x16x128xbf16> to vector<256x128xbf16>
    %c0_53 = arith.constant 0 : index
    %c2_54 = arith.constant 2 : index
    %c0_55 = arith.constant 0 : index
    %40 = vector.load %arg8[%c0_53, %c2_54, %c0_55] : memref<18x18x128xbf16, #tpu.memory_space<vmem>>, vector<16x16x128xbf16>
    %41 = vector.shape_cast %40 : vector<16x16x128xbf16> to vector<256x128xbf16>
    %c1_56 = arith.constant 1 : index
    %c0_57 = arith.constant 0 : index
    %c0_58 = arith.constant 0 : index
    %42 = vector.load %arg8[%c1_56, %c0_57, %c0_58] : memref<18x18x128xbf16, #tpu.memory_space<vmem>>, vector<16x16x128xbf16>
    %43 = vector.shape_cast %42 : vector<16x16x128xbf16> to vector<256x128xbf16>
    %c1_59 = arith.constant 1 : index
    %c1_60 = arith.constant 1 : index
    %c0_61 = arith.constant 0 : index
    %44 = vector.load %arg8[%c1_59, %c1_60, %c0_61] : memref<18x18x128xbf16, #tpu.memory_space<vmem>>, vector<16x16x128xbf16>
    %45 = vector.shape_cast %44 : vector<16x16x128xbf16> to vector<256x128xbf16>
    %c1_62 = arith.constant 1 : index
    %c2_63 = arith.constant 2 : index
    %c0_64 = arith.constant 0 : index
    %46 = vector.load %arg8[%c1_62, %c2_63, %c0_64] : memref<18x18x128xbf16, #tpu.memory_space<vmem>>, vector<16x16x128xbf16>
    %47 = vector.shape_cast %46 : vector<16x16x128xbf16> to vector<256x128xbf16>
    %c2_65 = arith.constant 2 : index
    %c0_66 = arith.constant 0 : index
    %c0_67 = arith.constant 0 : index
    %48 = vector.load %arg8[%c2_65, %c0_66, %c0_67] : memref<18x18x128xbf16, #tpu.memory_space<vmem>>, vector<16x16x128xbf16>
    %49 = vector.shape_cast %48 : vector<16x16x128xbf16> to vector<256x128xbf16>
    %c2_68 = arith.constant 2 : index
    %c1_69 = arith.constant 1 : index
    %c0_70 = arith.constant 0 : index
    %50 = vector.load %arg8[%c2_68, %c1_69, %c0_70] : memref<18x18x128xbf16, #tpu.memory_space<vmem>>, vector<16x16x128xbf16>
    %51 = vector.shape_cast %50 : vector<16x16x128xbf16> to vector<256x128xbf16>
    %c2_71 = arith.constant 2 : index
    %c2_72 = arith.constant 2 : index
    %c0_73 = arith.constant 0 : index
    %52 = vector.load %arg8[%c2_71, %c2_72, %c0_73] : memref<18x18x128xbf16, #tpu.memory_space<vmem>>, vector<16x16x128xbf16>
    %53 = vector.shape_cast %52 : vector<16x16x128xbf16> to vector<256x128xbf16>
    %54 = tpu.concatenate %37, %39, %41, %43, %45, %47, %49, %51, %53 in 1 : vector<256x128xbf16>, vector<256x128xbf16>, vector<256x128xbf16>, vector<256x128xbf16>, vector<256x128xbf16>, vector<256x128xbf16>, vector<256x128xbf16>, vector<256x128xbf16>, vector<256x128xbf16> -> vector<256x1152xbf16>
    %c0_74 = arith.constant 0 : index
    %c0_75 = arith.constant 0 : index
    %55 = vector.load %arg4[%c0_74, %c0_75] : memref<1152x128xbf16, #tpu.memory_space<vmem>>, vector<1152x128xbf16>
    %cst_76 = arith.constant dense<0.000000e+00> : vector<256x128xf32>
    %56 = tpu.matmul %54, %55, %cst_76 {dimension_numbers = #tpu.dot_dimension_numbers<[1], [0], [0], [1], [0, 0, 1, 1], [], []>} : vector<256x1152xbf16>, vector<1152x128xbf16>, vector<256x128xf32> -> vector<256x128xf32>
    %c0_77 = arith.constant 0 : index
    %c0_78 = arith.constant 0 : index
    %57 = vector.load %arg5[%c0_77, %c0_78] : memref<1x128xf32, #tpu.memory_space<vmem>>, vector<1x128xf32>
    %58 = vector.broadcast %57 : vector<1x128xf32> to vector<256x128xf32>
    %59 = arith.addf %56, %58 : vector<256x128xf32>
    %cst_79 = arith.constant 0.000000e+00 : f32
    %60 = vector.broadcast %cst_79 : f32 to vector<256x128xf32>
    %61 = arith.maximumf %59, %60 : vector<256x128xf32>
    %62 = vector.shape_cast %61 : vector<256x128xf32> to vector<16x16x128xf32>
    %c0_80 = arith.constant 0 : index
    %c0_81 = arith.constant 0 : index
    %c0_82 = arith.constant 0 : index
    %c0_83 = arith.constant 0 : index
    %63 = vector.load %arg6[%c0_80, %c0_81, %c0_82, %c0_83] : memref<1x16x16x128xf32, #tpu.memory_space<vmem>>, vector<1x16x16x128xf32>
    %64 = vector.shape_cast %63 : vector<1x16x16x128xf32> to vector<16x16x128xf32>
    %65 = vector.shape_cast %62 : vector<16x16x128xf32> to vector<1x16x16x128xf32>
    tpu.vector_store %arg6[%c0_80, %c0_81, %c0_82, %c0_83], %65 {strides = array<i32>} : memref<1x16x16x128xf32, #tpu.memory_space<vmem>>, vector<1x16x16x128xf32>,
    return
  }
  func.func @transform_0(%arg0: i32) -> (i32, i32, i32, i32) {
    %c0_i32 = arith.constant 0 : i32
    %c0_i32_0 = arith.constant 0 : i32
    %c0_i32_1 = arith.constant 0 : i32
    %c0_i32_2 = arith.constant 0 : i32
    return %arg0, %c0_i32, %c0_i32_0, %c0_i32_1 : i32, i32, i32, i32
  }
  func.func @transform_1(%arg0: i32) -> (i32, i32) {
    %c0_i32 = arith.constant 0 : i32
    %c0_i32_0 = arith.constant 0 : i32
    %c0_i32_1 = arith.constant 0 : i32
    return %c0_i32, %c0_i32_0 : i32, i32
  }
  func.func @transform_2(%arg0: i32) -> (i32, i32) {
    %c0_i32 = arith.constant 0 : i32
    %c0_i32_0 = arith.constant 0 : i32
    %c0_i32_1 = arith.constant 0 : i32
    return %c0_i32, %c0_i32_0 : i32, i32
  }
  func.func @transform_3(%arg0: i32) -> (i32, i32) {
    %c0_i32 = arith.constant 0 : i32
    %c0_i32_0 = arith.constant 0 : i32
    %c0_i32_1 = arith.constant 0 : i32
    return %c0_i32, %c0_i32_0 : i32, i32
  }
  func.func @transform_4(%arg0: i32) -> (i32, i32) {
    %c0_i32 = arith.constant 0 : i32
    %c0_i32_0 = arith.constant 0 : i32
    %c0_i32_1 = arith.constant 0 : i32
    return %c0_i32, %c0_i32_0 : i32, i32
  }
  func.func @transform_5(%arg0: i32) -> (i32, i32, i32, i32) {
    %c0_i32 = arith.constant 0 : i32
    %c0_i32_0 = arith.constant 0 : i32
    %c0_i32_1 = arith.constant 0 : i32
    %c0_i32_2 = arith.constant 0 : i32
    return %arg0, %c0_i32, %c0_i32_0, %c0_i32_1 : i32, i32, i32, i32
  }
}

</mosaic_0001>

<llo_original>
// kernel: input_cv_block.1
$region0: #{input_cv_block.1}
  #allocation0 [shape = 'u32[]', space=smem, size = 0x4, offset = 0x4, fixed_abs, tag = 'smem constant byte address 0x4 - core index']
  #allocation1 [shape = 'u32[72,128]{1,0:T(1,128)}', space=vmem, size = 0x9000, scoped, tag = 'internal scratch']
  #allocation2 [shape = 'bf16[18,18,16]{2,1,0:T(8,128)(2,1)}', space=vmem, size = 0x1b000, scoped, tag = 'scratch operand']
  #allocation3 [shape = 'bf16[18,18,128]{2,1,0:T(8,128)(2,1)}', space=vmem, size = 0x1b000, scoped, tag = 'scratch operand']
  %s0 = inlined_call_operand.vmem [shape: bf16[2,16,16,16], index: 0, kind: input, shape index: {}]
  %s1 = inlined_call_operand.vmem [shape: bf16[144,128], index: 1, kind: input, shape index: {}]
  %s2 = inlined_call_operand.vmem [shape: f32[1,128], index: 2, kind: input, shape index: {}]
  %s3 = inlined_call_operand.vmem [shape: bf16[1152,128], index: 3, kind: input, shape index: {}]
  %s4 = inlined_call_operand.vmem [shape: f32[1,128], index: 4, kind: input, shape index: {}]
  %s5 = inlined_call_operand.vmem [shape: f32[2,16,16,128], index: 5, kind: output, shape index: {}]
  %s6 = sld [smem:[#allocation0]]
  $region53: #{input_cv_block.1} parent=0
    _
  %s8 = ssub.s32 1, %s6
  %s9 = scalar_select 0, %s8, %s6
  loop: start=0, step=1, limit=4
  $region2: #{input_cv_block.1} parent=0 // loop_pre_header
    _
  $region3: #{input_cv_block.1} parent=0 // loop_header
    %s11 = sphi 0, %s15
    %p12 = scmp.ge.s32.totalorder %s11, 4
    %s21 = sphi 0, %s23
    %s24 = sphi 0, %s21
    %s25 = sphi 0, %s24
    %s41 = sphi 0, %s25
    %s45 = sphi 0, %s45
    %s47 = sphi 0, %s45
    %s48 = sphi 0, %s47
    %s62 = sphi 0, %s48
    %s66 = sphi 0, %s66
    %s68 = sphi 0, %s66
    %s69 = sphi 0, %s68
    %s83 = sphi 0, %s69
    %s87 = sphi 0, %s87
    %s89 = sphi 0, %s87
    %s90 = sphi 0, %s89
    %s104 = sphi 0, %s90
    %s108 = sphi 0, %s108
    %s110 = sphi 0, %s108
    %s111 = sphi 0, %s110
    %s125 = sphi 0, %s111
    %s131 = sphi 0, %s133
    %s134 = sphi 0, %s131
    %s135 = sphi 0, %s134
    %s151 = sphi 0, %s135
  $region4: #{input_cv_block.1} parent=0 // loop_header_branch
    %14 = sbr.rel (%p12) target = $region8
  $region5: #{input_cv_block.1} parent=0 // loop_body
    %s16 = ssub.s32 %s11, 1
    %s17 = ssub.s32 %s11, 2
    %s18 = sadd.s32 %s11, 1
    %s19 = ssub.s32 %s11, %s18
    %p20 = scmp.eq.s32.totalorder %s19, 0
    %s22 = sadd.s32 %s21, 1
    %s23 = scalar_select %p20, %s21, %s22
    %p26 = pneg %p20
    %p27 = scmp.eq.s32.totalorder %s11, 1
    %p28 = por %p26, %p27
    %p29 = scmp.ne.s32.totalorder %s21, %s24
    %p30 = scmp.eq.s32.totalorder %s11, 0
    %p31 = por %p29, %p30
    %p32 = scmp.ne.s32.totalorder %s21, %s24
    %p33 = scmp.eq.s32.totalorder %s16, 1
    %p34 = por %p32, %p33
    %p35 = scmp.ne.s32.totalorder %s24, %s25
    %p36 = scmp.eq.s32.totalorder %s16, 0
    %p37 = por %p35, %p36
    %p38 = scmp.ne.s32.totalorder %s24, %s25
    %p39 = scmp.eq.s32.totalorder %s17, 1
    %p40 = por %p38, %p39
    %p42 = scmp.ne.s32.totalorder %s25, %s41
    %p43 = scmp.eq.s32.totalorder %s17, 0
    %p44 = por %p42, %p43
    %s46 = sadd.s32 %s45, 1
    %p49 = scmp.eq.s32.totalorder %s11, 1
    %p50 = scmp.ne.s32.totalorder %s45, %s47
    %p51 = scmp.eq.s32.totalorder %s11, 0
    %p52 = por %p50, %p51
    %p53 = scmp.ne.s32.totalorder %s45, %s47
    %p54 = scmp.eq.s32.totalorder %s16, 1
    %p55 = por %p53, %p54
    %p56 = scmp.ne.s32.totalorder %s47, %s48
    %p57 = scmp.eq.s32.totalorder %s16, 0
    %p58 = por %p56, %p57
    %p59 = scmp.ne.s32.totalorder %s47, %s48
    %p60 = scmp.eq.s32.totalorder %s17, 1
    %p61 = por %p59, %p60
    %p63 = scmp.ne.s32.totalorder %s48, %s62
    %p64 = scmp.eq.s32.totalorder %s17, 0
    %p65 = por %p63, %p64
    %s67 = sadd.s32 %s66, 1
    %p70 = scmp.eq.s32.totalorder %s11, 1
    %p71 = scmp.ne.s32.totalorder %s66, %s68
    %p72 = scmp.eq.s32.totalorder %s11, 0
    %p73 = por %p71, %p72
    %p74 = scmp.ne.s32.totalorder %s66, %s68
    %p75 = scmp.eq.s32.totalorder %s16, 1
    %p76 = por %p74, %p75
    %p77 = scmp.ne.s32.totalorder %s68, %s69
    %p78 = scmp.eq.s32.totalorder %s16, 0
    %p79 = por %p77, %p78
    %p80 = scmp.ne.s32.totalorder %s68, %s69
    %p81 = scmp.eq.s32.totalorder %s17, 1
    %p82 = por %p80, %p81
    %p84 = scmp.ne.s32.totalorder %s69, %s83
    %p85 = scmp.eq.s32.totalorder %s17, 0
    %p86 = por %p84, %p85
    %s88 = sadd.s32 %s87, 1
    %p91 = scmp.eq.s32.totalorder %s11, 1
    %p92 = scmp.ne.s32.totalorder %s87, %s89
    %p93 = scmp.eq.s32.totalorder %s11, 0
    %p94 = por %p92, %p93
    %p95 = scmp.ne.s32.totalorder %s87, %s89
    %p96 = scmp.eq.s32.totalorder %s16, 1
    %p97 = por %p95, %p96
    %p98 = scmp.ne.s32.totalorder %s89, %s90
    %p99 = scmp.eq.s32.totalorder %s16, 0
    %p100 = por %p98, %p99
    %p101 = scmp.ne.s32.totalorder %s89, %s90
    %p102 = scmp.eq.s32.totalorder %s17, 1
    %p103 = por %p101, %p102
    %p105 = scmp.ne.s32.totalorder %s90, %s104
    %p106 = scmp.eq.s32.totalorder %s17, 0
    %p107 = por %p105, %p106
    %s109 = sadd.s32 %s108, 1
    %p112 = scmp.eq.s32.totalorder %s11, 1
    %p113 = scmp.ne.s32.totalorder %s108, %s110
    %p114 = scmp.eq.s32.totalorder %s11, 0
    %p115 = por %p113, %p114
    %p116 = scmp.ne.s32.totalorder %s108, %s110
    %p117 = scmp.eq.s32.totalorder %s16, 1
    %p118 = por %p116, %p117
    %p119 = scmp.ne.s32.totalorder %s110, %s111
    %p120 = scmp.eq.s32.totalorder %s16, 0
    %p121 = por %p119, %p120
    %p122 = scmp.ne.s32.totalorder %s110, %s111
    %p123 = scmp.eq.s32.totalorder %s17, 1
    %p124 = por %p122, %p123
    %p126 = scmp.ne.s32.totalorder %s111, %s125
    %p127 = scmp.eq.s32.totalorder %s17, 0
    %p128 = por %p126, %p127
    %s129 = ssub.s32 %s11, %s18
    %p130 = scmp.eq.s32.totalorder %s129, 0
    %s132 = sadd.s32 %s131, 1
    %s133 = scalar_select %p130, %s131, %s132
    %p136 = pneg %p130
    %p137 = scmp.eq.s32.totalorder %s11, 1
    %p138 = por %p136, %p137
    %p139 = scmp.ne.s32.totalorder %s131, %s134
    %p140 = scmp.eq.s32.totalorder %s11, 0
    %p141 = por %p139, %p140
    %p142 = scmp.ne.s32.totalorder %s131, %s134
    %p143 = scmp.eq.s32.totalorder %s16, 1
    %p144 = por %p142, %p143
    %p145 = scmp.ne.s32.totalorder %s134, %s135
    %p146 = scmp.eq.s32.totalorder %s16, 0
    %p147 = por %p145, %p146
    %p148 = scmp.ne.s32.totalorder %s134, %s135
    %p149 = scmp.eq.s32.totalorder %s17, 1
    %p150 = por %p148, %p149
    %p152 = scmp.ne.s32.totalorder %s135, %s151
    %p153 = scmp.eq.s32.totalorder %s17, 0
    %p154 = por %p152, %p153
    %p155 = scmp.le.s32.totalorder 1, %s11
    %p156 = scmp.lt.s32.totalorder %s11, 3
    %p157 = pnand %p155, %p156
    %p158 = pneg %p157
    // Predicated region
    $region9: #{input_cv_block.1} parent=5 // pred_check
      _
    $region10: #{input_cv_block.1} parent=5 // pred_check_branch
      %160 = sbr.rel (%p157) target = $region12
    $region11: #{input_cv_block.1} parent=5 // pred_region
      %s161 = ssub.s32 %s11, 1
      // Predicated region
      $region13: #{input_cv_block.1} parent=11 // pred_check
        %p162 = pneg %p58
      $region14: #{input_cv_block.1} parent=11 // pred_check_branch
        %164 = sbr.rel (%p162) target = $region16
      $region15: #{input_cv_block.1} parent=11 // pred_region
        _
      $region16: #{input_cv_block.1} parent=11 // pred_fallthru
        _
      // Predicated region
      $region17: #{input_cv_block.1} parent=11 // pred_check
        %p165 = pneg %p79
      $region18: #{input_cv_block.1} parent=11 // pred_check_branch
        %167 = sbr.rel (%p165) target = $region20
      $region19: #{input_cv_block.1} parent=11 // pred_region
        _
      $region20: #{input_cv_block.1} parent=11 // pred_fallthru
        _
      // Predicated region
      $region21: #{input_cv_block.1} parent=11 // pred_check
        %p168 = pneg %p100
      $region22: #{input_cv_block.1} parent=11 // pred_check_branch
        %170 = sbr.rel (%p168) target = $region24
      $region23: #{input_cv_block.1} parent=11 // pred_region
        _
      $region24: #{input_cv_block.1} parent=11 // pred_fallthru
        _
      // Predicated region
      $region25: #{input_cv_block.1} parent=11 // pred_check
        %p171 = pneg %p121
      $region26: #{input_cv_block.1} parent=11 // pred_check_branch
        %173 = sbr.rel (%p171) target = $region28
      $region27: #{input_cv_block.1} parent=11 // pred_region
        _
      $region28: #{input_cv_block.1} parent=11 // pred_fallthru
        _
    $region12: #{input_cv_block.1} parent=5 // pred_fallthru
      _
    %p174 = scmp.lt.s32.totalorder %s11, 2
    // Predicated region
    $region29: #{input_cv_block.1} parent=5 // pred_check
      %p175 = pneg %p174
    $region30: #{input_cv_block.1} parent=5 // pred_check_branch
      %177 = sbr.rel (%p175) target = $region32
    $region31: #{input_cv_block.1} parent=5 // pred_region
      // Predicated region
      $region33: #{input_cv_block.1} parent=31 // pred_check
        %p178 = pneg %p31
      $region34: #{input_cv_block.1} parent=31 // pred_check_branch
        %180 = sbr.rel (%p178) target = $region36
      $region35: #{input_cv_block.1} parent=31 // pred_region
        %p181 = scmp.lt.s32.totalorder %s11, 1
        %s182 = scalar_select %p181, %s11, 1
        %s183 = smul.addr %s182, 32
        %s184 = smul.addr %s183, 4
        %s185 = scalar_lea.vmem %s0, %s184
      $region36: #{input_cv_block.1} parent=31 // pred_fallthru
        _
    $region32: #{input_cv_block.1} parent=5 // pred_fallthru
      _
    %p186 = scmp.le.s32.totalorder 1, %s11
    %p187 = scmp.lt.s32.totalorder %s11, 3
    %p188 = pnand %p186, %p187
    %p189 = pneg %p188
    // Predicated region
    $region37: #{input_cv_block.1} parent=5 // pred_check
      _
    $region38: #{input_cv_block.1} parent=5 // pred_check_branch
      %191 = sbr.rel (%p188) target = $region40
    $region39: #{input_cv_block.1} parent=5 // pred_region
      %s192 = ssub.s32 %s11, 1
      %p193 = scmp.lt.s32.totalorder %s16, 1
      %s194 = scalar_select %p193, %s16, 1
      %s195 = smul.addr %s194, 32
      %s196 = smul.addr %s195, 4
      %s197 = scalar_lea.vmem %s0, %s196
      %p198 = pneg %p37
      %p199 = pneg %p34
      %p200 = pneg %p58
      %p201 = pneg %p55
      %p202 = pneg %p79
      %p203 = pneg %p76
      %p204 = pneg %p100
      %p205 = pneg %p97
      %p206 = pneg %p121
      %p207 = pneg %p118
      %p208 = pneg %p147
      %p209 = pneg %p144
      %p210 = scmp.lt.s32.totalorder %s16, 1
      %s211 = scalar_select %p210, %s16, 1
      %s212 = smul.addr %s211, 32
      %s213 = smul.addr %s212, 8
      %s214 = scalar_lea.vmem %s5, %s213
      %p215 = scmp.lt.s32.totalorder %s16, 1
      %s216 = scalar_select %p215, %s16, 1
      %s217 = smul.addr %s216, 32
      %s218 = smul.addr %s217, 4
      %s219 = scalar_lea.vmem %s0, %s218
      %p220 = scmp.lt.s32.totalorder %s16, 1
      %s221 = scalar_select %p220, %s16, 1
      %s222 = smul.addr %s221, 32
      %s223 = smul.addr %s222, 8
      %s224 = scalar_lea.vmem %s5, %s223
      %vm226 = vcmask 125952
      %227 = vst.msk [vmem:[#allocation2] sm:$0xf] %vm226, 0
      %228 = vst.msk [vmem:[#allocation2 + $0x4] sm:$0xf] %vm226, 0
      %vm229 = vcmask 122880
      %230 = vst.msk [vmem:[#allocation2 + $0x8] sm:$0x1] %vm229, 0
      %231 = vst.msk [vmem:[#allocation2 + $0xc] sm:$0xf] %vm226, 0
      %232 = vst.msk [vmem:[#allocation2 + $0x10] sm:$0xf] %vm226, 0
      %233 = vst.msk [vmem:[#allocation2 + $0x14] sm:$0x1] %vm229, 0
      %234 = vst.msk [vmem:[#allocation2 + $0x18] sm:$0xf] %vm226, 0
      %235 = vst.msk [vmem:[#allocation2 + $0x1c] sm:$0xf] %vm226, 0
      %236 = vst.msk [vmem:[#allocation2 + $0x20] sm:$0x1] %vm229, 0
      %237 = vst.msk [vmem:[#allocation2 + $0x24] sm:$0xf] %vm226, 0
      %238 = vst.msk [vmem:[#allocation2 + $0x28] sm:$0xf] %vm226, 0
      %239 = vst.msk [vmem:[#allocation2 + $0x2c] sm:$0x1] %vm229, 0
      %240 = vst.msk [vmem:[#allocation2 + $0x30] sm:$0xf] %vm226, 0
      %241 = vst.msk [vmem:[#allocation2 + $0x34] sm:$0xf] %vm226, 0
      %242 = vst.msk [vmem:[#allocation2 + $0x38] sm:$0x1] %vm229, 0
      %243 = vst.msk [vmem:[#allocation2 + $0x3c] sm:$0xf] %vm226, 0
      %244 = vst.msk [vmem:[#allocation2 + $0x40] sm:$0xf] %vm226, 0
      %245 = vst.msk [vmem:[#allocation2 + $0x44] sm:$0x1] %vm229, 0
      %246 = vst.msk [vmem:[#allocation2 + $0x48] sm:$0xf] %vm226, 0
      %247 = vst.msk [vmem:[#allocation2 + $0x4c] sm:$0xf] %vm226, 0
      %248 = vst.msk [vmem:[#allocation2 + $0x50] sm:$0x1] %vm229, 0
      %249 = vst.msk [vmem:[#allocation2 + $0x54] sm:$0xf] %vm226, 0
      %250 = vst.msk [vmem:[#allocation2 + $0x58] sm:$0xf] %vm226, 0
      %251 = vst.msk [vmem:[#allocation2 + $0x5c] sm:$0x1] %vm229, 0
      %252 = vst.msk [vmem:[#allocation2 + $0x60] sm:$0xf] %vm226, 0
      %253 = vst.msk [vmem:[#allocation2 + $0x64] sm:$0xf] %vm226, 0
      %254 = vst.msk [vmem:[#allocation2 + $0x68] sm:$0x1] %vm229, 0
      %255 = vst.msk [vmem:[#allocation2 + $0x6c] sm:$0xf] %vm226, 0
      %256 = vst.msk [vmem:[#allocation2 + $0x70] sm:$0xf] %vm226, 0
      %257 = vst.msk [vmem:[#allocation2 + $0x74] sm:$0x1] %vm229, 0
      %258 = vst.msk [vmem:[#allocation2 + $0x78] sm:$0xf] %vm226, 0
      %259 = vst.msk [vmem:[#allocation2 + $0x7c] sm:$0xf] %vm226, 0
      %260 = vst.msk [vmem:[#allocation2 + $0x80] sm:$0x1] %vm229, 0
      %261 = vst.msk [vmem:[#allocation2 + $0x84] sm:$0xf] %vm226, 0
      %262 = vst.msk [vmem:[#allocation2 + $0x88] sm:$0xf] %vm226, 0
      %263 = vst.msk [vmem:[#allocation2 + $0x8c] sm:$0x1] %vm229, 0
      %264 = vst.msk [vmem:[#allocation2 + $0x90] sm:$0xf] %vm226, 0
      %265 = vst.msk [vmem:[#allocation2 + $0x94] sm:$0xf] %vm226, 0
      %266 = vst.msk [vmem:[#allocation2 + $0x98] sm:$0x1] %vm229, 0
      %267 = vst.msk [vmem:[#allocation2 + $0x9c] sm:$0xf] %vm226, 0
      %268 = vst.msk [vmem:[#allocation2 + $0xa0] sm:$0xf] %vm226, 0
      %269 = vst.msk [vmem:[#allocation2 + $0xa4] sm:$0x1] %vm229, 0
      %270 = vst.msk [vmem:[#allocation2 + $0xa8] sm:$0xf] %vm226, 0
      %271 = vst.msk [vmem:[#allocation2 + $0xac] sm:$0xf] %vm226, 0
      %272 = vst.msk [vmem:[#allocation2 + $0xb0] sm:$0x1] %vm229, 0
      %273 = vst.msk [vmem:[#allocation2 + $0xb4] sm:$0xf] %vm226, 0
      %274 = vst.msk [vmem:[#allocation2 + $0xb8] sm:$0xf] %vm226, 0
      %275 = vst.msk [vmem:[#allocation2 + $0xbc] sm:$0x1] %vm229, 0
      %276 = vst.msk [vmem:[#allocation2 + $0xc0] sm:$0xf] %vm226, 0
      %277 = vst.msk [vmem:[#allocation2 + $0xc4] sm:$0xf] %vm226, 0
      %278 = vst.msk [vmem:[#allocation2 + $0xc8] sm:$0x1] %vm229, 0
      %279 = vst.msk [vmem:[#allocation2 + $0xcc] sm:$0xf] %vm226, 0
      %280 = vst.msk [vmem:[#allocation2 + $0xd0] sm:$0xf] %vm226, 0
      %281 = vst.msk [vmem:[#allocation2 + $0xd4] sm:$0x1] %vm229, 0
      %v282 = vld [vmem:[%s219] sm:$0xf]
      %v283 = vld [vmem:[%s219 + $0x4] sm:$0xf]
      %v284 = vld [vmem:[%s219 + $0x8] sm:$0xf]
      %v285 = vld [vmem:[%s219 + $0xc] sm:$0xf]
      %v286 = vld [vmem:[%s219 + $0x10] sm:$0xf]
      %v287 = vld [vmem:[%s219 + $0x14] sm:$0xf]
      %v288 = vld [vmem:[%s219 + $0x18] sm:$0xf]
      %v289 = vld [vmem:[%s219 + $0x1c] sm:$0xf]
      %v290 = vld [vmem:[%s219 + $0x20] sm:$0xf]
      %v291 = vld [vmem:[%s219 + $0x24] sm:$0xf]
      %v292 = vld [vmem:[%s219 + $0x28] sm:$0xf]
      %v293 = vld [vmem:[%s219 + $0x2c] sm:$0xf]
      %v294 = vld [vmem:[%s219 + $0x30] sm:$0xf]
      %v295 = vld [vmem:[%s219 + $0x34] sm:$0xf]
      %v296 = vld [vmem:[%s219 + $0x38] sm:$0xf]
      %v297 = vld [vmem:[%s219 + $0x3c] sm:$0xf]
      %v298 = vld [vmem:[%s219 + $0x40] sm:$0xf]
      %v299 = vld [vmem:[%s219 + $0x44] sm:$0xf]
      %v300 = vld [vmem:[%s219 + $0x48] sm:$0xf]
      %v301 = vld [vmem:[%s219 + $0x4c] sm:$0xf]
      %v302 = vld [vmem:[%s219 + $0x50] sm:$0xf]
      %v303 = vld [vmem:[%s219 + $0x54] sm:$0xf]
      %v304 = vld [vmem:[%s219 + $0x58] sm:$0xf]
      %v305 = vld [vmem:[%s219 + $0x5c] sm:$0xf]
      %v306 = vld [vmem:[%s219 + $0x60] sm:$0xf]
      %v307 = vld [vmem:[%s219 + $0x64] sm:$0xf]
      %v308 = vld [vmem:[%s219 + $0x68] sm:$0xf]
      %v309 = vld [vmem:[%s219 + $0x6c] sm:$0xf]
      %v310 = vld [vmem:[%s219 + $0x70] sm:$0xf]
      %v311 = vld [vmem:[%s219 + $0x74] sm:$0xf]
      %v312 = vld [vmem:[%s219 + $0x78] sm:$0xf]
      %v313 = vld [vmem:[%s219 + $0x7c] sm:$0xf]
      %vm314 = vsmask.f32 256
      %vm315 = vsmask.f32 4368
      %vm316 = vmor %vm314, %vm315
      %v318 = vshrl.u32 %v282, 16
      %v320 = vrot.slane %v318, 7
      %v321 = vshll.u32 %v282, 16
      %v323 = vor.u32 %v320, %v321
      %v324 = vrot.slane %v320, 4
      %v326 = vshrl.u32 %v283, 16
      %v328 = vrot.slane %v326, 7
      %v329 = vshll.u32 %v283, 16
      %v331 = vor.u32 %v328, %v329
      %v332 = vsel %vm316, %v324, %v331
      %v333 = vrot.slane %v328, 4
      %v335 = vshrl.u32 %v284, 16
      %v337 = vrot.slane %v335, 7
      %v338 = vshll.u32 %v284, 16
      %v340 = vor.u32 %v337, %v338
      %v341 = vrot.slane %v337, 4
      %v343 = vshrl.u32 %v285, 16
      %v345 = vrot.slane %v343, 7
      %v346 = vshll.u32 %v285, 16
      %v348 = vor.u32 %v345, %v346
      %v349 = vsel %vm316, %v341, %v348
      %v350 = vrot.slane %v345, 4
      %v352 = vshrl.u32 %v286, 16
      %v354 = vrot.slane %v352, 7
      %v355 = vshll.u32 %v286, 16
      %v357 = vor.u32 %v354, %v355
      %v358 = vrot.slane %v354, 4
      %v360 = vshrl.u32 %v287, 16
      %v362 = vrot.slane %v360, 7
      %v363 = vshll.u32 %v287, 16
      %v365 = vor.u32 %v362, %v363
      %v366 = vsel %vm316, %v358, %v365
      %v367 = vrot.slane %v362, 4
      %v369 = vshrl.u32 %v288, 16
      %v371 = vrot.slane %v369, 7
      %v372 = vshll.u32 %v288, 16
      %v374 = vor.u32 %v371, %v372
      %v375 = vrot.slane %v371, 4
      %v377 = vshrl.u32 %v289, 16
      %v379 = vrot.slane %v377, 7
      %v380 = vshll.u32 %v289, 16
      %v382 = vor.u32 %v379, %v380
      %v383 = vsel %vm316, %v375, %v382
      %v384 = vrot.slane %v379, 4
      %v386 = vshrl.u32 %v290, 16
      %v388 = vrot.slane %v386, 7
      %v389 = vshll.u32 %v290, 16
      %v391 = vor.u32 %v388, %v389
      %v392 = vrot.slane %v388, 4
      %v394 = vshrl.u32 %v291, 16
      %v396 = vrot.slane %v394, 7
      %v397 = vshll.u32 %v291, 16
      %v399 = vor.u32 %v396, %v397
      %v400 = vsel %vm316, %v392, %v399
      %v401 = vrot.slane %v396, 4
      %v403 = vshrl.u32 %v292, 16
      %v405 = vrot.slane %v403, 7
      %v406 = vshll.u32 %v292, 16
      %v408 = vor.u32 %v405, %v406
      %v409 = vrot.slane %v405, 4
      %v411 = vshrl.u32 %v293, 16
      %v413 = vrot.slane %v411, 7
      %v414 = vshll.u32 %v293, 16
      %v416 = vor.u32 %v413, %v414
      %v417 = vsel %vm316, %v409, %v416
      %v418 = vrot.slane %v413, 4
      %v420 = vshrl.u32 %v294, 16
      %v422 = vrot.slane %v420, 7
      %v423 = vshll.u32 %v294, 16
      %v425 = vor.u32 %v422, %v423
      %v426 = vrot.slane %v422, 4
      %v428 = vshrl.u32 %v295, 16
      %v430 = vrot.slane %v428, 7
      %v431 = vshll.u32 %v295, 16
      %v433 = vor.u32 %v430, %v431
      %v434 = vsel %vm316, %v426, %v433
      %v435 = vrot.slane %v430, 4
      %v437 = vshrl.u32 %v296, 16
      %v439 = vrot.slane %v437, 7
      %v440 = vshll.u32 %v296, 16
      %v442 = vor.u32 %v439, %v440
      %v443 = vrot.slane %v439, 4
      %v445 = vshrl.u32 %v297, 16
      %v447 = vrot.slane %v445, 7
      %v448 = vshll.u32 %v297, 16
      %v450 = vor.u32 %v447, %v448
      %v451 = vsel %vm316, %v443, %v450
      %v452 = vrot.slane %v447, 4
      %v454 = vshrl.u32 %v298, 16
      %v456 = vrot.slane %v454, 7
      %v457 = vshll.u32 %v298, 16
      %v459 = vor.u32 %v456, %v457
      %v460 = vrot.slane %v456, 4
      %v462 = vshrl.u32 %v299, 16
      %v464 = vrot.slane %v462, 7
      %v465 = vshll.u32 %v299, 16
      %v467 = vor.u32 %v464, %v465
      %v468 = vsel %vm316, %v460, %v467
      %v469 = vrot.slane %v464, 4
      %v471 = vshrl.u32 %v300, 16
      %v473 = vrot.slane %v471, 7
      %v474 = vshll.u32 %v300, 16
      %v476 = vor.u32 %v473, %v474
      %v477 = vrot.slane %v473, 4
      %v479 = vshrl.u32 %v301, 16
      %v481 = vrot.slane %v479, 7
      %v482 = vshll.u32 %v301, 16
      %v484 = vor.u32 %v481, %v482
      %v485 = vsel %vm316, %v477, %v484
      %v486 = vrot.slane %v481, 4
      %v488 = vshrl.u32 %v302, 16
      %v490 = vrot.slane %v488, 7
      %v491 = vshll.u32 %v302, 16
      %v493 = vor.u32 %v490, %v491
      %v494 = vrot.slane %v490, 4
      %v496 = vshrl.u32 %v303, 16
      %v498 = vrot.slane %v496, 7
      %v499 = vshll.u32 %v303, 16
      %v501 = vor.u32 %v498, %v499
      %v502 = vsel %vm316, %v494, %v501
      %v503 = vrot.slane %v498, 4
      %v505 = vshrl.u32 %v304, 16
      %v507 = vrot.slane %v505, 7
      %v508 = vshll.u32 %v304, 16
      %v510 = vor.u32 %v507, %v508
      %v511 = vrot.slane %v507, 4
      %v513 = vshrl.u32 %v305, 16
      %v515 = vrot.slane %v513, 7
      %v516 = vshll.u32 %v305, 16
      %v518 = vor.u32 %v515, %v516
      %v519 = vsel %vm316, %v511, %v518
      %v520 = vrot.slane %v515, 4
      %v522 = vshrl.u32 %v306, 16
      %v524 = vrot.slane %v522, 7
      %v525 = vshll.u32 %v306, 16
      %v527 = vor.u32 %v524, %v525
      %v528 = vrot.slane %v524, 4
      %v530 = vshrl.u32 %v307, 16
      %v532 = vrot.slane %v530, 7
      %v533 = vshll.u32 %v307, 16
      %v535 = vor.u32 %v532, %v533
      %v536 = vsel %vm316, %v528, %v535
      %v537 = vrot.slane %v532, 4
      %v539 = vshrl.u32 %v308, 16
      %v541 = vrot.slane %v539, 7
      %v542 = vshll.u32 %v308, 16
      %v544 = vor.u32 %v541, %v542
      %v545 = vrot.slane %v541, 4
      %v547 = vshrl.u32 %v309, 16
      %v549 = vrot.slane %v547, 7
      %v550 = vshll.u32 %v309, 16
      %v552 = vor.u32 %v549, %v550
      %v553 = vsel %vm316, %v545, %v552
      %v554 = vrot.slane %v549, 4
      %v556 = vshrl.u32 %v310, 16
      %v558 = vrot.slane %v556, 7
      %v559 = vshll.u32 %v310, 16
      %v561 = vor.u32 %v558, %v559
      %v562 = vrot.slane %v558, 4
      %v564 = vshrl.u32 %v311, 16
      %v566 = vrot.slane %v564, 7
      %v567 = vshll.u32 %v311, 16
      %v569 = vor.u32 %v566, %v567
      %v570 = vsel %vm316, %v562, %v569
      %v571 = vrot.slane %v566, 4
      %v573 = vshrl.u32 %v312, 16
      %v575 = vrot.slane %v573, 7
      %v576 = vshll.u32 %v312, 16
      %v578 = vor.u32 %v575, %v576
      %v579 = vrot.slane %v575, 4
      %v581 = vshrl.u32 %v313, 16
      %v583 = vrot.slane %v581, 7
      %v584 = vshll.u32 %v313, 16
      %v586 = vor.u32 %v583, %v584
      %v587 = vsel %vm316, %v579, %v586
      %v588 = vrot.slane %v583, 4
      %s637 = scalar_lea.vmem [#allocation2], 12
      %vm638 = vcmask 125952
      %vm639 = vsmask.f32 7938
      %vm640 = vmand %vm638, %vm639
      %v641 = vld [vmem:[%s637] sm:$0xf]
      %v642 = vsel %vm640, %v323, %v641
      %643 = vst [vmem:[%s637] sm:$0xf] %v642
      %644 = vst.msk [vmem:[%s637 + $0x4] sm:$0xf] %vm226, %v332
      %vm645 = vcmask 122880
      %vm646 = vmand %vm645, %vm314
      %v647 = vld [vmem:[%s637 + $0x8] sm:$0x1]
      %v648 = vsel %vm646, %v333, %v647
      %649 = vst [vmem:[%s637 + $0x8] sm:$0x1] %v648
      %v650 = vld [vmem:[%s637 + $0xc] sm:$0xf]
      %v651 = vsel %vm640, %v340, %v650
      %652 = vst [vmem:[%s637 + $0xc] sm:$0xf] %v651
      %653 = vst.msk [vmem:[%s637 + $0x10] sm:$0xf] %vm226, %v349
      %v654 = vld [vmem:[%s637 + $0x14] sm:$0x1]
      %v655 = vsel %vm646, %v350, %v654
      %656 = vst [vmem:[%s637 + $0x14] sm:$0x1] %v655
      %v657 = vld [vmem:[%s637 + $0x18] sm:$0xf]
      %v658 = vsel %vm640, %v357, %v657
      %659 = vst [vmem:[%s637 + $0x18] sm:$0xf] %v658
      %660 = vst.msk [vmem:[%s637 + $0x1c] sm:$0xf] %vm226, %v366
      %v661 = vld [vmem:[%s637 + $0x20] sm:$0x1]
      %v662 = vsel %vm646, %v367, %v661
      %663 = vst [vmem:[%s637 + $0x20] sm:$0x1] %v662
      %v664 = vld [vmem:[%s637 + $0x24] sm:$0xf]
      %v665 = vsel %vm640, %v374, %v664
      %666 = vst [vmem:[%s637 + $0x24] sm:$0xf] %v665
      %667 = vst.msk [vmem:[%s637 + $0x28] sm:$0xf] %vm226, %v383
      %v668 = vld [vmem:[%s637 + $0x2c] sm:$0x1]
      %v669 = vsel %vm646, %v384, %v668
      %670 = vst [vmem:[%s637 + $0x2c] sm:$0x1] %v669
      %v671 = vld [vmem:[%s637 + $0x30] sm:$0xf]
      %v672 = vsel %vm640, %v391, %v671
      %673 = vst [vmem:[%s637 + $0x30] sm:$0xf] %v672
      %674 = vst.msk [vmem:[%s637 + $0x34] sm:$0xf] %vm226, %v400
      %v675 = vld [vmem:[%s637 + $0x38] sm:$0x1]
      %v676 = vsel %vm646, %v401, %v675
      %677 = vst [vmem:[%s637 + $0x38] sm:$0x1] %v676
      %v678 = vld [vmem:[%s637 + $0x3c] sm:$0xf]
      %v679 = vsel %vm640, %v408, %v678
      %680 = vst [vmem:[%s637 + $0x3c] sm:$0xf] %v679
      %681 = vst.msk [vmem:[%s637 + $0x40] sm:$0xf] %vm226, %v417
      %v682 = vld [vmem:[%s637 + $0x44] sm:$0x1]
      %v683 = vsel %vm646, %v418, %v682
      %684 = vst [vmem:[%s637 + $0x44] sm:$0x1] %v683
      %v685 = vld [vmem:[%s637 + $0x48] sm:$0xf]
      %v686 = vsel %vm640, %v425, %v685
      %687 = vst [vmem:[%s637 + $0x48] sm:$0xf] %v686
      %688 = vst.msk [vmem:[%s637 + $0x4c] sm:$0xf] %vm226, %v434
      %v689 = vld [vmem:[%s637 + $0x50] sm:$0x1]
      %v690 = vsel %vm646, %v435, %v689
      %691 = vst [vmem:[%s637 + $0x50] sm:$0x1] %v690
      %v692 = vld [vmem:[%s637 + $0x54] sm:$0xf]
      %v693 = vsel %vm640, %v442, %v692
      %694 = vst [vmem:[%s637 + $0x54] sm:$0xf] %v693
      %695 = vst.msk [vmem:[%s637 + $0x58] sm:$0xf] %vm226, %v451
      %v696 = vld [vmem:[%s637 + $0x5c] sm:$0x1]
      %v697 = vsel %vm646, %v452, %v696
      %698 = vst [vmem:[%s637 + $0x5c] sm:$0x1] %v697
      %v699 = vld [vmem:[%s637 + $0x60] sm:$0xf]
      %v700 = vsel %vm640, %v459, %v699
      %701 = vst [vmem:[%s637 + $0x60] sm:$0xf] %v700
      %702 = vst.msk [vmem:[%s637 + $0x64] sm:$0xf] %vm226, %v468
      %v703 = vld [vmem:[%s637 + $0x68] sm:$0x1]
      %v704 = vsel %vm646, %v469, %v703
      %705 = vst [vmem:[%s637 + $0x68] sm:$0x1] %v704
      %v706 = vld [vmem:[%s637 + $0x6c] sm:$0xf]
      %v707 = vsel %vm640, %v476, %v706
      %708 = vst [vmem:[%s637 + $0x6c] sm:$0xf] %v707
      %709 = vst.msk [vmem:[%s637 + $0x70] sm:$0xf] %vm226, %v485
      %v710 = vld [vmem:[%s637 + $0x74] sm:$0x1]
      %v711 = vsel %vm646, %v486, %v710
      %712 = vst [vmem:[%s637 + $0x74] sm:$0x1] %v711
      %v713 = vld [vmem:[%s637 + $0x78] sm:$0xf]
      %v714 = vsel %vm640, %v493, %v713
      %715 = vst [vmem:[%s637 + $0x78] sm:$0xf] %v714
      %716 = vst.msk [vmem:[%s637 + $0x7c] sm:$0xf] %vm226, %v502
      %v717 = vld [vmem:[%s637 + $0x80] sm:$0x1]
      %v718 = vsel %vm646, %v503, %v717
      %719 = vst [vmem:[%s637 + $0x80] sm:$0x1] %v718
      %v720 = vld [vmem:[%s637 + $0x84] sm:$0xf]
      %v721 = vsel %vm640, %v510, %v720
      %722 = vst [vmem:[%s637 + $0x84] sm:$0xf] %v721
      %723 = vst.msk [vmem:[%s637 + $0x88] sm:$0xf] %vm226, %v519
      %v724 = vld [vmem:[%s637 + $0x8c] sm:$0x1]
      %v725 = vsel %vm646, %v520, %v724
      %726 = vst [vmem:[%s637 + $0x8c] sm:$0x1] %v725
      %v727 = vld [vmem:[%s637 + $0x90] sm:$0xf]
      %v728 = vsel %vm640, %v527, %v727
      %729 = vst [vmem:[%s637 + $0x90] sm:$0xf] %v728
      %730 = vst.msk [vmem:[%s637 + $0x94] sm:$0xf] %vm226, %v536
      %v731 = vld [vmem:[%s637 + $0x98] sm:$0x1]
      %v732 = vsel %vm646, %v537, %v731
      %733 = vst [vmem:[%s637 + $0x98] sm:$0x1] %v732
      %v734 = vld [vmem:[%s637 + $0x9c] sm:$0xf]
      %v735 = vsel %vm640, %v544, %v734
      %736 = vst [vmem:[%s637 + $0x9c] sm:$0xf] %v735
      %737 = vst.msk [vmem:[%s637 + $0xa0] sm:$0xf] %vm226, %v553
      %v738 = vld [vmem:[%s637 + $0xa4] sm:$0x1]
      %v739 = vsel %vm646, %v554, %v738
      %740 = vst [vmem:[%s637 + $0xa4] sm:$0x1] %v739
      %v741 = vld [vmem:[%s637 + $0xa8] sm:$0xf]
      %v742 = vsel %vm640, %v561, %v741
      %743 = vst [vmem:[%s637 + $0xa8] sm:$0xf] %v742
      %744 = vst.msk [vmem:[%s637 + $0xac] sm:$0xf] %vm226, %v570
      %v745 = vld [vmem:[%s637 + $0xb0] sm:$0x1]
      %v746 = vsel %vm646, %v571, %v745
      %747 = vst [vmem:[%s637 + $0xb0] sm:$0x1] %v746
      %v748 = vld [vmem:[%s637 + $0xb4] sm:$0xf]
      %v749 = vsel %vm640, %v578, %v748
      %750 = vst [vmem:[%s637 + $0xb4] sm:$0xf] %v749
      %751 = vst.msk [vmem:[%s637 + $0xb8] sm:$0xf] %vm226, %v587
      %v752 = vld [vmem:[%s637 + $0xbc] sm:$0x1]
      %v753 = vsel %vm646, %v588, %v752
      %754 = vst [vmem:[%s637 + $0xbc] sm:$0x1] %v753
      %v755 = vld [vmem:[#allocation2] sm:$0xf]
      %v756 = vld [vmem:[#allocation2 + $0x4] sm:$0xf]
      %v757 = vld [vmem:[#allocation2 + $0xc] sm:$0xf]
      %v758 = vld [vmem:[#allocation2 + $0x10] sm:$0xf]
      %v759 = vld [vmem:[#allocation2 + $0x18] sm:$0xf]
      %v760 = vld [vmem:[#allocation2 + $0x1c] sm:$0xf]
      %v761 = vld [vmem:[#allocation2 + $0x24] sm:$0xf]
      %v762 = vld [vmem:[#allocation2 + $0x28] sm:$0xf]
      %v763 = vld [vmem:[#allocation2 + $0x30] sm:$0xf]
      %v764 = vld [vmem:[#allocation2 + $0x34] sm:$0xf]
      %v765 = vld [vmem:[#allocation2 + $0x3c] sm:$0xf]
      %v766 = vld [vmem:[#allocation2 + $0x40] sm:$0xf]
      %v767 = vld [vmem:[#allocation2 + $0x48] sm:$0xf]
      %v768 = vld [vmem:[#allocation2 + $0x4c] sm:$0xf]
      %v769 = vld [vmem:[#allocation2 + $0x54] sm:$0xf]
      %v770 = vld [vmem:[#allocation2 + $0x58] sm:$0xf]
      %v771 = vld [vmem:[#allocation2 + $0x60] sm:$0xf]
      %v772 = vld [vmem:[#allocation2 + $0x64] sm:$0xf]
      %v773 = vld [vmem:[#allocation2 + $0x6c] sm:$0xf]
      %v774 = vld [vmem:[#allocation2 + $0x70] sm:$0xf]
      %v775 = vld [vmem:[#allocation2 + $0x78] sm:$0xf]
      %v776 = vld [vmem:[#allocation2 + $0x7c] sm:$0xf]
      %v777 = vld [vmem:[#allocation2 + $0x84] sm:$0xf]
      %v778 = vld [vmem:[#allocation2 + $0x88] sm:$0xf]
      %v779 = vld [vmem:[#allocation2 + $0x90] sm:$0xf]
      %v780 = vld [vmem:[#allocation2 + $0x94] sm:$0xf]
      %v781 = vld [vmem:[#allocation2 + $0x9c] sm:$0xf]
      %v782 = vld [vmem:[#allocation2 + $0xa0] sm:$0xf]
      %v783 = vld [vmem:[#allocation2 + $0xa8] sm:$0xf]
      %v784 = vld [vmem:[#allocation2 + $0xac] sm:$0xf]
      %v785 = vld [vmem:[#allocation2 + $0xb4] sm:$0xf]
      %v786 = vld [vmem:[#allocation2 + $0xb8] sm:$0xf]
      %v787 = vld [vmem:[#allocation2 + $0x8] sm:$0x1]
      %v788 = vld [vmem:[#allocation2 + $0x14] sm:$0x1]
      %v789 = vld [vmem:[#allocation2 + $0x20] sm:$0x1]
      %v790 = vld [vmem:[#allocation2 + $0x2c] sm:$0x1]
      %v791 = vld [vmem:[#allocation2 + $0x38] sm:$0x1]
      %v792 = vld [vmem:[#allocation2 + $0x44] sm:$0x1]
      %v793 = vld [vmem:[#allocation2 + $0x50] sm:$0x1]
      %v794 = vld [vmem:[#allocation2 + $0x5c] sm:$0x1]
      %v795 = vld [vmem:[#allocation2 + $0x68] sm:$0x1]
      %v796 = vld [vmem:[#allocation2 + $0x74] sm:$0x1]
      %v797 = vld [vmem:[#allocation2 + $0x80] sm:$0x1]
      %v798 = vld [vmem:[#allocation2 + $0x8c] sm:$0x1]
      %v799 = vld [vmem:[#allocation2 + $0x98] sm:$0x1]
      %v800 = vld [vmem:[#allocation2 + $0xa4] sm:$0x1]
      %v801 = vld [vmem:[#allocation2 + $0xb0] sm:$0x1]
      %v802 = vld [vmem:[#allocation2 + $0xbc] sm:$0x1]
      %vm803 = vsmask.f32 3328
      %vm804 = vsmask.f32 7440
      %vm805 = vmor %vm803, %vm804
      %v807 = vshrl.u32 %v755, 16
      %v809 = vrot.slane %v807, 4
      %v810 = vshll.u32 %v755, 16
      %v812 = vrot.slane %v810, 5
      %v813 = vor.u32 %v809, %v812
      %v814 = vrot.slane %v813, 4
      %v816 = vshll.u32 %v756, 16
      %v818 = vrot.slane %v816, 5
      %v819 = vsel %vm805, %v814, %v818
      %v820 = vshrl.u32 %v756, 16
      %v822 = vrot.slane %v820, 4
      %v823 = vor.u32 %v822, %v818
      %v824 = vrot.slane %v823, 4
      %v826 = vshll.u32 %v787, 16
      %v828 = vrot.slane %v826, 5
      %v829 = vsel %vm805, %v824, %v828
      %v831 = vshrl.u32 %v757, 16
      %v833 = vrot.slane %v831, 4
      %v834 = vshll.u32 %v757, 16
      %v836 = vrot.slane %v834, 5
      %v837 = vor.u32 %v833, %v836
      %v838 = vrot.slane %v837, 4
      %v840 = vshll.u32 %v758, 16
      %v842 = vrot.slane %v840, 5
      %v843 = vsel %vm805, %v838, %v842
      %v844 = vshrl.u32 %v758, 16
      %v846 = vrot.slane %v844, 4
      %v847 = vor.u32 %v846, %v842
      %v848 = vrot.slane %v847, 4
      %v850 = vshll.u32 %v788, 16
      %v852 = vrot.slane %v850, 5
      %v853 = vsel %vm805, %v848, %v852
      %v855 = vshrl.u32 %v759, 16
      %v857 = vrot.slane %v855, 4
      %v858 = vshll.u32 %v759, 16
      %v860 = vrot.slane %v858, 5
      %v861 = vor.u32 %v857, %v860
      %v862 = vrot.slane %v861, 4
      %v864 = vshll.u32 %v760, 16
      %v866 = vrot.slane %v864, 5
      %v867 = vsel %vm805, %v862, %v866
      %v868 = vshrl.u32 %v760, 16
      %v870 = vrot.slane %v868, 4
      %v871 = vor.u32 %v870, %v866
      %v872 = vrot.slane %v871, 4
      %v874 = vshll.u32 %v789, 16
      %v876 = vrot.slane %v874, 5
      %v877 = vsel %vm805, %v872, %v876
      %v879 = vshrl.u32 %v761, 16
      %v881 = vrot.slane %v879, 4
      %v882 = vshll.u32 %v761, 16
      %v884 = vrot.slane %v882, 5
      %v885 = vor.u32 %v881, %v884
      %v886 = vrot.slane %v885, 4
      %v888 = vshll.u32 %v762, 16
      %v890 = vrot.slane %v888, 5
      %v891 = vsel %vm805, %v886, %v890
      %v892 = vshrl.u32 %v762, 16
      %v894 = vrot.slane %v892, 4
      %v895 = vor.u32 %v894, %v890
      %v896 = vrot.slane %v895, 4
      %v898 = vshll.u32 %v790, 16
      %v900 = vrot.slane %v898, 5
      %v901 = vsel %vm805, %v896, %v900
      %v903 = vshrl.u32 %v763, 16
      %v905 = vrot.slane %v903, 4
      %v906 = vshll.u32 %v763, 16
      %v908 = vrot.slane %v906, 5
      %v909 = vor.u32 %v905, %v908
      %v910 = vrot.slane %v909, 4
      %v912 = vshll.u32 %v764, 16
      %v914 = vrot.slane %v912, 5
      %v915 = vsel %vm805, %v910, %v914
      %v916 = vshrl.u32 %v764, 16
      %v918 = vrot.slane %v916, 4
      %v919 = vor.u32 %v918, %v914
      %v920 = vrot.slane %v919, 4
      %v922 = vshll.u32 %v791, 16
      %v924 = vrot.slane %v922, 5
      %v925 = vsel %vm805, %v920, %v924
      %v927 = vshrl.u32 %v765, 16
      %v929 = vrot.slane %v927, 4
      %v930 = vshll.u32 %v765, 16
      %v932 = vrot.slane %v930, 5
      %v933 = vor.u32 %v929, %v932
      %v934 = vrot.slane %v933, 4
      %v936 = vshll.u32 %v766, 16
      %v938 = vrot.slane %v936, 5
      %v939 = vsel %vm805, %v934, %v938
      %v940 = vshrl.u32 %v766, 16
      %v942 = vrot.slane %v940, 4
      %v943 = vor.u32 %v942, %v938
      %v944 = vrot.slane %v943, 4
      %v946 = vshll.u32 %v792, 16
      %v948 = vrot.slane %v946, 5
      %v949 = vsel %vm805, %v944, %v948
      %v951 = vshrl.u32 %v767, 16
      %v953 = vrot.slane %v951, 4
      %v954 = vshll.u32 %v767, 16
      %v956 = vrot.slane %v954, 5
      %v957 = vor.u32 %v953, %v956
      %v958 = vrot.slane %v957, 4
      %v960 = vshll.u32 %v768, 16
      %v962 = vrot.slane %v960, 5
      %v963 = vsel %vm805, %v958, %v962
      %v964 = vshrl.u32 %v768, 16
      %v966 = vrot.slane %v964, 4
      %v967 = vor.u32 %v966, %v962
      %v968 = vrot.slane %v967, 4
      %v970 = vshll.u32 %v793, 16
      %v972 = vrot.slane %v970, 5
      %v973 = vsel %vm805, %v968, %v972
      %v975 = vshrl.u32 %v769, 16
      %v977 = vrot.slane %v975, 4
      %v978 = vshll.u32 %v769, 16
      %v980 = vrot.slane %v978, 5
      %v981 = vor.u32 %v977, %v980
      %v982 = vrot.slane %v981, 4
      %v984 = vshll.u32 %v770, 16
      %v986 = vrot.slane %v984, 5
      %v987 = vsel %vm805, %v982, %v986
      %v988 = vshrl.u32 %v770, 16
      %v990 = vrot.slane %v988, 4
      %v991 = vor.u32 %v990, %v986
      %v992 = vrot.slane %v991, 4
      %v994 = vshll.u32 %v794, 16
      %v996 = vrot.slane %v994, 5
      %v997 = vsel %vm805, %v992, %v996
      %v999 = vshrl.u32 %v771, 16
      %v1001 = vrot.slane %v999, 4
      %v1002 = vshll.u32 %v771, 16
      %v1004 = vrot.slane %v1002, 5
      %v1005 = vor.u32 %v1001, %v1004
      %v1006 = vrot.slane %v1005, 4
      %v1008 = vshll.u32 %v772, 16
      %v1010 = vrot.slane %v1008, 5
      %v1011 = vsel %vm805, %v1006, %v1010
      %v1012 = vshrl.u32 %v772, 16
      %v1014 = vrot.slane %v1012, 4
      %v1015 = vor.u32 %v1014, %v1010
      %v1016 = vrot.slane %v1015, 4
      %v1018 = vshll.u32 %v795, 16
      %v1020 = vrot.slane %v1018, 5
      %v1021 = vsel %vm805, %v1016, %v1020
      %v1023 = vshrl.u32 %v773, 16
      %v1025 = vrot.slane %v1023, 4
      %v1026 = vshll.u32 %v773, 16
      %v1028 = vrot.slane %v1026, 5
      %v1029 = vor.u32 %v1025, %v1028
      %v1030 = vrot.slane %v1029, 4
      %v1032 = vshll.u32 %v774, 16
      %v1034 = vrot.slane %v1032, 5
      %v1035 = vsel %vm805, %v1030, %v1034
      %v1036 = vshrl.u32 %v774, 16
      %v1038 = vrot.slane %v1036, 4
      %v1039 = vor.u32 %v1038, %v1034
      %v1040 = vrot.slane %v1039, 4
      %v1042 = vshll.u32 %v796, 16
      %v1044 = vrot.slane %v1042, 5
      %v1045 = vsel %vm805, %v1040, %v1044
      %v1047 = vshrl.u32 %v775, 16
      %v1049 = vrot.slane %v1047, 4
      %v1050 = vshll.u32 %v775, 16
      %v1052 = vrot.slane %v1050, 5
      %v1053 = vor.u32 %v1049, %v1052
      %v1054 = vrot.slane %v1053, 4
      %v1056 = vshll.u32 %v776, 16
      %v1058 = vrot.slane %v1056, 5
      %v1059 = vsel %vm805, %v1054, %v1058
      %v1060 = vshrl.u32 %v776, 16
      %v1062 = vrot.slane %v1060, 4
      %v1063 = vor.u32 %v1062, %v1058
      %v1064 = vrot.slane %v1063, 4
      %v1066 = vshll.u32 %v797, 16
      %v1068 = vrot.slane %v1066, 5
      %v1069 = vsel %vm805, %v1064, %v1068
      %v1071 = vshrl.u32 %v777, 16
      %v1073 = vrot.slane %v1071, 4
      %v1074 = vshll.u32 %v777, 16
      %v1076 = vrot.slane %v1074, 5
      %v1077 = vor.u32 %v1073, %v1076
      %v1078 = vrot.slane %v1077, 4
      %v1080 = vshll.u32 %v778, 16
      %v1082 = vrot.slane %v1080, 5
      %v1083 = vsel %vm805, %v1078, %v1082
      %v1084 = vshrl.u32 %v778, 16
      %v1086 = vrot.slane %v1084, 4
      %v1087 = vor.u32 %v1086, %v1082
      %v1088 = vrot.slane %v1087, 4
      %v1090 = vshll.u32 %v798, 16
      %v1092 = vrot.slane %v1090, 5
      %v1093 = vsel %vm805, %v1088, %v1092
      %v1095 = vshrl.u32 %v779, 16
      %v1097 = vrot.slane %v1095, 4
      %v1098 = vshll.u32 %v779, 16
      %v1100 = vrot.slane %v1098, 5
      %v1101 = vor.u32 %v1097, %v1100
      %v1102 = vrot.slane %v1101, 4
      %v1104 = vshll.u32 %v780, 16
      %v1106 = vrot.slane %v1104, 5
      %v1107 = vsel %vm805, %v1102, %v1106
      %v1108 = vshrl.u32 %v780, 16
      %v1110 = vrot.slane %v1108, 4
      %v1111 = vor.u32 %v1110, %v1106
      %v1112 = vrot.slane %v1111, 4
      %v1114 = vshll.u32 %v799, 16
      %v1116 = vrot.slane %v1114, 5
      %v1117 = vsel %vm805, %v1112, %v1116
      %v1119 = vshrl.u32 %v781, 16
      %v1121 = vrot.slane %v1119, 4
      %v1122 = vshll.u32 %v781, 16
      %v1124 = vrot.slane %v1122, 5
      %v1125 = vor.u32 %v1121, %v1124
      %v1126 = vrot.slane %v1125, 4
      %v1128 = vshll.u32 %v782, 16
      %v1130 = vrot.slane %v1128, 5
      %v1131 = vsel %vm805, %v1126, %v1130
      %v1132 = vshrl.u32 %v782, 16
      %v1134 = vrot.slane %v1132, 4
      %v1135 = vor.u32 %v1134, %v1130
      %v1136 = vrot.slane %v1135, 4
      %v1138 = vshll.u32 %v800, 16
      %v1140 = vrot.slane %v1138, 5
      %v1141 = vsel %vm805, %v1136, %v1140
      %v1143 = vshrl.u32 %v783, 16
      %v1145 = vrot.slane %v1143, 4
      %v1146 = vshll.u32 %v783, 16
      %v1148 = vrot.slane %v1146, 5
      %v1149 = vor.u32 %v1145, %v1148
      %v1150 = vrot.slane %v1149, 4
      %v1152 = vshll.u32 %v784, 16
      %v1154 = vrot.slane %v1152, 5
      %v1155 = vsel %vm805, %v1150, %v1154
      %v1156 = vshrl.u32 %v784, 16
      %v1158 = vrot.slane %v1156, 4
      %v1159 = vor.u32 %v1158, %v1154
      %v1160 = vrot.slane %v1159, 4
      %v1162 = vshll.u32 %v801, 16
      %v1164 = vrot.slane %v1162, 5
      %v1165 = vsel %vm805, %v1160, %v1164
      %v1167 = vshrl.u32 %v785, 16
      %v1169 = vrot.slane %v1167, 4
      %v1170 = vshll.u32 %v785, 16
      %v1172 = vrot.slane %v1170, 5
      %v1173 = vor.u32 %v1169, %v1172
      %v1174 = vrot.slane %v1173, 4
      %v1176 = vshll.u32 %v786, 16
      %v1178 = vrot.slane %v1176, 5
      %v1179 = vsel %vm805, %v1174, %v1178
      %v1180 = vshrl.u32 %v786, 16
      %v1182 = vrot.slane %v1180, 4
      %v1183 = vor.u32 %v1182, %v1178
      %v1184 = vrot.slane %v1183, 4
      %v1186 = vshll.u32 %v802, 16
      %v1188 = vrot.slane %v1186, 5
      %v1189 = vsel %vm805, %v1184, %v1188
      %v1190 = vld [vmem:[#allocation2] sm:$0xe]
      %v1191 = vld [vmem:[#allocation2 + $0xc] sm:$0xe]
      %v1192 = vld [vmem:[#allocation2 + $0x18] sm:$0xe]
      %v1193 = vld [vmem:[#allocation2 + $0x24] sm:$0xe]
      %v1194 = vld [vmem:[#allocation2 + $0x30] sm:$0xe]
      %v1195 = vld [vmem:[#allocation2 + $0x3c] sm:$0xe]
      %v1196 = vld [vmem:[#allocation2 + $0x48] sm:$0xe]
      %v1197 = vld [vmem:[#allocation2 + $0x54] sm:$0xe]
      %v1198 = vld [vmem:[#allocation2 + $0x60] sm:$0xe]
      %v1199 = vld [vmem:[#allocation2 + $0x6c] sm:$0xe]
      %v1200 = vld [vmem:[#allocation2 + $0x78] sm:$0xe]
      %v1201 = vld [vmem:[#allocation2 + $0x84] sm:$0xe]
      %v1202 = vld [vmem:[#allocation2 + $0x90] sm:$0xe]
      %v1203 = vld [vmem:[#allocation2 + $0x9c] sm:$0xe]
      %v1204 = vld [vmem:[#allocation2 + $0xa8] sm:$0xe]
      %v1205 = vld [vmem:[#allocation2 + $0xb4] sm:$0xe]
      %vm1254 = vcmask 1042432
      %vm1255 = vcmask 1046532
      %vm1256 = vmor %vm1254, %vm1255
      %v1257 = vrot.slane %v1190, 5
      %v1258 = vrot.slane %v1257, 4
      %v1259 = vrot.slane %v756, 5
      %v1260 = vsel %vm1256, %v1258, %v1259
      %v1261 = vrot.slane %v1259, 4
      %v1262 = vrot.slane %v787, 5
      %v1263 = vsel %vm1256, %v1261, %v1262
      %v1264 = vrot.slane %v1191, 5
      %v1265 = vrot.slane %v1264, 4
      %v1266 = vrot.slane %v758, 5
      %v1267 = vsel %vm1256, %v1265, %v1266
      %v1268 = vrot.slane %v1266, 4
      %v1269 = vrot.slane %v788, 5
      %v1270 = vsel %vm1256, %v1268, %v1269
      %v1271 = vrot.slane %v1192, 5
      %v1272 = vrot.slane %v1271, 4
      %v1273 = vrot.slane %v760, 5
      %v1274 = vsel %vm1256, %v1272, %v1273
      %v1275 = vrot.slane %v1273, 4
      %v1276 = vrot.slane %v789, 5
      %v1277 = vsel %vm1256, %v1275, %v1276
      %v1278 = vrot.slane %v1193, 5
      %v1279 = vrot.slane %v1278, 4
      %v1280 = vrot.slane %v762, 5
      %v1281 = vsel %vm1256, %v1279, %v1280
      %v1282 = vrot.slane %v1280, 4
      %v1283 = vrot.slane %v790, 5
      %v1284 = vsel %vm1256, %v1282, %v1283
      %v1285 = vrot.slane %v1194, 5
      %v1286 = vrot.slane %v1285, 4
      %v1287 = vrot.slane %v764, 5
      %v1288 = vsel %vm1256, %v1286, %v1287
      %v1289 = vrot.slane %v1287, 4
      %v1290 = vrot.slane %v791, 5
      %v1291 = vsel %vm1256, %v1289, %v1290
      %v1292 = vrot.slane %v1195, 5
      %v1293 = vrot.slane %v1292, 4
      %v1294 = vrot.slane %v766, 5
      %v1295 = vsel %vm1256, %v1293, %v1294
      %v1296 = vrot.slane %v1294, 4
      %v1297 = vrot.slane %v792, 5
      %v1298 = vsel %vm1256, %v1296, %v1297
      %v1299 = vrot.slane %v1196, 5
      %v1300 = vrot.slane %v1299, 4
      %v1301 = vrot.slane %v768, 5
      %v1302 = vsel %vm1256, %v1300, %v1301
      %v1303 = vrot.slane %v1301, 4
      %v1304 = vrot.slane %v793, 5
      %v1305 = vsel %vm1256, %v1303, %v1304
      %v1306 = vrot.slane %v1197, 5
      %v1307 = vrot.slane %v1306, 4
      %v1308 = vrot.slane %v770, 5
      %v1309 = vsel %vm1256, %v1307, %v1308
      %v1310 = vrot.slane %v1308, 4
      %v1311 = vrot.slane %v794, 5
      %v1312 = vsel %vm1256, %v1310, %v1311
      %v1313 = vrot.slane %v1198, 5
      %v1314 = vrot.slane %v1313, 4
      %v1315 = vrot.slane %v772, 5
      %v1316 = vsel %vm1256, %v1314, %v1315
      %v1317 = vrot.slane %v1315, 4
      %v1318 = vrot.slane %v795, 5
      %v1319 = vsel %vm1256, %v1317, %v1318
      %v1320 = vrot.slane %v1199, 5
      %v1321 = vrot.slane %v1320, 4
      %v1322 = vrot.slane %v774, 5
      %v1323 = vsel %vm1256, %v1321, %v1322
      %v1324 = vrot.slane %v1322, 4
      %v1325 = vrot.slane %v796, 5
      %v1326 = vsel %vm1256, %v1324, %v1325
      %v1327 = vrot.slane %v1200, 5
      %v1328 = vrot.slane %v1327, 4
      %v1329 = vrot.slane %v776, 5
      %v1330 = vsel %vm1256, %v1328, %v1329
      %v1331 = vrot.slane %v1329, 4
      %v1332 = vrot.slane %v797, 5
      %v1333 = vsel %vm1256, %v1331, %v1332
      %v1334 = vrot.slane %v1201, 5
      %v1335 = vrot.slane %v1334, 4
      %v1336 = vrot.slane %v778, 5
      %v1337 = vsel %vm1256, %v1335, %v1336
      %v1338 = vrot.slane %v1336, 4
      %v1339 = vrot.slane %v798, 5
      %v1340 = vsel %vm1256, %v1338, %v1339
      %v1341 = vrot.slane %v1202, 5
      %v1342 = vrot.slane %v1341, 4
      %v1343 = vrot.slane %v780, 5
      %v1344 = vsel %vm1256, %v1342, %v1343
      %v1345 = vrot.slane %v1343, 4
      %v1346 = vrot.slane %v799, 5
      %v1347 = vsel %vm1256, %v1345, %v1346
      %v1348 = vrot.slane %v1203, 5
      %v1349 = vrot.slane %v1348, 4
      %v1350 = vrot.slane %v782, 5
      %v1351 = vsel %vm1256, %v1349, %v1350
      %v1352 = vrot.slane %v1350, 4
      %v1353 = vrot.slane %v800, 5
      %v1354 = vsel %vm1256, %v1352, %v1353
      %v1355 = vrot.slane %v1204, 5
      %v1356 = vrot.slane %v1355, 4
      %v1357 = vrot.slane %v784, 5
      %v1358 = vsel %vm1256, %v1356, %v1357
      %v1359 = vrot.slane %v1357, 4
      %v1360 = vrot.slane %v801, 5
      %v1361 = vsel %vm1256, %v1359, %v1360
      %v1362 = vrot.slane %v1205, 5
      %v1363 = vrot.slane %v1362, 4
      %v1364 = vrot.slane %v786, 5
      %v1365 = vsel %vm1256, %v1363, %v1364
      %v1366 = vrot.slane %v1364, 4
      %v1367 = vrot.slane %v802, 5
      %v1368 = vsel %vm1256, %v1366, %v1367
      %v1369 = vld [vmem:[%s637] sm:$0xf]
      %v1370 = vld [vmem:[%s637 + $0x4] sm:$0xf]
      %v1371 = vld [vmem:[%s637 + $0xc] sm:$0xf]
      %v1372 = vld [vmem:[%s637 + $0x10] sm:$0xf]
      %v1373 = vld [vmem:[%s637 + $0x18] sm:$0xf]
      %v1374 = vld [vmem:[%s637 + $0x1c] sm:$0xf]
      %v1375 = vld [vmem:[%s637 + $0x24] sm:$0xf]
      %v1376 = vld [vmem:[%s637 + $0x28] sm:$0xf]
      %v1377 = vld [vmem:[%s637 + $0x30] sm:$0xf]
      %v1378 = vld [vmem:[%s637 + $0x34] sm:$0xf]
      %v1379 = vld [vmem:[%s637 + $0x3c] sm:$0xf]
      %v1380 = vld [vmem:[%s637 + $0x40] sm:$0xf]
      %v1381 = vld [vmem:[%s637 + $0x48] sm:$0xf]
      %v1382 = vld [vmem:[%s637 + $0x4c] sm:$0xf]
      %v1383 = vld [vmem:[%s637 + $0x54] sm:$0xf]
      %v1384 = vld [vmem:[%s637 + $0x58] sm:$0xf]
      %v1385 = vld [vmem:[%s637 + $0x60] sm:$0xf]
      %v1386 = vld [vmem:[%s637 + $0x64] sm:$0xf]
      %v1387 = vld [vmem:[%s637 + $0x6c] sm:$0xf]
      %v1388 = vld [vmem:[%s637 + $0x70] sm:$0xf]
      %v1389 = vld [vmem:[%s637 + $0x78] sm:$0xf]
      %v1390 = vld [vmem:[%s637 + $0x7c] sm:$0xf]
      %v1391 = vld [vmem:[%s637 + $0x84] sm:$0xf]
      %v1392 = vld [vmem:[%s637 + $0x88] sm:$0xf]
      %v1393 = vld [vmem:[%s637 + $0x90] sm:$0xf]
      %v1394 = vld [vmem:[%s637 + $0x94] sm:$0xf]
      %v1395 = vld [vmem:[%s637 + $0x9c] sm:$0xf]
      %v1396 = vld [vmem:[%s637 + $0xa0] sm:$0xf]
      %v1397 = vld [vmem:[%s637 + $0xa8] sm:$0xf]
      %v1398 = vld [vmem:[%s637 + $0xac] sm:$0xf]
      %v1399 = vld [vmem:[%s637 + $0xb4] sm:$0xf]
      %v1400 = vld [vmem:[%s637 + $0xb8] sm:$0xf]
      %v1401 = vld [vmem:[%s637 + $0x8] sm:$0x1]
      %v1402 = vld [vmem:[%s637 + $0x14] sm:$0x1]
      %v1403 = vld [vmem:[%s637 + $0x20] sm:$0x1]
      %v1404 = vld [vmem:[%s637 + $0x2c] sm:$0x1]
      %v1405 = vld [vmem:[%s637 + $0x38] sm:$0x1]
      %v1406 = vld [vmem:[%s637 + $0x44] sm:$0x1]
      %v1407 = vld [vmem:[%s637 + $0x50] sm:$0x1]
      %v1408 = vld [vmem:[%s637 + $0x5c] sm:$0x1]
      %v1409 = vld [vmem:[%s637 + $0x68] sm:$0x1]
      %v1410 = vld [vmem:[%s637 + $0x74] sm:$0x1]
      %v1411 = vld [vmem:[%s637 + $0x80] sm:$0x1]
      %v1412 = vld [vmem:[%s637 + $0x8c] sm:$0x1]
      %v1413 = vld [vmem:[%s637 + $0x98] sm:$0x1]
      %v1414 = vld [vmem:[%s637 + $0xa4] sm:$0x1]
      %v1415 = vld [vmem:[%s637 + $0xb0] sm:$0x1]
      %v1416 = vld [vmem:[%s637 + $0xbc] sm:$0x1]
      %v1418 = vshrl.u32 %v1369, 16
      %v1420 = vrot.slane %v1418, 4
      %v1421 = vshll.u32 %v1369, 16
      %v1423 = vrot.slane %v1421, 5
      %v1424 = vor.u32 %v1420, %v1423
      %v1425 = vrot.slane %v1424, 4
      %v1427 = vshll.u32 %v1370, 16
      %v1429 = vrot.slane %v1427, 5
      %v1430 = vsel %vm805, %v1425, %v1429
      %v1431 = vshrl.u32 %v1370, 16
      %v1433 = vrot.slane %v1431, 4
      %v1434 = vor.u32 %v1433, %v1429
      %v1435 = vrot.slane %v1434, 4
      %v1437 = vshll.u32 %v1401, 16
      %v1439 = vrot.slane %v1437, 5
      %v1440 = vsel %vm805, %v1435, %v1439
      %v1442 = vshrl.u32 %v1371, 16
      %v1444 = vrot.slane %v1442, 4
      %v1445 = vshll.u32 %v1371, 16
      %v1447 = vrot.slane %v1445, 5
      %v1448 = vor.u32 %v1444, %v1447
      %v1449 = vrot.slane %v1448, 4
      %v1451 = vshll.u32 %v1372, 16
      %v1453 = vrot.slane %v1451, 5
      %v1454 = vsel %vm805, %v1449, %v1453
      %v1455 = vshrl.u32 %v1372, 16
      %v1457 = vrot.slane %v1455, 4
      %v1458 = vor.u32 %v1457, %v1453
      %v1459 = vrot.slane %v1458, 4
      %v1461 = vshll.u32 %v1402, 16
      %v1463 = vrot.slane %v1461, 5
      %v1464 = vsel %vm805, %v1459, %v1463
      %v1466 = vshrl.u32 %v1373, 16
      %v1468 = vrot.slane %v1466, 4
      %v1469 = vshll.u32 %v1373, 16
      %v1471 = vrot.slane %v1469, 5
      %v1472 = vor.u32 %v1468, %v1471
      %v1473 = vrot.slane %v1472, 4
      %v1475 = vshll.u32 %v1374, 16
      %v1477 = vrot.slane %v1475, 5
      %v1478 = vsel %vm805, %v1473, %v1477
      %v1479 = vshrl.u32 %v1374, 16
      %v1481 = vrot.slane %v1479, 4
      %v1482 = vor.u32 %v1481, %v1477
      %v1483 = vrot.slane %v1482, 4
      %v1485 = vshll.u32 %v1403, 16
      %v1487 = vrot.slane %v1485, 5
      %v1488 = vsel %vm805, %v1483, %v1487
      %v1490 = vshrl.u32 %v1375, 16
      %v1492 = vrot.slane %v1490, 4
      %v1493 = vshll.u32 %v1375, 16
      %v1495 = vrot.slane %v1493, 5
      %v1496 = vor.u32 %v1492, %v1495
      %v1497 = vrot.slane %v1496, 4
      %v1499 = vshll.u32 %v1376, 16
      %v1501 = vrot.slane %v1499, 5
      %v1502 = vsel %vm805, %v1497, %v1501
      %v1503 = vshrl.u32 %v1376, 16
      %v1505 = vrot.slane %v1503, 4
      %v1506 = vor.u32 %v1505, %v1501
      %v1507 = vrot.slane %v1506, 4
      %v1509 = vshll.u32 %v1404, 16
      %v1511 = vrot.slane %v1509, 5
      %v1512 = vsel %vm805, %v1507, %v1511
      %v1514 = vshrl.u32 %v1377, 16
      %v1516 = vrot.slane %v1514, 4
      %v1517 = vshll.u32 %v1377, 16
      %v1519 = vrot.slane %v1517, 5
      %v1520 = vor.u32 %v1516, %v1519
      %v1521 = vrot.slane %v1520, 4
      %v1523 = vshll.u32 %v1378, 16
      %v1525 = vrot.slane %v1523, 5
      %v1526 = vsel %vm805, %v1521, %v1525
      %v1527 = vshrl.u32 %v1378, 16
      %v1529 = vrot.slane %v1527, 4
      %v1530 = vor.u32 %v1529, %v1525
      %v1531 = vrot.slane %v1530, 4
      %v1533 = vshll.u32 %v1405, 16
      %v1535 = vrot.slane %v1533, 5
      %v1536 = vsel %vm805, %v1531, %v1535
      %v1538 = vshrl.u32 %v1379, 16
      %v1540 = vrot.slane %v1538, 4
      %v1541 = vshll.u32 %v1379, 16
      %v1543 = vrot.slane %v1541, 5
      %v1544 = vor.u32 %v1540, %v1543
      %v1545 = vrot.slane %v1544, 4
      %v1547 = vshll.u32 %v1380, 16
      %v1549 = vrot.slane %v1547, 5
      %v1550 = vsel %vm805, %v1545, %v1549
      %v1551 = vshrl.u32 %v1380, 16
      %v1553 = vrot.slane %v1551, 4
      %v1554 = vor.u32 %v1553, %v1549
      %v1555 = vrot.slane %v1554, 4
      %v1557 = vshll.u32 %v1406, 16
      %v1559 = vrot.slane %v1557, 5
      %v1560 = vsel %vm805, %v1555, %v1559
      %v1562 = vshrl.u32 %v1381, 16
      %v1564 = vrot.slane %v1562, 4
      %v1565 = vshll.u32 %v1381, 16
      %v1567 = vrot.slane %v1565, 5
      %v1568 = vor.u32 %v1564, %v1567
      %v1569 = vrot.slane %v1568, 4
      %v1571 = vshll.u32 %v1382, 16
      %v1573 = vrot.slane %v1571, 5
      %v1574 = vsel %vm805, %v1569, %v1573
      %v1575 = vshrl.u32 %v1382, 16
      %v1577 = vrot.slane %v1575, 4
      %v1578 = vor.u32 %v1577, %v1573
      %v1579 = vrot.slane %v1578, 4
      %v1581 = vshll.u32 %v1407, 16
      %v1583 = vrot.slane %v1581, 5
      %v1584 = vsel %vm805, %v1579, %v1583
      %v1586 = vshrl.u32 %v1383, 16
      %v1588 = vrot.slane %v1586, 4
      %v1589 = vshll.u32 %v1383, 16
      %v1591 = vrot.slane %v1589, 5
      %v1592 = vor.u32 %v1588, %v1591
      %v1593 = vrot.slane %v1592, 4
      %v1595 = vshll.u32 %v1384, 16
      %v1597 = vrot.slane %v1595, 5
      %v1598 = vsel %vm805, %v1593, %v1597
      %v1599 = vshrl.u32 %v1384, 16
      %v1601 = vrot.slane %v1599, 4
      %v1602 = vor.u32 %v1601, %v1597
      %v1603 = vrot.slane %v1602, 4
      %v1605 = vshll.u32 %v1408, 16
      %v1607 = vrot.slane %v1605, 5
      %v1608 = vsel %vm805, %v1603, %v1607
      %v1610 = vshrl.u32 %v1385, 16
      %v1612 = vrot.slane %v1610, 4
      %v1613 = vshll.u32 %v1385, 16
      %v1615 = vrot.slane %v1613, 5
      %v1616 = vor.u32 %v1612, %v1615
      %v1617 = vrot.slane %v1616, 4
      %v1619 = vshll.u32 %v1386, 16
      %v1621 = vrot.slane %v1619, 5
      %v1622 = vsel %vm805, %v1617, %v1621
      %v1623 = vshrl.u32 %v1386, 16
      %v1625 = vrot.slane %v1623, 4
      %v1626 = vor.u32 %v1625, %v1621
      %v1627 = vrot.slane %v1626, 4
      %v1629 = vshll.u32 %v1409, 16
      %v1631 = vrot.slane %v1629, 5
      %v1632 = vsel %vm805, %v1627, %v1631
      %v1634 = vshrl.u32 %v1387, 16
      %v1636 = vrot.slane %v1634, 4
      %v1637 = vshll.u32 %v1387, 16
      %v1639 = vrot.slane %v1637, 5
      %v1640 = vor.u32 %v1636, %v1639
      %v1641 = vrot.slane %v1640, 4
      %v1643 = vshll.u32 %v1388, 16
      %v1645 = vrot.slane %v1643, 5
      %v1646 = vsel %vm805, %v1641, %v1645
      %v1647 = vshrl.u32 %v1388, 16
      %v1649 = vrot.slane %v1647, 4
      %v1650 = vor.u32 %v1649, %v1645
      %v1651 = vrot.slane %v1650, 4
      %v1653 = vshll.u32 %v1410, 16
      %v1655 = vrot.slane %v1653, 5
      %v1656 = vsel %vm805, %v1651, %v1655
      %v1658 = vshrl.u32 %v1389, 16
      %v1660 = vrot.slane %v1658, 4
      %v1661 = vshll.u32 %v1389, 16
      %v1663 = vrot.slane %v1661, 5
      %v1664 = vor.u32 %v1660, %v1663
      %v1665 = vrot.slane %v1664, 4
      %v1667 = vshll.u32 %v1390, 16
      %v1669 = vrot.slane %v1667, 5
      %v1670 = vsel %vm805, %v1665, %v1669
      %v1671 = vshrl.u32 %v1390, 16
      %v1673 = vrot.slane %v1671, 4
      %v1674 = vor.u32 %v1673, %v1669
      %v1675 = vrot.slane %v1674, 4
      %v1677 = vshll.u32 %v1411, 16
      %v1679 = vrot.slane %v1677, 5
      %v1680 = vsel %vm805, %v1675, %v1679
      %v1682 = vshrl.u32 %v1391, 16
      %v1684 = vrot.slane %v1682, 4
      %v1685 = vshll.u32 %v1391, 16
      %v1687 = vrot.slane %v1685, 5
      %v1688 = vor.u32 %v1684, %v1687
      %v1689 = vrot.slane %v1688, 4
      %v1691 = vshll.u32 %v1392, 16
      %v1693 = vrot.slane %v1691, 5
      %v1694 = vsel %vm805, %v1689, %v1693
      %v1695 = vshrl.u32 %v1392, 16
      %v1697 = vrot.slane %v1695, 4
      %v1698 = vor.u32 %v1697, %v1693
      %v1699 = vrot.slane %v1698, 4
      %v1701 = vshll.u32 %v1412, 16
      %v1703 = vrot.slane %v1701, 5
      %v1704 = vsel %vm805, %v1699, %v1703
      %v1706 = vshrl.u32 %v1393, 16
      %v1708 = vrot.slane %v1706, 4
      %v1709 = vshll.u32 %v1393, 16
      %v1711 = vrot.slane %v1709, 5
      %v1712 = vor.u32 %v1708, %v1711
      %v1713 = vrot.slane %v1712, 4
      %v1715 = vshll.u32 %v1394, 16
      %v1717 = vrot.slane %v1715, 5
      %v1718 = vsel %vm805, %v1713, %v1717
      %v1719 = vshrl.u32 %v1394, 16
      %v1721 = vrot.slane %v1719, 4
      %v1722 = vor.u32 %v1721, %v1717
      %v1723 = vrot.slane %v1722, 4
      %v1725 = vshll.u32 %v1413, 16
      %v1727 = vrot.slane %v1725, 5
      %v1728 = vsel %vm805, %v1723, %v1727
      %v1730 = vshrl.u32 %v1395, 16
      %v1732 = vrot.slane %v1730, 4
      %v1733 = vshll.u32 %v1395, 16
      %v1735 = vrot.slane %v1733, 5
      %v1736 = vor.u32 %v1732, %v1735
      %v1737 = vrot.slane %v1736, 4
      %v1739 = vshll.u32 %v1396, 16
      %v1741 = vrot.slane %v1739, 5
      %v1742 = vsel %vm805, %v1737, %v1741
      %v1743 = vshrl.u32 %v1396, 16
      %v1745 = vrot.slane %v1743, 4
      %v1746 = vor.u32 %v1745, %v1741
      %v1747 = vrot.slane %v1746, 4
      %v1749 = vshll.u32 %v1414, 16
      %v1751 = vrot.slane %v1749, 5
      %v1752 = vsel %vm805, %v1747, %v1751
      %v1754 = vshrl.u32 %v1397, 16
      %v1756 = vrot.slane %v1754, 4
      %v1757 = vshll.u32 %v1397, 16
      %v1759 = vrot.slane %v1757, 5
      %v1760 = vor.u32 %v1756, %v1759
      %v1761 = vrot.slane %v1760, 4
      %v1763 = vshll.u32 %v1398, 16
      %v1765 = vrot.slane %v1763, 5
      %v1766 = vsel %vm805, %v1761, %v1765
      %v1767 = vshrl.u32 %v1398, 16
      %v1769 = vrot.slane %v1767, 4
      %v1770 = vor.u32 %v1769, %v1765
      %v1771 = vrot.slane %v1770, 4
      %v1773 = vshll.u32 %v1415, 16
      %v1775 = vrot.slane %v1773, 5
      %v1776 = vsel %vm805, %v1771, %v1775
      %v1778 = vshrl.u32 %v1399, 16
      %v1780 = vrot.slane %v1778, 4
      %v1781 = vshll.u32 %v1399, 16
      %v1783 = vrot.slane %v1781, 5
      %v1784 = vor.u32 %v1780, %v1783
      %v1785 = vrot.slane %v1784, 4
      %v1787 = vshll.u32 %v1400, 16
      %v1789 = vrot.slane %v1787, 5
      %v1790 = vsel %vm805, %v1785, %v1789
      %v1791 = vshrl.u32 %v1400, 16
      %v1793 = vrot.slane %v1791, 4
      %v1794 = vor.u32 %v1793, %v1789
      %v1795 = vrot.slane %v1794, 4
      %v1797 = vshll.u32 %v1416, 16
      %v1799 = vrot.slane %v1797, 5
      %v1800 = vsel %vm805, %v1795, %v1799
      %v1801 = vld [vmem:[%s637] sm:$0xe]
      %v1802 = vld [vmem:[%s637 + $0xc] sm:$0xe]
      %v1803 = vld [vmem:[%s637 + $0x18] sm:$0xe]
      %v1804 = vld [vmem:[%s637 + $0x24] sm:$0xe]
      %v1805 = vld [vmem:[%s637 + $0x30] sm:$0xe]
      %v1806 = vld [vmem:[%s637 + $0x3c] sm:$0xe]
      %v1807 = vld [vmem:[%s637 + $0x48] sm:$0xe]
      %v1808 = vld [vmem:[%s637 + $0x54] sm:$0xe]
      %v1809 = vld [vmem:[%s637 + $0x60] sm:$0xe]
      %v1810 = vld [vmem:[%s637 + $0x6c] sm:$0xe]
      %v1811 = vld [vmem:[%s637 + $0x78] sm:$0xe]
      %v1812 = vld [vmem:[%s637 + $0x84] sm:$0xe]
      %v1813 = vld [vmem:[%s637 + $0x90] sm:$0xe]
      %v1814 = vld [vmem:[%s637 + $0x9c] sm:$0xe]
      %v1815 = vld [vmem:[%s637 + $0xa8] sm:$0xe]
      %v1816 = vld [vmem:[%s637 + $0xb4] sm:$0xe]
      %v1865 = vrot.slane %v1801, 5
      %v1866 = vrot.slane %v1865, 4
      %v1867 = vrot.slane %v1370, 5
      %v1868 = vsel %vm1256, %v1866, %v1867
      %v1869 = vrot.slane %v1867, 4
      %v1870 = vrot.slane %v1401, 5
      %v1871 = vsel %vm1256, %v1869, %v1870
      %v1872 = vrot.slane %v1802, 5
      %v1873 = vrot.slane %v1872, 4
      %v1874 = vrot.slane %v1372, 5
      %v1875 = vsel %vm1256, %v1873, %v1874
      %v1876 = vrot.slane %v1874, 4
      %v1877 = vrot.slane %v1402, 5
      %v1878 = vsel %vm1256, %v1876, %v1877
      %v1879 = vrot.slane %v1803, 5
      %v1880 = vrot.slane %v1879, 4
      %v1881 = vrot.slane %v1374, 5
      %v1882 = vsel %vm1256, %v1880, %v1881
      %v1883 = vrot.slane %v1881, 4
      %v1884 = vrot.slane %v1403, 5
      %v1885 = vsel %vm1256, %v1883, %v1884
      %v1886 = vrot.slane %v1804, 5
      %v1887 = vrot.slane %v1886, 4
      %v1888 = vrot.slane %v1376, 5
      %v1889 = vsel %vm1256, %v1887, %v1888
      %v1890 = vrot.slane %v1888, 4
      %v1891 = vrot.slane %v1404, 5
      %v1892 = vsel %vm1256, %v1890, %v1891
      %v1893 = vrot.slane %v1805, 5
      %v1894 = vrot.slane %v1893, 4
      %v1895 = vrot.slane %v1378, 5
      %v1896 = vsel %vm1256, %v1894, %v1895
      %v1897 = vrot.slane %v1895, 4
      %v1898 = vrot.slane %v1405, 5
      %v1899 = vsel %vm1256, %v1897, %v1898
      %v1900 = vrot.slane %v1806, 5
      %v1901 = vrot.slane %v1900, 4
      %v1902 = vrot.slane %v1380, 5
      %v1903 = vsel %vm1256, %v1901, %v1902
      %v1904 = vrot.slane %v1902, 4
      %v1905 = vrot.slane %v1406, 5
      %v1906 = vsel %vm1256, %v1904, %v1905
      %v1907 = vrot.slane %v1807, 5
      %v1908 = vrot.slane %v1907, 4
      %v1909 = vrot.slane %v1382, 5
      %v1910 = vsel %vm1256, %v1908, %v1909
      %v1911 = vrot.slane %v1909, 4
      %v1912 = vrot.slane %v1407, 5
      %v1913 = vsel %vm1256, %v1911, %v1912
      %v1914 = vrot.slane %v1808, 5
      %v1915 = vrot.slane %v1914, 4
      %v1916 = vrot.slane %v1384, 5
      %v1917 = vsel %vm1256, %v1915, %v1916
      %v1918 = vrot.slane %v1916, 4
      %v1919 = vrot.slane %v1408, 5
      %v1920 = vsel %vm1256, %v1918, %v1919
      %v1921 = vrot.slane %v1809, 5
      %v1922 = vrot.slane %v1921, 4
      %v1923 = vrot.slane %v1386, 5
      %v1924 = vsel %vm1256, %v1922, %v1923
      %v1925 = vrot.slane %v1923, 4
      %v1926 = vrot.slane %v1409, 5
      %v1927 = vsel %vm1256, %v1925, %v1926
      %v1928 = vrot.slane %v1810, 5
      %v1929 = vrot.slane %v1928, 4
      %v1930 = vrot.slane %v1388, 5
      %v1931 = vsel %vm1256, %v1929, %v1930
      %v1932 = vrot.slane %v1930, 4
      %v1933 = vrot.slane %v1410, 5
      %v1934 = vsel %vm1256, %v1932, %v1933
      %v1935 = vrot.slane %v1811, 5
      %v1936 = vrot.slane %v1935, 4
      %v1937 = vrot.slane %v1390, 5
      %v1938 = vsel %vm1256, %v1936, %v1937
      %v1939 = vrot.slane %v1937, 4
      %v1940 = vrot.slane %v1411, 5
      %v1941 = vsel %vm1256, %v1939, %v1940
      %v1942 = vrot.slane %v1812, 5
      %v1943 = vrot.slane %v1942, 4
      %v1944 = vrot.slane %v1392, 5
      %v1945 = vsel %vm1256, %v1943, %v1944
      %v1946 = vrot.slane %v1944, 4
      %v1947 = vrot.slane %v1412, 5
      %v1948 = vsel %vm1256, %v1946, %v1947
      %v1949 = vrot.slane %v1813, 5
      %v1950 = vrot.slane %v1949, 4
      %v1951 = vrot.slane %v1394, 5
      %v1952 = vsel %vm1256, %v1950, %v1951
      %v1953 = vrot.slane %v1951, 4
      %v1954 = vrot.slane %v1413, 5
      %v1955 = vsel %vm1256, %v1953, %v1954
      %v1956 = vrot.slane %v1814, 5
      %v1957 = vrot.slane %v1956, 4
      %v1958 = vrot.slane %v1396, 5
      %v1959 = vsel %vm1256, %v1957, %v1958
      %v1960 = vrot.slane %v1958, 4
      %v1961 = vrot.slane %v1414, 5
      %v1962 = vsel %vm1256, %v1960, %v1961
      %v1963 = vrot.slane %v1815, 5
      %v1964 = vrot.slane %v1963, 4
      %v1965 = vrot.slane %v1398, 5
      %v1966 = vsel %vm1256, %v1964, %v1965
      %v1967 = vrot.slane %v1965, 4
      %v1968 = vrot.slane %v1415, 5
      %v1969 = vsel %vm1256, %v1967, %v1968
      %v1970 = vrot.slane %v1816, 5
      %v1971 = vrot.slane %v1970, 4
      %v1972 = vrot.slane %v1400, 5
      %v1973 = vsel %vm1256, %v1971, %v1972
      %v1974 = vrot.slane %v1972, 4
      %v1975 = vrot.slane %v1416, 5
      %v1976 = vsel %vm1256, %v1974, %v1975
      %s1977 = scalar_lea.vmem [#allocation2], 24
      %v1978 = vld [vmem:[%s1977] sm:$0xf]
      %v1979 = vld [vmem:[%s1977 + $0x4] sm:$0xf]
      %v1980 = vld [vmem:[%s1977 + $0xc] sm:$0xf]
      %v1981 = vld [vmem:[%s1977 + $0x10] sm:$0xf]
      %v1982 = vld [vmem:[%s1977 + $0x18] sm:$0xf]
      %v1983 = vld [vmem:[%s1977 + $0x1c] sm:$0xf]
      %v1984 = vld [vmem:[%s1977 + $0x24] sm:$0xf]
      %v1985 = vld [vmem:[%s1977 + $0x28] sm:$0xf]
      %v1986 = vld [vmem:[%s1977 + $0x30] sm:$0xf]
      %v1987 = vld [vmem:[%s1977 + $0x34] sm:$0xf]
      %v1988 = vld [vmem:[%s1977 + $0x3c] sm:$0xf]
      %v1989 = vld [vmem:[%s1977 + $0x40] sm:$0xf]
      %v1990 = vld [vmem:[%s1977 + $0x48] sm:$0xf]
      %v1991 = vld [vmem:[%s1977 + $0x4c] sm:$0xf]
      %v1992 = vld [vmem:[%s1977 + $0x54] sm:$0xf]
      %v1993 = vld [vmem:[%s1977 + $0x58] sm:$0xf]
      %v1994 = vld [vmem:[%s1977 + $0x60] sm:$0xf]
      %v1995 = vld [vmem:[%s1977 + $0x64] sm:$0xf]
      %v1996 = vld [vmem:[%s1977 + $0x6c] sm:$0xf]
      %v1997 = vld [vmem:[%s1977 + $0x70] sm:$0xf]
      %v1998 = vld [vmem:[%s1977 + $0x78] sm:$0xf]
      %v1999 = vld [vmem:[%s1977 + $0x7c] sm:$0xf]
      %v2000 = vld [vmem:[%s1977 + $0x84] sm:$0xf]
      %v2001 = vld [vmem:[%s1977 + $0x88] sm:$0xf]
      %v2002 = vld [vmem:[%s1977 + $0x90] sm:$0xf]
      %v2003 = vld [vmem:[%s1977 + $0x94] sm:$0xf]
      %v2004 = vld [vmem:[%s1977 + $0x9c] sm:$0xf]
      %v2005 = vld [vmem:[%s1977 + $0xa0] sm:$0xf]
      %v2006 = vld [vmem:[%s1977 + $0xa8] sm:$0xf]
      %v2007 = vld [vmem:[%s1977 + $0xac] sm:$0xf]
      %v2008 = vld [vmem:[%s1977 + $0xb4] sm:$0xf]
      %v2009 = vld [vmem:[%s1977 + $0xb8] sm:$0xf]
      %v2010 = vld [vmem:[%s1977 + $0x8] sm:$0x1]
      %v2011 = vld [vmem:[%s1977 + $0x14] sm:$0x1]
      %v2012 = vld [vmem:[%s1977 + $0x20] sm:$0x1]
      %v2013 = vld [vmem:[%s1977 + $0x2c] sm:$0x1]
      %v2014 = vld [vmem:[%s1977 + $0x38] sm:$0x1]
      %v2015 = vld [vmem:[%s1977 + $0x44] sm:$0x1]
      %v2016 = vld [vmem:[%s1977 + $0x50] sm:$0x1]
      %v2017 = vld [vmem:[%s1977 + $0x5c] sm:$0x1]
      %v2018 = vld [vmem:[%s1977 + $0x68] sm:$0x1]
      %v2019 = vld [vmem:[%s1977 + $0x74] sm:$0x1]
      %v2020 = vld [vmem:[%s1977 + $0x80] sm:$0x1]
      %v2021 = vld [vmem:[%s1977 + $0x8c] sm:$0x1]
      %v2022 = vld [vmem:[%s1977 + $0x98] sm:$0x1]
      %v2023 = vld [vmem:[%s1977 + $0xa4] sm:$0x1]
      %v2024 = vld [vmem:[%s1977 + $0xb0] sm:$0x1]
      %v2025 = vld [vmem:[%s1977 + $0xbc] sm:$0x1]
      %v2027 = vshrl.u32 %v1978, 16
      %v2029 = vrot.slane %v2027, 4
      %v2030 = vshll.u32 %v1978, 16
      %v2032 = vrot.slane %v2030, 5
      %v2033 = vor.u32 %v2029, %v2032
      %v2034 = vrot.slane %v2033, 4
      %v2036 = vshll.u32 %v1979, 16
      %v2038 = vrot.slane %v2036, 5
      %v2039 = vsel %vm805, %v2034, %v2038
      %v2040 = vshrl.u32 %v1979, 16
      %v2042 = vrot.slane %v2040, 4
      %v2043 = vor.u32 %v2042, %v2038
      %v2044 = vrot.slane %v2043, 4
      %v2046 = vshll.u32 %v2010, 16
      %v2048 = vrot.slane %v2046, 5
      %v2049 = vsel %vm805, %v2044, %v2048
      %v2051 = vshrl.u32 %v1980, 16
      %v2053 = vrot.slane %v2051, 4
      %v2054 = vshll.u32 %v1980, 16
      %v2056 = vrot.slane %v2054, 5
      %v2057 = vor.u32 %v2053, %v2056
      %v2058 = vrot.slane %v2057, 4
      %v2060 = vshll.u32 %v1981, 16
      %v2062 = vrot.slane %v2060, 5
      %v2063 = vsel %vm805, %v2058, %v2062
      %v2064 = vshrl.u32 %v1981, 16
      %v2066 = vrot.slane %v2064, 4
      %v2067 = vor.u32 %v2066, %v2062
      %v2068 = vrot.slane %v2067, 4
      %v2070 = vshll.u32 %v2011, 16
      %v2072 = vrot.slane %v2070, 5
      %v2073 = vsel %vm805, %v2068, %v2072
      %v2075 = vshrl.u32 %v1982, 16
      %v2077 = vrot.slane %v2075, 4
      %v2078 = vshll.u32 %v1982, 16
      %v2080 = vrot.slane %v2078, 5
      %v2081 = vor.u32 %v2077, %v2080
      %v2082 = vrot.slane %v2081, 4
      %v2084 = vshll.u32 %v1983, 16
      %v2086 = vrot.slane %v2084, 5
      %v2087 = vsel %vm805, %v2082, %v2086
      %v2088 = vshrl.u32 %v1983, 16
      %v2090 = vrot.slane %v2088, 4
      %v2091 = vor.u32 %v2090, %v2086
      %v2092 = vrot.slane %v2091, 4
      %v2094 = vshll.u32 %v2012, 16
      %v2096 = vrot.slane %v2094, 5
      %v2097 = vsel %vm805, %v2092, %v2096
      %v2099 = vshrl.u32 %v1984, 16
      %v2101 = vrot.slane %v2099, 4
      %v2102 = vshll.u32 %v1984, 16
      %v2104 = vrot.slane %v2102, 5
      %v2105 = vor.u32 %v2101, %v2104
      %v2106 = vrot.slane %v2105, 4
      %v2108 = vshll.u32 %v1985, 16
      %v2110 = vrot.slane %v2108, 5
      %v2111 = vsel %vm805, %v2106, %v2110
      %v2112 = vshrl.u32 %v1985, 16
      %v2114 = vrot.slane %v2112, 4
      %v2115 = vor.u32 %v2114, %v2110
      %v2116 = vrot.slane %v2115, 4
      %v2118 = vshll.u32 %v2013, 16
      %v2120 = vrot.slane %v2118, 5
      %v2121 = vsel %vm805, %v2116, %v2120
      %v2123 = vshrl.u32 %v1986, 16
      %v2125 = vrot.slane %v2123, 4
      %v2126 = vshll.u32 %v1986, 16
      %v2128 = vrot.slane %v2126, 5
      %v2129 = vor.u32 %v2125, %v2128
      %v2130 = vrot.slane %v2129, 4
      %v2132 = vshll.u32 %v1987, 16
      %v2134 = vrot.slane %v2132, 5
      %v2135 = vsel %vm805, %v2130, %v2134
      %v2136 = vshrl.u32 %v1987, 16
      %v2138 = vrot.slane %v2136, 4
      %v2139 = vor.u32 %v2138, %v2134
      %v2140 = vrot.slane %v2139, 4
      %v2142 = vshll.u32 %v2014, 16
      %v2144 = vrot.slane %v2142, 5
      %v2145 = vsel %vm805, %v2140, %v2144
      %v2147 = vshrl.u32 %v1988, 16
      %v2149 = vrot.slane %v2147, 4
      %v2150 = vshll.u32 %v1988, 16
      %v2152 = vrot.slane %v2150, 5
      %v2153 = vor.u32 %v2149, %v2152
      %v2154 = vrot.slane %v2153, 4
      %v2156 = vshll.u32 %v1989, 16
      %v2158 = vrot.slane %v2156, 5
      %v2159 = vsel %vm805, %v2154, %v2158
      %v2160 = vshrl.u32 %v1989, 16
      %v2162 = vrot.slane %v2160, 4
      %v2163 = vor.u32 %v2162, %v2158
      %v2164 = vrot.slane %v2163, 4
      %v2166 = vshll.u32 %v2015, 16
      %v2168 = vrot.slane %v2166, 5
      %v2169 = vsel %vm805, %v2164, %v2168
      %v2171 = vshrl.u32 %v1990, 16
      %v2173 = vrot.slane %v2171, 4
      %v2174 = vshll.u32 %v1990, 16
      %v2176 = vrot.slane %v2174, 5
      %v2177 = vor.u32 %v2173, %v2176
      %v2178 = vrot.slane %v2177, 4
      %v2180 = vshll.u32 %v1991, 16
      %v2182 = vrot.slane %v2180, 5
      %v2183 = vsel %vm805, %v2178, %v2182
      %v2184 = vshrl.u32 %v1991, 16
      %v2186 = vrot.slane %v2184, 4
      %v2187 = vor.u32 %v2186, %v2182
      %v2188 = vrot.slane %v2187, 4
      %v2190 = vshll.u32 %v2016, 16
      %v2192 = vrot.slane %v2190, 5
      %v2193 = vsel %vm805, %v2188, %v2192
      %v2195 = vshrl.u32 %v1992, 16
      %v2197 = vrot.slane %v2195, 4
      %v2198 = vshll.u32 %v1992, 16
      %v2200 = vrot.slane %v2198, 5
      %v2201 = vor.u32 %v2197, %v2200
      %v2202 = vrot.slane %v2201, 4
      %v2204 = vshll.u32 %v1993, 16
      %v2206 = vrot.slane %v2204, 5
      %v2207 = vsel %vm805, %v2202, %v2206
      %v2208 = vshrl.u32 %v1993, 16
      %v2210 = vrot.slane %v2208, 4
      %v2211 = vor.u32 %v2210, %v2206
      %v2212 = vrot.slane %v2211, 4
      %v2214 = vshll.u32 %v2017, 16
      %v2216 = vrot.slane %v2214, 5
      %v2217 = vsel %vm805, %v2212, %v2216
      %v2219 = vshrl.u32 %v1994, 16
      %v2221 = vrot.slane %v2219, 4
      %v2222 = vshll.u32 %v1994, 16
      %v2224 = vrot.slane %v2222, 5
      %v2225 = vor.u32 %v2221, %v2224
      %v2226 = vrot.slane %v2225, 4
      %v2228 = vshll.u32 %v1995, 16
      %v2230 = vrot.slane %v2228, 5
      %v2231 = vsel %vm805, %v2226, %v2230
      %v2232 = vshrl.u32 %v1995, 16
      %v2234 = vrot.slane %v2232, 4
      %v2235 = vor.u32 %v2234, %v2230
      %v2236 = vrot.slane %v2235, 4
      %v2238 = vshll.u32 %v2018, 16
      %v2240 = vrot.slane %v2238, 5
      %v2241 = vsel %vm805, %v2236, %v2240
      %v2243 = vshrl.u32 %v1996, 16
      %v2245 = vrot.slane %v2243, 4
      %v2246 = vshll.u32 %v1996, 16
      %v2248 = vrot.slane %v2246, 5
      %v2249 = vor.u32 %v2245, %v2248
      %v2250 = vrot.slane %v2249, 4
      %v2252 = vshll.u32 %v1997, 16
      %v2254 = vrot.slane %v2252, 5
      %v2255 = vsel %vm805, %v2250, %v2254
      %v2256 = vshrl.u32 %v1997, 16
      %v2258 = vrot.slane %v2256, 4
      %v2259 = vor.u32 %v2258, %v2254
      %v2260 = vrot.slane %v2259, 4
      %v2262 = vshll.u32 %v2019, 16
      %v2264 = vrot.slane %v2262, 5
      %v2265 = vsel %vm805, %v2260, %v2264
      %v2267 = vshrl.u32 %v1998, 16
      %v2269 = vrot.slane %v2267, 4
      %v2270 = vshll.u32 %v1998, 16
      %v2272 = vrot.slane %v2270, 5
      %v2273 = vor.u32 %v2269, %v2272
      %v2274 = vrot.slane %v2273, 4
      %v2276 = vshll.u32 %v1999, 16
      %v2278 = vrot.slane %v2276, 5
      %v2279 = vsel %vm805, %v2274, %v2278
      %v2280 = vshrl.u32 %v1999, 16
      %v2282 = vrot.slane %v2280, 4
      %v2283 = vor.u32 %v2282, %v2278
      %v2284 = vrot.slane %v2283, 4
      %v2286 = vshll.u32 %v2020, 16
      %v2288 = vrot.slane %v2286, 5
      %v2289 = vsel %vm805, %v2284, %v2288
      %v2291 = vshrl.u32 %v2000, 16
      %v2293 = vrot.slane %v2291, 4
      %v2294 = vshll.u32 %v2000, 16
      %v2296 = vrot.slane %v2294, 5
      %v2297 = vor.u32 %v2293, %v2296
      %v2298 = vrot.slane %v2297, 4
      %v2300 = vshll.u32 %v2001, 16
      %v2302 = vrot.slane %v2300, 5
      %v2303 = vsel %vm805, %v2298, %v2302
      %v2304 = vshrl.u32 %v2001, 16
      %v2306 = vrot.slane %v2304, 4
      %v2307 = vor.u32 %v2306, %v2302
      %v2308 = vrot.slane %v2307, 4
      %v2310 = vshll.u32 %v2021, 16
      %v2312 = vrot.slane %v2310, 5
      %v2313 = vsel %vm805, %v2308, %v2312
      %v2315 = vshrl.u32 %v2002, 16
      %v2317 = vrot.slane %v2315, 4
      %v2318 = vshll.u32 %v2002, 16
      %v2320 = vrot.slane %v2318, 5
      %v2321 = vor.u32 %v2317, %v2320
      %v2322 = vrot.slane %v2321, 4
      %v2324 = vshll.u32 %v2003, 16
      %v2326 = vrot.slane %v2324, 5
      %v2327 = vsel %vm805, %v2322, %v2326
      %v2328 = vshrl.u32 %v2003, 16
      %v2330 = vrot.slane %v2328, 4
      %v2331 = vor.u32 %v2330, %v2326
      %v2332 = vrot.slane %v2331, 4
      %v2334 = vshll.u32 %v2022, 16
      %v2336 = vrot.slane %v2334, 5
      %v2337 = vsel %vm805, %v2332, %v2336
      %v2339 = vshrl.u32 %v2004, 16
      %v2341 = vrot.slane %v2339, 4
      %v2342 = vshll.u32 %v2004, 16
      %v2344 = vrot.slane %v2342, 5
      %v2345 = vor.u32 %v2341, %v2344
      %v2346 = vrot.slane %v2345, 4
      %v2348 = vshll.u32 %v2005, 16
      %v2350 = vrot.slane %v2348, 5
      %v2351 = vsel %vm805, %v2346, %v2350
      %v2352 = vshrl.u32 %v2005, 16
      %v2354 = vrot.slane %v2352, 4
      %v2355 = vor.u32 %v2354, %v2350
      %v2356 = vrot.slane %v2355, 4
      %v2358 = vshll.u32 %v2023, 16
      %v2360 = vrot.slane %v2358, 5
      %v2361 = vsel %vm805, %v2356, %v2360
      %v2363 = vshrl.u32 %v2006, 16
      %v2365 = vrot.slane %v2363, 4
      %v2366 = vshll.u32 %v2006, 16
      %v2368 = vrot.slane %v2366, 5
      %v2369 = vor.u32 %v2365, %v2368
      %v2370 = vrot.slane %v2369, 4
      %v2372 = vshll.u32 %v2007, 16
      %v2374 = vrot.slane %v2372, 5
      %v2375 = vsel %vm805, %v2370, %v2374
      %v2376 = vshrl.u32 %v2007, 16
      %v2378 = vrot.slane %v2376, 4
      %v2379 = vor.u32 %v2378, %v2374
      %v2380 = vrot.slane %v2379, 4
      %v2382 = vshll.u32 %v2024, 16
      %v2384 = vrot.slane %v2382, 5
      %v2385 = vsel %vm805, %v2380, %v2384
      %v2387 = vshrl.u32 %v2008, 16
      %v2389 = vrot.slane %v2387, 4
      %v2390 = vshll.u32 %v2008, 16
      %v2392 = vrot.slane %v2390, 5
      %v2393 = vor.u32 %v2389, %v2392
      %v2394 = vrot.slane %v2393, 4
      %v2396 = vshll.u32 %v2009, 16
      %v2398 = vrot.slane %v2396, 5
      %v2399 = vsel %vm805, %v2394, %v2398
      %v2400 = vshrl.u32 %v2009, 16
      %v2402 = vrot.slane %v2400, 4
      %v2403 = vor.u32 %v2402, %v2398
      %v2404 = vrot.slane %v2403, 4
      %v2406 = vshll.u32 %v2025, 16
      %v2408 = vrot.slane %v2406, 5
      %v2409 = vsel %vm805, %v2404, %v2408
      %v2410 = vld [vmem:[%s1977] sm:$0xe]
      %v2411 = vld [vmem:[%s1977 + $0xc] sm:$0xe]
      %v2412 = vld [vmem:[%s1977 + $0x18] sm:$0xe]
      %v2413 = vld [vmem:[%s1977 + $0x24] sm:$0xe]
      %v2414 = vld [vmem:[%s1977 + $0x30] sm:$0xe]
      %v2415 = vld [vmem:[%s1977 + $0x3c] sm:$0xe]
      %v2416 = vld [vmem:[%s1977 + $0x48] sm:$0xe]
      %v2417 = vld [vmem:[%s1977 + $0x54] sm:$0xe]
      %v2418 = vld [vmem:[%s1977 + $0x60] sm:$0xe]
      %v2419 = vld [vmem:[%s1977 + $0x6c] sm:$0xe]
      %v2420 = vld [vmem:[%s1977 + $0x78] sm:$0xe]
      %v2421 = vld [vmem:[%s1977 + $0x84] sm:$0xe]
      %v2422 = vld [vmem:[%s1977 + $0x90] sm:$0xe]
      %v2423 = vld [vmem:[%s1977 + $0x9c] sm:$0xe]
      %v2424 = vld [vmem:[%s1977 + $0xa8] sm:$0xe]
      %v2425 = vld [vmem:[%s1977 + $0xb4] sm:$0xe]
      %v2474 = vrot.slane %v2410, 5
      %v2475 = vrot.slane %v2474, 4
      %v2476 = vrot.slane %v1979, 5
      %v2477 = vsel %vm1256, %v2475, %v2476
      %v2478 = vrot.slane %v2476, 4
      %v2479 = vrot.slane %v2010, 5
      %v2480 = vsel %vm1256, %v2478, %v2479
      %v2481 = vrot.slane %v2411, 5
      %v2482 = vrot.slane %v2481, 4
      %v2483 = vrot.slane %v1981, 5
      %v2484 = vsel %vm1256, %v2482, %v2483
      %v2485 = vrot.slane %v2483, 4
      %v2486 = vrot.slane %v2011, 5
      %v2487 = vsel %vm1256, %v2485, %v2486
      %v2488 = vrot.slane %v2412, 5
      %v2489 = vrot.slane %v2488, 4
      %v2490 = vrot.slane %v1983, 5
      %v2491 = vsel %vm1256, %v2489, %v2490
      %v2492 = vrot.slane %v2490, 4
      %v2493 = vrot.slane %v2012, 5
      %v2494 = vsel %vm1256, %v2492, %v2493
      %v2495 = vrot.slane %v2413, 5
      %v2496 = vrot.slane %v2495, 4
      %v2497 = vrot.slane %v1985, 5
      %v2498 = vsel %vm1256, %v2496, %v2497
      %v2499 = vrot.slane %v2497, 4
      %v2500 = vrot.slane %v2013, 5
      %v2501 = vsel %vm1256, %v2499, %v2500
      %v2502 = vrot.slane %v2414, 5
      %v2503 = vrot.slane %v2502, 4
      %v2504 = vrot.slane %v1987, 5
      %v2505 = vsel %vm1256, %v2503, %v2504
      %v2506 = vrot.slane %v2504, 4
      %v2507 = vrot.slane %v2014, 5
      %v2508 = vsel %vm1256, %v2506, %v2507
      %v2509 = vrot.slane %v2415, 5
      %v2510 = vrot.slane %v2509, 4
      %v2511 = vrot.slane %v1989, 5
      %v2512 = vsel %vm1256, %v2510, %v2511
      %v2513 = vrot.slane %v2511, 4
      %v2514 = vrot.slane %v2015, 5
      %v2515 = vsel %vm1256, %v2513, %v2514
      %v2516 = vrot.slane %v2416, 5
      %v2517 = vrot.slane %v2516, 4
      %v2518 = vrot.slane %v1991, 5
      %v2519 = vsel %vm1256, %v2517, %v2518
      %v2520 = vrot.slane %v2518, 4
      %v2521 = vrot.slane %v2016, 5
      %v2522 = vsel %vm1256, %v2520, %v2521
      %v2523 = vrot.slane %v2417, 5
      %v2524 = vrot.slane %v2523, 4
      %v2525 = vrot.slane %v1993, 5
      %v2526 = vsel %vm1256, %v2524, %v2525
      %v2527 = vrot.slane %v2525, 4
      %v2528 = vrot.slane %v2017, 5
      %v2529 = vsel %vm1256, %v2527, %v2528
      %v2530 = vrot.slane %v2418, 5
      %v2531 = vrot.slane %v2530, 4
      %v2532 = vrot.slane %v1995, 5
      %v2533 = vsel %vm1256, %v2531, %v2532
      %v2534 = vrot.slane %v2532, 4
      %v2535 = vrot.slane %v2018, 5
      %v2536 = vsel %vm1256, %v2534, %v2535
      %v2537 = vrot.slane %v2419, 5
      %v2538 = vrot.slane %v2537, 4
      %v2539 = vrot.slane %v1997, 5
      %v2540 = vsel %vm1256, %v2538, %v2539
      %v2541 = vrot.slane %v2539, 4
      %v2542 = vrot.slane %v2019, 5
      %v2543 = vsel %vm1256, %v2541, %v2542
      %v2544 = vrot.slane %v2420, 5
      %v2545 = vrot.slane %v2544, 4
      %v2546 = vrot.slane %v1999, 5
      %v2547 = vsel %vm1256, %v2545, %v2546
      %v2548 = vrot.slane %v2546, 4
      %v2549 = vrot.slane %v2020, 5
      %v2550 = vsel %vm1256, %v2548, %v2549
      %v2551 = vrot.slane %v2421, 5
      %v2552 = vrot.slane %v2551, 4
      %v2553 = vrot.slane %v2001, 5
      %v2554 = vsel %vm1256, %v2552, %v2553
      %v2555 = vrot.slane %v2553, 4
      %v2556 = vrot.slane %v2021, 5
      %v2557 = vsel %vm1256, %v2555, %v2556
      %v2558 = vrot.slane %v2422, 5
      %v2559 = vrot.slane %v2558, 4
      %v2560 = vrot.slane %v2003, 5
      %v2561 = vsel %vm1256, %v2559, %v2560
      %v2562 = vrot.slane %v2560, 4
      %v2563 = vrot.slane %v2022, 5
      %v2564 = vsel %vm1256, %v2562, %v2563
      %v2565 = vrot.slane %v2423, 5
      %v2566 = vrot.slane %v2565, 4
      %v2567 = vrot.slane %v2005, 5
      %v2568 = vsel %vm1256, %v2566, %v2567
      %v2569 = vrot.slane %v2567, 4
      %v2570 = vrot.slane %v2023, 5
      %v2571 = vsel %vm1256, %v2569, %v2570
      %v2572 = vrot.slane %v2424, 5
      %v2573 = vrot.slane %v2572, 4
      %v2574 = vrot.slane %v2007, 5
      %v2575 = vsel %vm1256, %v2573, %v2574
      %v2576 = vrot.slane %v2574, 4
      %v2577 = vrot.slane %v2024, 5
      %v2578 = vsel %vm1256, %v2576, %v2577
      %v2579 = vrot.slane %v2425, 5
      %v2580 = vrot.slane %v2579, 4
      %v2581 = vrot.slane %v2009, 5
      %v2582 = vsel %vm1256, %v2580, %v2581
      %v2583 = vrot.slane %v2581, 4
      %v2584 = vrot.slane %v2025, 5
      %v2585 = vsel %vm1256, %v2583, %v2584
      %v2602 = vunpack.c.l.b16 %v755
      %v2603 = vunpack.c.l.b16 %v756
      %v2604 = vunpack.c.l.b16 %v757
      %v2605 = vunpack.c.l.b16 %v758
      %v2606 = vunpack.c.l.b16 %v759
      %v2607 = vunpack.c.l.b16 %v760
      %v2608 = vunpack.c.l.b16 %v761
      %v2609 = vunpack.c.l.b16 %v762
      %v2610 = vunpack.c.l.b16 %v763
      %v2611 = vunpack.c.l.b16 %v764
      %v2612 = vunpack.c.l.b16 %v765
      %v2613 = vunpack.c.l.b16 %v766
      %v2614 = vunpack.c.l.b16 %v767
      %v2615 = vunpack.c.l.b16 %v768
      %v2616 = vunpack.c.l.b16 %v769
      %v2617 = vunpack.c.l.b16 %v770
      %v2618 = vunpack.c.l.b16 %v771
      %v2619 = vunpack.c.l.b16 %v772
      %v2620 = vunpack.c.l.b16 %v773
      %v2621 = vunpack.c.l.b16 %v774
      %v2622 = vunpack.c.l.b16 %v775
      %v2623 = vunpack.c.l.b16 %v776
      %v2624 = vunpack.c.l.b16 %v777
      %v2625 = vunpack.c.l.b16 %v778
      %v2626 = vunpack.c.l.b16 %v779
      %v2627 = vunpack.c.l.b16 %v780
      %v2628 = vunpack.c.l.b16 %v781
      %v2629 = vunpack.c.l.b16 %v782
      %v2630 = vunpack.c.l.b16 %v783
      %v2631 = vunpack.c.l.b16 %v784
      %v2632 = vunpack.c.l.b16 %v785
      %v2633 = vunpack.c.l.b16 %v786
      %v2634 = vpack.c.b16 %v2603, %v2602
      %v2635 = vpack.c.b16 %v2605, %v2604
      %v2636 = vpack.c.b16 %v2607, %v2606
      %v2637 = vpack.c.b16 %v2609, %v2608
      %v2638 = vpack.c.b16 %v2611, %v2610
      %v2639 = vpack.c.b16 %v2613, %v2612
      %v2640 = vpack.c.b16 %v2615, %v2614
      %v2641 = vpack.c.b16 %v2617, %v2616
      %v2642 = vpack.c.b16 %v2619, %v2618
      %v2643 = vpack.c.b16 %v2621, %v2620
      %v2644 = vpack.c.b16 %v2623, %v2622
      %v2645 = vpack.c.b16 %v2625, %v2624
      %v2646 = vpack.c.b16 %v2627, %v2626
      %v2647 = vpack.c.b16 %v2629, %v2628
      %v2648 = vpack.c.b16 %v2631, %v2630
      %v2649 = vpack.c.b16 %v2633, %v2632
      %v2650 = vunpack.c.l.b16 %v819
      %v2651 = vunpack.c.l.b16 %v829
      %v2652 = vunpack.c.l.b16 %v843
      %v2653 = vunpack.c.l.b16 %v853
      %v2654 = vunpack.c.l.b16 %v867
      %v2655 = vunpack.c.l.b16 %v877
      %v2656 = vunpack.c.l.b16 %v891
      %v2657 = vunpack.c.l.b16 %v901
      %v2658 = vunpack.c.l.b16 %v915
      %v2659 = vunpack.c.l.b16 %v925
      %v2660 = vunpack.c.l.b16 %v939
      %v2661 = vunpack.c.l.b16 %v949
      %v2662 = vunpack.c.l.b16 %v963
      %v2663 = vunpack.c.l.b16 %v973
      %v2664 = vunpack.c.l.b16 %v987
      %v2665 = vunpack.c.l.b16 %v997
      %v2666 = vunpack.c.l.b16 %v1011
      %v2667 = vunpack.c.l.b16 %v1021
      %v2668 = vunpack.c.l.b16 %v1035
      %v2669 = vunpack.c.l.b16 %v1045
      %v2670 = vunpack.c.l.b16 %v1059
      %v2671 = vunpack.c.l.b16 %v1069
      %v2672 = vunpack.c.l.b16 %v1083
      %v2673 = vunpack.c.l.b16 %v1093
      %v2674 = vunpack.c.l.b16 %v1107
      %v2675 = vunpack.c.l.b16 %v1117
      %v2676 = vunpack.c.l.b16 %v1131
      %v2677 = vunpack.c.l.b16 %v1141
      %v2678 = vunpack.c.l.b16 %v1155
      %v2679 = vunpack.c.l.b16 %v1165
      %v2680 = vunpack.c.l.b16 %v1179
      %v2681 = vunpack.c.l.b16 %v1189
      %v2682 = vpack.c.b16 %v2651, %v2650
      %v2683 = vpack.c.b16 %v2653, %v2652
      %v2684 = vpack.c.b16 %v2655, %v2654
      %v2685 = vpack.c.b16 %v2657, %v2656
      %v2686 = vpack.c.b16 %v2659, %v2658
      %v2687 = vpack.c.b16 %v2661, %v2660
      %v2688 = vpack.c.b16 %v2663, %v2662
      %v2689 = vpack.c.b16 %v2665, %v2664
      %v2690 = vpack.c.b16 %v2667, %v2666
      %v2691 = vpack.c.b16 %v2669, %v2668
      %v2692 = vpack.c.b16 %v2671, %v2670
      %v2693 = vpack.c.b16 %v2673, %v2672
      %v2694 = vpack.c.b16 %v2675, %v2674
      %v2695 = vpack.c.b16 %v2677, %v2676
      %v2696 = vpack.c.b16 %v2679, %v2678
      %v2697 = vpack.c.b16 %v2681, %v2680
      %2698 = vrot.lane.b32.xlu0 %v2682, 16
      %v2699 = vpop.permute.xlu0 %2698
      %2700 = vrot.lane.b32.xlu0 %v2683, 16
      %v2701 = vpop.permute.xlu0 %2700
      %2702 = vrot.lane.b32.xlu0 %v2684, 16
      %v2703 = vpop.permute.xlu0 %2702
      %2704 = vrot.lane.b32.xlu0 %v2685, 16
      %v2705 = vpop.permute.xlu0 %2704
      %2706 = vrot.lane.b32.xlu0 %v2686, 16
      %v2707 = vpop.permute.xlu0 %2706
      %2708 = vrot.lane.b32.xlu0 %v2687, 16
      %v2709 = vpop.permute.xlu0 %2708
      %2710 = vrot.lane.b32.xlu0 %v2688, 16
      %v2711 = vpop.permute.xlu0 %2710
      %2712 = vrot.lane.b32.xlu0 %v2689, 16
      %v2713 = vpop.permute.xlu0 %2712
      %2714 = vrot.lane.b32.xlu0 %v2690, 16
      %v2715 = vpop.permute.xlu0 %2714
      %2716 = vrot.lane.b32.xlu0 %v2691, 16
      %v2717 = vpop.permute.xlu0 %2716
      %2718 = vrot.lane.b32.xlu0 %v2692, 16
      %v2719 = vpop.permute.xlu0 %2718
      %2720 = vrot.lane.b32.xlu0 %v2693, 16
      %v2721 = vpop.permute.xlu0 %2720
      %2722 = vrot.lane.b32.xlu0 %v2694, 16
      %v2723 = vpop.permute.xlu0 %2722
      %2724 = vrot.lane.b32.xlu0 %v2695, 16
      %v2725 = vpop.permute.xlu0 %2724
      %2726 = vrot.lane.b32.xlu0 %v2696, 16
      %v2727 = vpop.permute.xlu0 %2726
      %2728 = vrot.lane.b32.xlu0 %v2697, 16
      %v2729 = vpop.permute.xlu0 %2728
      %v2730 = vunpack.c.l.b16 %v1260
      %v2731 = vunpack.c.l.b16 %v1263
      %v2732 = vunpack.c.l.b16 %v1267
      %v2733 = vunpack.c.l.b16 %v1270
      %v2734 = vunpack.c.l.b16 %v1274
      %v2735 = vunpack.c.l.b16 %v1277
      %v2736 = vunpack.c.l.b16 %v1281
      %v2737 = vunpack.c.l.b16 %v1284
      %v2738 = vunpack.c.l.b16 %v1288
      %v2739 = vunpack.c.l.b16 %v1291
      %v2740 = vunpack.c.l.b16 %v1295
      %v2741 = vunpack.c.l.b16 %v1298
      %v2742 = vunpack.c.l.b16 %v1302
      %v2743 = vunpack.c.l.b16 %v1305
      %v2744 = vunpack.c.l.b16 %v1309
      %v2745 = vunpack.c.l.b16 %v1312
      %v2746 = vunpack.c.l.b16 %v1316
      %v2747 = vunpack.c.l.b16 %v1319
      %v2748 = vunpack.c.l.b16 %v1323
      %v2749 = vunpack.c.l.b16 %v1326
      %v2750 = vunpack.c.l.b16 %v1330
      %v2751 = vunpack.c.l.b16 %v1333
      %v2752 = vunpack.c.l.b16 %v1337
      %v2753 = vunpack.c.l.b16 %v1340
      %v2754 = vunpack.c.l.b16 %v1344
      %v2755 = vunpack.c.l.b16 %v1347
      %v2756 = vunpack.c.l.b16 %v1351
      %v2757 = vunpack.c.l.b16 %v1354
      %v2758 = vunpack.c.l.b16 %v1358
      %v2759 = vunpack.c.l.b16 %v1361
      %v2760 = vunpack.c.l.b16 %v1365
      %v2761 = vunpack.c.l.b16 %v1368
      %v2762 = vpack.c.b16 %v2731, %v2730
      %v2763 = vpack.c.b16 %v2733, %v2732
      %v2764 = vpack.c.b16 %v2735, %v2734
      %v2765 = vpack.c.b16 %v2737, %v2736
      %v2766 = vpack.c.b16 %v2739, %v2738
      %v2767 = vpack.c.b16 %v2741, %v2740
      %v2768 = vpack.c.b16 %v2743, %v2742
      %v2769 = vpack.c.b16 %v2745, %v2744
      %v2770 = vpack.c.b16 %v2747, %v2746
      %v2771 = vpack.c.b16 %v2749, %v2748
      %v2772 = vpack.c.b16 %v2751, %v2750
      %v2773 = vpack.c.b16 %v2753, %v2752
      %v2774 = vpack.c.b16 %v2755, %v2754
      %v2775 = vpack.c.b16 %v2757, %v2756
      %v2776 = vpack.c.b16 %v2759, %v2758
      %v2777 = vpack.c.b16 %v2761, %v2760
      %2778 = vrot.lane.b32.xlu0 %v2762, 32
      %v2779 = vpop.permute.xlu0 %2778
      %2780 = vrot.lane.b32.xlu0 %v2763, 32
      %v2781 = vpop.permute.xlu0 %2780
      %2782 = vrot.lane.b32.xlu0 %v2764, 32
      %v2783 = vpop.permute.xlu0 %2782
      %2784 = vrot.lane.b32.xlu0 %v2765, 32
      %v2785 = vpop.permute.xlu0 %2784
      %2786 = vrot.lane.b32.xlu0 %v2766, 32
      %v2787 = vpop.permute.xlu0 %2786
      %2788 = vrot.lane.b32.xlu0 %v2767, 32
      %v2789 = vpop.permute.xlu0 %2788
      %2790 = vrot.lane.b32.xlu0 %v2768, 32
      %v2791 = vpop.permute.xlu0 %2790
      %2792 = vrot.lane.b32.xlu0 %v2769, 32
      %v2793 = vpop.permute.xlu0 %2792
      %2794 = vrot.lane.b32.xlu0 %v2770, 32
      %v2795 = vpop.permute.xlu0 %2794
      %2796 = vrot.lane.b32.xlu0 %v2771, 32
      %v2797 = vpop.permute.xlu0 %2796
      %2798 = vrot.lane.b32.xlu0 %v2772, 32
      %v2799 = vpop.permute.xlu0 %2798
      %2800 = vrot.lane.b32.xlu0 %v2773, 32
      %v2801 = vpop.permute.xlu0 %2800
      %2802 = vrot.lane.b32.xlu0 %v2774, 32
      %v2803 = vpop.permute.xlu0 %2802
      %2804 = vrot.lane.b32.xlu0 %v2775, 32
      %v2805 = vpop.permute.xlu0 %2804
      %2806 = vrot.lane.b32.xlu0 %v2776, 32
      %v2807 = vpop.permute.xlu0 %2806
      %2808 = vrot.lane.b32.xlu0 %v2777, 32
      %v2809 = vpop.permute.xlu0 %2808
      %v2826 = vunpack.c.l.b16 %v1369
      %v2827 = vunpack.c.l.b16 %v1370
      %v2828 = vunpack.c.l.b16 %v1371
      %v2829 = vunpack.c.l.b16 %v1372
      %v2830 = vunpack.c.l.b16 %v1373
      %v2831 = vunpack.c.l.b16 %v1374
      %v2832 = vunpack.c.l.b16 %v1375
      %v2833 = vunpack.c.l.b16 %v1376
      %v2834 = vunpack.c.l.b16 %v1377
      %v2835 = vunpack.c.l.b16 %v1378
      %v2836 = vunpack.c.l.b16 %v1379
      %v2837 = vunpack.c.l.b16 %v1380
      %v2838 = vunpack.c.l.b16 %v1381
      %v2839 = vunpack.c.l.b16 %v1382
      %v2840 = vunpack.c.l.b16 %v1383
      %v2841 = vunpack.c.l.b16 %v1384
      %v2842 = vunpack.c.l.b16 %v1385
      %v2843 = vunpack.c.l.b16 %v1386
      %v2844 = vunpack.c.l.b16 %v1387
      %v2845 = vunpack.c.l.b16 %v1388
      %v2846 = vunpack.c.l.b16 %v1389
      %v2847 = vunpack.c.l.b16 %v1390
      %v2848 = vunpack.c.l.b16 %v1391
      %v2849 = vunpack.c.l.b16 %v1392
      %v2850 = vunpack.c.l.b16 %v1393
      %v2851 = vunpack.c.l.b16 %v1394
      %v2852 = vunpack.c.l.b16 %v1395
      %v2853 = vunpack.c.l.b16 %v1396
      %v2854 = vunpack.c.l.b16 %v1397
      %v2855 = vunpack.c.l.b16 %v1398
      %v2856 = vunpack.c.l.b16 %v1399
      %v2857 = vunpack.c.l.b16 %v1400
      %v2858 = vpack.c.b16 %v2827, %v2826
      %v2859 = vpack.c.b16 %v2829, %v2828
      %v2860 = vpack.c.b16 %v2831, %v2830
      %v2861 = vpack.c.b16 %v2833, %v2832
      %v2862 = vpack.c.b16 %v2835, %v2834
      %v2863 = vpack.c.b16 %v2837, %v2836
      %v2864 = vpack.c.b16 %v2839, %v2838
      %v2865 = vpack.c.b16 %v2841, %v2840
      %v2866 = vpack.c.b16 %v2843, %v2842
      %v2867 = vpack.c.b16 %v2845, %v2844
      %v2868 = vpack.c.b16 %v2847, %v2846
      %v2869 = vpack.c.b16 %v2849, %v2848
      %v2870 = vpack.c.b16 %v2851, %v2850
      %v2871 = vpack.c.b16 %v2853, %v2852
      %v2872 = vpack.c.b16 %v2855, %v2854
      %v2873 = vpack.c.b16 %v2857, %v2856
      %2874 = vrot.lane.b32.xlu0 %v2858, 48
      %v2875 = vpop.permute.xlu0 %2874
      %2876 = vrot.lane.b32.xlu0 %v2859, 48
      %v2877 = vpop.permute.xlu0 %2876
      %2878 = vrot.lane.b32.xlu0 %v2860, 48
      %v2879 = vpop.permute.xlu0 %2878
      %2880 = vrot.lane.b32.xlu0 %v2861, 48
      %v2881 = vpop.permute.xlu0 %2880
      %2882 = vrot.lane.b32.xlu0 %v2862, 48
      %v2883 = vpop.permute.xlu0 %2882
      %2884 = vrot.lane.b32.xlu0 %v2863, 48
      %v2885 = vpop.permute.xlu0 %2884
      %2886 = vrot.lane.b32.xlu0 %v2864, 48
      %v2887 = vpop.permute.xlu0 %2886
      %2888 = vrot.lane.b32.xlu0 %v2865, 48
      %v2889 = vpop.permute.xlu0 %2888
      %2890 = vrot.lane.b32.xlu0 %v2866, 48
      %v2891 = vpop.permute.xlu0 %2890
      %2892 = vrot.lane.b32.xlu0 %v2867, 48
      %v2893 = vpop.permute.xlu0 %2892
      %2894 = vrot.lane.b32.xlu0 %v2868, 48
      %v2895 = vpop.permute.xlu0 %2894
      %2896 = vrot.lane.b32.xlu0 %v2869, 48
      %v2897 = vpop.permute.xlu0 %2896
      %2898 = vrot.lane.b32.xlu0 %v2870, 48
      %v2899 = vpop.permute.xlu0 %2898
      %2900 = vrot.lane.b32.xlu0 %v2871, 48
      %v2901 = vpop.permute.xlu0 %2900
      %2902 = vrot.lane.b32.xlu0 %v2872, 48
      %v2903 = vpop.permute.xlu0 %2902
      %2904 = vrot.lane.b32.xlu0 %v2873, 48
      %v2905 = vpop.permute.xlu0 %2904
      %v2906 = vunpack.c.l.b16 %v1430
      %v2907 = vunpack.c.l.b16 %v1440
      %v2908 = vunpack.c.l.b16 %v1454
      %v2909 = vunpack.c.l.b16 %v1464
      %v2910 = vunpack.c.l.b16 %v1478
      %v2911 = vunpack.c.l.b16 %v1488
      %v2912 = vunpack.c.l.b16 %v1502
      %v2913 = vunpack.c.l.b16 %v1512
      %v2914 = vunpack.c.l.b16 %v1526
      %v2915 = vunpack.c.l.b16 %v1536
      %v2916 = vunpack.c.l.b16 %v1550
      %v2917 = vunpack.c.l.b16 %v1560
      %v2918 = vunpack.c.l.b16 %v1574
      %v2919 = vunpack.c.l.b16 %v1584
      %v2920 = vunpack.c.l.b16 %v1598
      %v2921 = vunpack.c.l.b16 %v1608
      %v2922 = vunpack.c.l.b16 %v1622
      %v2923 = vunpack.c.l.b16 %v1632
      %v2924 = vunpack.c.l.b16 %v1646
      %v2925 = vunpack.c.l.b16 %v1656
      %v2926 = vunpack.c.l.b16 %v1670
      %v2927 = vunpack.c.l.b16 %v1680
      %v2928 = vunpack.c.l.b16 %v1694
      %v2929 = vunpack.c.l.b16 %v1704
      %v2930 = vunpack.c.l.b16 %v1718
      %v2931 = vunpack.c.l.b16 %v1728
      %v2932 = vunpack.c.l.b16 %v1742
      %v2933 = vunpack.c.l.b16 %v1752
      %v2934 = vunpack.c.l.b16 %v1766
      %v2935 = vunpack.c.l.b16 %v1776
      %v2936 = vunpack.c.l.b16 %v1790
      %v2937 = vunpack.c.l.b16 %v1800
      %v2938 = vpack.c.b16 %v2907, %v2906
      %v2939 = vpack.c.b16 %v2909, %v2908
      %v2940 = vpack.c.b16 %v2911, %v2910
      %v2941 = vpack.c.b16 %v2913, %v2912
      %v2942 = vpack.c.b16 %v2915, %v2914
      %v2943 = vpack.c.b16 %v2917, %v2916
      %v2944 = vpack.c.b16 %v2919, %v2918
      %v2945 = vpack.c.b16 %v2921, %v2920
      %v2946 = vpack.c.b16 %v2923, %v2922
      %v2947 = vpack.c.b16 %v2925, %v2924
      %v2948 = vpack.c.b16 %v2927, %v2926
      %v2949 = vpack.c.b16 %v2929, %v2928
      %v2950 = vpack.c.b16 %v2931, %v2930
      %v2951 = vpack.c.b16 %v2933, %v2932
      %v2952 = vpack.c.b16 %v2935, %v2934
      %v2953 = vpack.c.b16 %v2937, %v2936
      %2954 = vrot.lane.b32.xlu0 %v2938, 64
      %v2955 = vpop.permute.xlu0 %2954
      %2956 = vrot.lane.b32.xlu0 %v2939, 64
      %v2957 = vpop.permute.xlu0 %2956
      %2958 = vrot.lane.b32.xlu0 %v2940, 64
      %v2959 = vpop.permute.xlu0 %2958
      %2960 = vrot.lane.b32.xlu0 %v2941, 64
      %v2961 = vpop.permute.xlu0 %2960
      %2962 = vrot.lane.b32.xlu0 %v2942, 64
      %v2963 = vpop.permute.xlu0 %2962
      %2964 = vrot.lane.b32.xlu0 %v2943, 64
      %v2965 = vpop.permute.xlu0 %2964
      %2966 = vrot.lane.b32.xlu0 %v2944, 64
      %v2967 = vpop.permute.xlu0 %2966
      %2968 = vrot.lane.b32.xlu0 %v2945, 64
      %v2969 = vpop.permute.xlu0 %2968
      %2970 = vrot.lane.b32.xlu0 %v2946, 64
      %v2971 = vpop.permute.xlu0 %2970
      %2972 = vrot.lane.b32.xlu0 %v2947, 64
      %v2973 = vpop.permute.xlu0 %2972
      %2974 = vrot.lane.b32.xlu0 %v2948, 64
      %v2975 = vpop.permute.xlu0 %2974
      %2976 = vrot.lane.b32.xlu0 %v2949, 64
      %v2977 = vpop.permute.xlu0 %2976
      %2978 = vrot.lane.b32.xlu0 %v2950, 64
      %v2979 = vpop.permute.xlu0 %2978
      %2980 = vrot.lane.b32.xlu0 %v2951, 64
      %v2981 = vpop.permute.xlu0 %2980
      %2982 = vrot.lane.b32.xlu0 %v2952, 64
      %v2983 = vpop.permute.xlu0 %2982
      %2984 = vrot.lane.b32.xlu0 %v2953, 64
      %v2985 = vpop.permute.xlu0 %2984
      %v2986 = vunpack.c.l.b16 %v1868
      %v2987 = vunpack.c.l.b16 %v1871
      %v2988 = vunpack.c.l.b16 %v1875
      %v2989 = vunpack.c.l.b16 %v1878
      %v2990 = vunpack.c.l.b16 %v1882
      %v2991 = vunpack.c.l.b16 %v1885
      %v2992 = vunpack.c.l.b16 %v1889
      %v2993 = vunpack.c.l.b16 %v1892
      %v2994 = vunpack.c.l.b16 %v1896
      %v2995 = vunpack.c.l.b16 %v1899
      %v2996 = vunpack.c.l.b16 %v1903
      %v2997 = vunpack.c.l.b16 %v1906
      %v2998 = vunpack.c.l.b16 %v1910
      %v2999 = vunpack.c.l.b16 %v1913
      %v3000 = vunpack.c.l.b16 %v1917
      %v3001 = vunpack.c.l.b16 %v1920
      %v3002 = vunpack.c.l.b16 %v1924
      %v3003 = vunpack.c.l.b16 %v1927
      %v3004 = vunpack.c.l.b16 %v1931
      %v3005 = vunpack.c.l.b16 %v1934
      %v3006 = vunpack.c.l.b16 %v1938
      %v3007 = vunpack.c.l.b16 %v1941
      %v3008 = vunpack.c.l.b16 %v1945
      %v3009 = vunpack.c.l.b16 %v1948
      %v3010 = vunpack.c.l.b16 %v1952
      %v3011 = vunpack.c.l.b16 %v1955
      %v3012 = vunpack.c.l.b16 %v1959
      %v3013 = vunpack.c.l.b16 %v1962
      %v3014 = vunpack.c.l.b16 %v1966
      %v3015 = vunpack.c.l.b16 %v1969
      %v3016 = vunpack.c.l.b16 %v1973
      %v3017 = vunpack.c.l.b16 %v1976
      %v3018 = vpack.c.b16 %v2987, %v2986
      %v3019 = vpack.c.b16 %v2989, %v2988
      %v3020 = vpack.c.b16 %v2991, %v2990
      %v3021 = vpack.c.b16 %v2993, %v2992
      %v3022 = vpack.c.b16 %v2995, %v2994
      %v3023 = vpack.c.b16 %v2997, %v2996
      %v3024 = vpack.c.b16 %v2999, %v2998
      %v3025 = vpack.c.b16 %v3001, %v3000
      %v3026 = vpack.c.b16 %v3003, %v3002
      %v3027 = vpack.c.b16 %v3005, %v3004
      %v3028 = vpack.c.b16 %v3007, %v3006
      %v3029 = vpack.c.b16 %v3009, %v3008
      %v3030 = vpack.c.b16 %v3011, %v3010
      %v3031 = vpack.c.b16 %v3013, %v3012
      %v3032 = vpack.c.b16 %v3015, %v3014
      %v3033 = vpack.c.b16 %v3017, %v3016
      %3034 = vrot.lane.b32.xlu0 %v3018, 80
      %v3035 = vpop.permute.xlu0 %3034
      %3036 = vrot.lane.b32.xlu0 %v3019, 80
      %v3037 = vpop.permute.xlu0 %3036
      %3038 = vrot.lane.b32.xlu0 %v3020, 80
      %v3039 = vpop.permute.xlu0 %3038
      %3040 = vrot.lane.b32.xlu0 %v3021, 80
      %v3041 = vpop.permute.xlu0 %3040
      %3042 = vrot.lane.b32.xlu0 %v3022, 80
      %v3043 = vpop.permute.xlu0 %3042
      %3044 = vrot.lane.b32.xlu0 %v3023, 80
      %v3045 = vpop.permute.xlu0 %3044
      %3046 = vrot.lane.b32.xlu0 %v3024, 80
      %v3047 = vpop.permute.xlu0 %3046
      %3048 = vrot.lane.b32.xlu0 %v3025, 80
      %v3049 = vpop.permute.xlu0 %3048
      %3050 = vrot.lane.b32.xlu0 %v3026, 80
      %v3051 = vpop.permute.xlu0 %3050
      %3052 = vrot.lane.b32.xlu0 %v3027, 80
      %v3053 = vpop.permute.xlu0 %3052
      %3054 = vrot.lane.b32.xlu0 %v3028, 80
      %v3055 = vpop.permute.xlu0 %3054
      %3056 = vrot.lane.b32.xlu0 %v3029, 80
      %v3057 = vpop.permute.xlu0 %3056
      %3058 = vrot.lane.b32.xlu0 %v3030, 80
      %v3059 = vpop.permute.xlu0 %3058
      %3060 = vrot.lane.b32.xlu0 %v3031, 80
      %v3061 = vpop.permute.xlu0 %3060
      %3062 = vrot.lane.b32.xlu0 %v3032, 80
      %v3063 = vpop.permute.xlu0 %3062
      %3064 = vrot.lane.b32.xlu0 %v3033, 80
      %v3065 = vpop.permute.xlu0 %3064
      %v3082 = vunpack.c.l.b16 %v1978
      %v3083 = vunpack.c.l.b16 %v1979
      %v3084 = vunpack.c.l.b16 %v1980
      %v3085 = vunpack.c.l.b16 %v1981
      %v3086 = vunpack.c.l.b16 %v1982
      %v3087 = vunpack.c.l.b16 %v1983
      %v3088 = vunpack.c.l.b16 %v1984
      %v3089 = vunpack.c.l.b16 %v1985
      %v3090 = vunpack.c.l.b16 %v1986
      %v3091 = vunpack.c.l.b16 %v1987
      %v3092 = vunpack.c.l.b16 %v1988
      %v3093 = vunpack.c.l.b16 %v1989
      %v3094 = vunpack.c.l.b16 %v1990
      %v3095 = vunpack.c.l.b16 %v1991
      %v3096 = vunpack.c.l.b16 %v1992
      %v3097 = vunpack.c.l.b16 %v1993
      %v3098 = vunpack.c.l.b16 %v1994
      %v3099 = vunpack.c.l.b16 %v1995
      %v3100 = vunpack.c.l.b16 %v1996
      %v3101 = vunpack.c.l.b16 %v1997
      %v3102 = vunpack.c.l.b16 %v1998
      %v3103 = vunpack.c.l.b16 %v1999
      %v3104 = vunpack.c.l.b16 %v2000
      %v3105 = vunpack.c.l.b16 %v2001
      %v3106 = vunpack.c.l.b16 %v2002
      %v3107 = vunpack.c.l.b16 %v2003
      %v3108 = vunpack.c.l.b16 %v2004
      %v3109 = vunpack.c.l.b16 %v2005
      %v3110 = vunpack.c.l.b16 %v2006
      %v3111 = vunpack.c.l.b16 %v2007
      %v3112 = vunpack.c.l.b16 %v2008
      %v3113 = vunpack.c.l.b16 %v2009
      %v3114 = vpack.c.b16 %v3083, %v3082
      %v3115 = vpack.c.b16 %v3085, %v3084
      %v3116 = vpack.c.b16 %v3087, %v3086
      %v3117 = vpack.c.b16 %v3089, %v3088
      %v3118 = vpack.c.b16 %v3091, %v3090
      %v3119 = vpack.c.b16 %v3093, %v3092
      %v3120 = vpack.c.b16 %v3095, %v3094
      %v3121 = vpack.c.b16 %v3097, %v3096
      %v3122 = vpack.c.b16 %v3099, %v3098
      %v3123 = vpack.c.b16 %v3101, %v3100
      %v3124 = vpack.c.b16 %v3103, %v3102
      %v3125 = vpack.c.b16 %v3105, %v3104
      %v3126 = vpack.c.b16 %v3107, %v3106
      %v3127 = vpack.c.b16 %v3109, %v3108
      %v3128 = vpack.c.b16 %v3111, %v3110
      %v3129 = vpack.c.b16 %v3113, %v3112
      %3130 = vrot.lane.b32.xlu0 %v3114, 96
      %v3131 = vpop.permute.xlu0 %3130
      %3132 = vrot.lane.b32.xlu0 %v3115, 96
      %v3133 = vpop.permute.xlu0 %3132
      %3134 = vrot.lane.b32.xlu0 %v3116, 96
      %v3135 = vpop.permute.xlu0 %3134
      %3136 = vrot.lane.b32.xlu0 %v3117, 96
      %v3137 = vpop.permute.xlu0 %3136
      %3138 = vrot.lane.b32.xlu0 %v3118, 96
      %v3139 = vpop.permute.xlu0 %3138
      %3140 = vrot.lane.b32.xlu0 %v3119, 96
      %v3141 = vpop.permute.xlu0 %3140
      %3142 = vrot.lane.b32.xlu0 %v3120, 96
      %v3143 = vpop.permute.xlu0 %3142
      %3144 = vrot.lane.b32.xlu0 %v3121, 96
      %v3145 = vpop.permute.xlu0 %3144
      %3146 = vrot.lane.b32.xlu0 %v3122, 96
      %v3147 = vpop.permute.xlu0 %3146
      %3148 = vrot.lane.b32.xlu0 %v3123, 96
      %v3149 = vpop.permute.xlu0 %3148
      %3150 = vrot.lane.b32.xlu0 %v3124, 96
      %v3151 = vpop.permute.xlu0 %3150
      %3152 = vrot.lane.b32.xlu0 %v3125, 96
      %v3153 = vpop.permute.xlu0 %3152
      %3154 = vrot.lane.b32.xlu0 %v3126, 96
      %v3155 = vpop.permute.xlu0 %3154
      %3156 = vrot.lane.b32.xlu0 %v3127, 96
      %v3157 = vpop.permute.xlu0 %3156
      %3158 = vrot.lane.b32.xlu0 %v3128, 96
      %v3159 = vpop.permute.xlu0 %3158
      %3160 = vrot.lane.b32.xlu0 %v3129, 96
      %v3161 = vpop.permute.xlu0 %3160
      %v3162 = vunpack.c.l.b16 %v2039
      %v3163 = vunpack.c.l.b16 %v2049
      %v3164 = vunpack.c.l.b16 %v2063
      %v3165 = vunpack.c.l.b16 %v2073
      %v3166 = vunpack.c.l.b16 %v2087
      %v3167 = vunpack.c.l.b16 %v2097
      %v3168 = vunpack.c.l.b16 %v2111
      %v3169 = vunpack.c.l.b16 %v2121
      %v3170 = vunpack.c.l.b16 %v2135
      %v3171 = vunpack.c.l.b16 %v2145
      %v3172 = vunpack.c.l.b16 %v2159
      %v3173 = vunpack.c.l.b16 %v2169
      %v3174 = vunpack.c.l.b16 %v2183
      %v3175 = vunpack.c.l.b16 %v2193
      %v3176 = vunpack.c.l.b16 %v2207
      %v3177 = vunpack.c.l.b16 %v2217
      %v3178 = vunpack.c.l.b16 %v2231
      %v3179 = vunpack.c.l.b16 %v2241
      %v3180 = vunpack.c.l.b16 %v2255
      %v3181 = vunpack.c.l.b16 %v2265
      %v3182 = vunpack.c.l.b16 %v2279
      %v3183 = vunpack.c.l.b16 %v2289
      %v3184 = vunpack.c.l.b16 %v2303
      %v3185 = vunpack.c.l.b16 %v2313
      %v3186 = vunpack.c.l.b16 %v2327
      %v3187 = vunpack.c.l.b16 %v2337
      %v3188 = vunpack.c.l.b16 %v2351
      %v3189 = vunpack.c.l.b16 %v2361
      %v3190 = vunpack.c.l.b16 %v2375
      %v3191 = vunpack.c.l.b16 %v2385
      %v3192 = vunpack.c.l.b16 %v2399
      %v3193 = vunpack.c.l.b16 %v2409
      %v3194 = vpack.c.b16 %v3163, %v3162
      %v3195 = vpack.c.b16 %v3165, %v3164
      %v3196 = vpack.c.b16 %v3167, %v3166
      %v3197 = vpack.c.b16 %v3169, %v3168
      %v3198 = vpack.c.b16 %v3171, %v3170
      %v3199 = vpack.c.b16 %v3173, %v3172
      %v3200 = vpack.c.b16 %v3175, %v3174
      %v3201 = vpack.c.b16 %v3177, %v3176
      %v3202 = vpack.c.b16 %v3179, %v3178
      %v3203 = vpack.c.b16 %v3181, %v3180
      %v3204 = vpack.c.b16 %v3183, %v3182
      %v3205 = vpack.c.b16 %v3185, %v3184
      %v3206 = vpack.c.b16 %v3187, %v3186
      %v3207 = vpack.c.b16 %v3189, %v3188
      %v3208 = vpack.c.b16 %v3191, %v3190
      %v3209 = vpack.c.b16 %v3193, %v3192
      %3210 = vrot.lane.b32.xlu0 %v3194, 112
      %v3211 = vpop.permute.xlu0 %3210
      %3212 = vrot.lane.b32.xlu0 %v3195, 112
      %v3213 = vpop.permute.xlu0 %3212
      %3214 = vrot.lane.b32.xlu0 %v3196, 112
      %v3215 = vpop.permute.xlu0 %3214
      %3216 = vrot.lane.b32.xlu0 %v3197, 112
      %v3217 = vpop.permute.xlu0 %3216
      %3218 = vrot.lane.b32.xlu0 %v3198, 112
      %v3219 = vpop.permute.xlu0 %3218
      %3220 = vrot.lane.b32.xlu0 %v3199, 112
      %v3221 = vpop.permute.xlu0 %3220
      %3222 = vrot.lane.b32.xlu0 %v3200, 112
      %v3223 = vpop.permute.xlu0 %3222
      %3224 = vrot.lane.b32.xlu0 %v3201, 112
      %v3225 = vpop.permute.xlu0 %3224
      %3226 = vrot.lane.b32.xlu0 %v3202, 112
      %v3227 = vpop.permute.xlu0 %3226
      %3228 = vrot.lane.b32.xlu0 %v3203, 112
      %v3229 = vpop.permute.xlu0 %3228
      %3230 = vrot.lane.b32.xlu0 %v3204, 112
      %v3231 = vpop.permute.xlu0 %3230
      %3232 = vrot.lane.b32.xlu0 %v3205, 112
      %v3233 = vpop.permute.xlu0 %3232
      %3234 = vrot.lane.b32.xlu0 %v3206, 112
      %v3235 = vpop.permute.xlu0 %3234
      %3236 = vrot.lane.b32.xlu0 %v3207, 112
      %v3237 = vpop.permute.xlu0 %3236
      %3238 = vrot.lane.b32.xlu0 %v3208, 112
      %v3239 = vpop.permute.xlu0 %3238
      %3240 = vrot.lane.b32.xlu0 %v3209, 112
      %v3241 = vpop.permute.xlu0 %3240
      %v3242 = vunpack.c.l.b16 %v2477
      %v3243 = vunpack.c.l.b16 %v2480
      %v3244 = vunpack.c.l.b16 %v2484
      %v3245 = vunpack.c.l.b16 %v2487
      %v3246 = vunpack.c.l.b16 %v2491
      %v3247 = vunpack.c.l.b16 %v2494
      %v3248 = vunpack.c.l.b16 %v2498
      %v3249 = vunpack.c.l.b16 %v2501
      %v3250 = vunpack.c.l.b16 %v2505
      %v3251 = vunpack.c.l.b16 %v2508
      %v3252 = vunpack.c.l.b16 %v2512
      %v3253 = vunpack.c.l.b16 %v2515
      %v3254 = vunpack.c.l.b16 %v2519
      %v3255 = vunpack.c.l.b16 %v2522
      %v3256 = vunpack.c.l.b16 %v2526
      %v3257 = vunpack.c.l.b16 %v2529
      %v3258 = vunpack.c.l.b16 %v2533
      %v3259 = vunpack.c.l.b16 %v2536
      %v3260 = vunpack.c.l.b16 %v2540
      %v3261 = vunpack.c.l.b16 %v2543
      %v3262 = vunpack.c.l.b16 %v2547
      %v3263 = vunpack.c.l.b16 %v2550
      %v3264 = vunpack.c.l.b16 %v2554
      %v3265 = vunpack.c.l.b16 %v2557
      %v3266 = vunpack.c.l.b16 %v2561
      %v3267 = vunpack.c.l.b16 %v2564
      %v3268 = vunpack.c.l.b16 %v2568
      %v3269 = vunpack.c.l.b16 %v2571
      %v3270 = vunpack.c.l.b16 %v2575
      %v3271 = vunpack.c.l.b16 %v2578
      %v3272 = vunpack.c.l.b16 %v2582
      %v3273 = vunpack.c.l.b16 %v2585
      %v3274 = vpack.c.b16 %v3243, %v3242
      %v3275 = vpack.c.b16 %v3245, %v3244
      %v3276 = vpack.c.b16 %v3247, %v3246
      %v3277 = vpack.c.b16 %v3249, %v3248
      %v3278 = vpack.c.b16 %v3251, %v3250
      %v3279 = vpack.c.b16 %v3253, %v3252
      %v3280 = vpack.c.b16 %v3255, %v3254
      %v3281 = vpack.c.b16 %v3257, %v3256
      %v3282 = vpack.c.b16 %v3259, %v3258
      %v3283 = vpack.c.b16 %v3261, %v3260
      %v3284 = vpack.c.b16 %v3263, %v3262
      %v3285 = vpack.c.b16 %v3265, %v3264
      %v3286 = vpack.c.b16 %v3267, %v3266
      %v3287 = vpack.c.b16 %v3269, %v3268
      %v3288 = vpack.c.b16 %v3271, %v3270
      %v3289 = vpack.c.b16 %v3273, %v3272
      %vm3290 = vcmask 130048
      %v3293 = vsel %vm3290, %v2634, %v2699
      %v3296 = vsel %vm3290, %v2635, %v2701
      %v3299 = vsel %vm3290, %v2636, %v2703
      %v3302 = vsel %vm3290, %v2637, %v2705
      %v3305 = vsel %vm3290, %v2638, %v2707
      %v3308 = vsel %vm3290, %v2639, %v2709
      %v3311 = vsel %vm3290, %v2640, %v2711
      %v3314 = vsel %vm3290, %v2641, %v2713
      %v3317 = vsel %vm3290, %v2642, %v2715
      %v3320 = vsel %vm3290, %v2643, %v2717
      %v3323 = vsel %vm3290, %v2644, %v2719
      %v3326 = vsel %vm3290, %v2645, %v2721
      %v3329 = vsel %vm3290, %v2646, %v2723
      %v3332 = vsel %vm3290, %v2647, %v2725
      %v3335 = vsel %vm3290, %v2648, %v2727
      %v3338 = vsel %vm3290, %v2649, %v2729
      %vm3339 = vcmask 261120
      %v3341 = vsel %vm3339, %v3293, %v2779
      %v3343 = vsel %vm3339, %v3296, %v2781
      %v3345 = vsel %vm3339, %v3299, %v2783
      %v3347 = vsel %vm3339, %v3302, %v2785
      %v3349 = vsel %vm3339, %v3305, %v2787
      %v3351 = vsel %vm3339, %v3308, %v2789
      %v3353 = vsel %vm3339, %v3311, %v2791
      %v3355 = vsel %vm3339, %v3314, %v2793
      %v3357 = vsel %vm3339, %v3317, %v2795
      %v3359 = vsel %vm3339, %v3320, %v2797
      %v3361 = vsel %vm3339, %v3323, %v2799
      %v3363 = vsel %vm3339, %v3326, %v2801
      %v3365 = vsel %vm3339, %v3329, %v2803
      %v3367 = vsel %vm3339, %v3332, %v2805
      %v3369 = vsel %vm3339, %v3335, %v2807
      %v3371 = vsel %vm3339, %v3338, %v2809
      %vm3372 = vcmask 392192
      %v3374 = vsel %vm3372, %v3341, %v2875
      %v3376 = vsel %vm3372, %v3343, %v2877
      %v3378 = vsel %vm3372, %v3345, %v2879
      %v3380 = vsel %vm3372, %v3347, %v2881
      %v3382 = vsel %vm3372, %v3349, %v2883
      %v3384 = vsel %vm3372, %v3351, %v2885
      %v3386 = vsel %vm3372, %v3353, %v2887
      %v3388 = vsel %vm3372, %v3355, %v2889
      %v3390 = vsel %vm3372, %v3357, %v2891
      %v3392 = vsel %vm3372, %v3359, %v2893
      %v3394 = vsel %vm3372, %v3361, %v2895
      %v3396 = vsel %vm3372, %v3363, %v2897
      %v3398 = vsel %vm3372, %v3365, %v2899
      %v3400 = vsel %vm3372, %v3367, %v2901
      %v3402 = vsel %vm3372, %v3369, %v2903
      %v3404 = vsel %vm3372, %v3371, %v2905
      %vm3405 = vcmask 523264
      %v3407 = vsel %vm3405, %v3374, %v2955
      %v3409 = vsel %vm3405, %v3376, %v2957
      %v3411 = vsel %vm3405, %v3378, %v2959
      %v3413 = vsel %vm3405, %v3380, %v2961
      %v3415 = vsel %vm3405, %v3382, %v2963
      %v3417 = vsel %vm3405, %v3384, %v2965
      %v3419 = vsel %vm3405, %v3386, %v2967
      %v3421 = vsel %vm3405, %v3388, %v2969
      %v3423 = vsel %vm3405, %v3390, %v2971
      %v3425 = vsel %vm3405, %v3392, %v2973
      %v3427 = vsel %vm3405, %v3394, %v2975
      %v3429 = vsel %vm3405, %v3396, %v2977
      %v3431 = vsel %vm3405, %v3398, %v2979
      %v3433 = vsel %vm3405, %v3400, %v2981
      %v3435 = vsel %vm3405, %v3402, %v2983
      %v3437 = vsel %vm3405, %v3404, %v2985
      %vm3438 = vcmask 654336
      %v3440 = vsel %vm3438, %v3407, %v3035
      %v3442 = vsel %vm3438, %v3409, %v3037
      %v3444 = vsel %vm3438, %v3411, %v3039
      %v3446 = vsel %vm3438, %v3413, %v3041
      %v3448 = vsel %vm3438, %v3415, %v3043
      %v3450 = vsel %vm3438, %v3417, %v3045
      %v3452 = vsel %vm3438, %v3419, %v3047
      %v3454 = vsel %vm3438, %v3421, %v3049
      %v3456 = vsel %vm3438, %v3423, %v3051
      %v3458 = vsel %vm3438, %v3425, %v3053
      %v3460 = vsel %vm3438, %v3427, %v3055
      %v3462 = vsel %vm3438, %v3429, %v3057
      %v3464 = vsel %vm3438, %v3431, %v3059
      %v3466 = vsel %vm3438, %v3433, %v3061
      %v3468 = vsel %vm3438, %v3435, %v3063
      %v3470 = vsel %vm3438, %v3437, %v3065
      %vm3471 = vcmask 785408
      %v3473 = vsel %vm3471, %v3440, %v3131
      %v3475 = vsel %vm3471, %v3442, %v3133
      %v3477 = vsel %vm3471, %v3444, %v3135
      %v3479 = vsel %vm3471, %v3446, %v3137
      %v3481 = vsel %vm3471, %v3448, %v3139
      %v3483 = vsel %vm3471, %v3450, %v3141
      %v3485 = vsel %vm3471, %v3452, %v3143
      %v3487 = vsel %vm3471, %v3454, %v3145
      %v3489 = vsel %vm3471, %v3456, %v3147
      %v3491 = vsel %vm3471, %v3458, %v3149
      %v3493 = vsel %vm3471, %v3460, %v3151
      %v3495 = vsel %vm3471, %v3462, %v3153
      %v3497 = vsel %vm3471, %v3464, %v3155
      %v3499 = vsel %vm3471, %v3466, %v3157
      %v3501 = vsel %vm3471, %v3468, %v3159
      %v3503 = vsel %vm3471, %v3470, %v3161
      %vm3504 = vcmask 916480
      %v3506 = vsel %vm3504, %v3473, %v3211
      %v3509 = vsel %vm3504, %v3475, %v3213
      %v3512 = vsel %vm3504, %v3477, %v3215
      %v3515 = vsel %vm3504, %v3479, %v3217
      %v3518 = vsel %vm3504, %v3481, %v3219
      %v3521 = vsel %vm3504, %v3483, %v3221
      %v3524 = vsel %vm3504, %v3485, %v3223
      %v3527 = vsel %vm3504, %v3487, %v3225
      %v3530 = vsel %vm3504, %v3489, %v3227
      %v3533 = vsel %vm3504, %v3491, %v3229
      %v3536 = vsel %vm3504, %v3493, %v3231
      %v3539 = vsel %vm3504, %v3495, %v3233
      %v3542 = vsel %vm3504, %v3497, %v3235
      %v3545 = vsel %vm3504, %v3499, %v3237
      %v3548 = vsel %vm3504, %v3501, %v3239
      %v3551 = vsel %vm3504, %v3503, %v3241
      %v3553 = vld [vmem:[%s1] sm:$0xf]
      %v3554 = vld [vmem:[%s1 + $0x4] sm:$0xf]
      %v3555 = vld [vmem:[%s1 + $0x8] sm:$0xf]
      %v3556 = vld [vmem:[%s1 + $0xc] sm:$0xf]
      %v3557 = vld [vmem:[%s1 + $0x10] sm:$0xf]
      %v3558 = vld [vmem:[%s1 + $0x14] sm:$0xf]
      %v3559 = vld [vmem:[%s1 + $0x18] sm:$0xf]
      %v3560 = vld [vmem:[%s1 + $0x1c] sm:$0xf]
      %v3561 = vld [vmem:[%s1 + $0x20] sm:$0xf]
      %v3562 = vld [vmem:[%s1 + $0x24] sm:$0xf]
      %v3563 = vld [vmem:[%s1 + $0x28] sm:$0xf]
      %v3564 = vld [vmem:[%s1 + $0x2c] sm:$0xf]
      %v3565 = vld [vmem:[%s1 + $0x30] sm:$0xf]
      %v3566 = vld [vmem:[%s1 + $0x34] sm:$0xf]
      %v3567 = vld [vmem:[%s1 + $0x38] sm:$0xf]
      %v3568 = vld [vmem:[%s1 + $0x3c] sm:$0xf]
      %v3569 = vld [vmem:[%s1 + $0x40] sm:$0xf]
      %v3570 = vld [vmem:[%s1 + $0x44] sm:$0xf]
      %v3571 = vld [vmem:[%s2] sm:$0x1]
      %v3573 = vperm.slane %v3571, 0
      %v3593 = vunpack.c.l.b16 %v3553
      %v3594 = vunpack.c.l.b16 %v3554
      %v3595 = vunpack.c.l.b16 %v3555
      %v3596 = vunpack.c.l.b16 %v3556
      %v3597 = vunpack.c.l.b16 %v3557
      %v3598 = vunpack.c.l.b16 %v3558
      %v3599 = vunpack.c.l.b16 %v3559
      %v3600 = vunpack.c.l.b16 %v3560
      %v3601 = vunpack.c.l.b16 %v3561
      %v3602 = vunpack.c.l.b16 %v3562
      %v3603 = vunpack.c.l.b16 %v3563
      %v3604 = vunpack.c.l.b16 %v3564
      %v3605 = vunpack.c.l.b16 %v3565
      %v3606 = vunpack.c.l.b16 %v3566
      %v3607 = vunpack.c.l.b16 %v3567
      %v3608 = vunpack.c.l.b16 %v3568
      %v3609 = vunpack.c.l.b16 %v3569
      %v3610 = vunpack.c.l.b16 %v3570
      %v3611 = vpack.c.b16 %v3594, %v3593
      %v3612 = vpack.c.b16 %v3596, %v3595
      %v3613 = vpack.c.b16 %v3598, %v3597
      %v3614 = vpack.c.b16 %v3600, %v3599
      %v3615 = vpack.c.b16 %v3602, %v3601
      %v3616 = vpack.c.b16 %v3604, %v3603
      %v3617 = vpack.c.b16 %v3606, %v3605
      %v3618 = vpack.c.b16 %v3608, %v3607
      %v3619 = vpack.c.b16 %v3610, %v3609
      %v3630 = vsel %vm3290, %v3274, 0
      %v3633 = vsel %vm3290, %v3275, 0
      %v3636 = vsel %vm3290, %v3276, 0
      %v3639 = vsel %vm3290, %v3277, 0
      %v3642 = vsel %vm3290, %v3278, 0
      %v3645 = vsel %vm3290, %v3279, 0
      %v3648 = vsel %vm3290, %v3280, 0
      %v3651 = vsel %vm3290, %v3281, 0
      %v3654 = vsel %vm3290, %v3282, 0
      %v3657 = vsel %vm3290, %v3283, 0
      %v3660 = vsel %vm3290, %v3284, 0
      %v3663 = vsel %vm3290, %v3285, 0
      %v3666 = vsel %vm3290, %v3286, 0
      %v3669 = vsel %vm3290, %v3287, 0
      %v3672 = vsel %vm3290, %v3288, 0
      %v3675 = vsel %vm3290, %v3289, 0
      %3677 = vmatpush.bf16.msra.mxu0 %v3618
      %3678 = vmatpush.bf16.msra.mxu0 %v3617
      %3679 = vmatpush.bf16.msra.mxu0 %v3616
      %3680 = vmatpush.bf16.msra.mxu0 %v3615
      %3681 = vmatpush.bf16.msra.mxu0 %v3614
      %3682 = vmatpush.bf16.msra.mxu0 %v3613
      %3683 = vmatpush.bf16.msra.mxu0 %v3612
      %3684 = vmatpush.bf16.msra.mxu0 %v3611
      %3685 = vmatmul.bf16.gmra.mxu0 %v3506
      %v3686 = vpop.f32.mrf.mxu0
      %v3687 = vadd.f32 %v3573, %v3686
      %v3688 = vpop.f32.mrf.mxu0
      %v3689 = vadd.f32 %v3573, %v3688
      %3690 = vmatmul.bf16.gmra.mxu0 %v3509
      %v3691 = vpop.f32.mrf.mxu0
      %v3692 = vadd.f32 %v3573, %v3691
      %v3693 = vpop.f32.mrf.mxu0
      %v3694 = vadd.f32 %v3573, %v3693
      %3695 = vmatmul.bf16.gmra.mxu0 %v3512
      %v3696 = vpop.f32.mrf.mxu0
      %v3697 = vadd.f32 %v3573, %v3696
      %v3698 = vpop.f32.mrf.mxu0
      %v3699 = vadd.f32 %v3573, %v3698
      %3700 = vmatmul.bf16.gmra.mxu0 %v3515
      %v3701 = vpop.f32.mrf.mxu0
      %v3702 = vadd.f32 %v3573, %v3701
      %v3703 = vpop.f32.mrf.mxu0
      %v3704 = vadd.f32 %v3573, %v3703
      %3705 = vmatmul.bf16.gmra.mxu0 %v3518
      %v3706 = vpop.f32.mrf.mxu0
      %v3707 = vadd.f32 %v3573, %v3706
      %v3708 = vpop.f32.mrf.mxu0
      %v3709 = vadd.f32 %v3573, %v3708
      %3710 = vmatmul.bf16.gmra.mxu0 %v3521
      %v3711 = vpop.f32.mrf.mxu0
      %v3712 = vadd.f32 %v3573, %v3711
      %v3713 = vpop.f32.mrf.mxu0
      %v3714 = vadd.f32 %v3573, %v3713
      %3715 = vmatmul.bf16.gmra.mxu0 %v3524
      %v3716 = vpop.f32.mrf.mxu0
      %v3717 = vadd.f32 %v3573, %v3716
      %v3718 = vpop.f32.mrf.mxu0
      %v3719 = vadd.f32 %v3573, %v3718
      %3720 = vmatmul.bf16.gmra.mxu0 %v3527
      %v3721 = vpop.f32.mrf.mxu0
      %v3722 = vadd.f32 %v3573, %v3721
      %v3723 = vpop.f32.mrf.mxu0
      %v3724 = vadd.f32 %v3573, %v3723
      %3725 = vmatmul.bf16.gmra.mxu0 %v3530
      %v3726 = vpop.f32.mrf.mxu0
      %v3727 = vadd.f32 %v3573, %v3726
      %v3728 = vpop.f32.mrf.mxu0
      %v3729 = vadd.f32 %v3573, %v3728
      %3730 = vmatmul.bf16.gmra.mxu0 %v3533
      %v3731 = vpop.f32.mrf.mxu0
      %v3732 = vadd.f32 %v3573, %v3731
      %v3733 = vpop.f32.mrf.mxu0
      %v3734 = vadd.f32 %v3573, %v3733
      %3735 = vmatmul.bf16.gmra.mxu0 %v3536
      %v3736 = vpop.f32.mrf.mxu0
      %v3737 = vadd.f32 %v3573, %v3736
      %v3738 = vpop.f32.mrf.mxu0
      %v3739 = vadd.f32 %v3573, %v3738
      %3740 = vmatmul.bf16.gmra.mxu0 %v3539
      %v3741 = vpop.f32.mrf.mxu0
      %v3742 = vadd.f32 %v3573, %v3741
      %v3743 = vpop.f32.mrf.mxu0
      %v3744 = vadd.f32 %v3573, %v3743
      %3745 = vmatmul.bf16.gmra.mxu0 %v3542
      %v3746 = vpop.f32.mrf.mxu0
      %v3747 = vadd.f32 %v3573, %v3746
      %v3748 = vpop.f32.mrf.mxu0
      %v3749 = vadd.f32 %v3573, %v3748
      %3750 = vmatmul.bf16.gmra.mxu0 %v3545
      %v3751 = vpop.f32.mrf.mxu0
      %v3752 = vadd.f32 %v3573, %v3751
      %v3753 = vpop.f32.mrf.mxu0
      %v3754 = vadd.f32 %v3573, %v3753
      %3755 = vmatmul.bf16.gmra.mxu0 %v3548
      %v3756 = vpop.f32.mrf.mxu0
      %v3757 = vadd.f32 %v3573, %v3756
      %v3758 = vpop.f32.mrf.mxu0
      %v3759 = vadd.f32 %v3573, %v3758
      %3760 = vmatmul.bf16.gmra.mxu0 %v3551
      %v3761 = vpop.f32.mrf.mxu0
      %v3762 = vadd.f32 %v3573, %v3761
      %v3763 = vpop.f32.mrf.mxu0
      %v3764 = vadd.f32 %v3573, %v3763
      %3765 = vdwg.mxu0
      %3766 = vmatpush.bf16.msra.mxu0 0
      %3767 = vmatpush.bf16.msra.mxu0 0
      %3768 = vmatpush.bf16.msra.mxu0 0
      %3769 = vmatpush.bf16.msra.mxu0 0
      %3770 = vmatpush.bf16.msra.mxu0 0
      %3771 = vmatpush.bf16.msra.mxu0 0
      %3772 = vmatpush.bf16.msra.mxu0 0
      %3773 = vmatpush.bf16.msra.mxu0 %v3619
      %3774 = vmatmul.bf16.gmra.mxu0 %v3630
      %v3775 = vpop.f32.mrf.mxu0
      %v3776 = vadd.f32 %v3687, %v3775
      %v3777 = vpop.f32.mrf.mxu0
      %v3778 = vadd.f32 %v3689, %v3777
      %3779 = vmatmul.bf16.gmra.mxu0 %v3633
      %v3780 = vpop.f32.mrf.mxu0
      %v3781 = vadd.f32 %v3692, %v3780
      %v3782 = vpop.f32.mrf.mxu0
      %v3783 = vadd.f32 %v3694, %v3782
      %3784 = vmatmul.bf16.gmra.mxu0 %v3636
      %v3785 = vpop.f32.mrf.mxu0
      %v3786 = vadd.f32 %v3697, %v3785
      %v3787 = vpop.f32.mrf.mxu0
      %v3788 = vadd.f32 %v3699, %v3787
      %3789 = vmatmul.bf16.gmra.mxu0 %v3639
      %v3790 = vpop.f32.mrf.mxu0
      %v3791 = vadd.f32 %v3702, %v3790
      %v3792 = vpop.f32.mrf.mxu0
      %v3793 = vadd.f32 %v3704, %v3792
      %3794 = vmatmul.bf16.gmra.mxu0 %v3642
      %v3795 = vpop.f32.mrf.mxu0
      %v3796 = vadd.f32 %v3707, %v3795
      %v3797 = vpop.f32.mrf.mxu0
      %v3798 = vadd.f32 %v3709, %v3797
      %3799 = vmatmul.bf16.gmra.mxu0 %v3645
      %v3800 = vpop.f32.mrf.mxu0
      %v3801 = vadd.f32 %v3712, %v3800
      %v3802 = vpop.f32.mrf.mxu0
      %v3803 = vadd.f32 %v3714, %v3802
      %3804 = vmatmul.bf16.gmra.mxu0 %v3648
      %v3805 = vpop.f32.mrf.mxu0
      %v3806 = vadd.f32 %v3717, %v3805
      %v3807 = vpop.f32.mrf.mxu0
      %v3808 = vadd.f32 %v3719, %v3807
      %3809 = vmatmul.bf16.gmra.mxu0 %v3651
      %v3810 = vpop.f32.mrf.mxu0
      %v3811 = vadd.f32 %v3722, %v3810
      %v3812 = vpop.f32.mrf.mxu0
      %v3813 = vadd.f32 %v3724, %v3812
      %3814 = vmatmul.bf16.gmra.mxu0 %v3654
      %v3815 = vpop.f32.mrf.mxu0
      %v3816 = vadd.f32 %v3727, %v3815
      %v3817 = vpop.f32.mrf.mxu0
      %v3818 = vadd.f32 %v3729, %v3817
      %3819 = vmatmul.bf16.gmra.mxu0 %v3657
      %v3820 = vpop.f32.mrf.mxu0
      %v3821 = vadd.f32 %v3732, %v3820
      %v3822 = vpop.f32.mrf.mxu0
      %v3823 = vadd.f32 %v3734, %v3822
      %3824 = vmatmul.bf16.gmra.mxu0 %v3660
      %v3825 = vpop.f32.mrf.mxu0
      %v3826 = vadd.f32 %v3737, %v3825
      %v3827 = vpop.f32.mrf.mxu0
      %v3828 = vadd.f32 %v3739, %v3827
      %3829 = vmatmul.bf16.gmra.mxu0 %v3663
      %v3830 = vpop.f32.mrf.mxu0
      %v3831 = vadd.f32 %v3742, %v3830
      %v3832 = vpop.f32.mrf.mxu0
      %v3833 = vadd.f32 %v3744, %v3832
      %3834 = vmatmul.bf16.gmra.mxu0 %v3666
      %v3835 = vpop.f32.mrf.mxu0
      %v3836 = vadd.f32 %v3747, %v3835
      %v3837 = vpop.f32.mrf.mxu0
      %v3838 = vadd.f32 %v3749, %v3837
      %3839 = vmatmul.bf16.gmra.mxu0 %v3669
      %v3840 = vpop.f32.mrf.mxu0
      %v3841 = vadd.f32 %v3752, %v3840
      %v3842 = vpop.f32.mrf.mxu0
      %v3843 = vadd.f32 %v3754, %v3842
      %3844 = vmatmul.bf16.gmra.mxu0 %v3672
      %v3845 = vpop.f32.mrf.mxu0
      %v3846 = vadd.f32 %v3757, %v3845
      %v3847 = vpop.f32.mrf.mxu0
      %v3848 = vadd.f32 %v3759, %v3847
      %3849 = vmatmul.bf16.gmra.mxu0 %v3675
      %v3850 = vpop.f32.mrf.mxu0
      %v3851 = vadd.f32 %v3762, %v3850
      %v3852 = vpop.f32.mrf.mxu0
      %v3853 = vadd.f32 %v3764, %v3852
      %3854 = vdwg.mxu0
      %v3855 = vmax.f32 %v3776, 0.0
      %v3856 = vmax.f32 %v3778, 0.0
      %v3857 = vmax.f32 %v3781, 0.0
      %v3858 = vmax.f32 %v3783, 0.0
      %v3859 = vmax.f32 %v3786, 0.0
      %v3860 = vmax.f32 %v3788, 0.0
      %v3861 = vmax.f32 %v3791, 0.0
      %v3862 = vmax.f32 %v3793, 0.0
      %v3863 = vmax.f32 %v3796, 0.0
      %v3864 = vmax.f32 %v3798, 0.0
      %v3865 = vmax.f32 %v3801, 0.0
      %v3866 = vmax.f32 %v3803, 0.0
      %v3867 = vmax.f32 %v3806, 0.0
      %v3868 = vmax.f32 %v3808, 0.0
      %v3869 = vmax.f32 %v3811, 0.0
      %v3870 = vmax.f32 %v3813, 0.0
      %v3871 = vmax.f32 %v3816, 0.0
      %v3872 = vmax.f32 %v3818, 0.0
      %v3873 = vmax.f32 %v3821, 0.0
      %v3874 = vmax.f32 %v3823, 0.0
      %v3875 = vmax.f32 %v3826, 0.0
      %v3876 = vmax.f32 %v3828, 0.0
      %v3877 = vmax.f32 %v3831, 0.0
      %v3878 = vmax.f32 %v3833, 0.0
      %v3879 = vmax.f32 %v3836, 0.0
      %v3880 = vmax.f32 %v3838, 0.0
      %v3881 = vmax.f32 %v3841, 0.0
      %v3882 = vmax.f32 %v3843, 0.0
      %v3883 = vmax.f32 %v3846, 0.0
      %v3884 = vmax.f32 %v3848, 0.0
      %v3885 = vmax.f32 %v3851, 0.0
      %v3886 = vmax.f32 %v3853, 0.0
      %3887 = vst [vmem:[#allocation3] sm:$0xf] 0
      %3888 = vst [vmem:[#allocation3 + $0x4] sm:$0xf] 0
      %3889 = vst [vmem:[#allocation3 + $0x8] sm:$0x1] 0
      %3890 = vst [vmem:[#allocation3 + $0xc] sm:$0xf] 0
      %3891 = vst [vmem:[#allocation3 + $0x10] sm:$0xf] 0
      %3892 = vst [vmem:[#allocation3 + $0x14] sm:$0x1] 0
      %3893 = vst [vmem:[#allocation3 + $0x18] sm:$0xf] 0
      %3894 = vst [vmem:[#allocation3 + $0x1c] sm:$0xf] 0
      %3895 = vst [vmem:[#allocation3 + $0x20] sm:$0x1] 0
      %3896 = vst [vmem:[#allocation3 + $0x24] sm:$0xf] 0
      %3897 = vst [vmem:[#allocation3 + $0x28] sm:$0xf] 0
      %3898 = vst [vmem:[#allocation3 + $0x2c] sm:$0x1] 0
      %3899 = vst [vmem:[#allocation3 + $0x30] sm:$0xf] 0
      %3900 = vst [vmem:[#allocation3 + $0x34] sm:$0xf] 0
      %3901 = vst [vmem:[#allocation3 + $0x38] sm:$0x1] 0
      %3902 = vst [vmem:[#allocation3 + $0x3c] sm:$0xf] 0
      %3903 = vst [vmem:[#allocation3 + $0x40] sm:$0xf] 0
      %3904 = vst [vmem:[#allocation3 + $0x44] sm:$0x1] 0
      %3905 = vst [vmem:[#allocation3 + $0x48] sm:$0xf] 0
      %3906 = vst [vmem:[#allocation3 + $0x4c] sm:$0xf] 0
      %3907 = vst [vmem:[#allocation3 + $0x50] sm:$0x1] 0
      %3908 = vst [vmem:[#allocation3 + $0x54] sm:$0xf] 0
      %3909 = vst [vmem:[#allocation3 + $0x58] sm:$0xf] 0
      %3910 = vst [vmem:[#allocation3 + $0x5c] sm:$0x1] 0
      %3911 = vst [vmem:[#allocation3 + $0x60] sm:$0xf] 0
      %3912 = vst [vmem:[#allocation3 + $0x64] sm:$0xf] 0
      %3913 = vst [vmem:[#allocation3 + $0x68] sm:$0x1] 0
      %3914 = vst [vmem:[#allocation3 + $0x6c] sm:$0xf] 0
      %3915 = vst [vmem:[#allocation3 + $0x70] sm:$0xf] 0
      %3916 = vst [vmem:[#allocation3 + $0x74] sm:$0x1] 0
      %3917 = vst [vmem:[#allocation3 + $0x78] sm:$0xf] 0
      %3918 = vst [vmem:[#allocation3 + $0x7c] sm:$0xf] 0
      %3919 = vst [vmem:[#allocation3 + $0x80] sm:$0x1] 0
      %3920 = vst [vmem:[#allocation3 + $0x84] sm:$0xf] 0
      %3921 = vst [vmem:[#allocation3 + $0x88] sm:$0xf] 0
      %3922 = vst [vmem:[#allocation3 + $0x8c] sm:$0x1] 0
      %3923 = vst [vmem:[#allocation3 + $0x90] sm:$0xf] 0
      %3924 = vst [vmem:[#allocation3 + $0x94] sm:$0xf] 0
      %3925 = vst [vmem:[#allocation3 + $0x98] sm:$0x1] 0
      %3926 = vst [vmem:[#allocation3 + $0x9c] sm:$0xf] 0
      %3927 = vst [vmem:[#allocation3 + $0xa0] sm:$0xf] 0
      %3928 = vst [vmem:[#allocation3 + $0xa4] sm:$0x1] 0
      %3929 = vst [vmem:[#allocation3 + $0xa8] sm:$0xf] 0
      %3930 = vst [vmem:[#allocation3 + $0xac] sm:$0xf] 0
      %3931 = vst [vmem:[#allocation3 + $0xb0] sm:$0x1] 0
      %3932 = vst [vmem:[#allocation3 + $0xb4] sm:$0xf] 0
      %3933 = vst [vmem:[#allocation3 + $0xb8] sm:$0xf] 0
      %3934 = vst [vmem:[#allocation3 + $0xbc] sm:$0x1] 0
      %3935 = vst [vmem:[#allocation3 + $0xc0] sm:$0xf] 0
      %3936 = vst [vmem:[#allocation3 + $0xc4] sm:$0xf] 0
      %3937 = vst [vmem:[#allocation3 + $0xc8] sm:$0x1] 0
      %3938 = vst [vmem:[#allocation3 + $0xcc] sm:$0xf] 0
      %3939 = vst [vmem:[#allocation3 + $0xd0] sm:$0xf] 0
      %3940 = vst [vmem:[#allocation3 + $0xd4] sm:$0x1] 0
      %v3941 = vpack.c.bf16 %v3855, %v3855
      %v3942 = vpack.c.bf16 %v3856, %v3856
      %v3943 = vpack.c.bf16 %v3857, %v3857
      %v3944 = vpack.c.bf16 %v3858, %v3858
      %v3945 = vpack.c.bf16 %v3859, %v3859
      %v3946 = vpack.c.bf16 %v3860, %v3860
      %v3947 = vpack.c.bf16 %v3861, %v3861
      %v3948 = vpack.c.bf16 %v3862, %v3862
      %v3949 = vpack.c.bf16 %v3863, %v3863
      %v3950 = vpack.c.bf16 %v3864, %v3864
      %v3951 = vpack.c.bf16 %v3865, %v3865
      %v3952 = vpack.c.bf16 %v3866, %v3866
      %v3953 = vpack.c.bf16 %v3867, %v3867
      %v3954 = vpack.c.bf16 %v3868, %v3868
      %v3955 = vpack.c.bf16 %v3869, %v3869
      %v3956 = vpack.c.bf16 %v3870, %v3870
      %v3957 = vpack.c.bf16 %v3871, %v3871
      %v3958 = vpack.c.bf16 %v3872, %v3872
      %v3959 = vpack.c.bf16 %v3873, %v3873
      %v3960 = vpack.c.bf16 %v3874, %v3874
      %v3961 = vpack.c.bf16 %v3875, %v3875
      %v3962 = vpack.c.bf16 %v3876, %v3876
      %v3963 = vpack.c.bf16 %v3877, %v3877
      %v3964 = vpack.c.bf16 %v3878, %v3878
      %v3965 = vpack.c.bf16 %v3879, %v3879
      %v3966 = vpack.c.bf16 %v3880, %v3880
      %v3967 = vpack.c.bf16 %v3881, %v3881
      %v3968 = vpack.c.bf16 %v3882, %v3882
      %v3969 = vpack.c.bf16 %v3883, %v3883
      %v3970 = vpack.c.bf16 %v3884, %v3884
      %v3971 = vpack.c.bf16 %v3885, %v3885
      %v3972 = vpack.c.bf16 %v3886, %v3886
      %v3974 = vshrl.u32 %v3941, 16
      %v3976 = vrot.slane %v3974, 7
      %v3977 = vshll.u32 %v3941, 16
      %v3979 = vor.u32 %v3976, %v3977
      %v3980 = vrot.slane %v3976, 4
      %v3982 = vshrl.u32 %v3942, 16
      %v3984 = vrot.slane %v3982, 7
      %v3985 = vshll.u32 %v3942, 16
      %v3987 = vor.u32 %v3984, %v3985
      %v3988 = vsel %vm316, %v3980, %v3987
      %v3989 = vrot.slane %v3984, 4
      %v3991 = vshrl.u32 %v3943, 16
      %v3993 = vrot.slane %v3991, 7
      %v3994 = vshll.u32 %v3943, 16
      %v3996 = vor.u32 %v3993, %v3994
      %v3997 = vrot.slane %v3993, 4
      %v3999 = vshrl.u32 %v3944, 16
      %v4001 = vrot.slane %v3999, 7
      %v4002 = vshll.u32 %v3944, 16
      %v4004 = vor.u32 %v4001, %v4002
      %v4005 = vsel %vm316, %v3997, %v4004
      %v4006 = vrot.slane %v4001, 4
      %v4008 = vshrl.u32 %v3945, 16
      %v4010 = vrot.slane %v4008, 7
      %v4011 = vshll.u32 %v3945, 16
      %v4013 = vor.u32 %v4010, %v4011
      %v4014 = vrot.slane %v4010, 4
      %v4016 = vshrl.u32 %v3946, 16
      %v4018 = vrot.slane %v4016, 7
      %v4019 = vshll.u32 %v3946, 16
      %v4021 = vor.u32 %v4018, %v4019
      %v4022 = vsel %vm316, %v4014, %v4021
      %v4023 = vrot.slane %v4018, 4
      %v4025 = vshrl.u32 %v3947, 16
      %v4027 = vrot.slane %v4025, 7
      %v4028 = vshll.u32 %v3947, 16
      %v4030 = vor.u32 %v4027, %v4028
      %v4031 = vrot.slane %v4027, 4
      %v4033 = vshrl.u32 %v3948, 16
      %v4035 = vrot.slane %v4033, 7
      %v4036 = vshll.u32 %v3948, 16
      %v4038 = vor.u32 %v4035, %v4036
      %v4039 = vsel %vm316, %v4031, %v4038
      %v4040 = vrot.slane %v4035, 4
      %v4042 = vshrl.u32 %v3949, 16
      %v4044 = vrot.slane %v4042, 7
      %v4045 = vshll.u32 %v3949, 16
      %v4047 = vor.u32 %v4044, %v4045
      %v4048 = vrot.slane %v4044, 4
      %v4050 = vshrl.u32 %v3950, 16
      %v4052 = vrot.slane %v4050, 7
      %v4053 = vshll.u32 %v3950, 16
      %v4055 = vor.u32 %v4052, %v4053
      %v4056 = vsel %vm316, %v4048, %v4055
      %v4057 = vrot.slane %v4052, 4
      %v4059 = vshrl.u32 %v3951, 16
      %v4061 = vrot.slane %v4059, 7
      %v4062 = vshll.u32 %v3951, 16
      %v4064 = vor.u32 %v4061, %v4062
      %v4065 = vrot.slane %v4061, 4
      %v4067 = vshrl.u32 %v3952, 16
      %v4069 = vrot.slane %v4067, 7
      %v4070 = vshll.u32 %v3952, 16
      %v4072 = vor.u32 %v4069, %v4070
      %v4073 = vsel %vm316, %v4065, %v4072
      %v4074 = vrot.slane %v4069, 4
      %v4076 = vshrl.u32 %v3953, 16
      %v4078 = vrot.slane %v4076, 7
      %v4079 = vshll.u32 %v3953, 16
      %v4081 = vor.u32 %v4078, %v4079
      %v4082 = vrot.slane %v4078, 4
      %v4084 = vshrl.u32 %v3954, 16
      %v4086 = vrot.slane %v4084, 7
      %v4087 = vshll.u32 %v3954, 16
      %v4089 = vor.u32 %v4086, %v4087
      %v4090 = vsel %vm316, %v4082, %v4089
      %v4091 = vrot.slane %v4086, 4
      %v4093 = vshrl.u32 %v3955, 16
      %v4095 = vrot.slane %v4093, 7
      %v4096 = vshll.u32 %v3955, 16
      %v4098 = vor.u32 %v4095, %v4096
      %v4099 = vrot.slane %v4095, 4
      %v4101 = vshrl.u32 %v3956, 16
      %v4103 = vrot.slane %v4101, 7
      %v4104 = vshll.u32 %v3956, 16
      %v4106 = vor.u32 %v4103, %v4104
      %v4107 = vsel %vm316, %v4099, %v4106
      %v4108 = vrot.slane %v4103, 4
      %v4110 = vshrl.u32 %v3957, 16
      %v4112 = vrot.slane %v4110, 7
      %v4113 = vshll.u32 %v3957, 16
      %v4115 = vor.u32 %v4112, %v4113
      %v4116 = vrot.slane %v4112, 4
      %v4118 = vshrl.u32 %v3958, 16
      %v4120 = vrot.slane %v4118, 7
      %v4121 = vshll.u32 %v3958, 16
      %v4123 = vor.u32 %v4120, %v4121
      %v4124 = vsel %vm316, %v4116, %v4123
      %v4125 = vrot.slane %v4120, 4
      %v4127 = vshrl.u32 %v3959, 16
      %v4129 = vrot.slane %v4127, 7
      %v4130 = vshll.u32 %v3959, 16
      %v4132 = vor.u32 %v4129, %v4130
      %v4133 = vrot.slane %v4129, 4
      %v4135 = vshrl.u32 %v3960, 16
      %v4137 = vrot.slane %v4135, 7
      %v4138 = vshll.u32 %v3960, 16
      %v4140 = vor.u32 %v4137, %v4138
      %v4141 = vsel %vm316, %v4133, %v4140
      %v4142 = vrot.slane %v4137, 4
      %v4144 = vshrl.u32 %v3961, 16
      %v4146 = vrot.slane %v4144, 7
      %v4147 = vshll.u32 %v3961, 16
      %v4149 = vor.u32 %v4146, %v4147
      %v4150 = vrot.slane %v4146, 4
      %v4152 = vshrl.u32 %v3962, 16
      %v4154 = vrot.slane %v4152, 7
      %v4155 = vshll.u32 %v3962, 16
      %v4157 = vor.u32 %v4154, %v4155
      %v4158 = vsel %vm316, %v4150, %v4157
      %v4159 = vrot.slane %v4154, 4
      %v4161 = vshrl.u32 %v3963, 16
      %v4163 = vrot.slane %v4161, 7
      %v4164 = vshll.u32 %v3963, 16
      %v4166 = vor.u32 %v4163, %v4164
      %v4167 = vrot.slane %v4163, 4
      %v4169 = vshrl.u32 %v3964, 16
      %v4171 = vrot.slane %v4169, 7
      %v4172 = vshll.u32 %v3964, 16
      %v4174 = vor.u32 %v4171, %v4172
      %v4175 = vsel %vm316, %v4167, %v4174
      %v4176 = vrot.slane %v4171, 4
      %v4178 = vshrl.u32 %v3965, 16
      %v4180 = vrot.slane %v4178, 7
      %v4181 = vshll.u32 %v3965, 16
      %v4183 = vor.u32 %v4180, %v4181
      %v4184 = vrot.slane %v4180, 4
      %v4186 = vshrl.u32 %v3966, 16
      %v4188 = vrot.slane %v4186, 7
      %v4189 = vshll.u32 %v3966, 16
      %v4191 = vor.u32 %v4188, %v4189
      %v4192 = vsel %vm316, %v4184, %v4191
      %v4193 = vrot.slane %v4188, 4
      %v4195 = vshrl.u32 %v3967, 16
      %v4197 = vrot.slane %v4195, 7
      %v4198 = vshll.u32 %v3967, 16
      %v4200 = vor.u32 %v4197, %v4198
      %v4201 = vrot.slane %v4197, 4
      %v4203 = vshrl.u32 %v3968, 16
      %v4205 = vrot.slane %v4203, 7
      %v4206 = vshll.u32 %v3968, 16
      %v4208 = vor.u32 %v4205, %v4206
      %v4209 = vsel %vm316, %v4201, %v4208
      %v4210 = vrot.slane %v4205, 4
      %v4212 = vshrl.u32 %v3969, 16
      %v4214 = vrot.slane %v4212, 7
      %v4215 = vshll.u32 %v3969, 16
      %v4217 = vor.u32 %v4214, %v4215
      %v4218 = vrot.slane %v4214, 4
      %v4220 = vshrl.u32 %v3970, 16
      %v4222 = vrot.slane %v4220, 7
      %v4223 = vshll.u32 %v3970, 16
      %v4225 = vor.u32 %v4222, %v4223
      %v4226 = vsel %vm316, %v4218, %v4225
      %v4227 = vrot.slane %v4222, 4
      %v4229 = vshrl.u32 %v3971, 16
      %v4231 = vrot.slane %v4229, 7
      %v4232 = vshll.u32 %v3971, 16
      %v4234 = vor.u32 %v4231, %v4232
      %v4235 = vrot.slane %v4231, 4
      %v4237 = vshrl.u32 %v3972, 16
      %v4239 = vrot.slane %v4237, 7
      %v4240 = vshll.u32 %v3972, 16
      %v4242 = vor.u32 %v4239, %v4240
      %v4243 = vsel %vm316, %v4235, %v4242
      %v4244 = vrot.slane %v4239, 4
      %s4293 = scalar_lea.vmem [#allocation3], 12
      %vm4294 = vcmask 1043456
      %vm4295 = vmand %vm4294, %vm639
      %v4296 = vld [vmem:[%s4293] sm:$0xf]
      %v4297 = vsel %vm4295, %v3979, %v4296
      %4298 = vst [vmem:[%s4293] sm:$0xf] %v4297
      %4299 = vst [vmem:[%s4293 + $0x4] sm:$0xf] %v3988
      %vm4300 = vcmask 1040384
      %vm4301 = vmand %vm4300, %vm314
      %v4302 = vld [vmem:[%s4293 + $0x8] sm:$0x1]
      %v4303 = vsel %vm4301, %v3989, %v4302
      %4304 = vst [vmem:[%s4293 + $0x8] sm:$0x1] %v4303
      %v4305 = vld [vmem:[%s4293 + $0xc] sm:$0xf]
      %v4306 = vsel %vm4295, %v3996, %v4305
      %4307 = vst [vmem:[%s4293 + $0xc] sm:$0xf] %v4306
      %4308 = vst [vmem:[%s4293 + $0x10] sm:$0xf] %v4005
      %v4309 = vld [vmem:[%s4293 + $0x14] sm:$0x1]
      %v4310 = vsel %vm4301, %v4006, %v4309
      %4311 = vst [vmem:[%s4293 + $0x14] sm:$0x1] %v4310
      %v4312 = vld [vmem:[%s4293 + $0x18] sm:$0xf]
      %v4313 = vsel %vm4295, %v4013, %v4312
      %4314 = vst [vmem:[%s4293 + $0x18] sm:$0xf] %v4313
      %4315 = vst [vmem:[%s4293 + $0x1c] sm:$0xf] %v4022
      %v4316 = vld [vmem:[%s4293 + $0x20] sm:$0x1]
      %v4317 = vsel %vm4301, %v4023, %v4316
      %4318 = vst [vmem:[%s4293 + $0x20] sm:$0x1] %v4317
      %v4319 = vld [vmem:[%s4293 + $0x24] sm:$0xf]
      %v4320 = vsel %vm4295, %v4030, %v4319
      %4321 = vst [vmem:[%s4293 + $0x24] sm:$0xf] %v4320
      %4322 = vst [vmem:[%s4293 + $0x28] sm:$0xf] %v4039
      %v4323 = vld [vmem:[%s4293 + $0x2c] sm:$0x1]
      %v4324 = vsel %vm4301, %v4040, %v4323
      %4325 = vst [vmem:[%s4293 + $0x2c] sm:$0x1] %v4324
      %v4326 = vld [vmem:[%s4293 + $0x30] sm:$0xf]
      %v4327 = vsel %vm4295, %v4047, %v4326
      %4328 = vst [vmem:[%s4293 + $0x30] sm:$0xf] %v4327
      %4329 = vst [vmem:[%s4293 + $0x34] sm:$0xf] %v4056
      %v4330 = vld [vmem:[%s4293 + $0x38] sm:$0x1]
      %v4331 = vsel %vm4301, %v4057, %v4330
      %4332 = vst [vmem:[%s4293 + $0x38] sm:$0x1] %v4331
      %v4333 = vld [vmem:[%s4293 + $0x3c] sm:$0xf]
      %v4334 = vsel %vm4295, %v4064, %v4333
      %4335 = vst [vmem:[%s4293 + $0x3c] sm:$0xf] %v4334
      %4336 = vst [vmem:[%s4293 + $0x40] sm:$0xf] %v4073
      %v4337 = vld [vmem:[%s4293 + $0x44] sm:$0x1]
      %v4338 = vsel %vm4301, %v4074, %v4337
      %4339 = vst [vmem:[%s4293 + $0x44] sm:$0x1] %v4338
      %v4340 = vld [vmem:[%s4293 + $0x48] sm:$0xf]
      %v4341 = vsel %vm4295, %v4081, %v4340
      %4342 = vst [vmem:[%s4293 + $0x48] sm:$0xf] %v4341
      %4343 = vst [vmem:[%s4293 + $0x4c] sm:$0xf] %v4090
      %v4344 = vld [vmem:[%s4293 + $0x50] sm:$0x1]
      %v4345 = vsel %vm4301, %v4091, %v4344
      %4346 = vst [vmem:[%s4293 + $0x50] sm:$0x1] %v4345
      %v4347 = vld [vmem:[%s4293 + $0x54] sm:$0xf]
      %v4348 = vsel %vm4295, %v4098, %v4347
      %4349 = vst [vmem:[%s4293 + $0x54] sm:$0xf] %v4348
      %4350 = vst [vmem:[%s4293 + $0x58] sm:$0xf] %v4107
      %v4351 = vld [vmem:[%s4293 + $0x5c] sm:$0x1]
      %v4352 = vsel %vm4301, %v4108, %v4351
      %4353 = vst [vmem:[%s4293 + $0x5c] sm:$0x1] %v4352
      %v4354 = vld [vmem:[%s4293 + $0x60] sm:$0xf]
      %v4355 = vsel %vm4295, %v4115, %v4354
      %4356 = vst [vmem:[%s4293 + $0x60] sm:$0xf] %v4355
      %4357 = vst [vmem:[%s4293 + $0x64] sm:$0xf] %v4124
      %v4358 = vld [vmem:[%s4293 + $0x68] sm:$0x1]
      %v4359 = vsel %vm4301, %v4125, %v4358
      %4360 = vst [vmem:[%s4293 + $0x68] sm:$0x1] %v4359
      %v4361 = vld [vmem:[%s4293 + $0x6c] sm:$0xf]
      %v4362 = vsel %vm4295, %v4132, %v4361
      %4363 = vst [vmem:[%s4293 + $0x6c] sm:$0xf] %v4362
      %4364 = vst [vmem:[%s4293 + $0x70] sm:$0xf] %v4141
      %v4365 = vld [vmem:[%s4293 + $0x74] sm:$0x1]
      %v4366 = vsel %vm4301, %v4142, %v4365
      %4367 = vst [vmem:[%s4293 + $0x74] sm:$0x1] %v4366
      %v4368 = vld [vmem:[%s4293 + $0x78] sm:$0xf]
      %v4369 = vsel %vm4295, %v4149, %v4368
      %4370 = vst [vmem:[%s4293 + $0x78] sm:$0xf] %v4369
      %4371 = vst [vmem:[%s4293 + $0x7c] sm:$0xf] %v4158
      %v4372 = vld [vmem:[%s4293 + $0x80] sm:$0x1]
      %v4373 = vsel %vm4301, %v4159, %v4372
      %4374 = vst [vmem:[%s4293 + $0x80] sm:$0x1] %v4373
      %v4375 = vld [vmem:[%s4293 + $0x84] sm:$0xf]
      %v4376 = vsel %vm4295, %v4166, %v4375
      %4377 = vst [vmem:[%s4293 + $0x84] sm:$0xf] %v4376
      %4378 = vst [vmem:[%s4293 + $0x88] sm:$0xf] %v4175
      %v4379 = vld [vmem:[%s4293 + $0x8c] sm:$0x1]
      %v4380 = vsel %vm4301, %v4176, %v4379
      %4381 = vst [vmem:[%s4293 + $0x8c] sm:$0x1] %v4380
      %v4382 = vld [vmem:[%s4293 + $0x90] sm:$0xf]
      %v4383 = vsel %vm4295, %v4183, %v4382
      %4384 = vst [vmem:[%s4293 + $0x90] sm:$0xf] %v4383
      %4385 = vst [vmem:[%s4293 + $0x94] sm:$0xf] %v4192
      %v4386 = vld [vmem:[%s4293 + $0x98] sm:$0x1]
      %v4387 = vsel %vm4301, %v4193, %v4386
      %4388 = vst [vmem:[%s4293 + $0x98] sm:$0x1] %v4387
      %v4389 = vld [vmem:[%s4293 + $0x9c] sm:$0xf]
      %v4390 = vsel %vm4295, %v4200, %v4389
      %4391 = vst [vmem:[%s4293 + $0x9c] sm:$0xf] %v4390
      %4392 = vst [vmem:[%s4293 + $0xa0] sm:$0xf] %v4209
      %v4393 = vld [vmem:[%s4293 + $0xa4] sm:$0x1]
      %v4394 = vsel %vm4301, %v4210, %v4393
      %4395 = vst [vmem:[%s4293 + $0xa4] sm:$0x1] %v4394
      %v4396 = vld [vmem:[%s4293 + $0xa8] sm:$0xf]
      %v4397 = vsel %vm4295, %v4217, %v4396
      %4398 = vst [vmem:[%s4293 + $0xa8] sm:$0xf] %v4397
      %4399 = vst [vmem:[%s4293 + $0xac] sm:$0xf] %v4226
      %v4400 = vld [vmem:[%s4293 + $0xb0] sm:$0x1]
      %v4401 = vsel %vm4301, %v4227, %v4400
      %4402 = vst [vmem:[%s4293 + $0xb0] sm:$0x1] %v4401
      %v4403 = vld [vmem:[%s4293 + $0xb4] sm:$0xf]
      %v4404 = vsel %vm4295, %v4234, %v4403
      %4405 = vst [vmem:[%s4293 + $0xb4] sm:$0xf] %v4404
      %4406 = vst [vmem:[%s4293 + $0xb8] sm:$0xf] %v4243
      %v4407 = vld [vmem:[%s4293 + $0xbc] sm:$0x1]
      %v4408 = vsel %vm4301, %v4244, %v4407
      %4409 = vst [vmem:[%s4293 + $0xbc] sm:$0x1] %v4408
      %v4410 = vld [vmem:[#allocation3] sm:$0xf]
      %v4411 = vld [vmem:[#allocation3 + $0x4] sm:$0xf]
      %v4412 = vld [vmem:[#allocation3 + $0xc] sm:$0xf]
      %v4413 = vld [vmem:[#allocation3 + $0x10] sm:$0xf]
      %v4414 = vld [vmem:[#allocation3 + $0x18] sm:$0xf]
      %v4415 = vld [vmem:[#allocation3 + $0x1c] sm:$0xf]
      %v4416 = vld [vmem:[#allocation3 + $0x24] sm:$0xf]
      %v4417 = vld [vmem:[#allocation3 + $0x28] sm:$0xf]
      %v4418 = vld [vmem:[#allocation3 + $0x30] sm:$0xf]
      %v4419 = vld [vmem:[#allocation3 + $0x34] sm:$0xf]
      %v4420 = vld [vmem:[#allocation3 + $0x3c] sm:$0xf]
      %v4421 = vld [vmem:[#allocation3 + $0x40] sm:$0xf]
      %v4422 = vld [vmem:[#allocation3 + $0x48] sm:$0xf]
      %v4423 = vld [vmem:[#allocation3 + $0x4c] sm:$0xf]
      %v4424 = vld [vmem:[#allocation3 + $0x54] sm:$0xf]
      %v4425 = vld [vmem:[#allocation3 + $0x58] sm:$0xf]
      %v4426 = vld [vmem:[#allocation3 + $0x60] sm:$0xf]
      %v4427 = vld [vmem:[#allocation3 + $0x64] sm:$0xf]
      %v4428 = vld [vmem:[#allocation3 + $0x6c] sm:$0xf]
      %v4429 = vld [vmem:[#allocation3 + $0x70] sm:$0xf]
      %v4430 = vld [vmem:[#allocation3 + $0x78] sm:$0xf]
      %v4431 = vld [vmem:[#allocation3 + $0x7c] sm:$0xf]
      %v4432 = vld [vmem:[#allocation3 + $0x84] sm:$0xf]
      %v4433 = vld [vmem:[#allocation3 + $0x88] sm:$0xf]
      %v4434 = vld [vmem:[#allocation3 + $0x90] sm:$0xf]
      %v4435 = vld [vmem:[#allocation3 + $0x94] sm:$0xf]
      %v4436 = vld [vmem:[#allocation3 + $0x9c] sm:$0xf]
      %v4437 = vld [vmem:[#allocation3 + $0xa0] sm:$0xf]
      %v4438 = vld [vmem:[#allocation3 + $0xa8] sm:$0xf]
      %v4439 = vld [vmem:[#allocation3 + $0xac] sm:$0xf]
      %v4440 = vld [vmem:[#allocation3 + $0xb4] sm:$0xf]
      %v4441 = vld [vmem:[#allocation3 + $0xb8] sm:$0xf]
      %v4442 = vld [vmem:[#allocation3 + $0x8] sm:$0x1]
      %v4443 = vld [vmem:[#allocation3 + $0x14] sm:$0x1]
      %v4444 = vld [vmem:[#allocation3 + $0x20] sm:$0x1]
      %v4445 = vld [vmem:[#allocation3 + $0x2c] sm:$0x1]
      %v4446 = vld [vmem:[#allocation3 + $0x38] sm:$0x1]
      %v4447 = vld [vmem:[#allocation3 + $0x44] sm:$0x1]
      %v4448 = vld [vmem:[#allocation3 + $0x50] sm:$0x1]
      %v4449 = vld [vmem:[#allocation3 + $0x5c] sm:$0x1]
      %v4450 = vld [vmem:[#allocation3 + $0x68] sm:$0x1]
      %v4451 = vld [vmem:[#allocation3 + $0x74] sm:$0x1]
      %v4452 = vld [vmem:[#allocation3 + $0x80] sm:$0x1]
      %v4453 = vld [vmem:[#allocation3 + $0x8c] sm:$0x1]
      %v4454 = vld [vmem:[#allocation3 + $0x98] sm:$0x1]
      %v4455 = vld [vmem:[#allocation3 + $0xa4] sm:$0x1]
      %v4456 = vld [vmem:[#allocation3 + $0xb0] sm:$0x1]
      %v4457 = vld [vmem:[#allocation3 + $0xbc] sm:$0x1]
      %v4459 = vshrl.u32 %v4410, 16
      %v4461 = vrot.slane %v4459, 4
      %v4462 = vshll.u32 %v4410, 16
      %v4464 = vrot.slane %v4462, 5
      %v4465 = vor.u32 %v4461, %v4464
      %v4466 = vrot.slane %v4465, 4
      %v4468 = vshll.u32 %v4411, 16
      %v4470 = vrot.slane %v4468, 5
      %v4471 = vsel %vm805, %v4466, %v4470
      %v4472 = vshrl.u32 %v4411, 16
      %v4474 = vrot.slane %v4472, 4
      %v4475 = vor.u32 %v4474, %v4470
      %v4476 = vrot.slane %v4475, 4
      %v4478 = vshll.u32 %v4442, 16
      %v4480 = vrot.slane %v4478, 5
      %v4481 = vsel %vm805, %v4476, %v4480
      %v4483 = vshrl.u32 %v4412, 16
      %v4485 = vrot.slane %v4483, 4
      %v4486 = vshll.u32 %v4412, 16
      %v4488 = vrot.slane %v4486, 5
      %v4489 = vor.u32 %v4485, %v4488
      %v4490 = vrot.slane %v4489, 4
      %v4492 = vshll.u32 %v4413, 16
      %v4494 = vrot.slane %v4492, 5
      %v4495 = vsel %vm805, %v4490, %v4494
      %v4496 = vshrl.u32 %v4413, 16
      %v4498 = vrot.slane %v4496, 4
      %v4499 = vor.u32 %v4498, %v4494
      %v4500 = vrot.slane %v4499, 4
      %v4502 = vshll.u32 %v4443, 16
      %v4504 = vrot.slane %v4502, 5
      %v4505 = vsel %vm805, %v4500, %v4504
      %v4507 = vshrl.u32 %v4414, 16
      %v4509 = vrot.slane %v4507, 4
      %v4510 = vshll.u32 %v4414, 16
      %v4512 = vrot.slane %v4510, 5
      %v4513 = vor.u32 %v4509, %v4512
      %v4514 = vrot.slane %v4513, 4
      %v4516 = vshll.u32 %v4415, 16
      %v4518 = vrot.slane %v4516, 5
      %v4519 = vsel %vm805, %v4514, %v4518
      %v4520 = vshrl.u32 %v4415, 16
      %v4522 = vrot.slane %v4520, 4
      %v4523 = vor.u32 %v4522, %v4518
      %v4524 = vrot.slane %v4523, 4
      %v4526 = vshll.u32 %v4444, 16
      %v4528 = vrot.slane %v4526, 5
      %v4529 = vsel %vm805, %v4524, %v4528
      %v4531 = vshrl.u32 %v4416, 16
      %v4533 = vrot.slane %v4531, 4
      %v4534 = vshll.u32 %v4416, 16
      %v4536 = vrot.slane %v4534, 5
      %v4537 = vor.u32 %v4533, %v4536
      %v4538 = vrot.slane %v4537, 4
      %v4540 = vshll.u32 %v4417, 16
      %v4542 = vrot.slane %v4540, 5
      %v4543 = vsel %vm805, %v4538, %v4542
      %v4544 = vshrl.u32 %v4417, 16
      %v4546 = vrot.slane %v4544, 4
      %v4547 = vor.u32 %v4546, %v4542
      %v4548 = vrot.slane %v4547, 4
      %v4550 = vshll.u32 %v4445, 16
      %v4552 = vrot.slane %v4550, 5
      %v4553 = vsel %vm805, %v4548, %v4552
      %v4555 = vshrl.u32 %v4418, 16
      %v4557 = vrot.slane %v4555, 4
      %v4558 = vshll.u32 %v4418, 16
      %v4560 = vrot.slane %v4558, 5
      %v4561 = vor.u32 %v4557, %v4560
      %v4562 = vrot.slane %v4561, 4
      %v4564 = vshll.u32 %v4419, 16
      %v4566 = vrot.slane %v4564, 5
      %v4567 = vsel %vm805, %v4562, %v4566
      %v4568 = vshrl.u32 %v4419, 16
      %v4570 = vrot.slane %v4568, 4
      %v4571 = vor.u32 %v4570, %v4566
      %v4572 = vrot.slane %v4571, 4
      %v4574 = vshll.u32 %v4446, 16
      %v4576 = vrot.slane %v4574, 5
      %v4577 = vsel %vm805, %v4572, %v4576
      %v4579 = vshrl.u32 %v4420, 16
      %v4581 = vrot.slane %v4579, 4
      %v4582 = vshll.u32 %v4420, 16
      %v4584 = vrot.slane %v4582, 5
      %v4585 = vor.u32 %v4581, %v4584
      %v4586 = vrot.slane %v4585, 4
      %v4588 = vshll.u32 %v4421, 16
      %v4590 = vrot.slane %v4588, 5
      %v4591 = vsel %vm805, %v4586, %v4590
      %v4592 = vshrl.u32 %v4421, 16
      %v4594 = vrot.slane %v4592, 4
      %v4595 = vor.u32 %v4594, %v4590
      %v4596 = vrot.slane %v4595, 4
      %v4598 = vshll.u32 %v4447, 16
      %v4600 = vrot.slane %v4598, 5
      %v4601 = vsel %vm805, %v4596, %v4600
      %v4603 = vshrl.u32 %v4422, 16
      %v4605 = vrot.slane %v4603, 4
      %v4606 = vshll.u32 %v4422, 16
      %v4608 = vrot.slane %v4606, 5
      %v4609 = vor.u32 %v4605, %v4608
      %v4610 = vrot.slane %v4609, 4
      %v4612 = vshll.u32 %v4423, 16
      %v4614 = vrot.slane %v4612, 5
      %v4615 = vsel %vm805, %v4610, %v4614
      %v4616 = vshrl.u32 %v4423, 16
      %v4618 = vrot.slane %v4616, 4
      %v4619 = vor.u32 %v4618, %v4614
      %v4620 = vrot.slane %v4619, 4
      %v4622 = vshll.u32 %v4448, 16
      %v4624 = vrot.slane %v4622, 5
      %v4625 = vsel %vm805, %v4620, %v4624
      %v4627 = vshrl.u32 %v4424, 16
      %v4629 = vrot.slane %v4627, 4
      %v4630 = vshll.u32 %v4424, 16
      %v4632 = vrot.slane %v4630, 5
      %v4633 = vor.u32 %v4629, %v4632
      %v4634 = vrot.slane %v4633, 4
      %v4636 = vshll.u32 %v4425, 16
      %v4638 = vrot.slane %v4636, 5
      %v4639 = vsel %vm805, %v4634, %v4638
      %v4640 = vshrl.u32 %v4425, 16
      %v4642 = vrot.slane %v4640, 4
      %v4643 = vor.u32 %v4642, %v4638
      %v4644 = vrot.slane %v4643, 4
      %v4646 = vshll.u32 %v4449, 16
      %v4648 = vrot.slane %v4646, 5
      %v4649 = vsel %vm805, %v4644, %v4648
      %v4651 = vshrl.u32 %v4426, 16
      %v4653 = vrot.slane %v4651, 4
      %v4654 = vshll.u32 %v4426, 16
      %v4656 = vrot.slane %v4654, 5
      %v4657 = vor.u32 %v4653, %v4656
      %v4658 = vrot.slane %v4657, 4
      %v4660 = vshll.u32 %v4427, 16
      %v4662 = vrot.slane %v4660, 5
      %v4663 = vsel %vm805, %v4658, %v4662
      %v4664 = vshrl.u32 %v4427, 16
      %v4666 = vrot.slane %v4664, 4
      %v4667 = vor.u32 %v4666, %v4662
      %v4668 = vrot.slane %v4667, 4
      %v4670 = vshll.u32 %v4450, 16
      %v4672 = vrot.slane %v4670, 5
      %v4673 = vsel %vm805, %v4668, %v4672
      %v4675 = vshrl.u32 %v4428, 16
      %v4677 = vrot.slane %v4675, 4
      %v4678 = vshll.u32 %v4428, 16
      %v4680 = vrot.slane %v4678, 5
      %v4681 = vor.u32 %v4677, %v4680
      %v4682 = vrot.slane %v4681, 4
      %v4684 = vshll.u32 %v4429, 16
      %v4686 = vrot.slane %v4684, 5
      %v4687 = vsel %vm805, %v4682, %v4686
      %v4688 = vshrl.u32 %v4429, 16
      %v4690 = vrot.slane %v4688, 4
      %v4691 = vor.u32 %v4690, %v4686
      %v4692 = vrot.slane %v4691, 4
      %v4694 = vshll.u32 %v4451, 16
      %v4696 = vrot.slane %v4694, 5
      %v4697 = vsel %vm805, %v4692, %v4696
      %v4699 = vshrl.u32 %v4430, 16
      %v4701 = vrot.slane %v4699, 4
      %v4702 = vshll.u32 %v4430, 16
      %v4704 = vrot.slane %v4702, 5
      %v4705 = vor.u32 %v4701, %v4704
      %v4706 = vrot.slane %v4705, 4
      %v4708 = vshll.u32 %v4431, 16
      %v4710 = vrot.slane %v4708, 5
      %v4711 = vsel %vm805, %v4706, %v4710
      %v4712 = vshrl.u32 %v4431, 16
      %v4714 = vrot.slane %v4712, 4
      %v4715 = vor.u32 %v4714, %v4710
      %v4716 = vrot.slane %v4715, 4
      %v4718 = vshll.u32 %v4452, 16
      %v4720 = vrot.slane %v4718, 5
      %v4721 = vsel %vm805, %v4716, %v4720
      %v4723 = vshrl.u32 %v4432, 16
      %v4725 = vrot.slane %v4723, 4
      %v4726 = vshll.u32 %v4432, 16
      %v4728 = vrot.slane %v4726, 5
      %v4729 = vor.u32 %v4725, %v4728
      %v4730 = vrot.slane %v4729, 4
      %v4732 = vshll.u32 %v4433, 16
      %v4734 = vrot.slane %v4732, 5
      %v4735 = vsel %vm805, %v4730, %v4734
      %v4736 = vshrl.u32 %v4433, 16
      %v4738 = vrot.slane %v4736, 4
      %v4739 = vor.u32 %v4738, %v4734
      %v4740 = vrot.slane %v4739, 4
      %v4742 = vshll.u32 %v4453, 16
      %v4744 = vrot.slane %v4742, 5
      %v4745 = vsel %vm805, %v4740, %v4744
      %v4747 = vshrl.u32 %v4434, 16
      %v4749 = vrot.slane %v4747, 4
      %v4750 = vshll.u32 %v4434, 16
      %v4752 = vrot.slane %v4750, 5
      %v4753 = vor.u32 %v4749, %v4752
      %v4754 = vrot.slane %v4753, 4
      %v4756 = vshll.u32 %v4435, 16
      %v4758 = vrot.slane %v4756, 5
      %v4759 = vsel %vm805, %v4754, %v4758
      %v4760 = vshrl.u32 %v4435, 16
      %v4762 = vrot.slane %v4760, 4
      %v4763 = vor.u32 %v4762, %v4758
      %v4764 = vrot.slane %v4763, 4
      %v4766 = vshll.u32 %v4454, 16
      %v4768 = vrot.slane %v4766, 5
      %v4769 = vsel %vm805, %v4764, %v4768
      %v4771 = vshrl.u32 %v4436, 16
      %v4773 = vrot.slane %v4771, 4
      %v4774 = vshll.u32 %v4436, 16
      %v4776 = vrot.slane %v4774, 5
      %v4777 = vor.u32 %v4773, %v4776
      %v4778 = vrot.slane %v4777, 4
      %v4780 = vshll.u32 %v4437, 16
      %v4782 = vrot.slane %v4780, 5
      %v4783 = vsel %vm805, %v4778, %v4782
      %v4784 = vshrl.u32 %v4437, 16
      %v4786 = vrot.slane %v4784, 4
      %v4787 = vor.u32 %v4786, %v4782
      %v4788 = vrot.slane %v4787, 4
      %v4790 = vshll.u32 %v4455, 16
      %v4792 = vrot.slane %v4790, 5
      %v4793 = vsel %vm805, %v4788, %v4792
      %v4795 = vshrl.u32 %v4438, 16
      %v4797 = vrot.slane %v4795, 4
      %v4798 = vshll.u32 %v4438, 16
      %v4800 = vrot.slane %v4798, 5
      %v4801 = vor.u32 %v4797, %v4800
      %v4802 = vrot.slane %v4801, 4
      %v4804 = vshll.u32 %v4439, 16
      %v4806 = vrot.slane %v4804, 5
      %v4807 = vsel %vm805, %v4802, %v4806
      %v4808 = vshrl.u32 %v4439, 16
      %v4810 = vrot.slane %v4808, 4
      %v4811 = vor.u32 %v4810, %v4806
      %v4812 = vrot.slane %v4811, 4
      %v4814 = vshll.u32 %v4456, 16
      %v4816 = vrot.slane %v4814, 5
      %v4817 = vsel %vm805, %v4812, %v4816
      %v4819 = vshrl.u32 %v4440, 16
      %v4821 = vrot.slane %v4819, 4
      %v4822 = vshll.u32 %v4440, 16
      %v4824 = vrot.slane %v4822, 5
      %v4825 = vor.u32 %v4821, %v4824
      %v4826 = vrot.slane %v4825, 4
      %v4828 = vshll.u32 %v4441, 16
      %v4830 = vrot.slane %v4828, 5
      %v4831 = vsel %vm805, %v4826, %v4830
      %v4832 = vshrl.u32 %v4441, 16
      %v4834 = vrot.slane %v4832, 4
      %v4835 = vor.u32 %v4834, %v4830
      %v4836 = vrot.slane %v4835, 4
      %v4838 = vshll.u32 %v4457, 16
      %v4840 = vrot.slane %v4838, 5
      %v4841 = vsel %vm805, %v4836, %v4840
      %v4842 = vld [vmem:[#allocation3] sm:$0xe]
      %v4843 = vld [vmem:[#allocation3 + $0xc] sm:$0xe]
      %v4844 = vld [vmem:[#allocation3 + $0x18] sm:$0xe]
      %v4845 = vld [vmem:[#allocation3 + $0x24] sm:$0xe]
      %v4846 = vld [vmem:[#allocation3 + $0x30] sm:$0xe]
      %v4847 = vld [vmem:[#allocation3 + $0x3c] sm:$0xe]
      %v4848 = vld [vmem:[#allocation3 + $0x48] sm:$0xe]
      %v4849 = vld [vmem:[#allocation3 + $0x54] sm:$0xe]
      %v4850 = vld [vmem:[#allocation3 + $0x60] sm:$0xe]
      %v4851 = vld [vmem:[#allocation3 + $0x6c] sm:$0xe]
      %v4852 = vld [vmem:[#allocation3 + $0x78] sm:$0xe]
      %v4853 = vld [vmem:[#allocation3 + $0x84] sm:$0xe]
      %v4854 = vld [vmem:[#allocation3 + $0x90] sm:$0xe]
      %v4855 = vld [vmem:[#allocation3 + $0x9c] sm:$0xe]
      %v4856 = vld [vmem:[#allocation3 + $0xa8] sm:$0xe]
      %v4857 = vld [vmem:[#allocation3 + $0xb4] sm:$0xe]
      %v4906 = vrot.slane %v4842, 5
      %v4907 = vrot.slane %v4906, 4
      %v4908 = vrot.slane %v4411, 5
      %v4909 = vsel %vm1256, %v4907, %v4908
      %v4910 = vrot.slane %v4908, 4
      %v4911 = vrot.slane %v4442, 5
      %v4912 = vsel %vm1256, %v4910, %v4911
      %v4913 = vrot.slane %v4843, 5
      %v4914 = vrot.slane %v4913, 4
      %v4915 = vrot.slane %v4413, 5
      %v4916 = vsel %vm1256, %v4914, %v4915
      %v4917 = vrot.slane %v4915, 4
      %v4918 = vrot.slane %v4443, 5
      %v4919 = vsel %vm1256, %v4917, %v4918
      %v4920 = vrot.slane %v4844, 5
      %v4921 = vrot.slane %v4920, 4
      %v4922 = vrot.slane %v4415, 5
      %v4923 = vsel %vm1256, %v4921, %v4922
      %v4924 = vrot.slane %v4922, 4
      %v4925 = vrot.slane %v4444, 5
      %v4926 = vsel %vm1256, %v4924, %v4925
      %v4927 = vrot.slane %v4845, 5
      %v4928 = vrot.slane %v4927, 4
      %v4929 = vrot.slane %v4417, 5
      %v4930 = vsel %vm1256, %v4928, %v4929
      %v4931 = vrot.slane %v4929, 4
      %v4932 = vrot.slane %v4445, 5
      %v4933 = vsel %vm1256, %v4931, %v4932
      %v4934 = vrot.slane %v4846, 5
      %v4935 = vrot.slane %v4934, 4
      %v4936 = vrot.slane %v4419, 5
      %v4937 = vsel %vm1256, %v4935, %v4936
      %v4938 = vrot.slane %v4936, 4
      %v4939 = vrot.slane %v4446, 5
      %v4940 = vsel %vm1256, %v4938, %v4939
      %v4941 = vrot.slane %v4847, 5
      %v4942 = vrot.slane %v4941, 4
      %v4943 = vrot.slane %v4421, 5
      %v4944 = vsel %vm1256, %v4942, %v4943
      %v4945 = vrot.slane %v4943, 4
      %v4946 = vrot.slane %v4447, 5
      %v4947 = vsel %vm1256, %v4945, %v4946
      %v4948 = vrot.slane %v4848, 5
      %v4949 = vrot.slane %v4948, 4
      %v4950 = vrot.slane %v4423, 5
      %v4951 = vsel %vm1256, %v4949, %v4950
      %v4952 = vrot.slane %v4950, 4
      %v4953 = vrot.slane %v4448, 5
      %v4954 = vsel %vm1256, %v4952, %v4953
      %v4955 = vrot.slane %v4849, 5
      %v4956 = vrot.slane %v4955, 4
      %v4957 = vrot.slane %v4425, 5
      %v4958 = vsel %vm1256, %v4956, %v4957
      %v4959 = vrot.slane %v4957, 4
      %v4960 = vrot.slane %v4449, 5
      %v4961 = vsel %vm1256, %v4959, %v4960
      %v4962 = vrot.slane %v4850, 5
      %v4963 = vrot.slane %v4962, 4
      %v4964 = vrot.slane %v4427, 5
      %v4965 = vsel %vm1256, %v4963, %v4964
      %v4966 = vrot.slane %v4964, 4
      %v4967 = vrot.slane %v4450, 5
      %v4968 = vsel %vm1256, %v4966, %v4967
      %v4969 = vrot.slane %v4851, 5
      %v4970 = vrot.slane %v4969, 4
      %v4971 = vrot.slane %v4429, 5
      %v4972 = vsel %vm1256, %v4970, %v4971
      %v4973 = vrot.slane %v4971, 4
      %v4974 = vrot.slane %v4451, 5
      %v4975 = vsel %vm1256, %v4973, %v4974
      %v4976 = vrot.slane %v4852, 5
      %v4977 = vrot.slane %v4976, 4
      %v4978 = vrot.slane %v4431, 5
      %v4979 = vsel %vm1256, %v4977, %v4978
      %v4980 = vrot.slane %v4978, 4
      %v4981 = vrot.slane %v4452, 5
      %v4982 = vsel %vm1256, %v4980, %v4981
      %v4983 = vrot.slane %v4853, 5
      %v4984 = vrot.slane %v4983, 4
      %v4985 = vrot.slane %v4433, 5
      %v4986 = vsel %vm1256, %v4984, %v4985
      %v4987 = vrot.slane %v4985, 4
      %v4988 = vrot.slane %v4453, 5
      %v4989 = vsel %vm1256, %v4987, %v4988
      %v4990 = vrot.slane %v4854, 5
      %v4991 = vrot.slane %v4990, 4
      %v4992 = vrot.slane %v4435, 5
      %v4993 = vsel %vm1256, %v4991, %v4992
      %v4994 = vrot.slane %v4992, 4
      %v4995 = vrot.slane %v4454, 5
      %v4996 = vsel %vm1256, %v4994, %v4995
      %v4997 = vrot.slane %v4855, 5
      %v4998 = vrot.slane %v4997, 4
      %v4999 = vrot.slane %v4437, 5
      %v5000 = vsel %vm1256, %v4998, %v4999
      %v5001 = vrot.slane %v4999, 4
      %v5002 = vrot.slane %v4455, 5
      %v5003 = vsel %vm1256, %v5001, %v5002
      %v5004 = vrot.slane %v4856, 5
      %v5005 = vrot.slane %v5004, 4
      %v5006 = vrot.slane %v4439, 5
      %v5007 = vsel %vm1256, %v5005, %v5006
      %v5008 = vrot.slane %v5006, 4
      %v5009 = vrot.slane %v4456, 5
      %v5010 = vsel %vm1256, %v5008, %v5009
      %v5011 = vrot.slane %v4857, 5
      %v5012 = vrot.slane %v5011, 4
      %v5013 = vrot.slane %v4441, 5
      %v5014 = vsel %vm1256, %v5012, %v5013
      %v5015 = vrot.slane %v5013, 4
      %v5016 = vrot.slane %v4457, 5
      %v5017 = vsel %vm1256, %v5015, %v5016
      %v5018 = vld [vmem:[%s4293] sm:$0xf]
      %v5019 = vld [vmem:[%s4293 + $0x4] sm:$0xf]
      %v5020 = vld [vmem:[%s4293 + $0xc] sm:$0xf]
      %v5021 = vld [vmem:[%s4293 + $0x10] sm:$0xf]
      %v5022 = vld [vmem:[%s4293 + $0x18] sm:$0xf]
      %v5023 = vld [vmem:[%s4293 + $0x1c] sm:$0xf]
      %v5024 = vld [vmem:[%s4293 + $0x24] sm:$0xf]
      %v5025 = vld [vmem:[%s4293 + $0x28] sm:$0xf]
      %v5026 = vld [vmem:[%s4293 + $0x30] sm:$0xf]
      %v5027 = vld [vmem:[%s4293 + $0x34] sm:$0xf]
      %v5028 = vld [vmem:[%s4293 + $0x3c] sm:$0xf]
      %v5029 = vld [vmem:[%s4293 + $0x40] sm:$0xf]
      %v5030 = vld [vmem:[%s4293 + $0x48] sm:$0xf]
      %v5031 = vld [vmem:[%s4293 + $0x4c] sm:$0xf]
      %v5032 = vld [vmem:[%s4293 + $0x54] sm:$0xf]
      %v5033 = vld [vmem:[%s4293 + $0x58] sm:$0xf]
      %v5034 = vld [vmem:[%s4293 + $0x60] sm:$0xf]
      %v5035 = vld [vmem:[%s4293 + $0x64] sm:$0xf]
      %v5036 = vld [vmem:[%s4293 + $0x6c] sm:$0xf]
      %v5037 = vld [vmem:[%s4293 + $0x70] sm:$0xf]
      %v5038 = vld [vmem:[%s4293 + $0x78] sm:$0xf]
      %v5039 = vld [vmem:[%s4293 + $0x7c] sm:$0xf]
      %v5040 = vld [vmem:[%s4293 + $0x84] sm:$0xf]
      %v5041 = vld [vmem:[%s4293 + $0x88] sm:$0xf]
      %v5042 = vld [vmem:[%s4293 + $0x90] sm:$0xf]
      %v5043 = vld [vmem:[%s4293 + $0x94] sm:$0xf]
      %v5044 = vld [vmem:[%s4293 + $0x9c] sm:$0xf]
      %v5045 = vld [vmem:[%s4293 + $0xa0] sm:$0xf]
      %v5046 = vld [vmem:[%s4293 + $0xa8] sm:$0xf]
      %v5047 = vld [vmem:[%s4293 + $0xac] sm:$0xf]
      %v5048 = vld [vmem:[%s4293 + $0xb4] sm:$0xf]
      %v5049 = vld [vmem:[%s4293 + $0xb8] sm:$0xf]
      %v5050 = vld [vmem:[%s4293 + $0x8] sm:$0x1]
      %v5051 = vld [vmem:[%s4293 + $0x14] sm:$0x1]
      %v5052 = vld [vmem:[%s4293 + $0x20] sm:$0x1]
      %v5053 = vld [vmem:[%s4293 + $0x2c] sm:$0x1]
      %v5054 = vld [vmem:[%s4293 + $0x38] sm:$0x1]
      %v5055 = vld [vmem:[%s4293 + $0x44] sm:$0x1]
      %v5056 = vld [vmem:[%s4293 + $0x50] sm:$0x1]
      %v5057 = vld [vmem:[%s4293 + $0x5c] sm:$0x1]
      %v5058 = vld [vmem:[%s4293 + $0x68] sm:$0x1]
      %v5059 = vld [vmem:[%s4293 + $0x74] sm:$0x1]
      %v5060 = vld [vmem:[%s4293 + $0x80] sm:$0x1]
      %v5061 = vld [vmem:[%s4293 + $0x8c] sm:$0x1]
      %v5062 = vld [vmem:[%s4293 + $0x98] sm:$0x1]
      %v5063 = vld [vmem:[%s4293 + $0xa4] sm:$0x1]
      %v5064 = vld [vmem:[%s4293 + $0xb0] sm:$0x1]
      %v5065 = vld [vmem:[%s4293 + $0xbc] sm:$0x1]
      %v5067 = vshrl.u32 %v5018, 16
      %v5069 = vrot.slane %v5067, 4
      %v5070 = vshll.u32 %v5018, 16
      %v5072 = vrot.slane %v5070, 5
      %v5073 = vor.u32 %v5069, %v5072
      %v5074 = vrot.slane %v5073, 4
      %v5076 = vshll.u32 %v5019, 16
      %v5078 = vrot.slane %v5076, 5
      %v5079 = vsel %vm805, %v5074, %v5078
      %v5080 = vshrl.u32 %v5019, 16
      %v5082 = vrot.slane %v5080, 4
      %v5083 = vor.u32 %v5082, %v5078
      %v5084 = vrot.slane %v5083, 4
      %v5086 = vshll.u32 %v5050, 16
      %v5088 = vrot.slane %v5086, 5
      %v5089 = vsel %vm805, %v5084, %v5088
      %v5091 = vshrl.u32 %v5020, 16
      %v5093 = vrot.slane %v5091, 4
      %v5094 = vshll.u32 %v5020, 16
      %v5096 = vrot.slane %v5094, 5
      %v5097 = vor.u32 %v5093, %v5096
      %v5098 = vrot.slane %v5097, 4
      %v5100 = vshll.u32 %v5021, 16
      %v5102 = vrot.slane %v5100, 5
      %v5103 = vsel %vm805, %v5098, %v5102
      %v5104 = vshrl.u32 %v5021, 16
      %v5106 = vrot.slane %v5104, 4
      %v5107 = vor.u32 %v5106, %v5102
      %v5108 = vrot.slane %v5107, 4
      %v5110 = vshll.u32 %v5051, 16
      %v5112 = vrot.slane %v5110, 5
      %v5113 = vsel %vm805, %v5108, %v5112
      %v5115 = vshrl.u32 %v5022, 16
      %v5117 = vrot.slane %v5115, 4
      %v5118 = vshll.u32 %v5022, 16
      %v5120 = vrot.slane %v5118, 5
      %v5121 = vor.u32 %v5117, %v5120
      %v5122 = vrot.slane %v5121, 4
      %v5124 = vshll.u32 %v5023, 16
      %v5126 = vrot.slane %v5124, 5
      %v5127 = vsel %vm805, %v5122, %v5126
      %v5128 = vshrl.u32 %v5023, 16
      %v5130 = vrot.slane %v5128, 4
      %v5131 = vor.u32 %v5130, %v5126
      %v5132 = vrot.slane %v5131, 4
      %v5134 = vshll.u32 %v5052, 16
      %v5136 = vrot.slane %v5134, 5
      %v5137 = vsel %vm805, %v5132, %v5136
      %v5139 = vshrl.u32 %v5024, 16
      %v5141 = vrot.slane %v5139, 4
      %v5142 = vshll.u32 %v5024, 16
      %v5144 = vrot.slane %v5142, 5
      %v5145 = vor.u32 %v5141, %v5144
      %v5146 = vrot.slane %v5145, 4
      %v5148 = vshll.u32 %v5025, 16
      %v5150 = vrot.slane %v5148, 5
      %v5151 = vsel %vm805, %v5146, %v5150
      %v5152 = vshrl.u32 %v5025, 16
      %v5154 = vrot.slane %v5152, 4
      %v5155 = vor.u32 %v5154, %v5150
      %v5156 = vrot.slane %v5155, 4
      %v5158 = vshll.u32 %v5053, 16
      %v5160 = vrot.slane %v5158, 5
      %v5161 = vsel %vm805, %v5156, %v5160
      %v5163 = vshrl.u32 %v5026, 16
      %v5165 = vrot.slane %v5163, 4
      %v5166 = vshll.u32 %v5026, 16
      %v5168 = vrot.slane %v5166, 5
      %v5169 = vor.u32 %v5165, %v5168
      %v5170 = vrot.slane %v5169, 4
      %v5172 = vshll.u32 %v5027, 16
      %v5174 = vrot.slane %v5172, 5
      %v5175 = vsel %vm805, %v5170, %v5174
      %v5176 = vshrl.u32 %v5027, 16
      %v5178 = vrot.slane %v5176, 4
      %v5179 = vor.u32 %v5178, %v5174
      %v5180 = vrot.slane %v5179, 4
      %v5182 = vshll.u32 %v5054, 16
      %v5184 = vrot.slane %v5182, 5
      %v5185 = vsel %vm805, %v5180, %v5184
      %v5187 = vshrl.u32 %v5028, 16
      %v5189 = vrot.slane %v5187, 4
      %v5190 = vshll.u32 %v5028, 16
      %v5192 = vrot.slane %v5190, 5
      %v5193 = vor.u32 %v5189, %v5192
      %v5194 = vrot.slane %v5193, 4
      %v5196 = vshll.u32 %v5029, 16
      %v5198 = vrot.slane %v5196, 5
      %v5199 = vsel %vm805, %v5194, %v5198
      %v5200 = vshrl.u32 %v5029, 16
      %v5202 = vrot.slane %v5200, 4
      %v5203 = vor.u32 %v5202, %v5198
      %v5204 = vrot.slane %v5203, 4
      %v5206 = vshll.u32 %v5055, 16
      %v5208 = vrot.slane %v5206, 5
      %v5209 = vsel %vm805, %v5204, %v5208
      %v5211 = vshrl.u32 %v5030, 16
      %v5213 = vrot.slane %v5211, 4
      %v5214 = vshll.u32 %v5030, 16
      %v5216 = vrot.slane %v5214, 5
      %v5217 = vor.u32 %v5213, %v5216
      %v5218 = vrot.slane %v5217, 4
      %v5220 = vshll.u32 %v5031, 16
      %v5222 = vrot.slane %v5220, 5
      %v5223 = vsel %vm805, %v5218, %v5222
      %v5224 = vshrl.u32 %v5031, 16
      %v5226 = vrot.slane %v5224, 4
      %v5227 = vor.u32 %v5226, %v5222
      %v5228 = vrot.slane %v5227, 4
      %v5230 = vshll.u32 %v5056, 16
      %v5232 = vrot.slane %v5230, 5
      %v5233 = vsel %vm805, %v5228, %v5232
      %v5235 = vshrl.u32 %v5032, 16
      %v5237 = vrot.slane %v5235, 4
      %v5238 = vshll.u32 %v5032, 16
      %v5240 = vrot.slane %v5238, 5
      %v5241 = vor.u32 %v5237, %v5240
      %v5242 = vrot.slane %v5241, 4
      %v5244 = vshll.u32 %v5033, 16
      %v5246 = vrot.slane %v5244, 5
      %v5247 = vsel %vm805, %v5242, %v5246
      %v5248 = vshrl.u32 %v5033, 16
      %v5250 = vrot.slane %v5248, 4
      %v5251 = vor.u32 %v5250, %v5246
      %v5252 = vrot.slane %v5251, 4
      %v5254 = vshll.u32 %v5057, 16
      %v5256 = vrot.slane %v5254, 5
      %v5257 = vsel %vm805, %v5252, %v5256
      %v5259 = vshrl.u32 %v5034, 16
      %v5261 = vrot.slane %v5259, 4
      %v5262 = vshll.u32 %v5034, 16
      %v5264 = vrot.slane %v5262, 5
      %v5265 = vor.u32 %v5261, %v5264
      %v5266 = vrot.slane %v5265, 4
      %v5268 = vshll.u32 %v5035, 16
      %v5270 = vrot.slane %v5268, 5
      %v5271 = vsel %vm805, %v5266, %v5270
      %v5272 = vshrl.u32 %v5035, 16
      %v5274 = vrot.slane %v5272, 4
      %v5275 = vor.u32 %v5274, %v5270
      %v5276 = vrot.slane %v5275, 4
      %v5278 = vshll.u32 %v5058, 16
      %v5280 = vrot.slane %v5278, 5
      %v5281 = vsel %vm805, %v5276, %v5280
      %v5283 = vshrl.u32 %v5036, 16
      %v5285 = vrot.slane %v5283, 4
      %v5286 = vshll.u32 %v5036, 16
      %v5288 = vrot.slane %v5286, 5
      %v5289 = vor.u32 %v5285, %v5288
      %v5290 = vrot.slane %v5289, 4
      %v5292 = vshll.u32 %v5037, 16
      %v5294 = vrot.slane %v5292, 5
      %v5295 = vsel %vm805, %v5290, %v5294
      %v5296 = vshrl.u32 %v5037, 16
      %v5298 = vrot.slane %v5296, 4
      %v5299 = vor.u32 %v5298, %v5294
      %v5300 = vrot.slane %v5299, 4
      %v5302 = vshll.u32 %v5059, 16
      %v5304 = vrot.slane %v5302, 5
      %v5305 = vsel %vm805, %v5300, %v5304
      %v5307 = vshrl.u32 %v5038, 16
      %v5309 = vrot.slane %v5307, 4
      %v5310 = vshll.u32 %v5038, 16
      %v5312 = vrot.slane %v5310, 5
      %v5313 = vor.u32 %v5309, %v5312
      %v5314 = vrot.slane %v5313, 4
      %v5316 = vshll.u32 %v5039, 16
      %v5318 = vrot.slane %v5316, 5
      %v5319 = vsel %vm805, %v5314, %v5318
      %v5320 = vshrl.u32 %v5039, 16
      %v5322 = vrot.slane %v5320, 4
      %v5323 = vor.u32 %v5322, %v5318
      %v5324 = vrot.slane %v5323, 4
      %v5326 = vshll.u32 %v5060, 16
      %v5328 = vrot.slane %v5326, 5
      %v5329 = vsel %vm805, %v5324, %v5328
      %v5331 = vshrl.u32 %v5040, 16
      %v5333 = vrot.slane %v5331, 4
      %v5334 = vshll.u32 %v5040, 16
      %v5336 = vrot.slane %v5334, 5
      %v5337 = vor.u32 %v5333, %v5336
      %v5338 = vrot.slane %v5337, 4
      %v5340 = vshll.u32 %v5041, 16
      %v5342 = vrot.slane %v5340, 5
      %v5343 = vsel %vm805, %v5338, %v5342
      %v5344 = vshrl.u32 %v5041, 16
      %v5346 = vrot.slane %v5344, 4
      %v5347 = vor.u32 %v5346, %v5342
      %v5348 = vrot.slane %v5347, 4
      %v5350 = vshll.u32 %v5061, 16
      %v5352 = vrot.slane %v5350, 5
      %v5353 = vsel %vm805, %v5348, %v5352
      %v5355 = vshrl.u32 %v5042, 16
      %v5357 = vrot.slane %v5355, 4
      %v5358 = vshll.u32 %v5042, 16
      %v5360 = vrot.slane %v5358, 5
      %v5361 = vor.u32 %v5357, %v5360
      %v5362 = vrot.slane %v5361, 4
      %v5364 = vshll.u32 %v5043, 16
      %v5366 = vrot.slane %v5364, 5
      %v5367 = vsel %vm805, %v5362, %v5366
      %v5368 = vshrl.u32 %v5043, 16
      %v5370 = vrot.slane %v5368, 4
      %v5371 = vor.u32 %v5370, %v5366
      %v5372 = vrot.slane %v5371, 4
      %v5374 = vshll.u32 %v5062, 16
      %v5376 = vrot.slane %v5374, 5
      %v5377 = vsel %vm805, %v5372, %v5376
      %v5379 = vshrl.u32 %v5044, 16
      %v5381 = vrot.slane %v5379, 4
      %v5382 = vshll.u32 %v5044, 16
      %v5384 = vrot.slane %v5382, 5
      %v5385 = vor.u32 %v5381, %v5384
      %v5386 = vrot.slane %v5385, 4
      %v5388 = vshll.u32 %v5045, 16
      %v5390 = vrot.slane %v5388, 5
      %v5391 = vsel %vm805, %v5386, %v5390
      %v5392 = vshrl.u32 %v5045, 16
      %v5394 = vrot.slane %v5392, 4
      %v5395 = vor.u32 %v5394, %v5390
      %v5396 = vrot.slane %v5395, 4
      %v5398 = vshll.u32 %v5063, 16
      %v5400 = vrot.slane %v5398, 5
      %v5401 = vsel %vm805, %v5396, %v5400
      %v5403 = vshrl.u32 %v5046, 16
      %v5405 = vrot.slane %v5403, 4
      %v5406 = vshll.u32 %v5046, 16
      %v5408 = vrot.slane %v5406, 5
      %v5409 = vor.u32 %v5405, %v5408
      %v5410 = vrot.slane %v5409, 4
      %v5412 = vshll.u32 %v5047, 16
      %v5414 = vrot.slane %v5412, 5
      %v5415 = vsel %vm805, %v5410, %v5414
      %v5416 = vshrl.u32 %v5047, 16
      %v5418 = vrot.slane %v5416, 4
      %v5419 = vor.u32 %v5418, %v5414
      %v5420 = vrot.slane %v5419, 4
      %v5422 = vshll.u32 %v5064, 16
      %v5424 = vrot.slane %v5422, 5
      %v5425 = vsel %vm805, %v5420, %v5424
      %v5427 = vshrl.u32 %v5048, 16
      %v5429 = vrot.slane %v5427, 4
      %v5430 = vshll.u32 %v5048, 16
      %v5432 = vrot.slane %v5430, 5
      %v5433 = vor.u32 %v5429, %v5432
      %v5434 = vrot.slane %v5433, 4
      %v5436 = vshll.u32 %v5049, 16
      %v5438 = vrot.slane %v5436, 5
      %v5439 = vsel %vm805, %v5434, %v5438
      %v5440 = vshrl.u32 %v5049, 16
      %v5442 = vrot.slane %v5440, 4
      %v5443 = vor.u32 %v5442, %v5438
      %v5444 = vrot.slane %v5443, 4
      %v5446 = vshll.u32 %v5065, 16
      %v5448 = vrot.slane %v5446, 5
      %v5449 = vsel %vm805, %v5444, %v5448
      %v5450 = vld [vmem:[%s4293] sm:$0xe]
      %v5451 = vld [vmem:[%s4293 + $0xc] sm:$0xe]
      %v5452 = vld [vmem:[%s4293 + $0x18] sm:$0xe]
      %v5453 = vld [vmem:[%s4293 + $0x24] sm:$0xe]
      %v5454 = vld [vmem:[%s4293 + $0x30] sm:$0xe]
      %v5455 = vld [vmem:[%s4293 + $0x3c] sm:$0xe]
      %v5456 = vld [vmem:[%s4293 + $0x48] sm:$0xe]
      %v5457 = vld [vmem:[%s4293 + $0x54] sm:$0xe]
      %v5458 = vld [vmem:[%s4293 + $0x60] sm:$0xe]
      %v5459 = vld [vmem:[%s4293 + $0x6c] sm:$0xe]
      %v5460 = vld [vmem:[%s4293 + $0x78] sm:$0xe]
      %v5461 = vld [vmem:[%s4293 + $0x84] sm:$0xe]
      %v5462 = vld [vmem:[%s4293 + $0x90] sm:$0xe]
      %v5463 = vld [vmem:[%s4293 + $0x9c] sm:$0xe]
      %v5464 = vld [vmem:[%s4293 + $0xa8] sm:$0xe]
      %v5465 = vld [vmem:[%s4293 + $0xb4] sm:$0xe]
      %v5514 = vrot.slane %v5450, 5
      %v5515 = vrot.slane %v5514, 4
      %v5516 = vrot.slane %v5019, 5
      %v5517 = vsel %vm1256, %v5515, %v5516
      %v5518 = vrot.slane %v5516, 4
      %v5519 = vrot.slane %v5050, 5
      %v5520 = vsel %vm1256, %v5518, %v5519
      %v5521 = vrot.slane %v5451, 5
      %v5522 = vrot.slane %v5521, 4
      %v5523 = vrot.slane %v5021, 5
      %v5524 = vsel %vm1256, %v5522, %v5523
      %v5525 = vrot.slane %v5523, 4
      %v5526 = vrot.slane %v5051, 5
      %v5527 = vsel %vm1256, %v5525, %v5526
      %v5528 = vrot.slane %v5452, 5
      %v5529 = vrot.slane %v5528, 4
      %v5530 = vrot.slane %v5023, 5
      %v5531 = vsel %vm1256, %v5529, %v5530
      %v5532 = vrot.slane %v5530, 4
      %v5533 = vrot.slane %v5052, 5
      %v5534 = vsel %vm1256, %v5532, %v5533
      %v5535 = vrot.slane %v5453, 5
      %v5536 = vrot.slane %v5535, 4
      %v5537 = vrot.slane %v5025, 5
      %v5538 = vsel %vm1256, %v5536, %v5537
      %v5539 = vrot.slane %v5537, 4
      %v5540 = vrot.slane %v5053, 5
      %v5541 = vsel %vm1256, %v5539, %v5540
      %v5542 = vrot.slane %v5454, 5
      %v5543 = vrot.slane %v5542, 4
      %v5544 = vrot.slane %v5027, 5
      %v5545 = vsel %vm1256, %v5543, %v5544
      %v5546 = vrot.slane %v5544, 4
      %v5547 = vrot.slane %v5054, 5
      %v5548 = vsel %vm1256, %v5546, %v5547
      %v5549 = vrot.slane %v5455, 5
      %v5550 = vrot.slane %v5549, 4
      %v5551 = vrot.slane %v5029, 5
      %v5552 = vsel %vm1256, %v5550, %v5551
      %v5553 = vrot.slane %v5551, 4
      %v5554 = vrot.slane %v5055, 5
      %v5555 = vsel %vm1256, %v5553, %v5554
      %v5556 = vrot.slane %v5456, 5
      %v5557 = vrot.slane %v5556, 4
      %v5558 = vrot.slane %v5031, 5
      %v5559 = vsel %vm1256, %v5557, %v5558
      %v5560 = vrot.slane %v5558, 4
      %v5561 = vrot.slane %v5056, 5
      %v5562 = vsel %vm1256, %v5560, %v5561
      %v5563 = vrot.slane %v5457, 5
      %v5564 = vrot.slane %v5563, 4
      %v5565 = vrot.slane %v5033, 5
      %v5566 = vsel %vm1256, %v5564, %v5565
      %v5567 = vrot.slane %v5565, 4
      %v5568 = vrot.slane %v5057, 5
      %v5569 = vsel %vm1256, %v5567, %v5568
      %v5570 = vrot.slane %v5458, 5
      %v5571 = vrot.slane %v5570, 4
      %v5572 = vrot.slane %v5035, 5
      %v5573 = vsel %vm1256, %v5571, %v5572
      %v5574 = vrot.slane %v5572, 4
      %v5575 = vrot.slane %v5058, 5
      %v5576 = vsel %vm1256, %v5574, %v5575
      %v5577 = vrot.slane %v5459, 5
      %v5578 = vrot.slane %v5577, 4
      %v5579 = vrot.slane %v5037, 5
      %v5580 = vsel %vm1256, %v5578, %v5579
      %v5581 = vrot.slane %v5579, 4
      %v5582 = vrot.slane %v5059, 5
      %v5583 = vsel %vm1256, %v5581, %v5582
      %v5584 = vrot.slane %v5460, 5
      %v5585 = vrot.slane %v5584, 4
      %v5586 = vrot.slane %v5039, 5
      %v5587 = vsel %vm1256, %v5585, %v5586
      %v5588 = vrot.slane %v5586, 4
      %v5589 = vrot.slane %v5060, 5
      %v5590 = vsel %vm1256, %v5588, %v5589
      %v5591 = vrot.slane %v5461, 5
      %v5592 = vrot.slane %v5591, 4
      %v5593 = vrot.slane %v5041, 5
      %v5594 = vsel %vm1256, %v5592, %v5593
      %v5595 = vrot.slane %v5593, 4
      %v5596 = vrot.slane %v5061, 5
      %v5597 = vsel %vm1256, %v5595, %v5596
      %v5598 = vrot.slane %v5462, 5
      %v5599 = vrot.slane %v5598, 4
      %v5600 = vrot.slane %v5043, 5
      %v5601 = vsel %vm1256, %v5599, %v5600
      %v5602 = vrot.slane %v5600, 4
      %v5603 = vrot.slane %v5062, 5
      %v5604 = vsel %vm1256, %v5602, %v5603
      %v5605 = vrot.slane %v5463, 5
      %v5606 = vrot.slane %v5605, 4
      %v5607 = vrot.slane %v5045, 5
      %v5608 = vsel %vm1256, %v5606, %v5607
      %v5609 = vrot.slane %v5607, 4
      %v5610 = vrot.slane %v5063, 5
      %v5611 = vsel %vm1256, %v5609, %v5610
      %v5612 = vrot.slane %v5464, 5
      %v5613 = vrot.slane %v5612, 4
      %v5614 = vrot.slane %v5047, 5
      %v5615 = vsel %vm1256, %v5613, %v5614
      %v5616 = vrot.slane %v5614, 4
      %v5617 = vrot.slane %v5064, 5
      %v5618 = vsel %vm1256, %v5616, %v5617
      %v5619 = vrot.slane %v5465, 5
      %v5620 = vrot.slane %v5619, 4
      %v5621 = vrot.slane %v5049, 5
      %v5622 = vsel %vm1256, %v5620, %v5621
      %v5623 = vrot.slane %v5621, 4
      %v5624 = vrot.slane %v5065, 5
      %v5625 = vsel %vm1256, %v5623, %v5624
      %s5626 = scalar_lea.vmem [#allocation3], 24
      %v5627 = vld [vmem:[%s5626] sm:$0xf]
      %v5628 = vld [vmem:[%s5626 + $0x4] sm:$0xf]
      %v5629 = vld [vmem:[%s5626 + $0xc] sm:$0xf]
      %v5630 = vld [vmem:[%s5626 + $0x10] sm:$0xf]
      %v5631 = vld [vmem:[%s5626 + $0x18] sm:$0xf]
      %v5632 = vld [vmem:[%s5626 + $0x1c] sm:$0xf]
      %v5633 = vld [vmem:[%s5626 + $0x24] sm:$0xf]
      %v5634 = vld [vmem:[%s5626 + $0x28] sm:$0xf]
      %v5635 = vld [vmem:[%s5626 + $0x30] sm:$0xf]
      %v5636 = vld [vmem:[%s5626 + $0x34] sm:$0xf]
      %v5637 = vld [vmem:[%s5626 + $0x3c] sm:$0xf]
      %v5638 = vld [vmem:[%s5626 + $0x40] sm:$0xf]
      %v5639 = vld [vmem:[%s5626 + $0x48] sm:$0xf]
      %v5640 = vld [vmem:[%s5626 + $0x4c] sm:$0xf]
      %v5641 = vld [vmem:[%s5626 + $0x54] sm:$0xf]
      %v5642 = vld [vmem:[%s5626 + $0x58] sm:$0xf]
      %v5643 = vld [vmem:[%s5626 + $0x60] sm:$0xf]
      %v5644 = vld [vmem:[%s5626 + $0x64] sm:$0xf]
      %v5645 = vld [vmem:[%s5626 + $0x6c] sm:$0xf]
      %v5646 = vld [vmem:[%s5626 + $0x70] sm:$0xf]
      %v5647 = vld [vmem:[%s5626 + $0x78] sm:$0xf]
      %v5648 = vld [vmem:[%s5626 + $0x7c] sm:$0xf]
      %v5649 = vld [vmem:[%s5626 + $0x84] sm:$0xf]
      %v5650 = vld [vmem:[%s5626 + $0x88] sm:$0xf]
      %v5651 = vld [vmem:[%s5626 + $0x90] sm:$0xf]
      %v5652 = vld [vmem:[%s5626 + $0x94] sm:$0xf]
      %v5653 = vld [vmem:[%s5626 + $0x9c] sm:$0xf]
      %v5654 = vld [vmem:[%s5626 + $0xa0] sm:$0xf]
      %v5655 = vld [vmem:[%s5626 + $0xa8] sm:$0xf]
      %v5656 = vld [vmem:[%s5626 + $0xac] sm:$0xf]
      %v5657 = vld [vmem:[%s5626 + $0xb4] sm:$0xf]
      %v5658 = vld [vmem:[%s5626 + $0xb8] sm:$0xf]
      %v5659 = vld [vmem:[%s5626 + $0x8] sm:$0x1]
      %v5660 = vld [vmem:[%s5626 + $0x14] sm:$0x1]
      %v5661 = vld [vmem:[%s5626 + $0x20] sm:$0x1]
      %v5662 = vld [vmem:[%s5626 + $0x2c] sm:$0x1]
      %v5663 = vld [vmem:[%s5626 + $0x38] sm:$0x1]
      %v5664 = vld [vmem:[%s5626 + $0x44] sm:$0x1]
      %v5665 = vld [vmem:[%s5626 + $0x50] sm:$0x1]
      %v5666 = vld [vmem:[%s5626 + $0x5c] sm:$0x1]
      %v5667 = vld [vmem:[%s5626 + $0x68] sm:$0x1]
      %v5668 = vld [vmem:[%s5626 + $0x74] sm:$0x1]
      %v5669 = vld [vmem:[%s5626 + $0x80] sm:$0x1]
      %v5670 = vld [vmem:[%s5626 + $0x8c] sm:$0x1]
      %v5671 = vld [vmem:[%s5626 + $0x98] sm:$0x1]
      %v5672 = vld [vmem:[%s5626 + $0xa4] sm:$0x1]
      %v5673 = vld [vmem:[%s5626 + $0xb0] sm:$0x1]
      %v5674 = vld [vmem:[%s5626 + $0xbc] sm:$0x1]
      %v5676 = vshrl.u32 %v5627, 16
      %v5678 = vrot.slane %v5676, 4
      %v5679 = vshll.u32 %v5627, 16
      %v5681 = vrot.slane %v5679, 5
      %v5682 = vor.u32 %v5678, %v5681
      %v5683 = vrot.slane %v5682, 4
      %v5685 = vshll.u32 %v5628, 16
      %v5687 = vrot.slane %v5685, 5
      %v5688 = vsel %vm805, %v5683, %v5687
      %v5689 = vshrl.u32 %v5628, 16
      %v5691 = vrot.slane %v5689, 4
      %v5692 = vor.u32 %v5691, %v5687
      %v5693 = vrot.slane %v5692, 4
      %v5695 = vshll.u32 %v5659, 16
      %v5697 = vrot.slane %v5695, 5
      %v5698 = vsel %vm805, %v5693, %v5697
      %v5700 = vshrl.u32 %v5629, 16
      %v5702 = vrot.slane %v5700, 4
      %v5703 = vshll.u32 %v5629, 16
      %v5705 = vrot.slane %v5703, 5
      %v5706 = vor.u32 %v5702, %v5705
      %v5707 = vrot.slane %v5706, 4
      %v5709 = vshll.u32 %v5630, 16
      %v5711 = vrot.slane %v5709, 5
      %v5712 = vsel %vm805, %v5707, %v5711
      %v5713 = vshrl.u32 %v5630, 16
      %v5715 = vrot.slane %v5713, 4
      %v5716 = vor.u32 %v5715, %v5711
      %v5717 = vrot.slane %v5716, 4
      %v5719 = vshll.u32 %v5660, 16
      %v5721 = vrot.slane %v5719, 5
      %v5722 = vsel %vm805, %v5717, %v5721
      %v5724 = vshrl.u32 %v5631, 16
      %v5726 = vrot.slane %v5724, 4
      %v5727 = vshll.u32 %v5631, 16
      %v5729 = vrot.slane %v5727, 5
      %v5730 = vor.u32 %v5726, %v5729
      %v5731 = vrot.slane %v5730, 4
      %v5733 = vshll.u32 %v5632, 16
      %v5735 = vrot.slane %v5733, 5
      %v5736 = vsel %vm805, %v5731, %v5735
      %v5737 = vshrl.u32 %v5632, 16
      %v5739 = vrot.slane %v5737, 4
      %v5740 = vor.u32 %v5739, %v5735
      %v5741 = vrot.slane %v5740, 4
      %v5743 = vshll.u32 %v5661, 16
      %v5745 = vrot.slane %v5743, 5
      %v5746 = vsel %vm805, %v5741, %v5745
      %v5748 = vshrl.u32 %v5633, 16
      %v5750 = vrot.slane %v5748, 4
      %v5751 = vshll.u32 %v5633, 16
      %v5753 = vrot.slane %v5751, 5
      %v5754 = vor.u32 %v5750, %v5753
      %v5755 = vrot.slane %v5754, 4
      %v5757 = vshll.u32 %v5634, 16
      %v5759 = vrot.slane %v5757, 5
      %v5760 = vsel %vm805, %v5755, %v5759
      %v5761 = vshrl.u32 %v5634, 16
      %v5763 = vrot.slane %v5761, 4
      %v5764 = vor.u32 %v5763, %v5759
      %v5765 = vrot.slane %v5764, 4
      %v5767 = vshll.u32 %v5662, 16
      %v5769 = vrot.slane %v5767, 5
      %v5770 = vsel %vm805, %v5765, %v5769
      %v5772 = vshrl.u32 %v5635, 16
      %v5774 = vrot.slane %v5772, 4
      %v5775 = vshll.u32 %v5635, 16
      %v5777 = vrot.slane %v5775, 5
      %v5778 = vor.u32 %v5774, %v5777
      %v5779 = vrot.slane %v5778, 4
      %v5781 = vshll.u32 %v5636, 16
      %v5783 = vrot.slane %v5781, 5
      %v5784 = vsel %vm805, %v5779, %v5783
      %v5785 = vshrl.u32 %v5636, 16
      %v5787 = vrot.slane %v5785, 4
      %v5788 = vor.u32 %v5787, %v5783
      %v5789 = vrot.slane %v5788, 4
      %v5791 = vshll.u32 %v5663, 16
      %v5793 = vrot.slane %v5791, 5
      %v5794 = vsel %vm805, %v5789, %v5793
      %v5796 = vshrl.u32 %v5637, 16
      %v5798 = vrot.slane %v5796, 4
      %v5799 = vshll.u32 %v5637, 16
      %v5801 = vrot.slane %v5799, 5
      %v5802 = vor.u32 %v5798, %v5801
      %v5803 = vrot.slane %v5802, 4
      %v5805 = vshll.u32 %v5638, 16
      %v5807 = vrot.slane %v5805, 5
      %v5808 = vsel %vm805, %v5803, %v5807
      %v5809 = vshrl.u32 %v5638, 16
      %v5811 = vrot.slane %v5809, 4
      %v5812 = vor.u32 %v5811, %v5807
      %v5813 = vrot.slane %v5812, 4
      %v5815 = vshll.u32 %v5664, 16
      %v5817 = vrot.slane %v5815, 5
      %v5818 = vsel %vm805, %v5813, %v5817
      %v5820 = vshrl.u32 %v5639, 16
      %v5822 = vrot.slane %v5820, 4
      %v5823 = vshll.u32 %v5639, 16
      %v5825 = vrot.slane %v5823, 5
      %v5826 = vor.u32 %v5822, %v5825
      %v5827 = vrot.slane %v5826, 4
      %v5829 = vshll.u32 %v5640, 16
      %v5831 = vrot.slane %v5829, 5
      %v5832 = vsel %vm805, %v5827, %v5831
      %v5833 = vshrl.u32 %v5640, 16
      %v5835 = vrot.slane %v5833, 4
      %v5836 = vor.u32 %v5835, %v5831
      %v5837 = vrot.slane %v5836, 4
      %v5839 = vshll.u32 %v5665, 16
      %v5841 = vrot.slane %v5839, 5
      %v5842 = vsel %vm805, %v5837, %v5841
      %v5844 = vshrl.u32 %v5641, 16
      %v5846 = vrot.slane %v5844, 4
      %v5847 = vshll.u32 %v5641, 16
      %v5849 = vrot.slane %v5847, 5
      %v5850 = vor.u32 %v5846, %v5849
      %v5851 = vrot.slane %v5850, 4
      %v5853 = vshll.u32 %v5642, 16
      %v5855 = vrot.slane %v5853, 5
      %v5856 = vsel %vm805, %v5851, %v5855
      %v5857 = vshrl.u32 %v5642, 16
      %v5859 = vrot.slane %v5857, 4
      %v5860 = vor.u32 %v5859, %v5855
      %v5861 = vrot.slane %v5860, 4
      %v5863 = vshll.u32 %v5666, 16
      %v5865 = vrot.slane %v5863, 5
      %v5866 = vsel %vm805, %v5861, %v5865
      %v5868 = vshrl.u32 %v5643, 16
      %v5870 = vrot.slane %v5868, 4
      %v5871 = vshll.u32 %v5643, 16
      %v5873 = vrot.slane %v5871, 5
      %v5874 = vor.u32 %v5870, %v5873
      %v5875 = vrot.slane %v5874, 4
      %v5877 = vshll.u32 %v5644, 16
      %v5879 = vrot.slane %v5877, 5
      %v5880 = vsel %vm805, %v5875, %v5879
      %v5881 = vshrl.u32 %v5644, 16
      %v5883 = vrot.slane %v5881, 4
      %v5884 = vor.u32 %v5883, %v5879
      %v5885 = vrot.slane %v5884, 4
      %v5887 = vshll.u32 %v5667, 16
      %v5889 = vrot.slane %v5887, 5
      %v5890 = vsel %vm805, %v5885, %v5889
      %v5892 = vshrl.u32 %v5645, 16
      %v5894 = vrot.slane %v5892, 4
      %v5895 = vshll.u32 %v5645, 16
      %v5897 = vrot.slane %v5895, 5
      %v5898 = vor.u32 %v5894, %v5897
      %v5899 = vrot.slane %v5898, 4
      %v5901 = vshll.u32 %v5646, 16
      %v5903 = vrot.slane %v5901, 5
      %v5904 = vsel %vm805, %v5899, %v5903
      %v5905 = vshrl.u32 %v5646, 16
      %v5907 = vrot.slane %v5905, 4
      %v5908 = vor.u32 %v5907, %v5903
      %v5909 = vrot.slane %v5908, 4
      %v5911 = vshll.u32 %v5668, 16
      %v5913 = vrot.slane %v5911, 5
      %v5914 = vsel %vm805, %v5909, %v5913
      %v5916 = vshrl.u32 %v5647, 16
      %v5918 = vrot.slane %v5916, 4
      %v5919 = vshll.u32 %v5647, 16
      %v5921 = vrot.slane %v5919, 5
      %v5922 = vor.u32 %v5918, %v5921
      %v5923 = vrot.slane %v5922, 4
      %v5925 = vshll.u32 %v5648, 16
      %v5927 = vrot.slane %v5925, 5
      %v5928 = vsel %vm805, %v5923, %v5927
      %v5929 = vshrl.u32 %v5648, 16
      %v5931 = vrot.slane %v5929, 4
      %v5932 = vor.u32 %v5931, %v5927
      %v5933 = vrot.slane %v5932, 4
      %v5935 = vshll.u32 %v5669, 16
      %v5937 = vrot.slane %v5935, 5
      %v5938 = vsel %vm805, %v5933, %v5937
      %v5940 = vshrl.u32 %v5649, 16
      %v5942 = vrot.slane %v5940, 4
      %v5943 = vshll.u32 %v5649, 16
      %v5945 = vrot.slane %v5943, 5
      %v5946 = vor.u32 %v5942, %v5945
      %v5947 = vrot.slane %v5946, 4
      %v5949 = vshll.u32 %v5650, 16
      %v5951 = vrot.slane %v5949, 5
      %v5952 = vsel %vm805, %v5947, %v5951
      %v5953 = vshrl.u32 %v5650, 16
      %v5955 = vrot.slane %v5953, 4
      %v5956 = vor.u32 %v5955, %v5951
      %v5957 = vrot.slane %v5956, 4
      %v5959 = vshll.u32 %v5670, 16
      %v5961 = vrot.slane %v5959, 5
      %v5962 = vsel %vm805, %v5957, %v5961
      %v5964 = vshrl.u32 %v5651, 16
      %v5966 = vrot.slane %v5964, 4
      %v5967 = vshll.u32 %v5651, 16
      %v5969 = vrot.slane %v5967, 5
      %v5970 = vor.u32 %v5966, %v5969
      %v5971 = vrot.slane %v5970, 4
      %v5973 = vshll.u32 %v5652, 16
      %v5975 = vrot.slane %v5973, 5
      %v5976 = vsel %vm805, %v5971, %v5975
      %v5977 = vshrl.u32 %v5652, 16
      %v5979 = vrot.slane %v5977, 4
      %v5980 = vor.u32 %v5979, %v5975
      %v5981 = vrot.slane %v5980, 4
      %v5983 = vshll.u32 %v5671, 16
      %v5985 = vrot.slane %v5983, 5
      %v5986 = vsel %vm805, %v5981, %v5985
      %v5988 = vshrl.u32 %v5653, 16
      %v5990 = vrot.slane %v5988, 4
      %v5991 = vshll.u32 %v5653, 16
      %v5993 = vrot.slane %v5991, 5
      %v5994 = vor.u32 %v5990, %v5993
      %v5995 = vrot.slane %v5994, 4
      %v5997 = vshll.u32 %v5654, 16
      %v5999 = vrot.slane %v5997, 5
      %v6000 = vsel %vm805, %v5995, %v5999
      %v6001 = vshrl.u32 %v5654, 16
      %v6003 = vrot.slane %v6001, 4
      %v6004 = vor.u32 %v6003, %v5999
      %v6005 = vrot.slane %v6004, 4
      %v6007 = vshll.u32 %v5672, 16
      %v6009 = vrot.slane %v6007, 5
      %v6010 = vsel %vm805, %v6005, %v6009
      %v6012 = vshrl.u32 %v5655, 16
      %v6014 = vrot.slane %v6012, 4
      %v6015 = vshll.u32 %v5655, 16
      %v6017 = vrot.slane %v6015, 5
      %v6018 = vor.u32 %v6014, %v6017
      %v6019 = vrot.slane %v6018, 4
      %v6021 = vshll.u32 %v5656, 16
      %v6023 = vrot.slane %v6021, 5
      %v6024 = vsel %vm805, %v6019, %v6023
      %v6025 = vshrl.u32 %v5656, 16
      %v6027 = vrot.slane %v6025, 4
      %v6028 = vor.u32 %v6027, %v6023
      %v6029 = vrot.slane %v6028, 4
      %v6031 = vshll.u32 %v5673, 16
      %v6033 = vrot.slane %v6031, 5
      %v6034 = vsel %vm805, %v6029, %v6033
      %v6036 = vshrl.u32 %v5657, 16
      %v6038 = vrot.slane %v6036, 4
      %v6039 = vshll.u32 %v5657, 16
      %v6041 = vrot.slane %v6039, 5
      %v6042 = vor.u32 %v6038, %v6041
      %v6043 = vrot.slane %v6042, 4
      %v6045 = vshll.u32 %v5658, 16
      %v6047 = vrot.slane %v6045, 5
      %v6048 = vsel %vm805, %v6043, %v6047
      %v6049 = vshrl.u32 %v5658, 16
      %v6051 = vrot.slane %v6049, 4
      %v6052 = vor.u32 %v6051, %v6047
      %v6053 = vrot.slane %v6052, 4
      %v6055 = vshll.u32 %v5674, 16
      %v6057 = vrot.slane %v6055, 5
      %v6058 = vsel %vm805, %v6053, %v6057
      %v6059 = vld [vmem:[%s5626] sm:$0xe]
      %v6060 = vld [vmem:[%s5626 + $0xc] sm:$0xe]
      %v6061 = vld [vmem:[%s5626 + $0x18] sm:$0xe]
      %v6062 = vld [vmem:[%s5626 + $0x24] sm:$0xe]
      %v6063 = vld [vmem:[%s5626 + $0x30] sm:$0xe]
      %v6064 = vld [vmem:[%s5626 + $0x3c] sm:$0xe]
      %v6065 = vld [vmem:[%s5626 + $0x48] sm:$0xe]
      %v6066 = vld [vmem:[%s5626 + $0x54] sm:$0xe]
      %v6067 = vld [vmem:[%s5626 + $0x60] sm:$0xe]
      %v6068 = vld [vmem:[%s5626 + $0x6c] sm:$0xe]
      %v6069 = vld [vmem:[%s5626 + $0x78] sm:$0xe]
      %v6070 = vld [vmem:[%s5626 + $0x84] sm:$0xe]
      %v6071 = vld [vmem:[%s5626 + $0x90] sm:$0xe]
      %v6072 = vld [vmem:[%s5626 + $0x9c] sm:$0xe]
      %v6073 = vld [vmem:[%s5626 + $0xa8] sm:$0xe]
      %v6074 = vld [vmem:[%s5626 + $0xb4] sm:$0xe]
      %v6123 = vrot.slane %v6059, 5
      %v6124 = vrot.slane %v6123, 4
      %v6125 = vrot.slane %v5628, 5
      %v6126 = vsel %vm1256, %v6124, %v6125
      %v6127 = vrot.slane %v6125, 4
      %v6128 = vrot.slane %v5659, 5
      %v6129 = vsel %vm1256, %v6127, %v6128
      %v6130 = vrot.slane %v6060, 5
      %v6131 = vrot.slane %v6130, 4
      %v6132 = vrot.slane %v5630, 5
      %v6133 = vsel %vm1256, %v6131, %v6132
      %v6134 = vrot.slane %v6132, 4
      %v6135 = vrot.slane %v5660, 5
      %v6136 = vsel %vm1256, %v6134, %v6135
      %v6137 = vrot.slane %v6061, 5
      %v6138 = vrot.slane %v6137, 4
      %v6139 = vrot.slane %v5632, 5
      %v6140 = vsel %vm1256, %v6138, %v6139
      %v6141 = vrot.slane %v6139, 4
      %v6142 = vrot.slane %v5661, 5
      %v6143 = vsel %vm1256, %v6141, %v6142
      %v6144 = vrot.slane %v6062, 5
      %v6145 = vrot.slane %v6144, 4
      %v6146 = vrot.slane %v5634, 5
      %v6147 = vsel %vm1256, %v6145, %v6146
      %v6148 = vrot.slane %v6146, 4
      %v6149 = vrot.slane %v5662, 5
      %v6150 = vsel %vm1256, %v6148, %v6149
      %v6151 = vrot.slane %v6063, 5
      %v6152 = vrot.slane %v6151, 4
      %v6153 = vrot.slane %v5636, 5
      %v6154 = vsel %vm1256, %v6152, %v6153
      %v6155 = vrot.slane %v6153, 4
      %v6156 = vrot.slane %v5663, 5
      %v6157 = vsel %vm1256, %v6155, %v6156
      %v6158 = vrot.slane %v6064, 5
      %v6159 = vrot.slane %v6158, 4
      %v6160 = vrot.slane %v5638, 5
      %v6161 = vsel %vm1256, %v6159, %v6160
      %v6162 = vrot.slane %v6160, 4
      %v6163 = vrot.slane %v5664, 5
      %v6164 = vsel %vm1256, %v6162, %v6163
      %v6165 = vrot.slane %v6065, 5
      %v6166 = vrot.slane %v6165, 4
      %v6167 = vrot.slane %v5640, 5
      %v6168 = vsel %vm1256, %v6166, %v6167
      %v6169 = vrot.slane %v6167, 4
      %v6170 = vrot.slane %v5665, 5
      %v6171 = vsel %vm1256, %v6169, %v6170
      %v6172 = vrot.slane %v6066, 5
      %v6173 = vrot.slane %v6172, 4
      %v6174 = vrot.slane %v5642, 5
      %v6175 = vsel %vm1256, %v6173, %v6174
      %v6176 = vrot.slane %v6174, 4
      %v6177 = vrot.slane %v5666, 5
      %v6178 = vsel %vm1256, %v6176, %v6177
      %v6179 = vrot.slane %v6067, 5
      %v6180 = vrot.slane %v6179, 4
      %v6181 = vrot.slane %v5644, 5
      %v6182 = vsel %vm1256, %v6180, %v6181
      %v6183 = vrot.slane %v6181, 4
      %v6184 = vrot.slane %v5667, 5
      %v6185 = vsel %vm1256, %v6183, %v6184
      %v6186 = vrot.slane %v6068, 5
      %v6187 = vrot.slane %v6186, 4
      %v6188 = vrot.slane %v5646, 5
      %v6189 = vsel %vm1256, %v6187, %v6188
      %v6190 = vrot.slane %v6188, 4
      %v6191 = vrot.slane %v5668, 5
      %v6192 = vsel %vm1256, %v6190, %v6191
      %v6193 = vrot.slane %v6069, 5
      %v6194 = vrot.slane %v6193, 4
      %v6195 = vrot.slane %v5648, 5
      %v6196 = vsel %vm1256, %v6194, %v6195
      %v6197 = vrot.slane %v6195, 4
      %v6198 = vrot.slane %v5669, 5
      %v6199 = vsel %vm1256, %v6197, %v6198
      %v6200 = vrot.slane %v6070, 5
      %v6201 = vrot.slane %v6200, 4
      %v6202 = vrot.slane %v5650, 5
      %v6203 = vsel %vm1256, %v6201, %v6202
      %v6204 = vrot.slane %v6202, 4
      %v6205 = vrot.slane %v5670, 5
      %v6206 = vsel %vm1256, %v6204, %v6205
      %v6207 = vrot.slane %v6071, 5
      %v6208 = vrot.slane %v6207, 4
      %v6209 = vrot.slane %v5652, 5
      %v6210 = vsel %vm1256, %v6208, %v6209
      %v6211 = vrot.slane %v6209, 4
      %v6212 = vrot.slane %v5671, 5
      %v6213 = vsel %vm1256, %v6211, %v6212
      %v6214 = vrot.slane %v6072, 5
      %v6215 = vrot.slane %v6214, 4
      %v6216 = vrot.slane %v5654, 5
      %v6217 = vsel %vm1256, %v6215, %v6216
      %v6218 = vrot.slane %v6216, 4
      %v6219 = vrot.slane %v5672, 5
      %v6220 = vsel %vm1256, %v6218, %v6219
      %v6221 = vrot.slane %v6073, 5
      %v6222 = vrot.slane %v6221, 4
      %v6223 = vrot.slane %v5656, 5
      %v6224 = vsel %vm1256, %v6222, %v6223
      %v6225 = vrot.slane %v6223, 4
      %v6226 = vrot.slane %v5673, 5
      %v6227 = vsel %vm1256, %v6225, %v6226
      %v6228 = vrot.slane %v6074, 5
      %v6229 = vrot.slane %v6228, 4
      %v6230 = vrot.slane %v5658, 5
      %v6231 = vsel %vm1256, %v6229, %v6230
      %v6232 = vrot.slane %v6230, 4
      %v6233 = vrot.slane %v5674, 5
      %v6234 = vsel %vm1256, %v6232, %v6233
      %v6251 = vunpack.c.l.b16 %v4410
      %v6252 = vunpack.c.l.b16 %v4411
      %v6253 = vunpack.c.l.b16 %v4412
      %v6254 = vunpack.c.l.b16 %v4413
      %v6255 = vunpack.c.l.b16 %v4414
      %v6256 = vunpack.c.l.b16 %v4415
      %v6257 = vunpack.c.l.b16 %v4416
      %v6258 = vunpack.c.l.b16 %v4417
      %v6259 = vunpack.c.l.b16 %v4418
      %v6260 = vunpack.c.l.b16 %v4419
      %v6261 = vunpack.c.l.b16 %v4420
      %v6262 = vunpack.c.l.b16 %v4421
      %v6263 = vunpack.c.l.b16 %v4422
      %v6264 = vunpack.c.l.b16 %v4423
      %v6265 = vunpack.c.l.b16 %v4424
      %v6266 = vunpack.c.l.b16 %v4425
      %v6267 = vunpack.c.l.b16 %v4426
      %v6268 = vunpack.c.l.b16 %v4427
      %v6269 = vunpack.c.l.b16 %v4428
      %v6270 = vunpack.c.l.b16 %v4429
      %v6271 = vunpack.c.l.b16 %v4430
      %v6272 = vunpack.c.l.b16 %v4431
      %v6273 = vunpack.c.l.b16 %v4432
      %v6274 = vunpack.c.l.b16 %v4433
      %v6275 = vunpack.c.l.b16 %v4434
      %v6276 = vunpack.c.l.b16 %v4435
      %v6277 = vunpack.c.l.b16 %v4436
      %v6278 = vunpack.c.l.b16 %v4437
      %v6279 = vunpack.c.l.b16 %v4438
      %v6280 = vunpack.c.l.b16 %v4439
      %v6281 = vunpack.c.l.b16 %v4440
      %v6282 = vunpack.c.l.b16 %v4441
      %v6283 = vpack.c.b16 %v6252, %v6251
      %v6284 = vpack.c.b16 %v6254, %v6253
      %v6285 = vpack.c.b16 %v6256, %v6255
      %v6286 = vpack.c.b16 %v6258, %v6257
      %v6287 = vpack.c.b16 %v6260, %v6259
      %v6288 = vpack.c.b16 %v6262, %v6261
      %v6289 = vpack.c.b16 %v6264, %v6263
      %v6290 = vpack.c.b16 %v6266, %v6265
      %v6291 = vpack.c.b16 %v6268, %v6267
      %v6292 = vpack.c.b16 %v6270, %v6269
      %v6293 = vpack.c.b16 %v6272, %v6271
      %v6294 = vpack.c.b16 %v6274, %v6273
      %v6295 = vpack.c.b16 %v6276, %v6275
      %v6296 = vpack.c.b16 %v6278, %v6277
      %v6297 = vpack.c.b16 %v6280, %v6279
      %v6298 = vpack.c.b16 %v6282, %v6281
      %v6315 = vunpack.c.l.b16 %v4471
      %v6316 = vunpack.c.l.b16 %v4481
      %v6317 = vunpack.c.l.b16 %v4495
      %v6318 = vunpack.c.l.b16 %v4505
      %v6319 = vunpack.c.l.b16 %v4519
      %v6320 = vunpack.c.l.b16 %v4529
      %v6321 = vunpack.c.l.b16 %v4543
      %v6322 = vunpack.c.l.b16 %v4553
      %v6323 = vunpack.c.l.b16 %v4567
      %v6324 = vunpack.c.l.b16 %v4577
      %v6325 = vunpack.c.l.b16 %v4591
      %v6326 = vunpack.c.l.b16 %v4601
      %v6327 = vunpack.c.l.b16 %v4615
      %v6328 = vunpack.c.l.b16 %v4625
      %v6329 = vunpack.c.l.b16 %v4639
      %v6330 = vunpack.c.l.b16 %v4649
      %v6331 = vunpack.c.l.b16 %v4663
      %v6332 = vunpack.c.l.b16 %v4673
      %v6333 = vunpack.c.l.b16 %v4687
      %v6334 = vunpack.c.l.b16 %v4697
      %v6335 = vunpack.c.l.b16 %v4711
      %v6336 = vunpack.c.l.b16 %v4721
      %v6337 = vunpack.c.l.b16 %v4735
      %v6338 = vunpack.c.l.b16 %v4745
      %v6339 = vunpack.c.l.b16 %v4759
      %v6340 = vunpack.c.l.b16 %v4769
      %v6341 = vunpack.c.l.b16 %v4783
      %v6342 = vunpack.c.l.b16 %v4793
      %v6343 = vunpack.c.l.b16 %v4807
      %v6344 = vunpack.c.l.b16 %v4817
      %v6345 = vunpack.c.l.b16 %v4831
      %v6346 = vunpack.c.l.b16 %v4841
      %v6347 = vpack.c.b16 %v6316, %v6315
      %v6348 = vpack.c.b16 %v6318, %v6317
      %v6349 = vpack.c.b16 %v6320, %v6319
      %v6350 = vpack.c.b16 %v6322, %v6321
      %v6351 = vpack.c.b16 %v6324, %v6323
      %v6352 = vpack.c.b16 %v6326, %v6325
      %v6353 = vpack.c.b16 %v6328, %v6327
      %v6354 = vpack.c.b16 %v6330, %v6329
      %v6355 = vpack.c.b16 %v6332, %v6331
      %v6356 = vpack.c.b16 %v6334, %v6333
      %v6357 = vpack.c.b16 %v6336, %v6335
      %v6358 = vpack.c.b16 %v6338, %v6337
      %v6359 = vpack.c.b16 %v6340, %v6339
      %v6360 = vpack.c.b16 %v6342, %v6341
      %v6361 = vpack.c.b16 %v6344, %v6343
      %v6362 = vpack.c.b16 %v6346, %v6345
      %v6379 = vunpack.c.l.b16 %v4909
      %v6380 = vunpack.c.l.b16 %v4912
      %v6381 = vunpack.c.l.b16 %v4916
      %v6382 = vunpack.c.l.b16 %v4919
      %v6383 = vunpack.c.l.b16 %v4923
      %v6384 = vunpack.c.l.b16 %v4926
      %v6385 = vunpack.c.l.b16 %v4930
      %v6386 = vunpack.c.l.b16 %v4933
      %v6387 = vunpack.c.l.b16 %v4937
      %v6388 = vunpack.c.l.b16 %v4940
      %v6389 = vunpack.c.l.b16 %v4944
      %v6390 = vunpack.c.l.b16 %v4947
      %v6391 = vunpack.c.l.b16 %v4951
      %v6392 = vunpack.c.l.b16 %v4954
      %v6393 = vunpack.c.l.b16 %v4958
      %v6394 = vunpack.c.l.b16 %v4961
      %v6395 = vunpack.c.l.b16 %v4965
      %v6396 = vunpack.c.l.b16 %v4968
      %v6397 = vunpack.c.l.b16 %v4972
      %v6398 = vunpack.c.l.b16 %v4975
      %v6399 = vunpack.c.l.b16 %v4979
      %v6400 = vunpack.c.l.b16 %v4982
      %v6401 = vunpack.c.l.b16 %v4986
      %v6402 = vunpack.c.l.b16 %v4989
      %v6403 = vunpack.c.l.b16 %v4993
      %v6404 = vunpack.c.l.b16 %v4996
      %v6405 = vunpack.c.l.b16 %v5000
      %v6406 = vunpack.c.l.b16 %v5003
      %v6407 = vunpack.c.l.b16 %v5007
      %v6408 = vunpack.c.l.b16 %v5010
      %v6409 = vunpack.c.l.b16 %v5014
      %v6410 = vunpack.c.l.b16 %v5017
      %v6411 = vpack.c.b16 %v6380, %v6379
      %v6412 = vpack.c.b16 %v6382, %v6381
      %v6413 = vpack.c.b16 %v6384, %v6383
      %v6414 = vpack.c.b16 %v6386, %v6385
      %v6415 = vpack.c.b16 %v6388, %v6387
      %v6416 = vpack.c.b16 %v6390, %v6389
      %v6417 = vpack.c.b16 %v6392, %v6391
      %v6418 = vpack.c.b16 %v6394, %v6393
      %v6419 = vpack.c.b16 %v6396, %v6395
      %v6420 = vpack.c.b16 %v6398, %v6397
      %v6421 = vpack.c.b16 %v6400, %v6399
      %v6422 = vpack.c.b16 %v6402, %v6401
      %v6423 = vpack.c.b16 %v6404, %v6403
      %v6424 = vpack.c.b16 %v6406, %v6405
      %v6425 = vpack.c.b16 %v6408, %v6407
      %v6426 = vpack.c.b16 %v6410, %v6409
      %v6459 = vunpack.c.l.b16 %v5018
      %v6460 = vunpack.c.l.b16 %v5019
      %v6461 = vunpack.c.l.b16 %v5020
      %v6462 = vunpack.c.l.b16 %v5021
      %v6463 = vunpack.c.l.b16 %v5022
      %v6464 = vunpack.c.l.b16 %v5023
      %v6465 = vunpack.c.l.b16 %v5024
      %v6466 = vunpack.c.l.b16 %v5025
      %v6467 = vunpack.c.l.b16 %v5026
      %v6468 = vunpack.c.l.b16 %v5027
      %v6469 = vunpack.c.l.b16 %v5028
      %v6470 = vunpack.c.l.b16 %v5029
      %v6471 = vunpack.c.l.b16 %v5030
      %v6472 = vunpack.c.l.b16 %v5031
      %v6473 = vunpack.c.l.b16 %v5032
      %v6474 = vunpack.c.l.b16 %v5033
      %v6475 = vunpack.c.l.b16 %v5034
      %v6476 = vunpack.c.l.b16 %v5035
      %v6477 = vunpack.c.l.b16 %v5036
      %v6478 = vunpack.c.l.b16 %v5037
      %v6479 = vunpack.c.l.b16 %v5038
      %v6480 = vunpack.c.l.b16 %v5039
      %v6481 = vunpack.c.l.b16 %v5040
      %v6482 = vunpack.c.l.b16 %v5041
      %v6483 = vunpack.c.l.b16 %v5042
      %v6484 = vunpack.c.l.b16 %v5043
      %v6485 = vunpack.c.l.b16 %v5044
      %v6486 = vunpack.c.l.b16 %v5045
      %v6487 = vunpack.c.l.b16 %v5046
      %v6488 = vunpack.c.l.b16 %v5047
      %v6489 = vunpack.c.l.b16 %v5048
      %v6490 = vunpack.c.l.b16 %v5049
      %v6491 = vpack.c.b16 %v6460, %v6459
      %v6492 = vpack.c.b16 %v6462, %v6461
      %v6493 = vpack.c.b16 %v6464, %v6463
      %v6494 = vpack.c.b16 %v6466, %v6465
      %v6495 = vpack.c.b16 %v6468, %v6467
      %v6496 = vpack.c.b16 %v6470, %v6469
      %v6497 = vpack.c.b16 %v6472, %v6471
      %v6498 = vpack.c.b16 %v6474, %v6473
      %v6499 = vpack.c.b16 %v6476, %v6475
      %v6500 = vpack.c.b16 %v6478, %v6477
      %v6501 = vpack.c.b16 %v6480, %v6479
      %v6502 = vpack.c.b16 %v6482, %v6481
      %v6503 = vpack.c.b16 %v6484, %v6483
      %v6504 = vpack.c.b16 %v6486, %v6485
      %v6505 = vpack.c.b16 %v6488, %v6487
      %v6506 = vpack.c.b16 %v6490, %v6489
      %v6523 = vunpack.c.l.b16 %v5079
      %v6524 = vunpack.c.l.b16 %v5089
      %v6525 = vunpack.c.l.b16 %v5103
      %v6526 = vunpack.c.l.b16 %v5113
      %v6527 = vunpack.c.l.b16 %v5127
      %v6528 = vunpack.c.l.b16 %v5137
      %v6529 = vunpack.c.l.b16 %v5151
      %v6530 = vunpack.c.l.b16 %v5161
      %v6531 = vunpack.c.l.b16 %v5175
      %v6532 = vunpack.c.l.b16 %v5185
      %v6533 = vunpack.c.l.b16 %v5199
      %v6534 = vunpack.c.l.b16 %v5209
      %v6535 = vunpack.c.l.b16 %v5223
      %v6536 = vunpack.c.l.b16 %v5233
      %v6537 = vunpack.c.l.b16 %v5247
      %v6538 = vunpack.c.l.b16 %v5257
      %v6539 = vunpack.c.l.b16 %v5271
      %v6540 = vunpack.c.l.b16 %v5281
      %v6541 = vunpack.c.l.b16 %v5295
      %v6542 = vunpack.c.l.b16 %v5305
      %v6543 = vunpack.c.l.b16 %v5319
      %v6544 = vunpack.c.l.b16 %v5329
      %v6545 = vunpack.c.l.b16 %v5343
      %v6546 = vunpack.c.l.b16 %v5353
      %v6547 = vunpack.c.l.b16 %v5367
      %v6548 = vunpack.c.l.b16 %v5377
      %v6549 = vunpack.c.l.b16 %v5391
      %v6550 = vunpack.c.l.b16 %v5401
      %v6551 = vunpack.c.l.b16 %v5415
      %v6552 = vunpack.c.l.b16 %v5425
      %v6553 = vunpack.c.l.b16 %v5439
      %v6554 = vunpack.c.l.b16 %v5449
      %v6555 = vpack.c.b16 %v6524, %v6523
      %v6556 = vpack.c.b16 %v6526, %v6525
      %v6557 = vpack.c.b16 %v6528, %v6527
      %v6558 = vpack.c.b16 %v6530, %v6529
      %v6559 = vpack.c.b16 %v6532, %v6531
      %v6560 = vpack.c.b16 %v6534, %v6533
      %v6561 = vpack.c.b16 %v6536, %v6535
      %v6562 = vpack.c.b16 %v6538, %v6537
      %v6563 = vpack.c.b16 %v6540, %v6539
      %v6564 = vpack.c.b16 %v6542, %v6541
      %v6565 = vpack.c.b16 %v6544, %v6543
      %v6566 = vpack.c.b16 %v6546, %v6545
      %v6567 = vpack.c.b16 %v6548, %v6547
      %v6568 = vpack.c.b16 %v6550, %v6549
      %v6569 = vpack.c.b16 %v6552, %v6551
      %v6570 = vpack.c.b16 %v6554, %v6553
      %v6587 = vunpack.c.l.b16 %v5517
      %v6588 = vunpack.c.l.b16 %v5520
      %v6589 = vunpack.c.l.b16 %v5524
      %v6590 = vunpack.c.l.b16 %v5527
      %v6591 = vunpack.c.l.b16 %v5531
      %v6592 = vunpack.c.l.b16 %v5534
      %v6593 = vunpack.c.l.b16 %v5538
      %v6594 = vunpack.c.l.b16 %v5541
      %v6595 = vunpack.c.l.b16 %v5545
      %v6596 = vunpack.c.l.b16 %v5548
      %v6597 = vunpack.c.l.b16 %v5552
      %v6598 = vunpack.c.l.b16 %v5555
      %v6599 = vunpack.c.l.b16 %v5559
      %v6600 = vunpack.c.l.b16 %v5562
      %v6601 = vunpack.c.l.b16 %v5566
      %v6602 = vunpack.c.l.b16 %v5569
      %v6603 = vunpack.c.l.b16 %v5573
      %v6604 = vunpack.c.l.b16 %v5576
      %v6605 = vunpack.c.l.b16 %v5580
      %v6606 = vunpack.c.l.b16 %v5583
      %v6607 = vunpack.c.l.b16 %v5587
      %v6608 = vunpack.c.l.b16 %v5590
      %v6609 = vunpack.c.l.b16 %v5594
      %v6610 = vunpack.c.l.b16 %v5597
      %v6611 = vunpack.c.l.b16 %v5601
      %v6612 = vunpack.c.l.b16 %v5604
      %v6613 = vunpack.c.l.b16 %v5608
      %v6614 = vunpack.c.l.b16 %v5611
      %v6615 = vunpack.c.l.b16 %v5615
      %v6616 = vunpack.c.l.b16 %v5618
      %v6617 = vunpack.c.l.b16 %v5622
      %v6618 = vunpack.c.l.b16 %v5625
      %v6619 = vpack.c.b16 %v6588, %v6587
      %v6620 = vpack.c.b16 %v6590, %v6589
      %v6621 = vpack.c.b16 %v6592, %v6591
      %v6622 = vpack.c.b16 %v6594, %v6593
      %v6623 = vpack.c.b16 %v6596, %v6595
      %v6624 = vpack.c.b16 %v6598, %v6597
      %v6625 = vpack.c.b16 %v6600, %v6599
      %v6626 = vpack.c.b16 %v6602, %v6601
      %v6627 = vpack.c.b16 %v6604, %v6603
      %v6628 = vpack.c.b16 %v6606, %v6605
      %v6629 = vpack.c.b16 %v6608, %v6607
      %v6630 = vpack.c.b16 %v6610, %v6609
      %v6631 = vpack.c.b16 %v6612, %v6611
      %v6632 = vpack.c.b16 %v6614, %v6613
      %v6633 = vpack.c.b16 %v6616, %v6615
      %v6634 = vpack.c.b16 %v6618, %v6617
      %v6667 = vunpack.c.l.b16 %v5627
      %v6668 = vunpack.c.l.b16 %v5628
      %v6669 = vunpack.c.l.b16 %v5629
      %v6670 = vunpack.c.l.b16 %v5630
      %v6671 = vunpack.c.l.b16 %v5631
      %v6672 = vunpack.c.l.b16 %v5632
      %v6673 = vunpack.c.l.b16 %v5633
      %v6674 = vunpack.c.l.b16 %v5634
      %v6675 = vunpack.c.l.b16 %v5635
      %v6676 = vunpack.c.l.b16 %v5636
      %v6677 = vunpack.c.l.b16 %v5637
      %v6678 = vunpack.c.l.b16 %v5638
      %v6679 = vunpack.c.l.b16 %v5639
      %v6680 = vunpack.c.l.b16 %v5640
      %v6681 = vunpack.c.l.b16 %v5641
      %v6682 = vunpack.c.l.b16 %v5642
      %v6683 = vunpack.c.l.b16 %v5643
      %v6684 = vunpack.c.l.b16 %v5644
      %v6685 = vunpack.c.l.b16 %v5645
      %v6686 = vunpack.c.l.b16 %v5646
      %v6687 = vunpack.c.l.b16 %v5647
      %v6688 = vunpack.c.l.b16 %v5648
      %v6689 = vunpack.c.l.b16 %v5649
      %v6690 = vunpack.c.l.b16 %v5650
      %v6691 = vunpack.c.l.b16 %v5651
      %v6692 = vunpack.c.l.b16 %v5652
      %v6693 = vunpack.c.l.b16 %v5653
      %v6694 = vunpack.c.l.b16 %v5654
      %v6695 = vunpack.c.l.b16 %v5655
      %v6696 = vunpack.c.l.b16 %v5656
      %v6697 = vunpack.c.l.b16 %v5657
      %v6698 = vunpack.c.l.b16 %v5658
      %v6699 = vpack.c.b16 %v6668, %v6667
      %v6700 = vpack.c.b16 %v6670, %v6669
      %v6701 = vpack.c.b16 %v6672, %v6671
      %v6702 = vpack.c.b16 %v6674, %v6673
      %v6703 = vpack.c.b16 %v6676, %v6675
      %v6704 = vpack.c.b16 %v6678, %v6677
      %v6705 = vpack.c.b16 %v6680, %v6679
      %v6706 = vpack.c.b16 %v6682, %v6681
      %v6707 = vpack.c.b16 %v6684, %v6683
      %v6708 = vpack.c.b16 %v6686, %v6685
      %v6709 = vpack.c.b16 %v6688, %v6687
      %v6710 = vpack.c.b16 %v6690, %v6689
      %v6711 = vpack.c.b16 %v6692, %v6691
      %v6712 = vpack.c.b16 %v6694, %v6693
      %v6713 = vpack.c.b16 %v6696, %v6695
      %v6714 = vpack.c.b16 %v6698, %v6697
      %v6731 = vunpack.c.l.b16 %v5688
      %v6732 = vunpack.c.l.b16 %v5698
      %v6733 = vunpack.c.l.b16 %v5712
      %v6734 = vunpack.c.l.b16 %v5722
      %v6735 = vunpack.c.l.b16 %v5736
      %v6736 = vunpack.c.l.b16 %v5746
      %v6737 = vunpack.c.l.b16 %v5760
      %v6738 = vunpack.c.l.b16 %v5770
      %v6739 = vunpack.c.l.b16 %v5784
      %v6740 = vunpack.c.l.b16 %v5794
      %v6741 = vunpack.c.l.b16 %v5808
      %v6742 = vunpack.c.l.b16 %v5818
      %v6743 = vunpack.c.l.b16 %v5832
      %v6744 = vunpack.c.l.b16 %v5842
      %v6745 = vunpack.c.l.b16 %v5856
      %v6746 = vunpack.c.l.b16 %v5866
      %v6747 = vunpack.c.l.b16 %v5880
      %v6748 = vunpack.c.l.b16 %v5890
      %v6749 = vunpack.c.l.b16 %v5904
      %v6750 = vunpack.c.l.b16 %v5914
      %v6751 = vunpack.c.l.b16 %v5928
      %v6752 = vunpack.c.l.b16 %v5938
      %v6753 = vunpack.c.l.b16 %v5952
      %v6754 = vunpack.c.l.b16 %v5962
      %v6755 = vunpack.c.l.b16 %v5976
      %v6756 = vunpack.c.l.b16 %v5986
      %v6757 = vunpack.c.l.b16 %v6000
      %v6758 = vunpack.c.l.b16 %v6010
      %v6759 = vunpack.c.l.b16 %v6024
      %v6760 = vunpack.c.l.b16 %v6034
      %v6761 = vunpack.c.l.b16 %v6048
      %v6762 = vunpack.c.l.b16 %v6058
      %v6763 = vpack.c.b16 %v6732, %v6731
      %v6764 = vpack.c.b16 %v6734, %v6733
      %v6765 = vpack.c.b16 %v6736, %v6735
      %v6766 = vpack.c.b16 %v6738, %v6737
      %v6767 = vpack.c.b16 %v6740, %v6739
      %v6768 = vpack.c.b16 %v6742, %v6741
      %v6769 = vpack.c.b16 %v6744, %v6743
      %v6770 = vpack.c.b16 %v6746, %v6745
      %v6771 = vpack.c.b16 %v6748, %v6747
      %v6772 = vpack.c.b16 %v6750, %v6749
      %v6773 = vpack.c.b16 %v6752, %v6751
      %v6774 = vpack.c.b16 %v6754, %v6753
      %v6775 = vpack.c.b16 %v6756, %v6755
      %v6776 = vpack.c.b16 %v6758, %v6757
      %v6777 = vpack.c.b16 %v6760, %v6759
      %v6778 = vpack.c.b16 %v6762, %v6761
      %v6795 = vunpack.c.l.b16 %v6126
      %v6796 = vunpack.c.l.b16 %v6129
      %v6797 = vunpack.c.l.b16 %v6133
      %v6798 = vunpack.c.l.b16 %v6136
      %v6799 = vunpack.c.l.b16 %v6140
      %v6800 = vunpack.c.l.b16 %v6143
      %v6801 = vunpack.c.l.b16 %v6147
      %v6802 = vunpack.c.l.b16 %v6150
      %v6803 = vunpack.c.l.b16 %v6154
      %v6804 = vunpack.c.l.b16 %v6157
      %v6805 = vunpack.c.l.b16 %v6161
      %v6806 = vunpack.c.l.b16 %v6164
      %v6807 = vunpack.c.l.b16 %v6168
      %v6808 = vunpack.c.l.b16 %v6171
      %v6809 = vunpack.c.l.b16 %v6175
      %v6810 = vunpack.c.l.b16 %v6178
      %v6811 = vunpack.c.l.b16 %v6182
      %v6812 = vunpack.c.l.b16 %v6185
      %v6813 = vunpack.c.l.b16 %v6189
      %v6814 = vunpack.c.l.b16 %v6192
      %v6815 = vunpack.c.l.b16 %v6196
      %v6816 = vunpack.c.l.b16 %v6199
      %v6817 = vunpack.c.l.b16 %v6203
      %v6818 = vunpack.c.l.b16 %v6206
      %v6819 = vunpack.c.l.b16 %v6210
      %v6820 = vunpack.c.l.b16 %v6213
      %v6821 = vunpack.c.l.b16 %v6217
      %v6822 = vunpack.c.l.b16 %v6220
      %v6823 = vunpack.c.l.b16 %v6224
      %v6824 = vunpack.c.l.b16 %v6227
      %v6825 = vunpack.c.l.b16 %v6231
      %v6826 = vunpack.c.l.b16 %v6234
      %v6827 = vpack.c.b16 %v6796, %v6795
      %v6828 = vpack.c.b16 %v6798, %v6797
      %v6829 = vpack.c.b16 %v6800, %v6799
      %v6830 = vpack.c.b16 %v6802, %v6801
      %v6831 = vpack.c.b16 %v6804, %v6803
      %v6832 = vpack.c.b16 %v6806, %v6805
      %v6833 = vpack.c.b16 %v6808, %v6807
      %v6834 = vpack.c.b16 %v6810, %v6809
      %v6835 = vpack.c.b16 %v6812, %v6811
      %v6836 = vpack.c.b16 %v6814, %v6813
      %v6837 = vpack.c.b16 %v6816, %v6815
      %v6838 = vpack.c.b16 %v6818, %v6817
      %v6839 = vpack.c.b16 %v6820, %v6819
      %v6840 = vpack.c.b16 %v6822, %v6821
      %v6841 = vpack.c.b16 %v6824, %v6823
      %v6842 = vpack.c.b16 %v6826, %v6825
      %v6859 = vld [vmem:[%s3] sm:$0xf]
      %v6860 = vld [vmem:[%s3 + $0x4] sm:$0xf]
      %v6861 = vld [vmem:[%s3 + $0x8] sm:$0xf]
      %v6862 = vld [vmem:[%s3 + $0xc] sm:$0xf]
      %v6863 = vld [vmem:[%s3 + $0x10] sm:$0xf]
      %v6864 = vld [vmem:[%s3 + $0x14] sm:$0xf]
      %v6865 = vld [vmem:[%s3 + $0x18] sm:$0xf]
      %v6866 = vld [vmem:[%s3 + $0x1c] sm:$0xf]
      %v6867 = vld [vmem:[%s3 + $0x20] sm:$0xf]
      %v6868 = vld [vmem:[%s3 + $0x24] sm:$0xf]
      %v6869 = vld [vmem:[%s3 + $0x28] sm:$0xf]
      %v6870 = vld [vmem:[%s3 + $0x2c] sm:$0xf]
      %v6871 = vld [vmem:[%s3 + $0x30] sm:$0xf]
      %v6872 = vld [vmem:[%s3 + $0x34] sm:$0xf]
      %v6873 = vld [vmem:[%s3 + $0x38] sm:$0xf]
      %v6874 = vld [vmem:[%s3 + $0x3c] sm:$0xf]
      %v6875 = vld [vmem:[%s3 + $0x40] sm:$0xf]
      %v6876 = vld [vmem:[%s3 + $0x44] sm:$0xf]
      %v6877 = vld [vmem:[%s3 + $0x48] sm:$0xf]
      %v6878 = vld [vmem:[%s3 + $0x4c] sm:$0xf]
      %v6879 = vld [vmem:[%s3 + $0x50] sm:$0xf]
      %v6880 = vld [vmem:[%s3 + $0x54] sm:$0xf]
      %v6881 = vld [vmem:[%s3 + $0x58] sm:$0xf]
      %v6882 = vld [vmem:[%s3 + $0x5c] sm:$0xf]
      %v6883 = vld [vmem:[%s3 + $0x60] sm:$0xf]
      %v6884 = vld [vmem:[%s3 + $0x64] sm:$0xf]
      %v6885 = vld [vmem:[%s3 + $0x68] sm:$0xf]
      %v6886 = vld [vmem:[%s3 + $0x6c] sm:$0xf]
      %v6887 = vld [vmem:[%s3 + $0x70] sm:$0xf]
      %v6888 = vld [vmem:[%s3 + $0x74] sm:$0xf]
      %v6889 = vld [vmem:[%s3 + $0x78] sm:$0xf]
      %v6890 = vld [vmem:[%s3 + $0x7c] sm:$0xf]
      %v6891 = vld [vmem:[%s3 + $0x80] sm:$0xf]
      %v6892 = vld [vmem:[%s3 + $0x84] sm:$0xf]
      %v6893 = vld [vmem:[%s3 + $0x88] sm:$0xf]
      %v6894 = vld [vmem:[%s3 + $0x8c] sm:$0xf]
      %v6895 = vld [vmem:[%s3 + $0x90] sm:$0xf]
      %v6896 = vld [vmem:[%s3 + $0x94] sm:$0xf]
      %v6897 = vld [vmem:[%s3 + $0x98] sm:$0xf]
      %v6898 = vld [vmem:[%s3 + $0x9c] sm:$0xf]
      %v6899 = vld [vmem:[%s3 + $0xa0] sm:$0xf]
      %v6900 = vld [vmem:[%s3 + $0xa4] sm:$0xf]
      %v6901 = vld [vmem:[%s3 + $0xa8] sm:$0xf]
      %v6902 = vld [vmem:[%s3 + $0xac] sm:$0xf]
      %v6903 = vld [vmem:[%s3 + $0xb0] sm:$0xf]
      %v6904 = vld [vmem:[%s3 + $0xb4] sm:$0xf]
      %v6905 = vld [vmem:[%s3 + $0xb8] sm:$0xf]
      %v6906 = vld [vmem:[%s3 + $0xbc] sm:$0xf]
      %v6907 = vld [vmem:[%s3 + $0xc0] sm:$0xf]
      %v6908 = vld [vmem:[%s3 + $0xc4] sm:$0xf]
      %v6909 = vld [vmem:[%s3 + $0xc8] sm:$0xf]
      %v6910 = vld [vmem:[%s3 + $0xcc] sm:$0xf]
      %v6911 = vld [vmem:[%s3 + $0xd0] sm:$0xf]
      %v6912 = vld [vmem:[%s3 + $0xd4] sm:$0xf]
      %v6913 = vld [vmem:[%s3 + $0xd8] sm:$0xf]
      %v6914 = vld [vmem:[%s3 + $0xdc] sm:$0xf]
      %v6915 = vld [vmem:[%s3 + $0xe0] sm:$0xf]
      %v6916 = vld [vmem:[%s3 + $0xe4] sm:$0xf]
      %v6917 = vld [vmem:[%s3 + $0xe8] sm:$0xf]
      %v6918 = vld [vmem:[%s3 + $0xec] sm:$0xf]
      %v6919 = vld [vmem:[%s3 + $0xf0] sm:$0xf]
      %v6920 = vld [vmem:[%s3 + $0xf4] sm:$0xf]
      %v6921 = vld [vmem:[%s3 + $0xf8] sm:$0xf]
      %v6922 = vld [vmem:[%s3 + $0xfc] sm:$0xf]
      %v6923 = vld [vmem:[%s3 + $0x100] sm:$0xf]
      %v6924 = vld [vmem:[%s3 + $0x104] sm:$0xf]
      %v6925 = vld [vmem:[%s3 + $0x108] sm:$0xf]
      %v6926 = vld [vmem:[%s3 + $0x10c] sm:$0xf]
      %v6927 = vld [vmem:[%s3 + $0x110] sm:$0xf]
      %v6928 = vld [vmem:[%s3 + $0x114] sm:$0xf]
      %v6929 = vld [vmem:[%s3 + $0x118] sm:$0xf]
      %v6930 = vld [vmem:[%s3 + $0x11c] sm:$0xf]
      %v6931 = vld [vmem:[%s3 + $0x120] sm:$0xf]
      %v6932 = vld [vmem:[%s3 + $0x124] sm:$0xf]
      %v6933 = vld [vmem:[%s3 + $0x128] sm:$0xf]
      %v6934 = vld [vmem:[%s3 + $0x12c] sm:$0xf]
      %v6935 = vld [vmem:[%s3 + $0x130] sm:$0xf]
      %v6936 = vld [vmem:[%s3 + $0x134] sm:$0xf]
      %v6937 = vld [vmem:[%s3 + $0x138] sm:$0xf]
      %v6938 = vld [vmem:[%s3 + $0x13c] sm:$0xf]
      %v6939 = vld [vmem:[%s3 + $0x140] sm:$0xf]
      %v6940 = vld [vmem:[%s3 + $0x144] sm:$0xf]
      %v6941 = vld [vmem:[%s3 + $0x148] sm:$0xf]
      %v6942 = vld [vmem:[%s3 + $0x14c] sm:$0xf]
      %v6943 = vld [vmem:[%s3 + $0x150] sm:$0xf]
      %v6944 = vld [vmem:[%s3 + $0x154] sm:$0xf]
      %v6945 = vld [vmem:[%s3 + $0x158] sm:$0xf]
      %v6946 = vld [vmem:[%s3 + $0x15c] sm:$0xf]
      %v6947 = vld [vmem:[%s3 + $0x160] sm:$0xf]
      %v6948 = vld [vmem:[%s3 + $0x164] sm:$0xf]
      %v6949 = vld [vmem:[%s3 + $0x168] sm:$0xf]
      %v6950 = vld [vmem:[%s3 + $0x16c] sm:$0xf]
      %v6951 = vld [vmem:[%s3 + $0x170] sm:$0xf]
      %v6952 = vld [vmem:[%s3 + $0x174] sm:$0xf]
      %v6953 = vld [vmem:[%s3 + $0x178] sm:$0xf]
      %v6954 = vld [vmem:[%s3 + $0x17c] sm:$0xf]
      %v6955 = vld [vmem:[%s3 + $0x180] sm:$0xf]
      %v6956 = vld [vmem:[%s3 + $0x184] sm:$0xf]
      %v6957 = vld [vmem:[%s3 + $0x188] sm:$0xf]
      %v6958 = vld [vmem:[%s3 + $0x18c] sm:$0xf]
      %v6959 = vld [vmem:[%s3 + $0x190] sm:$0xf]
      %v6960 = vld [vmem:[%s3 + $0x194] sm:$0xf]
      %v6961 = vld [vmem:[%s3 + $0x198] sm:$0xf]
      %v6962 = vld [vmem:[%s3 + $0x19c] sm:$0xf]
      %v6963 = vld [vmem:[%s3 + $0x1a0] sm:$0xf]
      %v6964 = vld [vmem:[%s3 + $0x1a4] sm:$0xf]
      %v6965 = vld [vmem:[%s3 + $0x1a8] sm:$0xf]
      %v6966 = vld [vmem:[%s3 + $0x1ac] sm:$0xf]
      %v6967 = vld [vmem:[%s3 + $0x1b0] sm:$0xf]
      %v6968 = vld [vmem:[%s3 + $0x1b4] sm:$0xf]
      %v6969 = vld [vmem:[%s3 + $0x1b8] sm:$0xf]
      %v6970 = vld [vmem:[%s3 + $0x1bc] sm:$0xf]
      %v6971 = vld [vmem:[%s3 + $0x1c0] sm:$0xf]
      %v6972 = vld [vmem:[%s3 + $0x1c4] sm:$0xf]
      %v6973 = vld [vmem:[%s3 + $0x1c8] sm:$0xf]
      %v6974 = vld [vmem:[%s3 + $0x1cc] sm:$0xf]
      %v6975 = vld [vmem:[%s3 + $0x1d0] sm:$0xf]
      %v6976 = vld [vmem:[%s3 + $0x1d4] sm:$0xf]
      %v6977 = vld [vmem:[%s3 + $0x1d8] sm:$0xf]
      %v6978 = vld [vmem:[%s3 + $0x1dc] sm:$0xf]
      %v6979 = vld [vmem:[%s3 + $0x1e0] sm:$0xf]
      %v6980 = vld [vmem:[%s3 + $0x1e4] sm:$0xf]
      %v6981 = vld [vmem:[%s3 + $0x1e8] sm:$0xf]
      %v6982 = vld [vmem:[%s3 + $0x1ec] sm:$0xf]
      %v6983 = vld [vmem:[%s3 + $0x1f0] sm:$0xf]
      %v6984 = vld [vmem:[%s3 + $0x1f4] sm:$0xf]
      %v6985 = vld [vmem:[%s3 + $0x1f8] sm:$0xf]
      %v6986 = vld [vmem:[%s3 + $0x1fc] sm:$0xf]
      %v6987 = vld [vmem:[%s3 + $0x200] sm:$0xf]
      %v6988 = vld [vmem:[%s3 + $0x204] sm:$0xf]
      %v6989 = vld [vmem:[%s3 + $0x208] sm:$0xf]
      %v6990 = vld [vmem:[%s3 + $0x20c] sm:$0xf]
      %v6991 = vld [vmem:[%s3 + $0x210] sm:$0xf]
      %v6992 = vld [vmem:[%s3 + $0x214] sm:$0xf]
      %v6993 = vld [vmem:[%s3 + $0x218] sm:$0xf]
      %v6994 = vld [vmem:[%s3 + $0x21c] sm:$0xf]
      %v6995 = vld [vmem:[%s3 + $0x220] sm:$0xf]
      %v6996 = vld [vmem:[%s3 + $0x224] sm:$0xf]
      %v6997 = vld [vmem:[%s3 + $0x228] sm:$0xf]
      %v6998 = vld [vmem:[%s3 + $0x22c] sm:$0xf]
      %v6999 = vld [vmem:[%s3 + $0x230] sm:$0xf]
      %v7000 = vld [vmem:[%s3 + $0x234] sm:$0xf]
      %v7001 = vld [vmem:[%s3 + $0x238] sm:$0xf]
      %v7002 = vld [vmem:[%s3 + $0x23c] sm:$0xf]
      %v7003 = vld [vmem:[%s4] sm:$0x1]
      %v7005 = vperm.slane %v7003, 0
      %v7151 = vunpack.c.l.b16 %v6859
      %v7152 = vunpack.c.l.b16 %v6860
      %v7153 = vunpack.c.l.b16 %v6861
      %v7154 = vunpack.c.l.b16 %v6862
      %v7155 = vunpack.c.l.b16 %v6863
      %v7156 = vunpack.c.l.b16 %v6864
      %v7157 = vunpack.c.l.b16 %v6865
      %v7158 = vunpack.c.l.b16 %v6866
      %v7159 = vunpack.c.l.b16 %v6867
      %v7160 = vunpack.c.l.b16 %v6868
      %v7161 = vunpack.c.l.b16 %v6869
      %v7162 = vunpack.c.l.b16 %v6870
      %v7163 = vunpack.c.l.b16 %v6871
      %v7164 = vunpack.c.l.b16 %v6872
      %v7165 = vunpack.c.l.b16 %v6873
      %v7166 = vunpack.c.l.b16 %v6874
      %v7167 = vunpack.c.l.b16 %v6875
      %v7168 = vunpack.c.l.b16 %v6876
      %v7169 = vunpack.c.l.b16 %v6877
      %v7170 = vunpack.c.l.b16 %v6878
      %v7171 = vunpack.c.l.b16 %v6879
      %v7172 = vunpack.c.l.b16 %v6880
      %v7173 = vunpack.c.l.b16 %v6881
      %v7174 = vunpack.c.l.b16 %v6882
      %v7175 = vunpack.c.l.b16 %v6883
      %v7176 = vunpack.c.l.b16 %v6884
      %v7177 = vunpack.c.l.b16 %v6885
      %v7178 = vunpack.c.l.b16 %v6886
      %v7179 = vunpack.c.l.b16 %v6887
      %v7180 = vunpack.c.l.b16 %v6888
      %v7181 = vunpack.c.l.b16 %v6889
      %v7182 = vunpack.c.l.b16 %v6890
      %v7183 = vunpack.c.l.b16 %v6891
      %v7184 = vunpack.c.l.b16 %v6892
      %v7185 = vunpack.c.l.b16 %v6893
      %v7186 = vunpack.c.l.b16 %v6894
      %v7187 = vunpack.c.l.b16 %v6895
      %v7188 = vunpack.c.l.b16 %v6896
      %v7189 = vunpack.c.l.b16 %v6897
      %v7190 = vunpack.c.l.b16 %v6898
      %v7191 = vunpack.c.l.b16 %v6899
      %v7192 = vunpack.c.l.b16 %v6900
      %v7193 = vunpack.c.l.b16 %v6901
      %v7194 = vunpack.c.l.b16 %v6902
      %v7195 = vunpack.c.l.b16 %v6903
      %v7196 = vunpack.c.l.b16 %v6904
      %v7197 = vunpack.c.l.b16 %v6905
      %v7198 = vunpack.c.l.b16 %v6906
      %v7199 = vunpack.c.l.b16 %v6907
      %v7200 = vunpack.c.l.b16 %v6908
      %v7201 = vunpack.c.l.b16 %v6909
      %v7202 = vunpack.c.l.b16 %v6910
      %v7203 = vunpack.c.l.b16 %v6911
      %v7204 = vunpack.c.l.b16 %v6912
      %v7205 = vunpack.c.l.b16 %v6913
      %v7206 = vunpack.c.l.b16 %v6914
      %v7207 = vunpack.c.l.b16 %v6915
      %v7208 = vunpack.c.l.b16 %v6916
      %v7209 = vunpack.c.l.b16 %v6917
      %v7210 = vunpack.c.l.b16 %v6918
      %v7211 = vunpack.c.l.b16 %v6919
      %v7212 = vunpack.c.l.b16 %v6920
      %v7213 = vunpack.c.l.b16 %v6921
      %v7214 = vunpack.c.l.b16 %v6922
      %v7215 = vunpack.c.l.b16 %v6923
      %v7216 = vunpack.c.l.b16 %v6924
      %v7217 = vunpack.c.l.b16 %v6925
      %v7218 = vunpack.c.l.b16 %v6926
      %v7219 = vunpack.c.l.b16 %v6927
      %v7220 = vunpack.c.l.b16 %v6928
      %v7221 = vunpack.c.l.b16 %v6929
      %v7222 = vunpack.c.l.b16 %v6930
      %v7223 = vunpack.c.l.b16 %v6931
      %v7224 = vunpack.c.l.b16 %v6932
      %v7225 = vunpack.c.l.b16 %v6933
      %v7226 = vunpack.c.l.b16 %v6934
      %v7227 = vunpack.c.l.b16 %v6935
      %v7228 = vunpack.c.l.b16 %v6936
      %v7229 = vunpack.c.l.b16 %v6937
      %v7230 = vunpack.c.l.b16 %v6938
      %v7231 = vunpack.c.l.b16 %v6939
      %v7232 = vunpack.c.l.b16 %v6940
      %v7233 = vunpack.c.l.b16 %v6941
      %v7234 = vunpack.c.l.b16 %v6942
      %v7235 = vunpack.c.l.b16 %v6943
      %v7236 = vunpack.c.l.b16 %v6944
      %v7237 = vunpack.c.l.b16 %v6945
      %v7238 = vunpack.c.l.b16 %v6946
      %v7239 = vunpack.c.l.b16 %v6947
      %v7240 = vunpack.c.l.b16 %v6948
      %v7241 = vunpack.c.l.b16 %v6949
      %v7242 = vunpack.c.l.b16 %v6950
      %v7243 = vunpack.c.l.b16 %v6951
      %v7244 = vunpack.c.l.b16 %v6952
      %v7245 = vunpack.c.l.b16 %v6953
      %v7246 = vunpack.c.l.b16 %v6954
      %v7247 = vunpack.c.l.b16 %v6955
      %v7248 = vunpack.c.l.b16 %v6956
      %v7249 = vunpack.c.l.b16 %v6957
      %v7250 = vunpack.c.l.b16 %v6958
      %v7251 = vunpack.c.l.b16 %v6959
      %v7252 = vunpack.c.l.b16 %v6960
      %v7253 = vunpack.c.l.b16 %v6961
      %v7254 = vunpack.c.l.b16 %v6962
      %v7255 = vunpack.c.l.b16 %v6963
      %v7256 = vunpack.c.l.b16 %v6964
      %v7257 = vunpack.c.l.b16 %v6965
      %v7258 = vunpack.c.l.b16 %v6966
      %v7259 = vunpack.c.l.b16 %v6967
      %v7260 = vunpack.c.l.b16 %v6968
      %v7261 = vunpack.c.l.b16 %v6969
      %v7262 = vunpack.c.l.b16 %v6970
      %v7263 = vunpack.c.l.b16 %v6971
      %v7264 = vunpack.c.l.b16 %v6972
      %v7265 = vunpack.c.l.b16 %v6973
      %v7266 = vunpack.c.l.b16 %v6974
      %v7267 = vunpack.c.l.b16 %v6975
      %v7268 = vunpack.c.l.b16 %v6976
      %v7269 = vunpack.c.l.b16 %v6977
      %v7270 = vunpack.c.l.b16 %v6978
      %v7271 = vunpack.c.l.b16 %v6979
      %v7272 = vunpack.c.l.b16 %v6980
      %v7273 = vunpack.c.l.b16 %v6981
      %v7274 = vunpack.c.l.b16 %v6982
      %v7275 = vunpack.c.l.b16 %v6983
      %v7276 = vunpack.c.l.b16 %v6984
      %v7277 = vunpack.c.l.b16 %v6985
      %v7278 = vunpack.c.l.b16 %v6986
      %v7279 = vunpack.c.l.b16 %v6987
      %v7280 = vunpack.c.l.b16 %v6988
      %v7281 = vunpack.c.l.b16 %v6989
      %v7282 = vunpack.c.l.b16 %v6990
      %v7283 = vunpack.c.l.b16 %v6991
      %v7284 = vunpack.c.l.b16 %v6992
      %v7285 = vunpack.c.l.b16 %v6993
      %v7286 = vunpack.c.l.b16 %v6994
      %v7287 = vunpack.c.l.b16 %v6995
      %v7288 = vunpack.c.l.b16 %v6996
      %v7289 = vunpack.c.l.b16 %v6997
      %v7290 = vunpack.c.l.b16 %v6998
      %v7291 = vunpack.c.l.b16 %v6999
      %v7292 = vunpack.c.l.b16 %v7000
      %v7293 = vunpack.c.l.b16 %v7001
      %v7294 = vunpack.c.l.b16 %v7002
      %v7295 = vpack.c.b16 %v7152, %v7151
      %v7296 = vpack.c.b16 %v7154, %v7153
      %v7297 = vpack.c.b16 %v7156, %v7155
      %v7298 = vpack.c.b16 %v7158, %v7157
      %v7299 = vpack.c.b16 %v7160, %v7159
      %v7300 = vpack.c.b16 %v7162, %v7161
      %v7301 = vpack.c.b16 %v7164, %v7163
      %v7302 = vpack.c.b16 %v7166, %v7165
      %v7303 = vpack.c.b16 %v7168, %v7167
      %v7304 = vpack.c.b16 %v7170, %v7169
      %v7305 = vpack.c.b16 %v7172, %v7171
      %v7306 = vpack.c.b16 %v7174, %v7173
      %v7307 = vpack.c.b16 %v7176, %v7175
      %v7308 = vpack.c.b16 %v7178, %v7177
      %v7309 = vpack.c.b16 %v7180, %v7179
      %v7310 = vpack.c.b16 %v7182, %v7181
      %v7311 = vpack.c.b16 %v7184, %v7183
      %v7312 = vpack.c.b16 %v7186, %v7185
      %v7313 = vpack.c.b16 %v7188, %v7187
      %v7314 = vpack.c.b16 %v7190, %v7189
      %v7315 = vpack.c.b16 %v7192, %v7191
      %v7316 = vpack.c.b16 %v7194, %v7193
      %v7317 = vpack.c.b16 %v7196, %v7195
      %v7318 = vpack.c.b16 %v7198, %v7197
      %v7319 = vpack.c.b16 %v7200, %v7199
      %v7320 = vpack.c.b16 %v7202, %v7201
      %v7321 = vpack.c.b16 %v7204, %v7203
      %v7322 = vpack.c.b16 %v7206, %v7205
      %v7323 = vpack.c.b16 %v7208, %v7207
      %v7324 = vpack.c.b16 %v7210, %v7209
      %v7325 = vpack.c.b16 %v7212, %v7211
      %v7326 = vpack.c.b16 %v7214, %v7213
      %v7327 = vpack.c.b16 %v7216, %v7215
      %v7328 = vpack.c.b16 %v7218, %v7217
      %v7329 = vpack.c.b16 %v7220, %v7219
      %v7330 = vpack.c.b16 %v7222, %v7221
      %v7331 = vpack.c.b16 %v7224, %v7223
      %v7332 = vpack.c.b16 %v7226, %v7225
      %v7333 = vpack.c.b16 %v7228, %v7227
      %v7334 = vpack.c.b16 %v7230, %v7229
      %v7335 = vpack.c.b16 %v7232, %v7231
      %v7336 = vpack.c.b16 %v7234, %v7233
      %v7337 = vpack.c.b16 %v7236, %v7235
      %v7338 = vpack.c.b16 %v7238, %v7237
      %v7339 = vpack.c.b16 %v7240, %v7239
      %v7340 = vpack.c.b16 %v7242, %v7241
      %v7341 = vpack.c.b16 %v7244, %v7243
      %v7342 = vpack.c.b16 %v7246, %v7245
      %v7343 = vpack.c.b16 %v7248, %v7247
      %v7344 = vpack.c.b16 %v7250, %v7249
      %v7345 = vpack.c.b16 %v7252, %v7251
      %v7346 = vpack.c.b16 %v7254, %v7253
      %v7347 = vpack.c.b16 %v7256, %v7255
      %v7348 = vpack.c.b16 %v7258, %v7257
      %v7349 = vpack.c.b16 %v7260, %v7259
      %v7350 = vpack.c.b16 %v7262, %v7261
      %v7351 = vpack.c.b16 %v7264, %v7263
      %v7352 = vpack.c.b16 %v7266, %v7265
      %v7353 = vpack.c.b16 %v7268, %v7267
      %v7354 = vpack.c.b16 %v7270, %v7269
      %v7355 = vpack.c.b16 %v7272, %v7271
      %v7356 = vpack.c.b16 %v7274, %v7273
      %v7357 = vpack.c.b16 %v7276, %v7275
      %v7358 = vpack.c.b16 %v7278, %v7277
      %v7359 = vpack.c.b16 %v7280, %v7279
      %v7360 = vpack.c.b16 %v7282, %v7281
      %v7361 = vpack.c.b16 %v7284, %v7283
      %v7362 = vpack.c.b16 %v7286, %v7285
      %v7363 = vpack.c.b16 %v7288, %v7287
      %v7364 = vpack.c.b16 %v7290, %v7289
      %v7365 = vpack.c.b16 %v7292, %v7291
      %v7366 = vpack.c.b16 %v7294, %v7293
      %7439 = vmatpush.bf16.msra.mxu0 %v7302
      %7440 = vmatpush.bf16.msra.mxu0 %v7301
      %7441 = vmatpush.bf16.msra.mxu0 %v7300
      %7442 = vmatpush.bf16.msra.mxu0 %v7299
      %7443 = vmatpush.bf16.msra.mxu0 %v7298
      %7444 = vmatpush.bf16.msra.mxu0 %v7297
      %7445 = vmatpush.bf16.msra.mxu0 %v7296
      %7446 = vmatpush.bf16.msra.mxu0 %v7295
      %7447 = vmatmul.bf16.gmra.mxu0 %v6283
      %v7448 = vpop.f32.mrf.mxu0
      %v7449 = vadd.f32 %v7005, %v7448
      %v7450 = vpop.f32.mrf.mxu0
      %v7451 = vadd.f32 %v7005, %v7450
      %7452 = vmatmul.bf16.gmra.mxu0 %v6284
      %v7453 = vpop.f32.mrf.mxu0
      %v7454 = vadd.f32 %v7005, %v7453
      %v7455 = vpop.f32.mrf.mxu0
      %v7456 = vadd.f32 %v7005, %v7455
      %7457 = vmatmul.bf16.gmra.mxu0 %v6285
      %v7458 = vpop.f32.mrf.mxu0
      %v7459 = vadd.f32 %v7005, %v7458
      %v7460 = vpop.f32.mrf.mxu0
      %v7461 = vadd.f32 %v7005, %v7460
      %7462 = vmatmul.bf16.gmra.mxu0 %v6286
      %v7463 = vpop.f32.mrf.mxu0
      %v7464 = vadd.f32 %v7005, %v7463
      %v7465 = vpop.f32.mrf.mxu0
      %v7466 = vadd.f32 %v7005, %v7465
      %7467 = vmatmul.bf16.gmra.mxu0 %v6287
      %v7468 = vpop.f32.mrf.mxu0
      %v7469 = vadd.f32 %v7005, %v7468
      %v7470 = vpop.f32.mrf.mxu0
      %v7471 = vadd.f32 %v7005, %v7470
      %7472 = vmatmul.bf16.gmra.mxu0 %v6288
      %v7473 = vpop.f32.mrf.mxu0
      %v7474 = vadd.f32 %v7005, %v7473
      %v7475 = vpop.f32.mrf.mxu0
      %v7476 = vadd.f32 %v7005, %v7475
      %7477 = vmatmul.bf16.gmra.mxu0 %v6289
      %v7478 = vpop.f32.mrf.mxu0
      %v7479 = vadd.f32 %v7005, %v7478
      %v7480 = vpop.f32.mrf.mxu0
      %v7481 = vadd.f32 %v7005, %v7480
      %7482 = vmatmul.bf16.gmra.mxu0 %v6290
      %v7483 = vpop.f32.mrf.mxu0
      %v7484 = vadd.f32 %v7005, %v7483
      %v7485 = vpop.f32.mrf.mxu0
      %v7486 = vadd.f32 %v7005, %v7485
      %7487 = vmatmul.bf16.gmra.mxu0 %v6291
      %v7488 = vpop.f32.mrf.mxu0
      %v7489 = vadd.f32 %v7005, %v7488
      %v7490 = vpop.f32.mrf.mxu0
      %v7491 = vadd.f32 %v7005, %v7490
      %7492 = vmatmul.bf16.gmra.mxu0 %v6292
      %v7493 = vpop.f32.mrf.mxu0
      %v7494 = vadd.f32 %v7005, %v7493
      %v7495 = vpop.f32.mrf.mxu0
      %v7496 = vadd.f32 %v7005, %v7495
      %7497 = vmatmul.bf16.gmra.mxu0 %v6293
      %v7498 = vpop.f32.mrf.mxu0
      %v7499 = vadd.f32 %v7005, %v7498
      %v7500 = vpop.f32.mrf.mxu0
      %v7501 = vadd.f32 %v7005, %v7500
      %7502 = vmatmul.bf16.gmra.mxu0 %v6294
      %v7503 = vpop.f32.mrf.mxu0
      %v7504 = vadd.f32 %v7005, %v7503
      %v7505 = vpop.f32.mrf.mxu0
      %v7506 = vadd.f32 %v7005, %v7505
      %7507 = vmatmul.bf16.gmra.mxu0 %v6295
      %v7508 = vpop.f32.mrf.mxu0
      %v7509 = vadd.f32 %v7005, %v7508
      %v7510 = vpop.f32.mrf.mxu0
      %v7511 = vadd.f32 %v7005, %v7510
      %7512 = vmatmul.bf16.gmra.mxu0 %v6296
      %v7513 = vpop.f32.mrf.mxu0
      %v7514 = vadd.f32 %v7005, %v7513
      %v7515 = vpop.f32.mrf.mxu0
      %v7516 = vadd.f32 %v7005, %v7515
      %7517 = vmatmul.bf16.gmra.mxu0 %v6297
      %v7518 = vpop.f32.mrf.mxu0
      %v7519 = vadd.f32 %v7005, %v7518
      %v7520 = vpop.f32.mrf.mxu0
      %v7521 = vadd.f32 %v7005, %v7520
      %7522 = vmatmul.bf16.gmra.mxu0 %v6298
      %v7523 = vpop.f32.mrf.mxu0
      %v7524 = vadd.f32 %v7005, %v7523
      %v7525 = vpop.f32.mrf.mxu0
      %v7526 = vadd.f32 %v7005, %v7525
      %7527 = vdwg.mxu0
      %7528 = vmatpush.bf16.msra.mxu0 %v7310
      %7529 = vmatpush.bf16.msra.mxu0 %v7309
      %7530 = vmatpush.bf16.msra.mxu0 %v7308
      %7531 = vmatpush.bf16.msra.mxu0 %v7307
      %7532 = vmatpush.bf16.msra.mxu0 %v7306
      %7533 = vmatpush.bf16.msra.mxu0 %v7305
      %7534 = vmatpush.bf16.msra.mxu0 %v7304
      %7535 = vmatpush.bf16.msra.mxu0 %v7303
      %7536 = vmatmul.bf16.gmra.mxu0 %v6347
      %v7537 = vpop.f32.mrf.mxu0
      %v7538 = vadd.f32 %v7449, %v7537
      %v7539 = vpop.f32.mrf.mxu0
      %v7540 = vadd.f32 %v7451, %v7539
      %7541 = vmatmul.bf16.gmra.mxu0 %v6348
      %v7542 = vpop.f32.mrf.mxu0
      %v7543 = vadd.f32 %v7454, %v7542
      %v7544 = vpop.f32.mrf.mxu0
      %v7545 = vadd.f32 %v7456, %v7544
      %7546 = vmatmul.bf16.gmra.mxu0 %v6349
      %v7547 = vpop.f32.mrf.mxu0
      %v7548 = vadd.f32 %v7459, %v7547
      %v7549 = vpop.f32.mrf.mxu0
      %v7550 = vadd.f32 %v7461, %v7549
      %7551 = vmatmul.bf16.gmra.mxu0 %v6350
      %v7552 = vpop.f32.mrf.mxu0
      %v7553 = vadd.f32 %v7464, %v7552
      %v7554 = vpop.f32.mrf.mxu0
      %v7555 = vadd.f32 %v7466, %v7554
      %7556 = vmatmul.bf16.gmra.mxu0 %v6351
      %v7557 = vpop.f32.mrf.mxu0
      %v7558 = vadd.f32 %v7469, %v7557
      %v7559 = vpop.f32.mrf.mxu0
      %v7560 = vadd.f32 %v7471, %v7559
      %7561 = vmatmul.bf16.gmra.mxu0 %v6352
      %v7562 = vpop.f32.mrf.mxu0
      %v7563 = vadd.f32 %v7474, %v7562
      %v7564 = vpop.f32.mrf.mxu0
      %v7565 = vadd.f32 %v7476, %v7564
      %7566 = vmatmul.bf16.gmra.mxu0 %v6353
      %v7567 = vpop.f32.mrf.mxu0
      %v7568 = vadd.f32 %v7479, %v7567
      %v7569 = vpop.f32.mrf.mxu0
      %v7570 = vadd.f32 %v7481, %v7569
      %7571 = vmatmul.bf16.gmra.mxu0 %v6354
      %v7572 = vpop.f32.mrf.mxu0
      %v7573 = vadd.f32 %v7484, %v7572
      %v7574 = vpop.f32.mrf.mxu0
      %v7575 = vadd.f32 %v7486, %v7574
      %7576 = vmatmul.bf16.gmra.mxu0 %v6355
      %v7577 = vpop.f32.mrf.mxu0
      %v7578 = vadd.f32 %v7489, %v7577
      %v7579 = vpop.f32.mrf.mxu0
      %v7580 = vadd.f32 %v7491, %v7579
      %7581 = vmatmul.bf16.gmra.mxu0 %v6356
      %v7582 = vpop.f32.mrf.mxu0
      %v7583 = vadd.f32 %v7494, %v7582
      %v7584 = vpop.f32.mrf.mxu0
      %v7585 = vadd.f32 %v7496, %v7584
      %7586 = vmatmul.bf16.gmra.mxu0 %v6357
      %v7587 = vpop.f32.mrf.mxu0
      %v7588 = vadd.f32 %v7499, %v7587
      %v7589 = vpop.f32.mrf.mxu0
      %v7590 = vadd.f32 %v7501, %v7589
      %7591 = vmatmul.bf16.gmra.mxu0 %v6358
      %v7592 = vpop.f32.mrf.mxu0
      %v7593 = vadd.f32 %v7504, %v7592
      %v7594 = vpop.f32.mrf.mxu0
      %v7595 = vadd.f32 %v7506, %v7594
      %7596 = vmatmul.bf16.gmra.mxu0 %v6359
      %v7597 = vpop.f32.mrf.mxu0
      %v7598 = vadd.f32 %v7509, %v7597
      %v7599 = vpop.f32.mrf.mxu0
      %v7600 = vadd.f32 %v7511, %v7599
      %7601 = vmatmul.bf16.gmra.mxu0 %v6360
      %v7602 = vpop.f32.mrf.mxu0
      %v7603 = vadd.f32 %v7514, %v7602
      %v7604 = vpop.f32.mrf.mxu0
      %v7605 = vadd.f32 %v7516, %v7604
      %7606 = vmatmul.bf16.gmra.mxu0 %v6361
      %v7607 = vpop.f32.mrf.mxu0
      %v7608 = vadd.f32 %v7519, %v7607
      %v7609 = vpop.f32.mrf.mxu0
      %v7610 = vadd.f32 %v7521, %v7609
      %7611 = vmatmul.bf16.gmra.mxu0 %v6362
      %v7612 = vpop.f32.mrf.mxu0
      %v7613 = vadd.f32 %v7524, %v7612
      %v7614 = vpop.f32.mrf.mxu0
      %v7615 = vadd.f32 %v7526, %v7614
      %7616 = vdwg.mxu0
      %7617 = vmatpush.bf16.msra.mxu0 %v7318
      %7618 = vmatpush.bf16.msra.mxu0 %v7317
      %7619 = vmatpush.bf16.msra.mxu0 %v7316
      %7620 = vmatpush.bf16.msra.mxu0 %v7315
      %7621 = vmatpush.bf16.msra.mxu0 %v7314
      %7622 = vmatpush.bf16.msra.mxu0 %v7313
      %7623 = vmatpush.bf16.msra.mxu0 %v7312
      %7624 = vmatpush.bf16.msra.mxu0 %v7311
      %7625 = vmatmul.bf16.gmra.mxu0 %v6411
      %v7626 = vpop.f32.mrf.mxu0
      %v7627 = vadd.f32 %v7538, %v7626
      %v7628 = vpop.f32.mrf.mxu0
      %v7629 = vadd.f32 %v7540, %v7628
      %7630 = vmatmul.bf16.gmra.mxu0 %v6412
      %v7631 = vpop.f32.mrf.mxu0
      %v7632 = vadd.f32 %v7543, %v7631
      %v7633 = vpop.f32.mrf.mxu0
      %v7634 = vadd.f32 %v7545, %v7633
      %7635 = vmatmul.bf16.gmra.mxu0 %v6413
      %v7636 = vpop.f32.mrf.mxu0
      %v7637 = vadd.f32 %v7548, %v7636
      %v7638 = vpop.f32.mrf.mxu0
      %v7639 = vadd.f32 %v7550, %v7638
      %7640 = vmatmul.bf16.gmra.mxu0 %v6414
      %v7641 = vpop.f32.mrf.mxu0
      %v7642 = vadd.f32 %v7553, %v7641
      %v7643 = vpop.f32.mrf.mxu0
      %v7644 = vadd.f32 %v7555, %v7643
      %7645 = vmatmul.bf16.gmra.mxu0 %v6415
      %v7646 = vpop.f32.mrf.mxu0
      %v7647 = vadd.f32 %v7558, %v7646
      %v7648 = vpop.f32.mrf.mxu0
      %v7649 = vadd.f32 %v7560, %v7648
      %7650 = vmatmul.bf16.gmra.mxu0 %v6416
      %v7651 = vpop.f32.mrf.mxu0
      %v7652 = vadd.f32 %v7563, %v7651
      %v7653 = vpop.f32.mrf.mxu0
      %v7654 = vadd.f32 %v7565, %v7653
      %7655 = vmatmul.bf16.gmra.mxu0 %v6417
      %v7656 = vpop.f32.mrf.mxu0
      %v7657 = vadd.f32 %v7568, %v7656
      %v7658 = vpop.f32.mrf.mxu0
      %v7659 = vadd.f32 %v7570, %v7658
      %7660 = vmatmul.bf16.gmra.mxu0 %v6418
      %v7661 = vpop.f32.mrf.mxu0
      %v7662 = vadd.f32 %v7573, %v7661
      %v7663 = vpop.f32.mrf.mxu0
      %v7664 = vadd.f32 %v7575, %v7663
      %7665 = vmatmul.bf16.gmra.mxu0 %v6419
      %v7666 = vpop.f32.mrf.mxu0
      %v7667 = vadd.f32 %v7578, %v7666
      %v7668 = vpop.f32.mrf.mxu0
      %v7669 = vadd.f32 %v7580, %v7668
      %7670 = vmatmul.bf16.gmra.mxu0 %v6420
      %v7671 = vpop.f32.mrf.mxu0
      %v7672 = vadd.f32 %v7583, %v7671
      %v7673 = vpop.f32.mrf.mxu0
      %v7674 = vadd.f32 %v7585, %v7673
      %7675 = vmatmul.bf16.gmra.mxu0 %v6421
      %v7676 = vpop.f32.mrf.mxu0
      %v7677 = vadd.f32 %v7588, %v7676
      %v7678 = vpop.f32.mrf.mxu0
      %v7679 = vadd.f32 %v7590, %v7678
      %7680 = vmatmul.bf16.gmra.mxu0 %v6422
      %v7681 = vpop.f32.mrf.mxu0
      %v7682 = vadd.f32 %v7593, %v7681
      %v7683 = vpop.f32.mrf.mxu0
      %v7684 = vadd.f32 %v7595, %v7683
      %7685 = vmatmul.bf16.gmra.mxu0 %v6423
      %v7686 = vpop.f32.mrf.mxu0
      %v7687 = vadd.f32 %v7598, %v7686
      %v7688 = vpop.f32.mrf.mxu0
      %v7689 = vadd.f32 %v7600, %v7688
      %7690 = vmatmul.bf16.gmra.mxu0 %v6424
      %v7691 = vpop.f32.mrf.mxu0
      %v7692 = vadd.f32 %v7603, %v7691
      %v7693 = vpop.f32.mrf.mxu0
      %v7694 = vadd.f32 %v7605, %v7693
      %7695 = vmatmul.bf16.gmra.mxu0 %v6425
      %v7696 = vpop.f32.mrf.mxu0
      %v7697 = vadd.f32 %v7608, %v7696
      %v7698 = vpop.f32.mrf.mxu0
      %v7699 = vadd.f32 %v7610, %v7698
      %7700 = vmatmul.bf16.gmra.mxu0 %v6426
      %v7701 = vpop.f32.mrf.mxu0
      %v7702 = vadd.f32 %v7613, %v7701
      %v7703 = vpop.f32.mrf.mxu0
      %v7704 = vadd.f32 %v7615, %v7703
      %7705 = vdwg.mxu0
      %7706 = vmatpush.bf16.msra.mxu0 %v7326
      %7707 = vmatpush.bf16.msra.mxu0 %v7325
      %7708 = vmatpush.bf16.msra.mxu0 %v7324
      %7709 = vmatpush.bf16.msra.mxu0 %v7323
      %7710 = vmatpush.bf16.msra.mxu0 %v7322
      %7711 = vmatpush.bf16.msra.mxu0 %v7321
      %7712 = vmatpush.bf16.msra.mxu0 %v7320
      %7713 = vmatpush.bf16.msra.mxu0 %v7319
      %7714 = vmatmul.bf16.gmra.mxu0 %v6491
      %v7715 = vpop.f32.mrf.mxu0
      %v7716 = vadd.f32 %v7627, %v7715
      %v7717 = vpop.f32.mrf.mxu0
      %v7718 = vadd.f32 %v7629, %v7717
      %7719 = vmatmul.bf16.gmra.mxu0 %v6492
      %v7720 = vpop.f32.mrf.mxu0
      %v7721 = vadd.f32 %v7632, %v7720
      %v7722 = vpop.f32.mrf.mxu0
      %v7723 = vadd.f32 %v7634, %v7722
      %7724 = vmatmul.bf16.gmra.mxu0 %v6493
      %v7725 = vpop.f32.mrf.mxu0
      %v7726 = vadd.f32 %v7637, %v7725
      %v7727 = vpop.f32.mrf.mxu0
      %v7728 = vadd.f32 %v7639, %v7727
      %7729 = vmatmul.bf16.gmra.mxu0 %v6494
      %v7730 = vpop.f32.mrf.mxu0
      %v7731 = vadd.f32 %v7642, %v7730
      %v7732 = vpop.f32.mrf.mxu0
      %v7733 = vadd.f32 %v7644, %v7732
      %7734 = vmatmul.bf16.gmra.mxu0 %v6495
      %v7735 = vpop.f32.mrf.mxu0
      %v7736 = vadd.f32 %v7647, %v7735
      %v7737 = vpop.f32.mrf.mxu0
      %v7738 = vadd.f32 %v7649, %v7737
      %7739 = vmatmul.bf16.gmra.mxu0 %v6496
      %v7740 = vpop.f32.mrf.mxu0
      %v7741 = vadd.f32 %v7652, %v7740
      %v7742 = vpop.f32.mrf.mxu0
      %v7743 = vadd.f32 %v7654, %v7742
      %7744 = vmatmul.bf16.gmra.mxu0 %v6497
      %v7745 = vpop.f32.mrf.mxu0
      %v7746 = vadd.f32 %v7657, %v7745
      %v7747 = vpop.f32.mrf.mxu0
      %v7748 = vadd.f32 %v7659, %v7747
      %7749 = vmatmul.bf16.gmra.mxu0 %v6498
      %v7750 = vpop.f32.mrf.mxu0
      %v7751 = vadd.f32 %v7662, %v7750
      %v7752 = vpop.f32.mrf.mxu0
      %v7753 = vadd.f32 %v7664, %v7752
      %7754 = vmatmul.bf16.gmra.mxu0 %v6499
      %v7755 = vpop.f32.mrf.mxu0
      %v7756 = vadd.f32 %v7667, %v7755
      %v7757 = vpop.f32.mrf.mxu0
      %v7758 = vadd.f32 %v7669, %v7757
      %7759 = vmatmul.bf16.gmra.mxu0 %v6500
      %v7760 = vpop.f32.mrf.mxu0
      %v7761 = vadd.f32 %v7672, %v7760
      %v7762 = vpop.f32.mrf.mxu0
      %v7763 = vadd.f32 %v7674, %v7762
      %7764 = vmatmul.bf16.gmra.mxu0 %v6501
      %v7765 = vpop.f32.mrf.mxu0
      %v7766 = vadd.f32 %v7677, %v7765
      %v7767 = vpop.f32.mrf.mxu0
      %v7768 = vadd.f32 %v7679, %v7767
      %7769 = vmatmul.bf16.gmra.mxu0 %v6502
      %v7770 = vpop.f32.mrf.mxu0
      %v7771 = vadd.f32 %v7682, %v7770
      %v7772 = vpop.f32.mrf.mxu0
      %v7773 = vadd.f32 %v7684, %v7772
      %7774 = vmatmul.bf16.gmra.mxu0 %v6503
      %v7775 = vpop.f32.mrf.mxu0
      %v7776 = vadd.f32 %v7687, %v7775
      %v7777 = vpop.f32.mrf.mxu0
      %v7778 = vadd.f32 %v7689, %v7777
      %7779 = vmatmul.bf16.gmra.mxu0 %v6504
      %v7780 = vpop.f32.mrf.mxu0
      %v7781 = vadd.f32 %v7692, %v7780
      %v7782 = vpop.f32.mrf.mxu0
      %v7783 = vadd.f32 %v7694, %v7782
      %7784 = vmatmul.bf16.gmra.mxu0 %v6505
      %v7785 = vpop.f32.mrf.mxu0
      %v7786 = vadd.f32 %v7697, %v7785
      %v7787 = vpop.f32.mrf.mxu0
      %v7788 = vadd.f32 %v7699, %v7787
      %7789 = vmatmul.bf16.gmra.mxu0 %v6506
      %v7790 = vpop.f32.mrf.mxu0
      %v7791 = vadd.f32 %v7702, %v7790
      %v7792 = vpop.f32.mrf.mxu0
      %v7793 = vadd.f32 %v7704, %v7792
      %7794 = vdwg.mxu0
      %7795 = vmatpush.bf16.msra.mxu0 %v7334
      %7796 = vmatpush.bf16.msra.mxu0 %v7333
      %7797 = vmatpush.bf16.msra.mxu0 %v7332
      %7798 = vmatpush.bf16.msra.mxu0 %v7331
      %7799 = vmatpush.bf16.msra.mxu0 %v7330
      %7800 = vmatpush.bf16.msra.mxu0 %v7329
      %7801 = vmatpush.bf16.msra.mxu0 %v7328
      %7802 = vmatpush.bf16.msra.mxu0 %v7327
      %7803 = vmatmul.bf16.gmra.mxu0 %v6555
      %v7804 = vpop.f32.mrf.mxu0
      %v7805 = vadd.f32 %v7716, %v7804
      %v7806 = vpop.f32.mrf.mxu0
      %v7807 = vadd.f32 %v7718, %v7806
      %7808 = vmatmul.bf16.gmra.mxu0 %v6556
      %v7809 = vpop.f32.mrf.mxu0
      %v7810 = vadd.f32 %v7721, %v7809
      %v7811 = vpop.f32.mrf.mxu0
      %v7812 = vadd.f32 %v7723, %v7811
      %7813 = vmatmul.bf16.gmra.mxu0 %v6557
      %v7814 = vpop.f32.mrf.mxu0
      %v7815 = vadd.f32 %v7726, %v7814
      %v7816 = vpop.f32.mrf.mxu0
      %v7817 = vadd.f32 %v7728, %v7816
      %7818 = vmatmul.bf16.gmra.mxu0 %v6558
      %v7819 = vpop.f32.mrf.mxu0
      %v7820 = vadd.f32 %v7731, %v7819
      %v7821 = vpop.f32.mrf.mxu0
      %v7822 = vadd.f32 %v7733, %v7821
      %7823 = vmatmul.bf16.gmra.mxu0 %v6559
      %v7824 = vpop.f32.mrf.mxu0
      %v7825 = vadd.f32 %v7736, %v7824
      %v7826 = vpop.f32.mrf.mxu0
      %v7827 = vadd.f32 %v7738, %v7826
      %7828 = vmatmul.bf16.gmra.mxu0 %v6560
      %v7829 = vpop.f32.mrf.mxu0
      %v7830 = vadd.f32 %v7741, %v7829
      %v7831 = vpop.f32.mrf.mxu0
      %v7832 = vadd.f32 %v7743, %v7831
      %7833 = vmatmul.bf16.gmra.mxu0 %v6561
      %v7834 = vpop.f32.mrf.mxu0
      %v7835 = vadd.f32 %v7746, %v7834
      %v7836 = vpop.f32.mrf.mxu0
      %v7837 = vadd.f32 %v7748, %v7836
      %7838 = vmatmul.bf16.gmra.mxu0 %v6562
      %v7839 = vpop.f32.mrf.mxu0
      %v7840 = vadd.f32 %v7751, %v7839
      %v7841 = vpop.f32.mrf.mxu0
      %v7842 = vadd.f32 %v7753, %v7841
      %7843 = vmatmul.bf16.gmra.mxu0 %v6563
      %v7844 = vpop.f32.mrf.mxu0
      %v7845 = vadd.f32 %v7756, %v7844
      %v7846 = vpop.f32.mrf.mxu0
      %v7847 = vadd.f32 %v7758, %v7846
      %7848 = vmatmul.bf16.gmra.mxu0 %v6564
      %v7849 = vpop.f32.mrf.mxu0
      %v7850 = vadd.f32 %v7761, %v7849
      %v7851 = vpop.f32.mrf.mxu0
      %v7852 = vadd.f32 %v7763, %v7851
      %7853 = vmatmul.bf16.gmra.mxu0 %v6565
      %v7854 = vpop.f32.mrf.mxu0
      %v7855 = vadd.f32 %v7766, %v7854
      %v7856 = vpop.f32.mrf.mxu0
      %v7857 = vadd.f32 %v7768, %v7856
      %7858 = vmatmul.bf16.gmra.mxu0 %v6566
      %v7859 = vpop.f32.mrf.mxu0
      %v7860 = vadd.f32 %v7771, %v7859
      %v7861 = vpop.f32.mrf.mxu0
      %v7862 = vadd.f32 %v7773, %v7861
      %7863 = vmatmul.bf16.gmra.mxu0 %v6567
      %v7864 = vpop.f32.mrf.mxu0
      %v7865 = vadd.f32 %v7776, %v7864
      %v7866 = vpop.f32.mrf.mxu0
      %v7867 = vadd.f32 %v7778, %v7866
      %7868 = vmatmul.bf16.gmra.mxu0 %v6568
      %v7869 = vpop.f32.mrf.mxu0
      %v7870 = vadd.f32 %v7781, %v7869
      %v7871 = vpop.f32.mrf.mxu0
      %v7872 = vadd.f32 %v7783, %v7871
      %7873 = vmatmul.bf16.gmra.mxu0 %v6569
      %v7874 = vpop.f32.mrf.mxu0
      %v7875 = vadd.f32 %v7786, %v7874
      %v7876 = vpop.f32.mrf.mxu0
      %v7877 = vadd.f32 %v7788, %v7876
      %7878 = vmatmul.bf16.gmra.mxu0 %v6570
      %v7879 = vpop.f32.mrf.mxu0
      %v7880 = vadd.f32 %v7791, %v7879
      %v7881 = vpop.f32.mrf.mxu0
      %v7882 = vadd.f32 %v7793, %v7881
      %7883 = vdwg.mxu0
      %7884 = vmatpush.bf16.msra.mxu0 %v7342
      %7885 = vmatpush.bf16.msra.mxu0 %v7341
      %7886 = vmatpush.bf16.msra.mxu0 %v7340
      %7887 = vmatpush.bf16.msra.mxu0 %v7339
      %7888 = vmatpush.bf16.msra.mxu0 %v7338
      %7889 = vmatpush.bf16.msra.mxu0 %v7337
      %7890 = vmatpush.bf16.msra.mxu0 %v7336
      %7891 = vmatpush.bf16.msra.mxu0 %v7335
      %7892 = vmatmul.bf16.gmra.mxu0 %v6619
      %v7893 = vpop.f32.mrf.mxu0
      %v7894 = vadd.f32 %v7805, %v7893
      %v7895 = vpop.f32.mrf.mxu0
      %v7896 = vadd.f32 %v7807, %v7895
      %7897 = vmatmul.bf16.gmra.mxu0 %v6620
      %v7898 = vpop.f32.mrf.mxu0
      %v7899 = vadd.f32 %v7810, %v7898
      %v7900 = vpop.f32.mrf.mxu0
      %v7901 = vadd.f32 %v7812, %v7900
      %7902 = vmatmul.bf16.gmra.mxu0 %v6621
      %v7903 = vpop.f32.mrf.mxu0
      %v7904 = vadd.f32 %v7815, %v7903
      %v7905 = vpop.f32.mrf.mxu0
      %v7906 = vadd.f32 %v7817, %v7905
      %7907 = vmatmul.bf16.gmra.mxu0 %v6622
      %v7908 = vpop.f32.mrf.mxu0
      %v7909 = vadd.f32 %v7820, %v7908
      %v7910 = vpop.f32.mrf.mxu0
      %v7911 = vadd.f32 %v7822, %v7910
      %7912 = vmatmul.bf16.gmra.mxu0 %v6623
      %v7913 = vpop.f32.mrf.mxu0
      %v7914 = vadd.f32 %v7825, %v7913
      %v7915 = vpop.f32.mrf.mxu0
      %v7916 = vadd.f32 %v7827, %v7915
      %7917 = vmatmul.bf16.gmra.mxu0 %v6624
      %v7918 = vpop.f32.mrf.mxu0
      %v7919 = vadd.f32 %v7830, %v7918
      %v7920 = vpop.f32.mrf.mxu0
      %v7921 = vadd.f32 %v7832, %v7920
      %7922 = vmatmul.bf16.gmra.mxu0 %v6625
      %v7923 = vpop.f32.mrf.mxu0
      %v7924 = vadd.f32 %v7835, %v7923
      %v7925 = vpop.f32.mrf.mxu0
      %v7926 = vadd.f32 %v7837, %v7925
      %7927 = vmatmul.bf16.gmra.mxu0 %v6626
      %v7928 = vpop.f32.mrf.mxu0
      %v7929 = vadd.f32 %v7840, %v7928
      %v7930 = vpop.f32.mrf.mxu0
      %v7931 = vadd.f32 %v7842, %v7930
      %7932 = vmatmul.bf16.gmra.mxu0 %v6627
      %v7933 = vpop.f32.mrf.mxu0
      %v7934 = vadd.f32 %v7845, %v7933
      %v7935 = vpop.f32.mrf.mxu0
      %v7936 = vadd.f32 %v7847, %v7935
      %7937 = vmatmul.bf16.gmra.mxu0 %v6628
      %v7938 = vpop.f32.mrf.mxu0
      %v7939 = vadd.f32 %v7850, %v7938
      %v7940 = vpop.f32.mrf.mxu0
      %v7941 = vadd.f32 %v7852, %v7940
      %7942 = vmatmul.bf16.gmra.mxu0 %v6629
      %v7943 = vpop.f32.mrf.mxu0
      %v7944 = vadd.f32 %v7855, %v7943
      %v7945 = vpop.f32.mrf.mxu0
      %v7946 = vadd.f32 %v7857, %v7945
      %7947 = vmatmul.bf16.gmra.mxu0 %v6630
      %v7948 = vpop.f32.mrf.mxu0
      %v7949 = vadd.f32 %v7860, %v7948
      %v7950 = vpop.f32.mrf.mxu0
      %v7951 = vadd.f32 %v7862, %v7950
      %7952 = vmatmul.bf16.gmra.mxu0 %v6631
      %v7953 = vpop.f32.mrf.mxu0
      %v7954 = vadd.f32 %v7865, %v7953
      %v7955 = vpop.f32.mrf.mxu0
      %v7956 = vadd.f32 %v7867, %v7955
      %7957 = vmatmul.bf16.gmra.mxu0 %v6632
      %v7958 = vpop.f32.mrf.mxu0
      %v7959 = vadd.f32 %v7870, %v7958
      %v7960 = vpop.f32.mrf.mxu0
      %v7961 = vadd.f32 %v7872, %v7960
      %7962 = vmatmul.bf16.gmra.mxu0 %v6633
      %v7963 = vpop.f32.mrf.mxu0
      %v7964 = vadd.f32 %v7875, %v7963
      %v7965 = vpop.f32.mrf.mxu0
      %v7966 = vadd.f32 %v7877, %v7965
      %7967 = vmatmul.bf16.gmra.mxu0 %v6634
      %v7968 = vpop.f32.mrf.mxu0
      %v7969 = vadd.f32 %v7880, %v7968
      %v7970 = vpop.f32.mrf.mxu0
      %v7971 = vadd.f32 %v7882, %v7970
      %7972 = vdwg.mxu0
      %7973 = vmatpush.bf16.msra.mxu0 %v7350
      %7974 = vmatpush.bf16.msra.mxu0 %v7349
      %7975 = vmatpush.bf16.msra.mxu0 %v7348
      %7976 = vmatpush.bf16.msra.mxu0 %v7347
      %7977 = vmatpush.bf16.msra.mxu0 %v7346
      %7978 = vmatpush.bf16.msra.mxu0 %v7345
      %7979 = vmatpush.bf16.msra.mxu0 %v7344
      %7980 = vmatpush.bf16.msra.mxu0 %v7343
      %7981 = vmatmul.bf16.gmra.mxu0 %v6699
      %v7982 = vpop.f32.mrf.mxu0
      %v7983 = vadd.f32 %v7894, %v7982
      %v7984 = vpop.f32.mrf.mxu0
      %v7985 = vadd.f32 %v7896, %v7984
      %7986 = vmatmul.bf16.gmra.mxu0 %v6700
      %v7987 = vpop.f32.mrf.mxu0
      %v7988 = vadd.f32 %v7899, %v7987
      %v7989 = vpop.f32.mrf.mxu0
      %v7990 = vadd.f32 %v7901, %v7989
      %7991 = vmatmul.bf16.gmra.mxu0 %v6701
      %v7992 = vpop.f32.mrf.mxu0
      %v7993 = vadd.f32 %v7904, %v7992
      %v7994 = vpop.f32.mrf.mxu0
      %v7995 = vadd.f32 %v7906, %v7994
      %7996 = vmatmul.bf16.gmra.mxu0 %v6702
      %v7997 = vpop.f32.mrf.mxu0
      %v7998 = vadd.f32 %v7909, %v7997
      %v7999 = vpop.f32.mrf.mxu0
      %v8000 = vadd.f32 %v7911, %v7999
      %8001 = vmatmul.bf16.gmra.mxu0 %v6703
      %v8002 = vpop.f32.mrf.mxu0
      %v8003 = vadd.f32 %v7914, %v8002
      %v8004 = vpop.f32.mrf.mxu0
      %v8005 = vadd.f32 %v7916, %v8004
      %8006 = vmatmul.bf16.gmra.mxu0 %v6704
      %v8007 = vpop.f32.mrf.mxu0
      %v8008 = vadd.f32 %v7919, %v8007
      %v8009 = vpop.f32.mrf.mxu0
      %v8010 = vadd.f32 %v7921, %v8009
      %8011 = vmatmul.bf16.gmra.mxu0 %v6705
      %v8012 = vpop.f32.mrf.mxu0
      %v8013 = vadd.f32 %v7924, %v8012
      %v8014 = vpop.f32.mrf.mxu0
      %v8015 = vadd.f32 %v7926, %v8014
      %8016 = vmatmul.bf16.gmra.mxu0 %v6706
      %v8017 = vpop.f32.mrf.mxu0
      %v8018 = vadd.f32 %v7929, %v8017
      %v8019 = vpop.f32.mrf.mxu0
      %v8020 = vadd.f32 %v7931, %v8019
      %8021 = vmatmul.bf16.gmra.mxu0 %v6707
      %v8022 = vpop.f32.mrf.mxu0
      %v8023 = vadd.f32 %v7934, %v8022
      %v8024 = vpop.f32.mrf.mxu0
      %v8025 = vadd.f32 %v7936, %v8024
      %8026 = vmatmul.bf16.gmra.mxu0 %v6708
      %v8027 = vpop.f32.mrf.mxu0
      %v8028 = vadd.f32 %v7939, %v8027
      %v8029 = vpop.f32.mrf.mxu0
      %v8030 = vadd.f32 %v7941, %v8029
      %8031 = vmatmul.bf16.gmra.mxu0 %v6709
      %v8032 = vpop.f32.mrf.mxu0
      %v8033 = vadd.f32 %v7944, %v8032
      %v8034 = vpop.f32.mrf.mxu0
      %v8035 = vadd.f32 %v7946, %v8034
      %8036 = vmatmul.bf16.gmra.mxu0 %v6710
      %v8037 = vpop.f32.mrf.mxu0
      %v8038 = vadd.f32 %v7949, %v8037
      %v8039 = vpop.f32.mrf.mxu0
      %v8040 = vadd.f32 %v7951, %v8039
      %8041 = vmatmul.bf16.gmra.mxu0 %v6711
      %v8042 = vpop.f32.mrf.mxu0
      %v8043 = vadd.f32 %v7954, %v8042
      %v8044 = vpop.f32.mrf.mxu0
      %v8045 = vadd.f32 %v7956, %v8044
      %8046 = vmatmul.bf16.gmra.mxu0 %v6712
      %v8047 = vpop.f32.mrf.mxu0
      %v8048 = vadd.f32 %v7959, %v8047
      %v8049 = vpop.f32.mrf.mxu0
      %v8050 = vadd.f32 %v7961, %v8049
      %8051 = vmatmul.bf16.gmra.mxu0 %v6713
      %v8052 = vpop.f32.mrf.mxu0
      %v8053 = vadd.f32 %v7964, %v8052
      %v8054 = vpop.f32.mrf.mxu0
      %v8055 = vadd.f32 %v7966, %v8054
      %8056 = vmatmul.bf16.gmra.mxu0 %v6714
      %v8057 = vpop.f32.mrf.mxu0
      %v8058 = vadd.f32 %v7969, %v8057
      %v8059 = vpop.f32.mrf.mxu0
      %v8060 = vadd.f32 %v7971, %v8059
      %8061 = vdwg.mxu0
      %8062 = vmatpush.bf16.msra.mxu0 %v7358
      %8063 = vmatpush.bf16.msra.mxu0 %v7357
      %8064 = vmatpush.bf16.msra.mxu0 %v7356
      %8065 = vmatpush.bf16.msra.mxu0 %v7355
      %8066 = vmatpush.bf16.msra.mxu0 %v7354
      %8067 = vmatpush.bf16.msra.mxu0 %v7353
      %8068 = vmatpush.bf16.msra.mxu0 %v7352
      %8069 = vmatpush.bf16.msra.mxu0 %v7351
      %8070 = vmatmul.bf16.gmra.mxu0 %v6763
      %v8071 = vpop.f32.mrf.mxu0
      %v8072 = vadd.f32 %v7983, %v8071
      %v8073 = vpop.f32.mrf.mxu0
      %v8074 = vadd.f32 %v7985, %v8073
      %8075 = vmatmul.bf16.gmra.mxu0 %v6764
      %v8076 = vpop.f32.mrf.mxu0
      %v8077 = vadd.f32 %v7988, %v8076
      %v8078 = vpop.f32.mrf.mxu0
      %v8079 = vadd.f32 %v7990, %v8078
      %8080 = vmatmul.bf16.gmra.mxu0 %v6765
      %v8081 = vpop.f32.mrf.mxu0
      %v8082 = vadd.f32 %v7993, %v8081
      %v8083 = vpop.f32.mrf.mxu0
      %v8084 = vadd.f32 %v7995, %v8083
      %8085 = vmatmul.bf16.gmra.mxu0 %v6766
      %v8086 = vpop.f32.mrf.mxu0
      %v8087 = vadd.f32 %v7998, %v8086
      %v8088 = vpop.f32.mrf.mxu0
      %v8089 = vadd.f32 %v8000, %v8088
      %8090 = vmatmul.bf16.gmra.mxu0 %v6767
      %v8091 = vpop.f32.mrf.mxu0
      %v8092 = vadd.f32 %v8003, %v8091
      %v8093 = vpop.f32.mrf.mxu0
      %v8094 = vadd.f32 %v8005, %v8093
      %8095 = vmatmul.bf16.gmra.mxu0 %v6768
      %v8096 = vpop.f32.mrf.mxu0
      %v8097 = vadd.f32 %v8008, %v8096
      %v8098 = vpop.f32.mrf.mxu0
      %v8099 = vadd.f32 %v8010, %v8098
      %8100 = vmatmul.bf16.gmra.mxu0 %v6769
      %v8101 = vpop.f32.mrf.mxu0
      %v8102 = vadd.f32 %v8013, %v8101
      %v8103 = vpop.f32.mrf.mxu0
      %v8104 = vadd.f32 %v8015, %v8103
      %8105 = vmatmul.bf16.gmra.mxu0 %v6770
      %v8106 = vpop.f32.mrf.mxu0
      %v8107 = vadd.f32 %v8018, %v8106
      %v8108 = vpop.f32.mrf.mxu0
      %v8109 = vadd.f32 %v8020, %v8108
      %8110 = vmatmul.bf16.gmra.mxu0 %v6771
      %v8111 = vpop.f32.mrf.mxu0
      %v8112 = vadd.f32 %v8023, %v8111
      %v8113 = vpop.f32.mrf.mxu0
      %v8114 = vadd.f32 %v8025, %v8113
      %8115 = vmatmul.bf16.gmra.mxu0 %v6772
      %v8116 = vpop.f32.mrf.mxu0
      %v8117 = vadd.f32 %v8028, %v8116
      %v8118 = vpop.f32.mrf.mxu0
      %v8119 = vadd.f32 %v8030, %v8118
      %8120 = vmatmul.bf16.gmra.mxu0 %v6773
      %v8121 = vpop.f32.mrf.mxu0
      %v8122 = vadd.f32 %v8033, %v8121
      %v8123 = vpop.f32.mrf.mxu0
      %v8124 = vadd.f32 %v8035, %v8123
      %8125 = vmatmul.bf16.gmra.mxu0 %v6774
      %v8126 = vpop.f32.mrf.mxu0
      %v8127 = vadd.f32 %v8038, %v8126
      %v8128 = vpop.f32.mrf.mxu0
      %v8129 = vadd.f32 %v8040, %v8128
      %8130 = vmatmul.bf16.gmra.mxu0 %v6775
      %v8131 = vpop.f32.mrf.mxu0
      %v8132 = vadd.f32 %v8043, %v8131
      %v8133 = vpop.f32.mrf.mxu0
      %v8134 = vadd.f32 %v8045, %v8133
      %8135 = vmatmul.bf16.gmra.mxu0 %v6776
      %v8136 = vpop.f32.mrf.mxu0
      %v8137 = vadd.f32 %v8048, %v8136
      %v8138 = vpop.f32.mrf.mxu0
      %v8139 = vadd.f32 %v8050, %v8138
      %8140 = vmatmul.bf16.gmra.mxu0 %v6777
      %v8141 = vpop.f32.mrf.mxu0
      %v8142 = vadd.f32 %v8053, %v8141
      %v8143 = vpop.f32.mrf.mxu0
      %v8144 = vadd.f32 %v8055, %v8143
      %8145 = vmatmul.bf16.gmra.mxu0 %v6778
      %v8146 = vpop.f32.mrf.mxu0
      %v8147 = vadd.f32 %v8058, %v8146
      %v8148 = vpop.f32.mrf.mxu0
      %v8149 = vadd.f32 %v8060, %v8148
      %8150 = vdwg.mxu0
      %8151 = vmatpush.bf16.msra.mxu0 %v7366
      %8152 = vmatpush.bf16.msra.mxu0 %v7365
      %8153 = vmatpush.bf16.msra.mxu0 %v7364
      %8154 = vmatpush.bf16.msra.mxu0 %v7363
      %8155 = vmatpush.bf16.msra.mxu0 %v7362
      %8156 = vmatpush.bf16.msra.mxu0 %v7361
      %8157 = vmatpush.bf16.msra.mxu0 %v7360
      %8158 = vmatpush.bf16.msra.mxu0 %v7359
      %8159 = vmatmul.bf16.gmra.mxu0 %v6827
      %v8160 = vpop.f32.mrf.mxu0
      %v8161 = vadd.f32 %v8072, %v8160
      %v8162 = vpop.f32.mrf.mxu0
      %v8163 = vadd.f32 %v8074, %v8162
      %8164 = vmatmul.bf16.gmra.mxu0 %v6828
      %v8165 = vpop.f32.mrf.mxu0
      %v8166 = vadd.f32 %v8077, %v8165
      %v8167 = vpop.f32.mrf.mxu0
      %v8168 = vadd.f32 %v8079, %v8167
      %8169 = vmatmul.bf16.gmra.mxu0 %v6829
      %v8170 = vpop.f32.mrf.mxu0
      %v8171 = vadd.f32 %v8082, %v8170
      %v8172 = vpop.f32.mrf.mxu0
      %v8173 = vadd.f32 %v8084, %v8172
      %8174 = vmatmul.bf16.gmra.mxu0 %v6830
      %v8175 = vpop.f32.mrf.mxu0
      %v8176 = vadd.f32 %v8087, %v8175
      %v8177 = vpop.f32.mrf.mxu0
      %v8178 = vadd.f32 %v8089, %v8177
      %8179 = vmatmul.bf16.gmra.mxu0 %v6831
      %v8180 = vpop.f32.mrf.mxu0
      %v8181 = vadd.f32 %v8092, %v8180
      %v8182 = vpop.f32.mrf.mxu0
      %v8183 = vadd.f32 %v8094, %v8182
      %8184 = vmatmul.bf16.gmra.mxu0 %v6832
      %v8185 = vpop.f32.mrf.mxu0
      %v8186 = vadd.f32 %v8097, %v8185
      %v8187 = vpop.f32.mrf.mxu0
      %v8188 = vadd.f32 %v8099, %v8187
      %8189 = vmatmul.bf16.gmra.mxu0 %v6833
      %v8190 = vpop.f32.mrf.mxu0
      %v8191 = vadd.f32 %v8102, %v8190
      %v8192 = vpop.f32.mrf.mxu0
      %v8193 = vadd.f32 %v8104, %v8192
      %8194 = vmatmul.bf16.gmra.mxu0 %v6834
      %v8195 = vpop.f32.mrf.mxu0
      %v8196 = vadd.f32 %v8107, %v8195
      %v8197 = vpop.f32.mrf.mxu0
      %v8198 = vadd.f32 %v8109, %v8197
      %8199 = vmatmul.bf16.gmra.mxu0 %v6835
      %v8200 = vpop.f32.mrf.mxu0
      %v8201 = vadd.f32 %v8112, %v8200
      %v8202 = vpop.f32.mrf.mxu0
      %v8203 = vadd.f32 %v8114, %v8202
      %8204 = vmatmul.bf16.gmra.mxu0 %v6836
      %v8205 = vpop.f32.mrf.mxu0
      %v8206 = vadd.f32 %v8117, %v8205
      %v8207 = vpop.f32.mrf.mxu0
      %v8208 = vadd.f32 %v8119, %v8207
      %8209 = vmatmul.bf16.gmra.mxu0 %v6837
      %v8210 = vpop.f32.mrf.mxu0
      %v8211 = vadd.f32 %v8122, %v8210
      %v8212 = vpop.f32.mrf.mxu0
      %v8213 = vadd.f32 %v8124, %v8212
      %8214 = vmatmul.bf16.gmra.mxu0 %v6838
      %v8215 = vpop.f32.mrf.mxu0
      %v8216 = vadd.f32 %v8127, %v8215
      %v8217 = vpop.f32.mrf.mxu0
      %v8218 = vadd.f32 %v8129, %v8217
      %8219 = vmatmul.bf16.gmra.mxu0 %v6839
      %v8220 = vpop.f32.mrf.mxu0
      %v8221 = vadd.f32 %v8132, %v8220
      %v8222 = vpop.f32.mrf.mxu0
      %v8223 = vadd.f32 %v8134, %v8222
      %8224 = vmatmul.bf16.gmra.mxu0 %v6840
      %v8225 = vpop.f32.mrf.mxu0
      %v8226 = vadd.f32 %v8137, %v8225
      %v8227 = vpop.f32.mrf.mxu0
      %v8228 = vadd.f32 %v8139, %v8227
      %8229 = vmatmul.bf16.gmra.mxu0 %v6841
      %v8230 = vpop.f32.mrf.mxu0
      %v8231 = vadd.f32 %v8142, %v8230
      %v8232 = vpop.f32.mrf.mxu0
      %v8233 = vadd.f32 %v8144, %v8232
      %8234 = vmatmul.bf16.gmra.mxu0 %v6842
      %v8235 = vpop.f32.mrf.mxu0
      %v8236 = vadd.f32 %v8147, %v8235
      %v8237 = vpop.f32.mrf.mxu0
      %v8238 = vadd.f32 %v8149, %v8237
      %8239 = vdwg.mxu0
      %v8240 = vmax.f32 %v8161, 0.0
      %v8241 = vmax.f32 %v8163, 0.0
      %v8242 = vmax.f32 %v8166, 0.0
      %v8243 = vmax.f32 %v8168, 0.0
      %v8244 = vmax.f32 %v8171, 0.0
      %v8245 = vmax.f32 %v8173, 0.0
      %v8246 = vmax.f32 %v8176, 0.0
      %v8247 = vmax.f32 %v8178, 0.0
      %v8248 = vmax.f32 %v8181, 0.0
      %v8249 = vmax.f32 %v8183, 0.0
      %v8250 = vmax.f32 %v8186, 0.0
      %v8251 = vmax.f32 %v8188, 0.0
      %v8252 = vmax.f32 %v8191, 0.0
      %v8253 = vmax.f32 %v8193, 0.0
      %v8254 = vmax.f32 %v8196, 0.0
      %v8255 = vmax.f32 %v8198, 0.0
      %v8256 = vmax.f32 %v8201, 0.0
      %v8257 = vmax.f32 %v8203, 0.0
      %v8258 = vmax.f32 %v8206, 0.0
      %v8259 = vmax.f32 %v8208, 0.0
      %v8260 = vmax.f32 %v8211, 0.0
      %v8261 = vmax.f32 %v8213, 0.0
      %v8262 = vmax.f32 %v8216, 0.0
      %v8263 = vmax.f32 %v8218, 0.0
      %v8264 = vmax.f32 %v8221, 0.0
      %v8265 = vmax.f32 %v8223, 0.0
      %v8266 = vmax.f32 %v8226, 0.0
      %v8267 = vmax.f32 %v8228, 0.0
      %v8268 = vmax.f32 %v8231, 0.0
      %v8269 = vmax.f32 %v8233, 0.0
      %v8270 = vmax.f32 %v8236, 0.0
      %v8271 = vmax.f32 %v8238, 0.0
      %8272 = vst [vmem:[%s224] sm:$0xff] %v8240
      %8273 = vst [vmem:[%s224 + $0x8] sm:$0xff] %v8241
      %8274 = vst [vmem:[%s224 + $0x10] sm:$0xff] %v8242
      %8275 = vst [vmem:[%s224 + $0x18] sm:$0xff] %v8243
      %8276 = vst [vmem:[%s224 + $0x20] sm:$0xff] %v8244
      %8277 = vst [vmem:[%s224 + $0x28] sm:$0xff] %v8245
      %8278 = vst [vmem:[%s224 + $0x30] sm:$0xff] %v8246
      %8279 = vst [vmem:[%s224 + $0x38] sm:$0xff] %v8247
      %8280 = vst [vmem:[%s224 + $0x40] sm:$0xff] %v8248
      %8281 = vst [vmem:[%s224 + $0x48] sm:$0xff] %v8249
      %8282 = vst [vmem:[%s224 + $0x50] sm:$0xff] %v8250
      %8283 = vst [vmem:[%s224 + $0x58] sm:$0xff] %v8251
      %8284 = vst [vmem:[%s224 + $0x60] sm:$0xff] %v8252
      %8285 = vst [vmem:[%s224 + $0x68] sm:$0xff] %v8253
      %8286 = vst [vmem:[%s224 + $0x70] sm:$0xff] %v8254
      %8287 = vst [vmem:[%s224 + $0x78] sm:$0xff] %v8255
      %8288 = vst [vmem:[%s224 + $0x80] sm:$0xff] %v8256
      %8289 = vst [vmem:[%s224 + $0x88] sm:$0xff] %v8257
      %8290 = vst [vmem:[%s224 + $0x90] sm:$0xff] %v8258
      %8291 = vst [vmem:[%s224 + $0x98] sm:$0xff] %v8259
      %8292 = vst [vmem:[%s224 + $0xa0] sm:$0xff] %v8260
      %8293 = vst [vmem:[%s224 + $0xa8] sm:$0xff] %v8261
      %8294 = vst [vmem:[%s224 + $0xb0] sm:$0xff] %v8262
      %8295 = vst [vmem:[%s224 + $0xb8] sm:$0xff] %v8263
      %8296 = vst [vmem:[%s224 + $0xc0] sm:$0xff] %v8264
      %8297 = vst [vmem:[%s224 + $0xc8] sm:$0xff] %v8265
      %8298 = vst [vmem:[%s224 + $0xd0] sm:$0xff] %v8266
      %8299 = vst [vmem:[%s224 + $0xd8] sm:$0xff] %v8267
      %8300 = vst [vmem:[%s224 + $0xe0] sm:$0xff] %v8268
      %8301 = vst [vmem:[%s224 + $0xe8] sm:$0xff] %v8269
      %8302 = vst [vmem:[%s224 + $0xf0] sm:$0xff] %v8270
      %8303 = vst [vmem:[%s224 + $0xf8] sm:$0xff] %v8271
      %p8304 = scmp.lt.s32.totalorder %s16, 1
      %s8305 = scalar_select %p8304, %s16, 1
      %s8306 = smul.addr %s8305, 32
      %s8307 = smul.addr %s8306, 8
      %s8308 = scalar_lea.vmem %s5, %s8307
      // Predicated region
      $region41: #{input_cv_block.1} parent=39 // pred_check
        %p8309 = pneg %p144
      $region42: #{input_cv_block.1} parent=39 // pred_check_branch
        %8311 = sbr.rel (%p8309) target = $region44
      $region43: #{input_cv_block.1} parent=39 // pred_region
        _
      $region44: #{input_cv_block.1} parent=39 // pred_fallthru
        _
    $region40: #{input_cv_block.1} parent=5 // pred_fallthru
      _
    %p8312 = scmp.le.s32.totalorder 2, %s11
    // Predicated region
    $region45: #{input_cv_block.1} parent=5 // pred_check
      %p8313 = pneg %p8312
    $region46: #{input_cv_block.1} parent=5 // pred_check_branch
      %8315 = sbr.rel (%p8313) target = $region48
    $region47: #{input_cv_block.1} parent=5 // pred_region
      %s8316 = ssub.s32 %s11, 2
      // Predicated region
      $region49: #{input_cv_block.1} parent=47 // pred_check
        %p8317 = pneg %p150
      $region50: #{input_cv_block.1} parent=47 // pred_check_branch
        %8319 = sbr.rel (%p8317) target = $region52
      $region51: #{input_cv_block.1} parent=47 // pred_region
        %p8320 = scmp.lt.s32.totalorder %s17, 1
        %s8321 = scalar_select %p8320, %s17, 1
        %s8322 = smul.addr %s8321, 32
        %s8323 = smul.addr %s8322, 8
        %s8324 = scalar_lea.vmem %s5, %s8323
      $region52: #{input_cv_block.1} parent=47 // pred_fallthru
        _
    $region48: #{input_cv_block.1} parent=5 // pred_fallthru
      _
  $region6: #{input_cv_block.1} parent=0 // loop_footer
    %s15 = sadd.s32 1, %s11
  $region7: #{input_cv_block.1} parent=0 // loop_footer_branch
    %10 = sbr.rel target = $region3
  $region8: #{input_cv_block.1} parent=0 // loop_exit
    _

</llo_original>
